<compile_context>
chip_gen: v5e
topology: v5e:2x2
jax: 0.10.0
libtpu: 0.0.40
codegen_flags: <defaults>
</compile_context>

<pallas_src>
import functools

import jax
import jax.numpy as jnp
from jax.experimental import pallas as pl
from jax.experimental.pallas import tpu as pltpu


# ----------------------------- Pallas kernel ---------------------------------

def _generator_kernel(noise_ref,       # (Bb, Din)        feedback/noise input
                      cond_term_ref,   # (3, Bb, H)       cond_emb @ W_c[g] + b_ih0[g]
                      w_a_ref,         # (3, Din, H)      layer-0 feedback weights, gate-major
                      w_ih_rest_ref,   # ((L-1)*3, H, H)  layers 1..L-1 input weights
                      b_ih_rest_ref,   # ((L-1)*3, 1, H)
                      w_hh_ref,        # (L*3, H, H)      hidden weights, gate-major
                      b_hh_ref,        # (L*3, 1, H)
                      w1_ref,          # (H, H)           output head
                      b1_ref,          # (1, H)
                      w2_ref,          # (H, Dout)
                      b2_ref,          # (1, Dout)
                      o_ref,           # (Bb, seq_len*Dout)  single dense output block
                      *, seq_len):
    L = w_hh_ref.shape[0] // 3
    H = w_hh_ref.shape[-1]
    Dout = w2_ref.shape[1]
    Bb = noise_ref.shape[0]

    # ---- hoist all time-invariant loads out of the unrolled time loop ----
    w_a = [w_a_ref[g] for g in range(3)]                                 # (Din, H)
    cond = [cond_term_ref[g] for g in range(3)]                          # (Bb, H)
    whh = [[w_hh_ref[3 * l + g] for g in range(3)] for l in range(L)]    # (H, H)
    bhh = [[b_hh_ref[3 * l + g] for g in range(3)] for l in range(L)]    # (1, H)
    wih = [[w_ih_rest_ref[3 * l + g] for g in range(3)] for l in range(L - 1)]
    bih = [[b_ih_rest_ref[3 * l + g] for g in range(3)] for l in range(L - 1)]
    w1 = w1_ref[...]
    b1 = b1_ref[...]
    w2 = w2_ref[...]
    b2 = b2_ref[...]

    def gru_cell(gi_r, gi_z, gi_n, h, wh, bh):
        # PyTorch gate order r/z/n; n = tanh(gi_n + r * (h @ W_hn + b_hn))
        gh_r = jnp.dot(h, wh[0], preferred_element_type=jnp.float32) + bh[0]
        gh_z = jnp.dot(h, wh[1], preferred_element_type=jnp.float32) + bh[1]
        gh_n = jnp.dot(h, wh[2], preferred_element_type=jnp.float32) + bh[2]
        r = jax.nn.sigmoid(gi_r + gh_r)
        z = jax.nn.sigmoid(gi_z + gh_z)
        n = jnp.tanh(gi_n + r * gh_n)
        return (1.0 - z) * n + z * h

    h = [jnp.zeros((Bb, H), jnp.float32) for _ in range(L)]
    prev = noise_ref[...]          # (Bb, Din); Din == Dout for the feedback loop

    # Static unroll over timesteps (seq_len is small & static); one writeback total.
    for t in range(seq_len):
        # layer 0: feedback GEMM + precomputed time-invariant condition term
        gi = [jnp.dot(prev, w_a[g], preferred_element_type=jnp.float32) + cond[g]
              for g in range(3)]
        h[0] = gru_cell(gi[0], gi[1], gi[2], h[0], whh[0], bhh[0])
        x = h[0]
        # TODO(synk): nn.GRU inter-layer dropout(0.1) is training-only; eval semantics here.
        for l in range(1, L):
            gi = [jnp.dot(x, wih[l - 1][g], preferred_element_type=jnp.float32)
                  + bih[l - 1][g] for g in range(3)]
            h[l] = gru_cell(gi[0], gi[1], gi[2], h[l], whh[l], bhh[l])
            x = h[l]
        # output head: Linear -> ReLU -> Linear -> Tanh
        hid = jnp.maximum(jnp.dot(x, w1, preferred_element_type=jnp.float32) + b1, 0.0)
        out = jnp.tanh(jnp.dot(hid, w2, preferred_element_type=jnp.float32) + b2)
        o_ref[:, t * Dout:(t + 1) * Dout] = out.astype(o_ref.dtype)
        prev = out                 # autoregressive feedback


# ------------------------------- Wrapper --------------------------------------

def _round_up(x, m):
    return (x + m - 1) // m * m


def conditional_timegan_generator(noise, condition, seq_len, params):
    """noise: [B, input_dim] f32, condition: [B] int32 -> [B, seq_len, output_dim]."""
    emb = params["embedding"]                      # (condition_dim, H//4)
    cond_emb = emb[condition]                      # gather stays in plain JAX glue

    B, Din = noise.shape
    L = params["w_hh"].shape[0]
    H = params["w_hh"].shape[-1]
    Dout = params["w2"].shape[1]

    # Batch tiling: pad to >= 8 sublanes; for large batches, blocks of 128 rows
    # on a "parallel" grid axis (sharded across TensorCores on v7x megacore).
    if B <= 128:
        Bb = _round_up(max(B, 8), 8)
        nb = 1
    else:
        Bb = 128
        nb = pl.cdiv(B, Bb)
    B_pad = Bb * nb
    pad = B_pad - B
    noise_p = jnp.pad(noise.astype(jnp.float32), ((0, pad), (0, 0)))
    cond_emb_p = jnp.pad(cond_emb.astype(jnp.float32), ((0, pad), (0, 0)))

    # Time-invariant layer-0 condition term (folds b_ih0): (3, B_pad, H)
    cond_term = jnp.einsum("be,geh->gbh", cond_emb_p, params["w_ih0_c"]) + params["b_ih0"]

    # Flatten (L, 3, ...) -> (L*3, ...) so the kernel only issues rank-2 loads.
    w_ih_rest = params["w_ih_rest"].reshape((L - 1) * 3, H, H)
    b_ih_rest = params["b_ih_rest"].reshape((L - 1) * 3, 1, H)
    w_hh = params["w_hh"].reshape(L * 3, H, H)
    b_hh = params["b_hh"].reshape(L * 3, 1, H)

    c2 = lambda b: (0, 0)
    c3 = lambda b: (0, 0, 0)

    out_flat = pl.pallas_call(
        functools.partial(_generator_kernel, seq_len=seq_len),
        out_shape=jax.ShapeDtypeStruct((B_pad, seq_len * Dout), jnp.float32),
        grid_spec=pltpu.PrefetchScalarGridSpec(
            num_scalar_prefetch=0,
            grid=(nb,),
            in_specs=[
                pl.BlockSpec((Bb, Din), lambda b: (b, 0)),        # noise / feedback seed
                pl.BlockSpec((3, Bb, H), lambda b: (0, b, 0)),    # cond term (invariant in t)
                pl.BlockSpec((3, Din, H), c3),                    # w_ih0 feedback part
                pl.BlockSpec(((L - 1) * 3, H, H), c3),            # w_ih layers 1..L-1
                pl.BlockSpec(((L - 1) * 3, 1, H), c3),            # b_ih layers 1..L-1
                pl.BlockSpec((L * 3, H, H), c3),                  # w_hh
                pl.BlockSpec((L * 3, 1, H), c3),                  # b_hh
                pl.BlockSpec((H, H), c2),                         # w1
                pl.BlockSpec((1, H), c2),                         # b1
                pl.BlockSpec((H, Dout), c2),                      # w2
                pl.BlockSpec((1, Dout), c2),                      # b2
            ],
            out_specs=pl.BlockSpec((Bb, seq_len * Dout), lambda b: (b, 0)),
        ),
        compiler_params=pltpu.CompilerParams(
            dimension_semantics=("parallel",)),    # batch blocks are independent
    )(noise_p, cond_term, params["w_ih0_x"], w_ih_rest, b_ih_rest,
      w_hh, b_hh, params["w1"], params["b1"], params["w2"], params["b2"])

    # (B_pad, seq_len*Dout) -> [B, seq_len, Dout]  (PyTorch convention)
    return out_flat[:B].reshape(B, seq_len, Dout)


# --------------------------- Deterministic init --------------------------------

def init_params(key, input_dim, condition_dim, hidden_dim, output_dim, num_layers):
    H = hidden_dim
    emb_dim = H // 4
    assert input_dim == output_dim, "autoregressive feedback requires input_dim == output_dim"
    assert num_layers >= 2
    s = 1.0 / jnp.sqrt(H)
    ks = jax.random.split(key, 12)

    def u(k, shape):
        return jax.random.uniform(k, shape, jnp.float32, -s, s)

    return {
        "embedding": jax.random.normal(ks[0], (condition_dim, emb_dim), jnp.float32),
        # Layer-0 input weights split into feedback (x) and condition (c) halves,
        # gate-major (r, z, n), stored transposed for x @ W.
        "w_ih0_x": u(ks[1], (3, input_dim, H)),
        "w_ih0_c": u(ks[2], (3, emb_dim, H)),
        "b_ih0":   u(ks[3], (3, 1, H)),
        "w_ih_rest": u(ks[4], (num_layers - 1, 3, H, H)),
        "b_ih_rest": u(ks[5], (num_layers - 1, 3, 1, H)),
        "w_hh": u(ks[6], (num_layers, 3, H, H)),
        "b_hh": u(ks[7], (num_layers, 3, 1, H)),
        "w1": u(ks[8], (H, H)),
        "b1": u(ks[9], (1, H)),
        "w2": u(ks[10], (H, output_dim)),
        "b2": u(ks[11], (1, output_dim)),
    }


# --------------------------------- Main -----------------------------------------

if __name__ == "__main__":
    batch = 4
    input_dim = 8        # == output_dim (required by the autoregressive feedback)
    condition_dim = 5
    hidden_dim = 32
    output_dim = 8
    num_layers = 3
    seq_len = 8

    key = jax.random.PRNGKey(0)
    k_p, k_n, k_c = jax.random.split(key, 3)

    params = init_params(k_p, input_dim, condition_dim, hidden_dim, output_dim, num_layers)
    noise = jax.random.normal(k_n, (batch, input_dim), jnp.float32)
    condition = jax.random.randint(k_c, (batch,), 0, condition_dim, jnp.int32)

    gen = jax.jit(functools.partial(conditional_timegan_generator,
                                    seq_len=seq_len, params=params))
    out = gen(noise, condition)
    out = jax.block_until_ready(out)

    assert out.shape == (batch, seq_len, output_dim), out.shape
    assert bool(jnp.all(jnp.isfinite(out)))
    print("KERNEL_OK")
</pallas_src>

<mosaic_0001>
module attributes {stable_mosaic.version = 11 : i64} {
  func.func @_generator_kernel(%arg0: i32, %arg1: memref<8x8xf32, #tpu.memory_space<vmem>>, %arg2: memref<3x8x32xf32, #tpu.memory_space<vmem>>, %arg3: memref<3x8x32xf32, #tpu.memory_space<vmem>>, %arg4: memref<6x32x32xf32, #tpu.memory_space<vmem>>, %arg5: memref<6x1x32xf32, #tpu.memory_space<vmem>>, %arg6: memref<9x32x32xf32, #tpu.memory_space<vmem>>, %arg7: memref<9x1x32xf32, #tpu.memory_space<vmem>>, %arg8: memref<32x32xf32, #tpu.memory_space<vmem>>, %arg9: memref<1x32xf32, #tpu.memory_space<vmem>>, %arg10: memref<32x8xf32, #tpu.memory_space<vmem>>, %arg11: memref<1x8xf32, #tpu.memory_space<vmem>>, %arg12: memref<8x64xf32, #tpu.memory_space<vmem>>) attributes {dimension_semantics = [#tpu.dimension_semantics<parallel>], iteration_bounds = array<i64: 1>, scalar_prefetch = 0 : i64, scratch_operands = 0 : i64, tpu.core_type = #tpu.core_type<tc>, window_params = [{transform_indices = @transform_0, window_bounds = array<i64: 8, 8>}, {transform_indices = @transform_1, window_bounds = array<i64: 3, 8, 32>}, {pipeline_mode = #tpu.pipeline_mode<synchronous>, transform_indices = @transform_2, window_bounds = array<i64: 3, 8, 32>}, {pipeline_mode = #tpu.pipeline_mode<synchronous>, transform_indices = @transform_3, window_bounds = array<i64: 6, 32, 32>}, {pipeline_mode = #tpu.pipeline_mode<synchronous>, transform_indices = @transform_4, window_bounds = array<i64: 6, 1, 32>}, {pipeline_mode = #tpu.pipeline_mode<synchronous>, transform_indices = @transform_5, window_bounds = array<i64: 9, 32, 32>}, {pipeline_mode = #tpu.pipeline_mode<synchronous>, transform_indices = @transform_6, window_bounds = array<i64: 9, 1, 32>}, {pipeline_mode = #tpu.pipeline_mode<synchronous>, transform_indices = @transform_7, window_bounds = array<i64: 32, 32>}, {pipeline_mode = #tpu.pipeline_mode<synchronous>, transform_indices = @transform_8, window_bounds = array<i64: 1, 32>}, {pipeline_mode = #tpu.pipeline_mode<synchronous>, transform_indices = @transform_9, window_bounds = array<i64: 32, 8>}, {pipeline_mode = #tpu.pipeline_mode<synchronous>, transform_indices = @transform_10, window_bounds = array<i64: 1, 8>}, {transform_indices = @transform_11, window_bounds = array<i64: 8, 64>}]} {
    %c0 = arith.constant 0 : index
    %c0_0 = arith.constant 0 : index
    %c0_1 = arith.constant 0 : index
    %0 = vector.load %arg3[%c0, %c0_0, %c0_1] : memref<3x8x32xf32, #tpu.memory_space<vmem>>, vector<1x8x32xf32>
    %1 = vector.shape_cast %0 : vector<1x8x32xf32> to vector<8x32xf32>
    %c1 = arith.constant 1 : index
    %c0_2 = arith.constant 0 : index
    %c0_3 = arith.constant 0 : index
    %2 = vector.load %arg3[%c1, %c0_2, %c0_3] : memref<3x8x32xf32, #tpu.memory_space<vmem>>, vector<1x8x32xf32>
    %3 = vector.shape_cast %2 : vector<1x8x32xf32> to vector<8x32xf32>
    %c2 = arith.constant 2 : index
    %c0_4 = arith.constant 0 : index
    %c0_5 = arith.constant 0 : index
    %4 = vector.load %arg3[%c2, %c0_4, %c0_5] : memref<3x8x32xf32, #tpu.memory_space<vmem>>, vector<1x8x32xf32>
    %5 = vector.shape_cast %4 : vector<1x8x32xf32> to vector<8x32xf32>
    %c0_6 = arith.constant 0 : index
    %c0_7 = arith.constant 0 : index
    %c0_8 = arith.constant 0 : index
    %6 = vector.load %arg2[%c0_6, %c0_7, %c0_8] : memref<3x8x32xf32, #tpu.memory_space<vmem>>, vector<1x8x32xf32>
    %7 = vector.shape_cast %6 : vector<1x8x32xf32> to vector<8x32xf32>
    %c1_9 = arith.constant 1 : index
    %c0_10 = arith.constant 0 : index
    %c0_11 = arith.constant 0 : index
    %8 = vector.load %arg2[%c1_9, %c0_10, %c0_11] : memref<3x8x32xf32, #tpu.memory_space<vmem>>, vector<1x8x32xf32>
    %9 = vector.shape_cast %8 : vector<1x8x32xf32> to vector<8x32xf32>
    %c2_12 = arith.constant 2 : index
    %c0_13 = arith.constant 0 : index
    %c0_14 = arith.constant 0 : index
    %10 = vector.load %arg2[%c2_12, %c0_13, %c0_14] : memref<3x8x32xf32, #tpu.memory_space<vmem>>, vector<1x8x32xf32>
    %11 = vector.shape_cast %10 : vector<1x8x32xf32> to vector<8x32xf32>
    %c0_15 = arith.constant 0 : index
    %c0_16 = arith.constant 0 : index
    %c0_17 = arith.constant 0 : index
    %12 = vector.load %arg6[%c0_15, %c0_16, %c0_17] : memref<9x32x32xf32, #tpu.memory_space<vmem>>, vector<1x32x32xf32>
    %13 = vector.shape_cast %12 : vector<1x32x32xf32> to vector<32x32xf32>
    %c1_18 = arith.constant 1 : index
    %c0_19 = arith.constant 0 : index
    %c0_20 = arith.constant 0 : index
    %14 = vector.load %arg6[%c1_18, %c0_19, %c0_20] : memref<9x32x32xf32, #tpu.memory_space<vmem>>, vector<1x32x32xf32>
    %15 = vector.shape_cast %14 : vector<1x32x32xf32> to vector<32x32xf32>
    %c2_21 = arith.constant 2 : index
    %c0_22 = arith.constant 0 : index
    %c0_23 = arith.constant 0 : index
    %16 = vector.load %arg6[%c2_21, %c0_22, %c0_23] : memref<9x32x32xf32, #tpu.memory_space<vmem>>, vector<1x32x32xf32>
    %17 = vector.shape_cast %16 : vector<1x32x32xf32> to vector<32x32xf32>
    %c3 = arith.constant 3 : index
    %c0_24 = arith.constant 0 : index
    %c0_25 = arith.constant 0 : index
    %18 = vector.load %arg6[%c3, %c0_24, %c0_25] : memref<9x32x32xf32, #tpu.memory_space<vmem>>, vector<1x32x32xf32>
    %19 = vector.shape_cast %18 : vector<1x32x32xf32> to vector<32x32xf32>
    %c4 = arith.constant 4 : index
    %c0_26 = arith.constant 0 : index
    %c0_27 = arith.constant 0 : index
    %20 = vector.load %arg6[%c4, %c0_26, %c0_27] : memref<9x32x32xf32, #tpu.memory_space<vmem>>, vector<1x32x32xf32>
    %21 = vector.shape_cast %20 : vector<1x32x32xf32> to vector<32x32xf32>
    %c5 = arith.constant 5 : index
    %c0_28 = arith.constant 0 : index
    %c0_29 = arith.constant 0 : index
    %22 = vector.load %arg6[%c5, %c0_28, %c0_29] : memref<9x32x32xf32, #tpu.memory_space<vmem>>, vector<1x32x32xf32>
    %23 = vector.shape_cast %22 : vector<1x32x32xf32> to vector<32x32xf32>
    %c6 = arith.constant 6 : index
    %c0_30 = arith.constant 0 : index
    %c0_31 = arith.constant 0 : index
    %24 = vector.load %arg6[%c6, %c0_30, %c0_31] : memref<9x32x32xf32, #tpu.memory_space<vmem>>, vector<1x32x32xf32>
    %25 = vector.shape_cast %24 : vector<1x32x32xf32> to vector<32x32xf32>
    %c7 = arith.constant 7 : index
    %c0_32 = arith.constant 0 : index
    %c0_33 = arith.constant 0 : index
    %26 = vector.load %arg6[%c7, %c0_32, %c0_33] : memref<9x32x32xf32, #tpu.memory_space<vmem>>, vector<1x32x32xf32>
    %27 = vector.shape_cast %26 : vector<1x32x32xf32> to vector<32x32xf32>
    %c8 = arith.constant 8 : index
    %c0_34 = arith.constant 0 : index
    %c0_35 = arith.constant 0 : index
    %28 = vector.load %arg6[%c8, %c0_34, %c0_35] : memref<9x32x32xf32, #tpu.memory_space<vmem>>, vector<1x32x32xf32>
    %29 = vector.shape_cast %28 : vector<1x32x32xf32> to vector<32x32xf32>
    %c0_36 = arith.constant 0 : index
    %c0_37 = arith.constant 0 : index
    %c0_38 = arith.constant 0 : index
    %30 = vector.load %arg7[%c0_36, %c0_37, %c0_38] : memref<9x1x32xf32, #tpu.memory_space<vmem>>, vector<1x1x32xf32>
    %31 = vector.shape_cast %30 : vector<1x1x32xf32> to vector<1x32xf32>
    %c1_39 = arith.constant 1 : index
    %c0_40 = arith.constant 0 : index
    %c0_41 = arith.constant 0 : index
    %32 = vector.load %arg7[%c1_39, %c0_40, %c0_41] : memref<9x1x32xf32, #tpu.memory_space<vmem>>, vector<1x1x32xf32>
    %33 = vector.shape_cast %32 : vector<1x1x32xf32> to vector<1x32xf32>
    %c2_42 = arith.constant 2 : index
    %c0_43 = arith.constant 0 : index
    %c0_44 = arith.constant 0 : index
    %34 = vector.load %arg7[%c2_42, %c0_43, %c0_44] : memref<9x1x32xf32, #tpu.memory_space<vmem>>, vector<1x1x32xf32>
    %35 = vector.shape_cast %34 : vector<1x1x32xf32> to vector<1x32xf32>
    %c3_45 = arith.constant 3 : index
    %c0_46 = arith.constant 0 : index
    %c0_47 = arith.constant 0 : index
    %36 = vector.load %arg7[%c3_45, %c0_46, %c0_47] : memref<9x1x32xf32, #tpu.memory_space<vmem>>, vector<1x1x32xf32>
    %37 = vector.shape_cast %36 : vector<1x1x32xf32> to vector<1x32xf32>
    %c4_48 = arith.constant 4 : index
    %c0_49 = arith.constant 0 : index
    %c0_50 = arith.constant 0 : index
    %38 = vector.load %arg7[%c4_48, %c0_49, %c0_50] : memref<9x1x32xf32, #tpu.memory_space<vmem>>, vector<1x1x32xf32>
    %39 = vector.shape_cast %38 : vector<1x1x32xf32> to vector<1x32xf32>
    %c5_51 = arith.constant 5 : index
    %c0_52 = arith.constant 0 : index
    %c0_53 = arith.constant 0 : index
    %40 = vector.load %arg7[%c5_51, %c0_52, %c0_53] : memref<9x1x32xf32, #tpu.memory_space<vmem>>, vector<1x1x32xf32>
    %41 = vector.shape_cast %40 : vector<1x1x32xf32> to vector<1x32xf32>
    %c6_54 = arith.constant 6 : index
    %c0_55 = arith.constant 0 : index
    %c0_56 = arith.constant 0 : index
    %42 = vector.load %arg7[%c6_54, %c0_55, %c0_56] : memref<9x1x32xf32, #tpu.memory_space<vmem>>, vector<1x1x32xf32>
    %43 = vector.shape_cast %42 : vector<1x1x32xf32> to vector<1x32xf32>
    %c7_57 = arith.constant 7 : index
    %c0_58 = arith.constant 0 : index
    %c0_59 = arith.constant 0 : index
    %44 = vector.load %arg7[%c7_57, %c0_58, %c0_59] : memref<9x1x32xf32, #tpu.memory_space<vmem>>, vector<1x1x32xf32>
    %45 = vector.shape_cast %44 : vector<1x1x32xf32> to vector<1x32xf32>
    %c8_60 = arith.constant 8 : index
    %c0_61 = arith.constant 0 : index
    %c0_62 = arith.constant 0 : index
    %46 = vector.load %arg7[%c8_60, %c0_61, %c0_62] : memref<9x1x32xf32, #tpu.memory_space<vmem>>, vector<1x1x32xf32>
    %47 = vector.shape_cast %46 : vector<1x1x32xf32> to vector<1x32xf32>
    %c0_63 = arith.constant 0 : index
    %c0_64 = arith.constant 0 : index
    %c0_65 = arith.constant 0 : index
    %48 = vector.load %arg4[%c0_63, %c0_64, %c0_65] : memref<6x32x32xf32, #tpu.memory_space<vmem>>, vector<1x32x32xf32>
    %49 = vector.shape_cast %48 : vector<1x32x32xf32> to vector<32x32xf32>
    %c1_66 = arith.constant 1 : index
    %c0_67 = arith.constant 0 : index
    %c0_68 = arith.constant 0 : index
    %50 = vector.load %arg4[%c1_66, %c0_67, %c0_68] : memref<6x32x32xf32, #tpu.memory_space<vmem>>, vector<1x32x32xf32>
    %51 = vector.shape_cast %50 : vector<1x32x32xf32> to vector<32x32xf32>
    %c2_69 = arith.constant 2 : index
    %c0_70 = arith.constant 0 : index
    %c0_71 = arith.constant 0 : index
    %52 = vector.load %arg4[%c2_69, %c0_70, %c0_71] : memref<6x32x32xf32, #tpu.memory_space<vmem>>, vector<1x32x32xf32>
    %53 = vector.shape_cast %52 : vector<1x32x32xf32> to vector<32x32xf32>
    %c3_72 = arith.constant 3 : index
    %c0_73 = arith.constant 0 : index
    %c0_74 = arith.constant 0 : index
    %54 = vector.load %arg4[%c3_72, %c0_73, %c0_74] : memref<6x32x32xf32, #tpu.memory_space<vmem>>, vector<1x32x32xf32>
    %55 = vector.shape_cast %54 : vector<1x32x32xf32> to vector<32x32xf32>
    %c4_75 = arith.constant 4 : index
    %c0_76 = arith.constant 0 : index
    %c0_77 = arith.constant 0 : index
    %56 = vector.load %arg4[%c4_75, %c0_76, %c0_77] : memref<6x32x32xf32, #tpu.memory_space<vmem>>, vector<1x32x32xf32>
    %57 = vector.shape_cast %56 : vector<1x32x32xf32> to vector<32x32xf32>
    %c5_78 = arith.constant 5 : index
    %c0_79 = arith.constant 0 : index
    %c0_80 = arith.constant 0 : index
    %58 = vector.load %arg4[%c5_78, %c0_79, %c0_80] : memref<6x32x32xf32, #tpu.memory_space<vmem>>, vector<1x32x32xf32>
    %59 = vector.shape_cast %58 : vector<1x32x32xf32> to vector<32x32xf32>
    %c0_81 = arith.constant 0 : index
    %c0_82 = arith.constant 0 : index
    %c0_83 = arith.constant 0 : index
    %60 = vector.load %arg5[%c0_81, %c0_82, %c0_83] : memref<6x1x32xf32, #tpu.memory_space<vmem>>, vector<1x1x32xf32>
    %61 = vector.shape_cast %60 : vector<1x1x32xf32> to vector<1x32xf32>
    %c1_84 = arith.constant 1 : index
    %c0_85 = arith.constant 0 : index
    %c0_86 = arith.constant 0 : index
    %62 = vector.load %arg5[%c1_84, %c0_85, %c0_86] : memref<6x1x32xf32, #tpu.memory_space<vmem>>, vector<1x1x32xf32>
    %63 = vector.shape_cast %62 : vector<1x1x32xf32> to vector<1x32xf32>
    %c2_87 = arith.constant 2 : index
    %c0_88 = arith.constant 0 : index
    %c0_89 = arith.constant 0 : index
    %64 = vector.load %arg5[%c2_87, %c0_88, %c0_89] : memref<6x1x32xf32, #tpu.memory_space<vmem>>, vector<1x1x32xf32>
    %65 = vector.shape_cast %64 : vector<1x1x32xf32> to vector<1x32xf32>
    %c3_90 = arith.constant 3 : index
    %c0_91 = arith.constant 0 : index
    %c0_92 = arith.constant 0 : index
    %66 = vector.load %arg5[%c3_90, %c0_91, %c0_92] : memref<6x1x32xf32, #tpu.memory_space<vmem>>, vector<1x1x32xf32>
    %67 = vector.shape_cast %66 : vector<1x1x32xf32> to vector<1x32xf32>
    %c4_93 = arith.constant 4 : index
    %c0_94 = arith.constant 0 : index
    %c0_95 = arith.constant 0 : index
    %68 = vector.load %arg5[%c4_93, %c0_94, %c0_95] : memref<6x1x32xf32, #tpu.memory_space<vmem>>, vector<1x1x32xf32>
    %69 = vector.shape_cast %68 : vector<1x1x32xf32> to vector<1x32xf32>
    %c5_96 = arith.constant 5 : index
    %c0_97 = arith.constant 0 : index
    %c0_98 = arith.constant 0 : index
    %70 = vector.load %arg5[%c5_96, %c0_97, %c0_98] : memref<6x1x32xf32, #tpu.memory_space<vmem>>, vector<1x1x32xf32>
    %71 = vector.shape_cast %70 : vector<1x1x32xf32> to vector<1x32xf32>
    %c0_99 = arith.constant 0 : index
    %c0_100 = arith.constant 0 : index
    %72 = vector.load %arg8[%c0_99, %c0_100] : memref<32x32xf32, #tpu.memory_space<vmem>>, vector<32x32xf32>
    %c0_101 = arith.constant 0 : index
    %c0_102 = arith.constant 0 : index
    %73 = vector.load %arg9[%c0_101, %c0_102] : memref<1x32xf32, #tpu.memory_space<vmem>>, vector<1x32xf32>
    %c0_103 = arith.constant 0 : index
    %c0_104 = arith.constant 0 : index
    %74 = vector.load %arg10[%c0_103, %c0_104] : memref<32x8xf32, #tpu.memory_space<vmem>>, vector<32x8xf32>
    %c0_105 = arith.constant 0 : index
    %c0_106 = arith.constant 0 : index
    %75 = vector.load %arg11[%c0_105, %c0_106] : memref<1x8xf32, #tpu.memory_space<vmem>>, vector<1x8xf32>
    %cst = arith.constant 0.000000e+00 : f32
    %76 = vector.broadcast %cst : f32 to vector<8x32xf32>
    %cst_107 = arith.constant 0.000000e+00 : f32
    %77 = vector.broadcast %cst_107 : f32 to vector<8x32xf32>
    %cst_108 = arith.constant 0.000000e+00 : f32
    %78 = vector.broadcast %cst_108 : f32 to vector<8x32xf32>
    %c0_109 = arith.constant 0 : index
    %c0_110 = arith.constant 0 : index
    %79 = vector.load %arg1[%c0_109, %c0_110] : memref<8x8xf32, #tpu.memory_space<vmem>>, vector<8x8xf32>
    %cst_111 = arith.constant dense<0.000000e+00> : vector<8x32xf32>
    %80 = tpu.matmul %79, %1, %cst_111 {dimension_numbers = #tpu.dot_dimension_numbers<[1], [0], [0], [1], [0, 0, 1, 1], [], []>} : vector<8x8xf32>, vector<8x32xf32>, vector<8x32xf32> -> vector<8x32xf32>
    %81 = arith.addf %80, %7 : vector<8x32xf32>
    %cst_112 = arith.constant dense<0.000000e+00> : vector<8x32xf32>
    %82 = tpu.matmul %79, %3, %cst_112 {dimension_numbers = #tpu.dot_dimension_numbers<[1], [0], [0], [1], [0, 0, 1, 1], [], []>} : vector<8x8xf32>, vector<8x32xf32>, vector<8x32xf32> -> vector<8x32xf32>
    %83 = arith.addf %82, %9 : vector<8x32xf32>
    %cst_113 = arith.constant dense<0.000000e+00> : vector<8x32xf32>
    %84 = tpu.matmul %79, %5, %cst_113 {dimension_numbers = #tpu.dot_dimension_numbers<[1], [0], [0], [1], [0, 0, 1, 1], [], []>} : vector<8x8xf32>, vector<8x32xf32>, vector<8x32xf32> -> vector<8x32xf32>
    %85 = arith.addf %84, %11 : vector<8x32xf32>
    %cst_114 = arith.constant dense<0.000000e+00> : vector<8x32xf32>
    %86 = tpu.matmul %76, %13, %cst_114 {dimension_numbers = #tpu.dot_dimension_numbers<[1], [0], [0], [1], [0, 0, 1, 1], [], []>} : vector<8x32xf32>, vector<32x32xf32>, vector<8x32xf32> -> vector<8x32xf32>
    %87 = vector.broadcast %31 : vector<1x32xf32> to vector<8x32xf32>
    %88 = arith.addf %86, %87 : vector<8x32xf32>
    %cst_115 = arith.constant dense<0.000000e+00> : vector<8x32xf32>
    %89 = tpu.matmul %76, %15, %cst_115 {dimension_numbers = #tpu.dot_dimension_numbers<[1], [0], [0], [1], [0, 0, 1, 1], [], []>} : vector<8x32xf32>, vector<32x32xf32>, vector<8x32xf32> -> vector<8x32xf32>
    %90 = vector.broadcast %33 : vector<1x32xf32> to vector<8x32xf32>
    %91 = arith.addf %89, %90 : vector<8x32xf32>
    %cst_116 = arith.constant dense<0.000000e+00> : vector<8x32xf32>
    %92 = tpu.matmul %76, %17, %cst_116 {dimension_numbers = #tpu.dot_dimension_numbers<[1], [0], [0], [1], [0, 0, 1, 1], [], []>} : vector<8x32xf32>, vector<32x32xf32>, vector<8x32xf32> -> vector<8x32xf32>
    %93 = vector.broadcast %35 : vector<1x32xf32> to vector<8x32xf32>
    %94 = arith.addf %92, %93 : vector<8x32xf32>
    %95 = arith.addf %81, %88 : vector<8x32xf32>
    %96 = arith.negf %95 : vector<8x32xf32>
    %97 = math.exp %96 : vector<8x32xf32>
    %cst_117 = arith.constant 1.000000e+00 : f32
    %98 = vector.broadcast %cst_117 : f32 to vector<8x32xf32>
    %99 = arith.addf %98, %97 : vector<8x32xf32>
    %100 = arith.divf %98, %99 : vector<8x32xf32>
    %101 = arith.addf %83, %91 : vector<8x32xf32>
    %102 = arith.negf %101 : vector<8x32xf32>
    %103 = math.exp %102 : vector<8x32xf32>
    %cst_118 = arith.constant 1.000000e+00 : f32
    %104 = vector.broadcast %cst_118 : f32 to vector<8x32xf32>
    %105 = arith.addf %104, %103 : vector<8x32xf32>
    %106 = arith.divf %104, %105 : vector<8x32xf32>
    %107 = arith.mulf %100, %94 : vector<8x32xf32>
    %108 = arith.addf %85, %107 : vector<8x32xf32>
    %109 = math.tanh %108 : vector<8x32xf32>
    %cst_119 = arith.constant 1.000000e+00 : f32
    %110 = vector.broadcast %cst_119 : f32 to vector<8x32xf32>
    %111 = arith.subf %110, %106 : vector<8x32xf32>
    %112 = arith.mulf %111, %109 : vector<8x32xf32>
    %113 = arith.mulf %106, %76 : vector<8x32xf32>
    %114 = arith.addf %112, %113 : vector<8x32xf32>
    %cst_120 = arith.constant dense<0.000000e+00> : vector<8x32xf32>
    %115 = tpu.matmul %114, %49, %cst_120 {dimension_numbers = #tpu.dot_dimension_numbers<[1], [0], [0], [1], [0, 0, 1, 1], [], []>} : vector<8x32xf32>, vector<32x32xf32>, vector<8x32xf32> -> vector<8x32xf32>
    %116 = vector.broadcast %61 : vector<1x32xf32> to vector<8x32xf32>
    %117 = arith.addf %115, %116 : vector<8x32xf32>
    %cst_121 = arith.constant dense<0.000000e+00> : vector<8x32xf32>
    %118 = tpu.matmul %114, %51, %cst_121 {dimension_numbers = #tpu.dot_dimension_numbers<[1], [0], [0], [1], [0, 0, 1, 1], [], []>} : vector<8x32xf32>, vector<32x32xf32>, vector<8x32xf32> -> vector<8x32xf32>
    %119 = vector.broadcast %63 : vector<1x32xf32> to vector<8x32xf32>
    %120 = arith.addf %118, %119 : vector<8x32xf32>
    %cst_122 = arith.constant dense<0.000000e+00> : vector<8x32xf32>
    %121 = tpu.matmul %114, %53, %cst_122 {dimension_numbers = #tpu.dot_dimension_numbers<[1], [0], [0], [1], [0, 0, 1, 1], [], []>} : vector<8x32xf32>, vector<32x32xf32>, vector<8x32xf32> -> vector<8x32xf32>
    %122 = vector.broadcast %65 : vector<1x32xf32> to vector<8x32xf32>
    %123 = arith.addf %121, %122 : vector<8x32xf32>
    %cst_123 = arith.constant dense<0.000000e+00> : vector<8x32xf32>
    %124 = tpu.matmul %77, %19, %cst_123 {dimension_numbers = #tpu.dot_dimension_numbers<[1], [0], [0], [1], [0, 0, 1, 1], [], []>} : vector<8x32xf32>, vector<32x32xf32>, vector<8x32xf32> -> vector<8x32xf32>
    %125 = vector.broadcast %37 : vector<1x32xf32> to vector<8x32xf32>
    %126 = arith.addf %124, %125 : vector<8x32xf32>
    %cst_124 = arith.constant dense<0.000000e+00> : vector<8x32xf32>
    %127 = tpu.matmul %77, %21, %cst_124 {dimension_numbers = #tpu.dot_dimension_numbers<[1], [0], [0], [1], [0, 0, 1, 1], [], []>} : vector<8x32xf32>, vector<32x32xf32>, vector<8x32xf32> -> vector<8x32xf32>
    %128 = vector.broadcast %39 : vector<1x32xf32> to vector<8x32xf32>
    %129 = arith.addf %127, %128 : vector<8x32xf32>
    %cst_125 = arith.constant dense<0.000000e+00> : vector<8x32xf32>
    %130 = tpu.matmul %77, %23, %cst_125 {dimension_numbers = #tpu.dot_dimension_numbers<[1], [0], [0], [1], [0, 0, 1, 1], [], []>} : vector<8x32xf32>, vector<32x32xf32>, vector<8x32xf32> -> vector<8x32xf32>
    %131 = vector.broadcast %41 : vector<1x32xf32> to vector<8x32xf32>
    %132 = arith.addf %130, %131 : vector<8x32xf32>
    %133 = arith.addf %117, %126 : vector<8x32xf32>
    %134 = arith.negf %133 : vector<8x32xf32>
    %135 = math.exp %134 : vector<8x32xf32>
    %cst_126 = arith.constant 1.000000e+00 : f32
    %136 = vector.broadcast %cst_126 : f32 to vector<8x32xf32>
    %137 = arith.addf %136, %135 : vector<8x32xf32>
    %138 = arith.divf %136, %137 : vector<8x32xf32>
    %139 = arith.addf %120, %129 : vector<8x32xf32>
    %140 = arith.negf %139 : vector<8x32xf32>
    %141 = math.exp %140 : vector<8x32xf32>
    %cst_127 = arith.constant 1.000000e+00 : f32
    %142 = vector.broadcast %cst_127 : f32 to vector<8x32xf32>
    %143 = arith.addf %142, %141 : vector<8x32xf32>
    %144 = arith.divf %142, %143 : vector<8x32xf32>
    %145 = arith.mulf %138, %132 : vector<8x32xf32>
    %146 = arith.addf %123, %145 : vector<8x32xf32>
    %147 = math.tanh %146 : vector<8x32xf32>
    %cst_128 = arith.constant 1.000000e+00 : f32
    %148 = vector.broadcast %cst_128 : f32 to vector<8x32xf32>
    %149 = arith.subf %148, %144 : vector<8x32xf32>
    %150 = arith.mulf %149, %147 : vector<8x32xf32>
    %151 = arith.mulf %144, %77 : vector<8x32xf32>
    %152 = arith.addf %150, %151 : vector<8x32xf32>
    %cst_129 = arith.constant dense<0.000000e+00> : vector<8x32xf32>
    %153 = tpu.matmul %152, %55, %cst_129 {dimension_numbers = #tpu.dot_dimension_numbers<[1], [0], [0], [1], [0, 0, 1, 1], [], []>} : vector<8x32xf32>, vector<32x32xf32>, vector<8x32xf32> -> vector<8x32xf32>
    %154 = vector.broadcast %67 : vector<1x32xf32> to vector<8x32xf32>
    %155 = arith.addf %153, %154 : vector<8x32xf32>
    %cst_130 = arith.constant dense<0.000000e+00> : vector<8x32xf32>
    %156 = tpu.matmul %152, %57, %cst_130 {dimension_numbers = #tpu.dot_dimension_numbers<[1], [0], [0], [1], [0, 0, 1, 1], [], []>} : vector<8x32xf32>, vector<32x32xf32>, vector<8x32xf32> -> vector<8x32xf32>
    %157 = vector.broadcast %69 : vector<1x32xf32> to vector<8x32xf32>
    %158 = arith.addf %156, %157 : vector<8x32xf32>
    %cst_131 = arith.constant dense<0.000000e+00> : vector<8x32xf32>
    %159 = tpu.matmul %152, %59, %cst_131 {dimension_numbers = #tpu.dot_dimension_numbers<[1], [0], [0], [1], [0, 0, 1, 1], [], []>} : vector<8x32xf32>, vector<32x32xf32>, vector<8x32xf32> -> vector<8x32xf32>
    %160 = vector.broadcast %71 : vector<1x32xf32> to vector<8x32xf32>
    %161 = arith.addf %159, %160 : vector<8x32xf32>
    %cst_132 = arith.constant dense<0.000000e+00> : vector<8x32xf32>
    %162 = tpu.matmul %78, %25, %cst_132 {dimension_numbers = #tpu.dot_dimension_numbers<[1], [0], [0], [1], [0, 0, 1, 1], [], []>} : vector<8x32xf32>, vector<32x32xf32>, vector<8x32xf32> -> vector<8x32xf32>
    %163 = vector.broadcast %43 : vector<1x32xf32> to vector<8x32xf32>
    %164 = arith.addf %162, %163 : vector<8x32xf32>
    %cst_133 = arith.constant dense<0.000000e+00> : vector<8x32xf32>
    %165 = tpu.matmul %78, %27, %cst_133 {dimension_numbers = #tpu.dot_dimension_numbers<[1], [0], [0], [1], [0, 0, 1, 1], [], []>} : vector<8x32xf32>, vector<32x32xf32>, vector<8x32xf32> -> vector<8x32xf32>
    %166 = vector.broadcast %45 : vector<1x32xf32> to vector<8x32xf32>
    %167 = arith.addf %165, %166 : vector<8x32xf32>
    %cst_134 = arith.constant dense<0.000000e+00> : vector<8x32xf32>
    %168 = tpu.matmul %78, %29, %cst_134 {dimension_numbers = #tpu.dot_dimension_numbers<[1], [0], [0], [1], [0, 0, 1, 1], [], []>} : vector<8x32xf32>, vector<32x32xf32>, vector<8x32xf32> -> vector<8x32xf32>
    %169 = vector.broadcast %47 : vector<1x32xf32> to vector<8x32xf32>
    %170 = arith.addf %168, %169 : vector<8x32xf32>
    %171 = arith.addf %155, %164 : vector<8x32xf32>
    %172 = arith.negf %171 : vector<8x32xf32>
    %173 = math.exp %172 : vector<8x32xf32>
    %cst_135 = arith.constant 1.000000e+00 : f32
    %174 = vector.broadcast %cst_135 : f32 to vector<8x32xf32>
    %175 = arith.addf %174, %173 : vector<8x32xf32>
    %176 = arith.divf %174, %175 : vector<8x32xf32>
    %177 = arith.addf %158, %167 : vector<8x32xf32>
    %178 = arith.negf %177 : vector<8x32xf32>
    %179 = math.exp %178 : vector<8x32xf32>
    %cst_136 = arith.constant 1.000000e+00 : f32
    %180 = vector.broadcast %cst_136 : f32 to vector<8x32xf32>
    %181 = arith.addf %180, %179 : vector<8x32xf32>
    %182 = arith.divf %180, %181 : vector<8x32xf32>
    %183 = arith.mulf %176, %170 : vector<8x32xf32>
    %184 = arith.addf %161, %183 : vector<8x32xf32>
    %185 = math.tanh %184 : vector<8x32xf32>
    %cst_137 = arith.constant 1.000000e+00 : f32
    %186 = vector.broadcast %cst_137 : f32 to vector<8x32xf32>
    %187 = arith.subf %186, %182 : vector<8x32xf32>
    %188 = arith.mulf %187, %185 : vector<8x32xf32>
    %189 = arith.mulf %182, %78 : vector<8x32xf32>
    %190 = arith.addf %188, %189 : vector<8x32xf32>
    %cst_138 = arith.constant dense<0.000000e+00> : vector<8x32xf32>
    %191 = tpu.matmul %190, %72, %cst_138 {dimension_numbers = #tpu.dot_dimension_numbers<[1], [0], [0], [1], [0, 0, 1, 1], [], []>} : vector<8x32xf32>, vector<32x32xf32>, vector<8x32xf32> -> vector<8x32xf32>
    %192 = vector.broadcast %73 : vector<1x32xf32> to vector<8x32xf32>
    %193 = arith.addf %191, %192 : vector<8x32xf32>
    %cst_139 = arith.constant 0.000000e+00 : f32
    %194 = vector.broadcast %cst_139 : f32 to vector<8x32xf32>
    %195 = arith.maximumf %193, %194 : vector<8x32xf32>
    %cst_140 = arith.constant dense<0.000000e+00> : vector<8x8xf32>
    %196 = tpu.matmul %195, %74, %cst_140 {dimension_numbers = #tpu.dot_dimension_numbers<[1], [0], [0], [1], [0, 0, 1, 1], [], []>} : vector<8x32xf32>, vector<32x8xf32>, vector<8x8xf32> -> vector<8x8xf32>
    %197 = vector.broadcast %75 : vector<1x8xf32> to vector<8x8xf32>
    %198 = arith.addf %196, %197 : vector<8x8xf32>
    %199 = math.tanh %198 : vector<8x8xf32>
    %c0_141 = arith.constant 0 : index
    %c0_142 = arith.constant 0 : index
    %200 = vector.load %arg12[%c0_141, %c0_142] : memref<8x64xf32, #tpu.memory_space<vmem>>, vector<8x8xf32>
    tpu.vector_store %arg12[%c0_141, %c0_142], %199 {strides = array<i32>} : memref<8x64xf32, #tpu.memory_space<vmem>>, vector<8x8xf32>,
    %cst_143 = arith.constant dense<0.000000e+00> : vector<8x32xf32>
    %201 = tpu.matmul %199, %1, %cst_143 {dimension_numbers = #tpu.dot_dimension_numbers<[1], [0], [0], [1], [0, 0, 1, 1], [], []>} : vector<8x8xf32>, vector<8x32xf32>, vector<8x32xf32> -> vector<8x32xf32>
    %202 = arith.addf %201, %7 : vector<8x32xf32>
    %cst_144 = arith.constant dense<0.000000e+00> : vector<8x32xf32>
    %203 = tpu.matmul %199, %3, %cst_144 {dimension_numbers = #tpu.dot_dimension_numbers<[1], [0], [0], [1], [0, 0, 1, 1], [], []>} : vector<8x8xf32>, vector<8x32xf32>, vector<8x32xf32> -> vector<8x32xf32>
    %204 = arith.addf %203, %9 : vector<8x32xf32>
    %cst_145 = arith.constant dense<0.000000e+00> : vector<8x32xf32>
    %205 = tpu.matmul %199, %5, %cst_145 {dimension_numbers = #tpu.dot_dimension_numbers<[1], [0], [0], [1], [0, 0, 1, 1], [], []>} : vector<8x8xf32>, vector<8x32xf32>, vector<8x32xf32> -> vector<8x32xf32>
    %206 = arith.addf %205, %11 : vector<8x32xf32>
    %cst_146 = arith.constant dense<0.000000e+00> : vector<8x32xf32>
    %207 = tpu.matmul %114, %13, %cst_146 {dimension_numbers = #tpu.dot_dimension_numbers<[1], [0], [0], [1], [0, 0, 1, 1], [], []>} : vector<8x32xf32>, vector<32x32xf32>, vector<8x32xf32> -> vector<8x32xf32>
    %208 = vector.broadcast %31 : vector<1x32xf32> to vector<8x32xf32>
    %209 = arith.addf %207, %208 : vector<8x32xf32>
    %cst_147 = arith.constant dense<0.000000e+00> : vector<8x32xf32>
    %210 = tpu.matmul %114, %15, %cst_147 {dimension_numbers = #tpu.dot_dimension_numbers<[1], [0], [0], [1], [0, 0, 1, 1], [], []>} : vector<8x32xf32>, vector<32x32xf32>, vector<8x32xf32> -> vector<8x32xf32>
    %211 = vector.broadcast %33 : vector<1x32xf32> to vector<8x32xf32>
    %212 = arith.addf %210, %211 : vector<8x32xf32>
    %cst_148 = arith.constant dense<0.000000e+00> : vector<8x32xf32>
    %213 = tpu.matmul %114, %17, %cst_148 {dimension_numbers = #tpu.dot_dimension_numbers<[1], [0], [0], [1], [0, 0, 1, 1], [], []>} : vector<8x32xf32>, vector<32x32xf32>, vector<8x32xf32> -> vector<8x32xf32>
    %214 = vector.broadcast %35 : vector<1x32xf32> to vector<8x32xf32>
    %215 = arith.addf %213, %214 : vector<8x32xf32>
    %216 = arith.addf %202, %209 : vector<8x32xf32>
    %217 = arith.negf %216 : vector<8x32xf32>
    %218 = math.exp %217 : vector<8x32xf32>
    %cst_149 = arith.constant 1.000000e+00 : f32
    %219 = vector.broadcast %cst_149 : f32 to vector<8x32xf32>
    %220 = arith.addf %219, %218 : vector<8x32xf32>
    %221 = arith.divf %219, %220 : vector<8x32xf32>
    %222 = arith.addf %204, %212 : vector<8x32xf32>
    %223 = arith.negf %222 : vector<8x32xf32>
    %224 = math.exp %223 : vector<8x32xf32>
    %cst_150 = arith.constant 1.000000e+00 : f32
    %225 = vector.broadcast %cst_150 : f32 to vector<8x32xf32>
    %226 = arith.addf %225, %224 : vector<8x32xf32>
    %227 = arith.divf %225, %226 : vector<8x32xf32>
    %228 = arith.mulf %221, %215 : vector<8x32xf32>
    %229 = arith.addf %206, %228 : vector<8x32xf32>
    %230 = math.tanh %229 : vector<8x32xf32>
    %cst_151 = arith.constant 1.000000e+00 : f32
    %231 = vector.broadcast %cst_151 : f32 to vector<8x32xf32>
    %232 = arith.subf %231, %227 : vector<8x32xf32>
    %233 = arith.mulf %232, %230 : vector<8x32xf32>
    %234 = arith.mulf %227, %114 : vector<8x32xf32>
    %235 = arith.addf %233, %234 : vector<8x32xf32>
    %cst_152 = arith.constant dense<0.000000e+00> : vector<8x32xf32>
    %236 = tpu.matmul %235, %49, %cst_152 {dimension_numbers = #tpu.dot_dimension_numbers<[1], [0], [0], [1], [0, 0, 1, 1], [], []>} : vector<8x32xf32>, vector<32x32xf32>, vector<8x32xf32> -> vector<8x32xf32>
    %237 = vector.broadcast %61 : vector<1x32xf32> to vector<8x32xf32>
    %238 = arith.addf %236, %237 : vector<8x32xf32>
    %cst_153 = arith.constant dense<0.000000e+00> : vector<8x32xf32>
    %239 = tpu.matmul %235, %51, %cst_153 {dimension_numbers = #tpu.dot_dimension_numbers<[1], [0], [0], [1], [0, 0, 1, 1], [], []>} : vector<8x32xf32>, vector<32x32xf32>, vector<8x32xf32> -> vector<8x32xf32>
    %240 = vector.broadcast %63 : vector<1x32xf32> to vector<8x32xf32>
    %241 = arith.addf %239, %240 : vector<8x32xf32>
    %cst_154 = arith.constant dense<0.000000e+00> : vector<8x32xf32>
    %242 = tpu.matmul %235, %53, %cst_154 {dimension_numbers = #tpu.dot_dimension_numbers<[1], [0], [0], [1], [0, 0, 1, 1], [], []>} : vector<8x32xf32>, vector<32x32xf32>, vector<8x32xf32> -> vector<8x32xf32>
    %243 = vector.broadcast %65 : vector<1x32xf32> to vector<8x32xf32>
    %244 = arith.addf %242, %243 : vector<8x32xf32>
    %cst_155 = arith.constant dense<0.000000e+00> : vector<8x32xf32>
    %245 = tpu.matmul %152, %19, %cst_155 {dimension_numbers = #tpu.dot_dimension_numbers<[1], [0], [0], [1], [0, 0, 1, 1], [], []>} : vector<8x32xf32>, vector<32x32xf32>, vector<8x32xf32> -> vector<8x32xf32>
    %246 = vector.broadcast %37 : vector<1x32xf32> to vector<8x32xf32>
    %247 = arith.addf %245, %246 : vector<8x32xf32>
    %cst_156 = arith.constant dense<0.000000e+00> : vector<8x32xf32>
    %248 = tpu.matmul %152, %21, %cst_156 {dimension_numbers = #tpu.dot_dimension_numbers<[1], [0], [0], [1], [0, 0, 1, 1], [], []>} : vector<8x32xf32>, vector<32x32xf32>, vector<8x32xf32> -> vector<8x32xf32>
    %249 = vector.broadcast %39 : vector<1x32xf32> to vector<8x32xf32>
    %250 = arith.addf %248, %249 : vector<8x32xf32>
    %cst_157 = arith.constant dense<0.000000e+00> : vector<8x32xf32>
    %251 = tpu.matmul %152, %23, %cst_157 {dimension_numbers = #tpu.dot_dimension_numbers<[1], [0], [0], [1], [0, 0, 1, 1], [], []>} : vector<8x32xf32>, vector<32x32xf32>, vector<8x32xf32> -> vector<8x32xf32>
    %252 = vector.broadcast %41 : vector<1x32xf32> to vector<8x32xf32>
    %253 = arith.addf %251, %252 : vector<8x32xf32>
    %254 = arith.addf %238, %247 : vector<8x32xf32>
    %255 = arith.negf %254 : vector<8x32xf32>
    %256 = math.exp %255 : vector<8x32xf32>
    %cst_158 = arith.constant 1.000000e+00 : f32
    %257 = vector.broadcast %cst_158 : f32 to vector<8x32xf32>
    %258 = arith.addf %257, %256 : vector<8x32xf32>
    %259 = arith.divf %257, %258 : vector<8x32xf32>
    %260 = arith.addf %241, %250 : vector<8x32xf32>
    %261 = arith.negf %260 : vector<8x32xf32>
    %262 = math.exp %261 : vector<8x32xf32>
    %cst_159 = arith.constant 1.000000e+00 : f32
    %263 = vector.broadcast %cst_159 : f32 to vector<8x32xf32>
    %264 = arith.addf %263, %262 : vector<8x32xf32>
    %265 = arith.divf %263, %264 : vector<8x32xf32>
    %266 = arith.mulf %259, %253 : vector<8x32xf32>
    %267 = arith.addf %244, %266 : vector<8x32xf32>
    %268 = math.tanh %267 : vector<8x32xf32>
    %cst_160 = arith.constant 1.000000e+00 : f32
    %269 = vector.broadcast %cst_160 : f32 to vector<8x32xf32>
    %270 = arith.subf %269, %265 : vector<8x32xf32>
    %271 = arith.mulf %270, %268 : vector<8x32xf32>
    %272 = arith.mulf %265, %152 : vector<8x32xf32>
    %273 = arith.addf %271, %272 : vector<8x32xf32>
    %cst_161 = arith.constant dense<0.000000e+00> : vector<8x32xf32>
    %274 = tpu.matmul %273, %55, %cst_161 {dimension_numbers = #tpu.dot_dimension_numbers<[1], [0], [0], [1], [0, 0, 1, 1], [], []>} : vector<8x32xf32>, vector<32x32xf32>, vector<8x32xf32> -> vector<8x32xf32>
    %275 = vector.broadcast %67 : vector<1x32xf32> to vector<8x32xf32>
    %276 = arith.addf %274, %275 : vector<8x32xf32>
    %cst_162 = arith.constant dense<0.000000e+00> : vector<8x32xf32>
    %277 = tpu.matmul %273, %57, %cst_162 {dimension_numbers = #tpu.dot_dimension_numbers<[1], [0], [0], [1], [0, 0, 1, 1], [], []>} : vector<8x32xf32>, vector<32x32xf32>, vector<8x32xf32> -> vector<8x32xf32>
    %278 = vector.broadcast %69 : vector<1x32xf32> to vector<8x32xf32>
    %279 = arith.addf %277, %278 : vector<8x32xf32>
    %cst_163 = arith.constant dense<0.000000e+00> : vector<8x32xf32>
    %280 = tpu.matmul %273, %59, %cst_163 {dimension_numbers = #tpu.dot_dimension_numbers<[1], [0], [0], [1], [0, 0, 1, 1], [], []>} : vector<8x32xf32>, vector<32x32xf32>, vector<8x32xf32> -> vector<8x32xf32>
    %281 = vector.broadcast %71 : vector<1x32xf32> to vector<8x32xf32>
    %282 = arith.addf %280, %281 : vector<8x32xf32>
    %cst_164 = arith.constant dense<0.000000e+00> : vector<8x32xf32>
    %283 = tpu.matmul %190, %25, %cst_164 {dimension_numbers = #tpu.dot_dimension_numbers<[1], [0], [0], [1], [0, 0, 1, 1], [], []>} : vector<8x32xf32>, vector<32x32xf32>, vector<8x32xf32> -> vector<8x32xf32>
    %284 = vector.broadcast %43 : vector<1x32xf32> to vector<8x32xf32>
    %285 = arith.addf %283, %284 : vector<8x32xf32>
    %cst_165 = arith.constant dense<0.000000e+00> : vector<8x32xf32>
    %286 = tpu.matmul %190, %27, %cst_165 {dimension_numbers = #tpu.dot_dimension_numbers<[1], [0], [0], [1], [0, 0, 1, 1], [], []>} : vector<8x32xf32>, vector<32x32xf32>, vector<8x32xf32> -> vector<8x32xf32>
    %287 = vector.broadcast %45 : vector<1x32xf32> to vector<8x32xf32>
    %288 = arith.addf %286, %287 : vector<8x32xf32>
    %cst_166 = arith.constant dense<0.000000e+00> : vector<8x32xf32>
    %289 = tpu.matmul %190, %29, %cst_166 {dimension_numbers = #tpu.dot_dimension_numbers<[1], [0], [0], [1], [0, 0, 1, 1], [], []>} : vector<8x32xf32>, vector<32x32xf32>, vector<8x32xf32> -> vector<8x32xf32>
    %290 = vector.broadcast %47 : vector<1x32xf32> to vector<8x32xf32>
    %291 = arith.addf %289, %290 : vector<8x32xf32>
    %292 = arith.addf %276, %285 : vector<8x32xf32>
    %293 = arith.negf %292 : vector<8x32xf32>
    %294 = math.exp %293 : vector<8x32xf32>
    %cst_167 = arith.constant 1.000000e+00 : f32
    %295 = vector.broadcast %cst_167 : f32 to vector<8x32xf32>
    %296 = arith.addf %295, %294 : vector<8x32xf32>
    %297 = arith.divf %295, %296 : vector<8x32xf32>
    %298 = arith.addf %279, %288 : vector<8x32xf32>
    %299 = arith.negf %298 : vector<8x32xf32>
    %300 = math.exp %299 : vector<8x32xf32>
    %cst_168 = arith.constant 1.000000e+00 : f32
    %301 = vector.broadcast %cst_168 : f32 to vector<8x32xf32>
    %302 = arith.addf %301, %300 : vector<8x32xf32>
    %303 = arith.divf %301, %302 : vector<8x32xf32>
    %304 = arith.mulf %297, %291 : vector<8x32xf32>
    %305 = arith.addf %282, %304 : vector<8x32xf32>
    %306 = math.tanh %305 : vector<8x32xf32>
    %cst_169 = arith.constant 1.000000e+00 : f32
    %307 = vector.broadcast %cst_169 : f32 to vector<8x32xf32>
    %308 = arith.subf %307, %303 : vector<8x32xf32>
    %309 = arith.mulf %308, %306 : vector<8x32xf32>
    %310 = arith.mulf %303, %190 : vector<8x32xf32>
    %311 = arith.addf %309, %310 : vector<8x32xf32>
    %cst_170 = arith.constant dense<0.000000e+00> : vector<8x32xf32>
    %312 = tpu.matmul %311, %72, %cst_170 {dimension_numbers = #tpu.dot_dimension_numbers<[1], [0], [0], [1], [0, 0, 1, 1], [], []>} : vector<8x32xf32>, vector<32x32xf32>, vector<8x32xf32> -> vector<8x32xf32>
    %313 = vector.broadcast %73 : vector<1x32xf32> to vector<8x32xf32>
    %314 = arith.addf %312, %313 : vector<8x32xf32>
    %cst_171 = arith.constant 0.000000e+00 : f32
    %315 = vector.broadcast %cst_171 : f32 to vector<8x32xf32>
    %316 = arith.maximumf %314, %315 : vector<8x32xf32>
    %cst_172 = arith.constant dense<0.000000e+00> : vector<8x8xf32>
    %317 = tpu.matmul %316, %74, %cst_172 {dimension_numbers = #tpu.dot_dimension_numbers<[1], [0], [0], [1], [0, 0, 1, 1], [], []>} : vector<8x32xf32>, vector<32x8xf32>, vector<8x8xf32> -> vector<8x8xf32>
    %318 = vector.broadcast %75 : vector<1x8xf32> to vector<8x8xf32>
    %319 = arith.addf %317, %318 : vector<8x8xf32>
    %320 = math.tanh %319 : vector<8x8xf32>
    %c0_173 = arith.constant 0 : index
    %c8_174 = arith.constant 8 : index
    %321 = vector.load %arg12[%c0_173, %c8_174] : memref<8x64xf32, #tpu.memory_space<vmem>>, vector<8x8xf32>
    tpu.vector_store %arg12[%c0_173, %c8_174], %320 {strides = array<i32>} : memref<8x64xf32, #tpu.memory_space<vmem>>, vector<8x8xf32>,
    %cst_175 = arith.constant dense<0.000000e+00> : vector<8x32xf32>
    %322 = tpu.matmul %320, %1, %cst_175 {dimension_numbers = #tpu.dot_dimension_numbers<[1], [0], [0], [1], [0, 0, 1, 1], [], []>} : vector<8x8xf32>, vector<8x32xf32>, vector<8x32xf32> -> vector<8x32xf32>
    %323 = arith.addf %322, %7 : vector<8x32xf32>
    %cst_176 = arith.constant dense<0.000000e+00> : vector<8x32xf32>
    %324 = tpu.matmul %320, %3, %cst_176 {dimension_numbers = #tpu.dot_dimension_numbers<[1], [0], [0], [1], [0, 0, 1, 1], [], []>} : vector<8x8xf32>, vector<8x32xf32>, vector<8x32xf32> -> vector<8x32xf32>
    %325 = arith.addf %324, %9 : vector<8x32xf32>
    %cst_177 = arith.constant dense<0.000000e+00> : vector<8x32xf32>
    %326 = tpu.matmul %320, %5, %cst_177 {dimension_numbers = #tpu.dot_dimension_numbers<[1], [0], [0], [1], [0, 0, 1, 1], [], []>} : vector<8x8xf32>, vector<8x32xf32>, vector<8x32xf32> -> vector<8x32xf32>
    %327 = arith.addf %326, %11 : vector<8x32xf32>
    %cst_178 = arith.constant dense<0.000000e+00> : vector<8x32xf32>
    %328 = tpu.matmul %235, %13, %cst_178 {dimension_numbers = #tpu.dot_dimension_numbers<[1], [0], [0], [1], [0, 0, 1, 1], [], []>} : vector<8x32xf32>, vector<32x32xf32>, vector<8x32xf32> -> vector<8x32xf32>
    %329 = vector.broadcast %31 : vector<1x32xf32> to vector<8x32xf32>
    %330 = arith.addf %328, %329 : vector<8x32xf32>
    %cst_179 = arith.constant dense<0.000000e+00> : vector<8x32xf32>
    %331 = tpu.matmul %235, %15, %cst_179 {dimension_numbers = #tpu.dot_dimension_numbers<[1], [0], [0], [1], [0, 0, 1, 1], [], []>} : vector<8x32xf32>, vector<32x32xf32>, vector<8x32xf32> -> vector<8x32xf32>
    %332 = vector.broadcast %33 : vector<1x32xf32> to vector<8x32xf32>
    %333 = arith.addf %331, %332 : vector<8x32xf32>
    %cst_180 = arith.constant dense<0.000000e+00> : vector<8x32xf32>
    %334 = tpu.matmul %235, %17, %cst_180 {dimension_numbers = #tpu.dot_dimension_numbers<[1], [0], [0], [1], [0, 0, 1, 1], [], []>} : vector<8x32xf32>, vector<32x32xf32>, vector<8x32xf32> -> vector<8x32xf32>
    %335 = vector.broadcast %35 : vector<1x32xf32> to vector<8x32xf32>
    %336 = arith.addf %334, %335 : vector<8x32xf32>
    %337 = arith.addf %323, %330 : vector<8x32xf32>
    %338 = arith.negf %337 : vector<8x32xf32>
    %339 = math.exp %338 : vector<8x32xf32>
    %cst_181 = arith.constant 1.000000e+00 : f32
    %340 = vector.broadcast %cst_181 : f32 to vector<8x32xf32>
    %341 = arith.addf %340, %339 : vector<8x32xf32>
    %342 = arith.divf %340, %341 : vector<8x32xf32>
    %343 = arith.addf %325, %333 : vector<8x32xf32>
    %344 = arith.negf %343 : vector<8x32xf32>
    %345 = math.exp %344 : vector<8x32xf32>
    %cst_182 = arith.constant 1.000000e+00 : f32
    %346 = vector.broadcast %cst_182 : f32 to vector<8x32xf32>
    %347 = arith.addf %346, %345 : vector<8x32xf32>
    %348 = arith.divf %346, %347 : vector<8x32xf32>
    %349 = arith.mulf %342, %336 : vector<8x32xf32>
    %350 = arith.addf %327, %349 : vector<8x32xf32>
    %351 = math.tanh %350 : vector<8x32xf32>
    %cst_183 = arith.constant 1.000000e+00 : f32
    %352 = vector.broadcast %cst_183 : f32 to vector<8x32xf32>
    %353 = arith.subf %352, %348 : vector<8x32xf32>
    %354 = arith.mulf %353, %351 : vector<8x32xf32>
    %355 = arith.mulf %348, %235 : vector<8x32xf32>
    %356 = arith.addf %354, %355 : vector<8x32xf32>
    %cst_184 = arith.constant dense<0.000000e+00> : vector<8x32xf32>
    %357 = tpu.matmul %356, %49, %cst_184 {dimension_numbers = #tpu.dot_dimension_numbers<[1], [0], [0], [1], [0, 0, 1, 1], [], []>} : vector<8x32xf32>, vector<32x32xf32>, vector<8x32xf32> -> vector<8x32xf32>
    %358 = vector.broadcast %61 : vector<1x32xf32> to vector<8x32xf32>
    %359 = arith.addf %357, %358 : vector<8x32xf32>
    %cst_185 = arith.constant dense<0.000000e+00> : vector<8x32xf32>
    %360 = tpu.matmul %356, %51, %cst_185 {dimension_numbers = #tpu.dot_dimension_numbers<[1], [0], [0], [1], [0, 0, 1, 1], [], []>} : vector<8x32xf32>, vector<32x32xf32>, vector<8x32xf32> -> vector<8x32xf32>
    %361 = vector.broadcast %63 : vector<1x32xf32> to vector<8x32xf32>
    %362 = arith.addf %360, %361 : vector<8x32xf32>
    %cst_186 = arith.constant dense<0.000000e+00> : vector<8x32xf32>
    %363 = tpu.matmul %356, %53, %cst_186 {dimension_numbers = #tpu.dot_dimension_numbers<[1], [0], [0], [1], [0, 0, 1, 1], [], []>} : vector<8x32xf32>, vector<32x32xf32>, vector<8x32xf32> -> vector<8x32xf32>
    %364 = vector.broadcast %65 : vector<1x32xf32> to vector<8x32xf32>
    %365 = arith.addf %363, %364 : vector<8x32xf32>
    %cst_187 = arith.constant dense<0.000000e+00> : vector<8x32xf32>
    %366 = tpu.matmul %273, %19, %cst_187 {dimension_numbers = #tpu.dot_dimension_numbers<[1], [0], [0], [1], [0, 0, 1, 1], [], []>} : vector<8x32xf32>, vector<32x32xf32>, vector<8x32xf32> -> vector<8x32xf32>
    %367 = vector.broadcast %37 : vector<1x32xf32> to vector<8x32xf32>
    %368 = arith.addf %366, %367 : vector<8x32xf32>
    %cst_188 = arith.constant dense<0.000000e+00> : vector<8x32xf32>
    %369 = tpu.matmul %273, %21, %cst_188 {dimension_numbers = #tpu.dot_dimension_numbers<[1], [0], [0], [1], [0, 0, 1, 1], [], []>} : vector<8x32xf32>, vector<32x32xf32>, vector<8x32xf32> -> vector<8x32xf32>
    %370 = vector.broadcast %39 : vector<1x32xf32> to vector<8x32xf32>
    %371 = arith.addf %369, %370 : vector<8x32xf32>
    %cst_189 = arith.constant dense<0.000000e+00> : vector<8x32xf32>
    %372 = tpu.matmul %273, %23, %cst_189 {dimension_numbers = #tpu.dot_dimension_numbers<[1], [0], [0], [1], [0, 0, 1, 1], [], []>} : vector<8x32xf32>, vector<32x32xf32>, vector<8x32xf32> -> vector<8x32xf32>
    %373 = vector.broadcast %41 : vector<1x32xf32> to vector<8x32xf32>
    %374 = arith.addf %372, %373 : vector<8x32xf32>
    %375 = arith.addf %359, %368 : vector<8x32xf32>
    %376 = arith.negf %375 : vector<8x32xf32>
    %377 = math.exp %376 : vector<8x32xf32>
    %cst_190 = arith.constant 1.000000e+00 : f32
    %378 = vector.broadcast %cst_190 : f32 to vector<8x32xf32>
    %379 = arith.addf %378, %377 : vector<8x32xf32>
    %380 = arith.divf %378, %379 : vector<8x32xf32>
    %381 = arith.addf %362, %371 : vector<8x32xf32>
    %382 = arith.negf %381 : vector<8x32xf32>
    %383 = math.exp %382 : vector<8x32xf32>
    %cst_191 = arith.constant 1.000000e+00 : f32
    %384 = vector.broadcast %cst_191 : f32 to vector<8x32xf32>
    %385 = arith.addf %384, %383 : vector<8x32xf32>
    %386 = arith.divf %384, %385 : vector<8x32xf32>
    %387 = arith.mulf %380, %374 : vector<8x32xf32>
    %388 = arith.addf %365, %387 : vector<8x32xf32>
    %389 = math.tanh %388 : vector<8x32xf32>
    %cst_192 = arith.constant 1.000000e+00 : f32
    %390 = vector.broadcast %cst_192 : f32 to vector<8x32xf32>
    %391 = arith.subf %390, %386 : vector<8x32xf32>
    %392 = arith.mulf %391, %389 : vector<8x32xf32>
    %393 = arith.mulf %386, %273 : vector<8x32xf32>
    %394 = arith.addf %392, %393 : vector<8x32xf32>
    %cst_193 = arith.constant dense<0.000000e+00> : vector<8x32xf32>
    %395 = tpu.matmul %394, %55, %cst_193 {dimension_numbers = #tpu.dot_dimension_numbers<[1], [0], [0], [1], [0, 0, 1, 1], [], []>} : vector<8x32xf32>, vector<32x32xf32>, vector<8x32xf32> -> vector<8x32xf32>
    %396 = vector.broadcast %67 : vector<1x32xf32> to vector<8x32xf32>
    %397 = arith.addf %395, %396 : vector<8x32xf32>
    %cst_194 = arith.constant dense<0.000000e+00> : vector<8x32xf32>
    %398 = tpu.matmul %394, %57, %cst_194 {dimension_numbers = #tpu.dot_dimension_numbers<[1], [0], [0], [1], [0, 0, 1, 1], [], []>} : vector<8x32xf32>, vector<32x32xf32>, vector<8x32xf32> -> vector<8x32xf32>
    %399 = vector.broadcast %69 : vector<1x32xf32> to vector<8x32xf32>
    %400 = arith.addf %398, %399 : vector<8x32xf32>
    %cst_195 = arith.constant dense<0.000000e+00> : vector<8x32xf32>
    %401 = tpu.matmul %394, %59, %cst_195 {dimension_numbers = #tpu.dot_dimension_numbers<[1], [0], [0], [1], [0, 0, 1, 1], [], []>} : vector<8x32xf32>, vector<32x32xf32>, vector<8x32xf32> -> vector<8x32xf32>
    %402 = vector.broadcast %71 : vector<1x32xf32> to vector<8x32xf32>
    %403 = arith.addf %401, %402 : vector<8x32xf32>
    %cst_196 = arith.constant dense<0.000000e+00> : vector<8x32xf32>
    %404 = tpu.matmul %311, %25, %cst_196 {dimension_numbers = #tpu.dot_dimension_numbers<[1], [0], [0], [1], [0, 0, 1, 1], [], []>} : vector<8x32xf32>, vector<32x32xf32>, vector<8x32xf32> -> vector<8x32xf32>
    %405 = vector.broadcast %43 : vector<1x32xf32> to vector<8x32xf32>
    %406 = arith.addf %404, %405 : vector<8x32xf32>
    %cst_197 = arith.constant dense<0.000000e+00> : vector<8x32xf32>
    %407 = tpu.matmul %311, %27, %cst_197 {dimension_numbers = #tpu.dot_dimension_numbers<[1], [0], [0], [1], [0, 0, 1, 1], [], []>} : vector<8x32xf32>, vector<32x32xf32>, vector<8x32xf32> -> vector<8x32xf32>
    %408 = vector.broadcast %45 : vector<1x32xf32> to vector<8x32xf32>
    %409 = arith.addf %407, %408 : vector<8x32xf32>
    %cst_198 = arith.constant dense<0.000000e+00> : vector<8x32xf32>
    %410 = tpu.matmul %311, %29, %cst_198 {dimension_numbers = #tpu.dot_dimension_numbers<[1], [0], [0], [1], [0, 0, 1, 1], [], []>} : vector<8x32xf32>, vector<32x32xf32>, vector<8x32xf32> -> vector<8x32xf32>
    %411 = vector.broadcast %47 : vector<1x32xf32> to vector<8x32xf32>
    %412 = arith.addf %410, %411 : vector<8x32xf32>
    %413 = arith.addf %397, %406 : vector<8x32xf32>
    %414 = arith.negf %413 : vector<8x32xf32>
    %415 = math.exp %414 : vector<8x32xf32>
    %cst_199 = arith.constant 1.000000e+00 : f32
    %416 = vector.broadcast %cst_199 : f32 to vector<8x32xf32>
    %417 = arith.addf %416, %415 : vector<8x32xf32>
    %418 = arith.divf %416, %417 : vector<8x32xf32>
    %419 = arith.addf %400, %409 : vector<8x32xf32>
    %420 = arith.negf %419 : vector<8x32xf32>
    %421 = math.exp %420 : vector<8x32xf32>
    %cst_200 = arith.constant 1.000000e+00 : f32
    %422 = vector.broadcast %cst_200 : f32 to vector<8x32xf32>
    %423 = arith.addf %422, %421 : vector<8x32xf32>
    %424 = arith.divf %422, %423 : vector<8x32xf32>
    %425 = arith.mulf %418, %412 : vector<8x32xf32>
    %426 = arith.addf %403, %425 : vector<8x32xf32>
    %427 = math.tanh %426 : vector<8x32xf32>
    %cst_201 = arith.constant 1.000000e+00 : f32
    %428 = vector.broadcast %cst_201 : f32 to vector<8x32xf32>
    %429 = arith.subf %428, %424 : vector<8x32xf32>
    %430 = arith.mulf %429, %427 : vector<8x32xf32>
    %431 = arith.mulf %424, %311 : vector<8x32xf32>
    %432 = arith.addf %430, %431 : vector<8x32xf32>
    %cst_202 = arith.constant dense<0.000000e+00> : vector<8x32xf32>
    %433 = tpu.matmul %432, %72, %cst_202 {dimension_numbers = #tpu.dot_dimension_numbers<[1], [0], [0], [1], [0, 0, 1, 1], [], []>} : vector<8x32xf32>, vector<32x32xf32>, vector<8x32xf32> -> vector<8x32xf32>
    %434 = vector.broadcast %73 : vector<1x32xf32> to vector<8x32xf32>
    %435 = arith.addf %433, %434 : vector<8x32xf32>
    %cst_203 = arith.constant 0.000000e+00 : f32
    %436 = vector.broadcast %cst_203 : f32 to vector<8x32xf32>
    %437 = arith.maximumf %435, %436 : vector<8x32xf32>
    %cst_204 = arith.constant dense<0.000000e+00> : vector<8x8xf32>
    %438 = tpu.matmul %437, %74, %cst_204 {dimension_numbers = #tpu.dot_dimension_numbers<[1], [0], [0], [1], [0, 0, 1, 1], [], []>} : vector<8x32xf32>, vector<32x8xf32>, vector<8x8xf32> -> vector<8x8xf32>
    %439 = vector.broadcast %75 : vector<1x8xf32> to vector<8x8xf32>
    %440 = arith.addf %438, %439 : vector<8x8xf32>
    %441 = math.tanh %440 : vector<8x8xf32>
    %c0_205 = arith.constant 0 : index
    %c16 = arith.constant 16 : index
    %442 = vector.load %arg12[%c0_205, %c16] : memref<8x64xf32, #tpu.memory_space<vmem>>, vector<8x8xf32>
    tpu.vector_store %arg12[%c0_205, %c16], %441 {strides = array<i32>} : memref<8x64xf32, #tpu.memory_space<vmem>>, vector<8x8xf32>,
    %cst_206 = arith.constant dense<0.000000e+00> : vector<8x32xf32>
    %443 = tpu.matmul %441, %1, %cst_206 {dimension_numbers = #tpu.dot_dimension_numbers<[1], [0], [0], [1], [0, 0, 1, 1], [], []>} : vector<8x8xf32>, vector<8x32xf32>, vector<8x32xf32> -> vector<8x32xf32>
    %444 = arith.addf %443, %7 : vector<8x32xf32>
    %cst_207 = arith.constant dense<0.000000e+00> : vector<8x32xf32>
    %445 = tpu.matmul %441, %3, %cst_207 {dimension_numbers = #tpu.dot_dimension_numbers<[1], [0], [0], [1], [0, 0, 1, 1], [], []>} : vector<8x8xf32>, vector<8x32xf32>, vector<8x32xf32> -> vector<8x32xf32>
    %446 = arith.addf %445, %9 : vector<8x32xf32>
    %cst_208 = arith.constant dense<0.000000e+00> : vector<8x32xf32>
    %447 = tpu.matmul %441, %5, %cst_208 {dimension_numbers = #tpu.dot_dimension_numbers<[1], [0], [0], [1], [0, 0, 1, 1], [], []>} : vector<8x8xf32>, vector<8x32xf32>, vector<8x32xf32> -> vector<8x32xf32>
    %448 = arith.addf %447, %11 : vector<8x32xf32>
    %cst_209 = arith.constant dense<0.000000e+00> : vector<8x32xf32>
    %449 = tpu.matmul %356, %13, %cst_209 {dimension_numbers = #tpu.dot_dimension_numbers<[1], [0], [0], [1], [0, 0, 1, 1], [], []>} : vector<8x32xf32>, vector<32x32xf32>, vector<8x32xf32> -> vector<8x32xf32>
    %450 = vector.broadcast %31 : vector<1x32xf32> to vector<8x32xf32>
    %451 = arith.addf %449, %450 : vector<8x32xf32>
    %cst_210 = arith.constant dense<0.000000e+00> : vector<8x32xf32>
    %452 = tpu.matmul %356, %15, %cst_210 {dimension_numbers = #tpu.dot_dimension_numbers<[1], [0], [0], [1], [0, 0, 1, 1], [], []>} : vector<8x32xf32>, vector<32x32xf32>, vector<8x32xf32> -> vector<8x32xf32>
    %453 = vector.broadcast %33 : vector<1x32xf32> to vector<8x32xf32>
    %454 = arith.addf %452, %453 : vector<8x32xf32>
    %cst_211 = arith.constant dense<0.000000e+00> : vector<8x32xf32>
    %455 = tpu.matmul %356, %17, %cst_211 {dimension_numbers = #tpu.dot_dimension_numbers<[1], [0], [0], [1], [0, 0, 1, 1], [], []>} : vector<8x32xf32>, vector<32x32xf32>, vector<8x32xf32> -> vector<8x32xf32>
    %456 = vector.broadcast %35 : vector<1x32xf32> to vector<8x32xf32>
    %457 = arith.addf %455, %456 : vector<8x32xf32>
    %458 = arith.addf %444, %451 : vector<8x32xf32>
    %459 = arith.negf %458 : vector<8x32xf32>
    %460 = math.exp %459 : vector<8x32xf32>
    %cst_212 = arith.constant 1.000000e+00 : f32
    %461 = vector.broadcast %cst_212 : f32 to vector<8x32xf32>
    %462 = arith.addf %461, %460 : vector<8x32xf32>
    %463 = arith.divf %461, %462 : vector<8x32xf32>
    %464 = arith.addf %446, %454 : vector<8x32xf32>
    %465 = arith.negf %464 : vector<8x32xf32>
    %466 = math.exp %465 : vector<8x32xf32>
    %cst_213 = arith.constant 1.000000e+00 : f32
    %467 = vector.broadcast %cst_213 : f32 to vector<8x32xf32>
    %468 = arith.addf %467, %466 : vector<8x32xf32>
    %469 = arith.divf %467, %468 : vector<8x32xf32>
    %470 = arith.mulf %463, %457 : vector<8x32xf32>
    %471 = arith.addf %448, %470 : vector<8x32xf32>
    %472 = math.tanh %471 : vector<8x32xf32>
    %cst_214 = arith.constant 1.000000e+00 : f32
    %473 = vector.broadcast %cst_214 : f32 to vector<8x32xf32>
    %474 = arith.subf %473, %469 : vector<8x32xf32>
    %475 = arith.mulf %474, %472 : vector<8x32xf32>
    %476 = arith.mulf %469, %356 : vector<8x32xf32>
    %477 = arith.addf %475, %476 : vector<8x32xf32>
    %cst_215 = arith.constant dense<0.000000e+00> : vector<8x32xf32>
    %478 = tpu.matmul %477, %49, %cst_215 {dimension_numbers = #tpu.dot_dimension_numbers<[1], [0], [0], [1], [0, 0, 1, 1], [], []>} : vector<8x32xf32>, vector<32x32xf32>, vector<8x32xf32> -> vector<8x32xf32>
    %479 = vector.broadcast %61 : vector<1x32xf32> to vector<8x32xf32>
    %480 = arith.addf %478, %479 : vector<8x32xf32>
    %cst_216 = arith.constant dense<0.000000e+00> : vector<8x32xf32>
    %481 = tpu.matmul %477, %51, %cst_216 {dimension_numbers = #tpu.dot_dimension_numbers<[1], [0], [0], [1], [0, 0, 1, 1], [], []>} : vector<8x32xf32>, vector<32x32xf32>, vector<8x32xf32> -> vector<8x32xf32>
    %482 = vector.broadcast %63 : vector<1x32xf32> to vector<8x32xf32>
    %483 = arith.addf %481, %482 : vector<8x32xf32>
    %cst_217 = arith.constant dense<0.000000e+00> : vector<8x32xf32>
    %484 = tpu.matmul %477, %53, %cst_217 {dimension_numbers = #tpu.dot_dimension_numbers<[1], [0], [0], [1], [0, 0, 1, 1], [], []>} : vector<8x32xf32>, vector<32x32xf32>, vector<8x32xf32> -> vector<8x32xf32>
    %485 = vector.broadcast %65 : vector<1x32xf32> to vector<8x32xf32>
    %486 = arith.addf %484, %485 : vector<8x32xf32>
    %cst_218 = arith.constant dense<0.000000e+00> : vector<8x32xf32>
    %487 = tpu.matmul %394, %19, %cst_218 {dimension_numbers = #tpu.dot_dimension_numbers<[1], [0], [0], [1], [0, 0, 1, 1], [], []>} : vector<8x32xf32>, vector<32x32xf32>, vector<8x32xf32> -> vector<8x32xf32>
    %488 = vector.broadcast %37 : vector<1x32xf32> to vector<8x32xf32>
    %489 = arith.addf %487, %488 : vector<8x32xf32>
    %cst_219 = arith.constant dense<0.000000e+00> : vector<8x32xf32>
    %490 = tpu.matmul %394, %21, %cst_219 {dimension_numbers = #tpu.dot_dimension_numbers<[1], [0], [0], [1], [0, 0, 1, 1], [], []>} : vector<8x32xf32>, vector<32x32xf32>, vector<8x32xf32> -> vector<8x32xf32>
    %491 = vector.broadcast %39 : vector<1x32xf32> to vector<8x32xf32>
    %492 = arith.addf %490, %491 : vector<8x32xf32>
    %cst_220 = arith.constant dense<0.000000e+00> : vector<8x32xf32>
    %493 = tpu.matmul %394, %23, %cst_220 {dimension_numbers = #tpu.dot_dimension_numbers<[1], [0], [0], [1], [0, 0, 1, 1], [], []>} : vector<8x32xf32>, vector<32x32xf32>, vector<8x32xf32> -> vector<8x32xf32>
    %494 = vector.broadcast %41 : vector<1x32xf32> to vector<8x32xf32>
    %495 = arith.addf %493, %494 : vector<8x32xf32>
    %496 = arith.addf %480, %489 : vector<8x32xf32>
    %497 = arith.negf %496 : vector<8x32xf32>
    %498 = math.exp %497 : vector<8x32xf32>
    %cst_221 = arith.constant 1.000000e+00 : f32
    %499 = vector.broadcast %cst_221 : f32 to vector<8x32xf32>
    %500 = arith.addf %499, %498 : vector<8x32xf32>
    %501 = arith.divf %499, %500 : vector<8x32xf32>
    %502 = arith.addf %483, %492 : vector<8x32xf32>
    %503 = arith.negf %502 : vector<8x32xf32>
    %504 = math.exp %503 : vector<8x32xf32>
    %cst_222 = arith.constant 1.000000e+00 : f32
    %505 = vector.broadcast %cst_222 : f32 to vector<8x32xf32>
    %506 = arith.addf %505, %504 : vector<8x32xf32>
    %507 = arith.divf %505, %506 : vector<8x32xf32>
    %508 = arith.mulf %501, %495 : vector<8x32xf32>
    %509 = arith.addf %486, %508 : vector<8x32xf32>
    %510 = math.tanh %509 : vector<8x32xf32>
    %cst_223 = arith.constant 1.000000e+00 : f32
    %511 = vector.broadcast %cst_223 : f32 to vector<8x32xf32>
    %512 = arith.subf %511, %507 : vector<8x32xf32>
    %513 = arith.mulf %512, %510 : vector<8x32xf32>
    %514 = arith.mulf %507, %394 : vector<8x32xf32>
    %515 = arith.addf %513, %514 : vector<8x32xf32>
    %cst_224 = arith.constant dense<0.000000e+00> : vector<8x32xf32>
    %516 = tpu.matmul %515, %55, %cst_224 {dimension_numbers = #tpu.dot_dimension_numbers<[1], [0], [0], [1], [0, 0, 1, 1], [], []>} : vector<8x32xf32>, vector<32x32xf32>, vector<8x32xf32> -> vector<8x32xf32>
    %517 = vector.broadcast %67 : vector<1x32xf32> to vector<8x32xf32>
    %518 = arith.addf %516, %517 : vector<8x32xf32>
    %cst_225 = arith.constant dense<0.000000e+00> : vector<8x32xf32>
    %519 = tpu.matmul %515, %57, %cst_225 {dimension_numbers = #tpu.dot_dimension_numbers<[1], [0], [0], [1], [0, 0, 1, 1], [], []>} : vector<8x32xf32>, vector<32x32xf32>, vector<8x32xf32> -> vector<8x32xf32>
    %520 = vector.broadcast %69 : vector<1x32xf32> to vector<8x32xf32>
    %521 = arith.addf %519, %520 : vector<8x32xf32>
    %cst_226 = arith.constant dense<0.000000e+00> : vector<8x32xf32>
    %522 = tpu.matmul %515, %59, %cst_226 {dimension_numbers = #tpu.dot_dimension_numbers<[1], [0], [0], [1], [0, 0, 1, 1], [], []>} : vector<8x32xf32>, vector<32x32xf32>, vector<8x32xf32> -> vector<8x32xf32>
    %523 = vector.broadcast %71 : vector<1x32xf32> to vector<8x32xf32>
    %524 = arith.addf %522, %523 : vector<8x32xf32>
    %cst_227 = arith.constant dense<0.000000e+00> : vector<8x32xf32>
    %525 = tpu.matmul %432, %25, %cst_227 {dimension_numbers = #tpu.dot_dimension_numbers<[1], [0], [0], [1], [0, 0, 1, 1], [], []>} : vector<8x32xf32>, vector<32x32xf32>, vector<8x32xf32> -> vector<8x32xf32>
    %526 = vector.broadcast %43 : vector<1x32xf32> to vector<8x32xf32>
    %527 = arith.addf %525, %526 : vector<8x32xf32>
    %cst_228 = arith.constant dense<0.000000e+00> : vector<8x32xf32>
    %528 = tpu.matmul %432, %27, %cst_228 {dimension_numbers = #tpu.dot_dimension_numbers<[1], [0], [0], [1], [0, 0, 1, 1], [], []>} : vector<8x32xf32>, vector<32x32xf32>, vector<8x32xf32> -> vector<8x32xf32>
    %529 = vector.broadcast %45 : vector<1x32xf32> to vector<8x32xf32>
    %530 = arith.addf %528, %529 : vector<8x32xf32>
    %cst_229 = arith.constant dense<0.000000e+00> : vector<8x32xf32>
    %531 = tpu.matmul %432, %29, %cst_229 {dimension_numbers = #tpu.dot_dimension_numbers<[1], [0], [0], [1], [0, 0, 1, 1], [], []>} : vector<8x32xf32>, vector<32x32xf32>, vector<8x32xf32> -> vector<8x32xf32>
    %532 = vector.broadcast %47 : vector<1x32xf32> to vector<8x32xf32>
    %533 = arith.addf %531, %532 : vector<8x32xf32>
    %534 = arith.addf %518, %527 : vector<8x32xf32>
    %535 = arith.negf %534 : vector<8x32xf32>
    %536 = math.exp %535 : vector<8x32xf32>
    %cst_230 = arith.constant 1.000000e+00 : f32
    %537 = vector.broadcast %cst_230 : f32 to vector<8x32xf32>
    %538 = arith.addf %537, %536 : vector<8x32xf32>
    %539 = arith.divf %537, %538 : vector<8x32xf32>
    %540 = arith.addf %521, %530 : vector<8x32xf32>
    %541 = arith.negf %540 : vector<8x32xf32>
    %542 = math.exp %541 : vector<8x32xf32>
    %cst_231 = arith.constant 1.000000e+00 : f32
    %543 = vector.broadcast %cst_231 : f32 to vector<8x32xf32>
    %544 = arith.addf %543, %542 : vector<8x32xf32>
    %545 = arith.divf %543, %544 : vector<8x32xf32>
    %546 = arith.mulf %539, %533 : vector<8x32xf32>
    %547 = arith.addf %524, %546 : vector<8x32xf32>
    %548 = math.tanh %547 : vector<8x32xf32>
    %cst_232 = arith.constant 1.000000e+00 : f32
    %549 = vector.broadcast %cst_232 : f32 to vector<8x32xf32>
    %550 = arith.subf %549, %545 : vector<8x32xf32>
    %551 = arith.mulf %550, %548 : vector<8x32xf32>
    %552 = arith.mulf %545, %432 : vector<8x32xf32>
    %553 = arith.addf %551, %552 : vector<8x32xf32>
    %cst_233 = arith.constant dense<0.000000e+00> : vector<8x32xf32>
    %554 = tpu.matmul %553, %72, %cst_233 {dimension_numbers = #tpu.dot_dimension_numbers<[1], [0], [0], [1], [0, 0, 1, 1], [], []>} : vector<8x32xf32>, vector<32x32xf32>, vector<8x32xf32> -> vector<8x32xf32>
    %555 = vector.broadcast %73 : vector<1x32xf32> to vector<8x32xf32>
    %556 = arith.addf %554, %555 : vector<8x32xf32>
    %cst_234 = arith.constant 0.000000e+00 : f32
    %557 = vector.broadcast %cst_234 : f32 to vector<8x32xf32>
    %558 = arith.maximumf %556, %557 : vector<8x32xf32>
    %cst_235 = arith.constant dense<0.000000e+00> : vector<8x8xf32>
    %559 = tpu.matmul %558, %74, %cst_235 {dimension_numbers = #tpu.dot_dimension_numbers<[1], [0], [0], [1], [0, 0, 1, 1], [], []>} : vector<8x32xf32>, vector<32x8xf32>, vector<8x8xf32> -> vector<8x8xf32>
    %560 = vector.broadcast %75 : vector<1x8xf32> to vector<8x8xf32>
    %561 = arith.addf %559, %560 : vector<8x8xf32>
    %562 = math.tanh %561 : vector<8x8xf32>
    %c0_236 = arith.constant 0 : index
    %c24 = arith.constant 24 : index
    %563 = vector.load %arg12[%c0_236, %c24] : memref<8x64xf32, #tpu.memory_space<vmem>>, vector<8x8xf32>
    tpu.vector_store %arg12[%c0_236, %c24], %562 {strides = array<i32>} : memref<8x64xf32, #tpu.memory_space<vmem>>, vector<8x8xf32>,
    %cst_237 = arith.constant dense<0.000000e+00> : vector<8x32xf32>
    %564 = tpu.matmul %562, %1, %cst_237 {dimension_numbers = #tpu.dot_dimension_numbers<[1], [0], [0], [1], [0, 0, 1, 1], [], []>} : vector<8x8xf32>, vector<8x32xf32>, vector<8x32xf32> -> vector<8x32xf32>
    %565 = arith.addf %564, %7 : vector<8x32xf32>
    %cst_238 = arith.constant dense<0.000000e+00> : vector<8x32xf32>
    %566 = tpu.matmul %562, %3, %cst_238 {dimension_numbers = #tpu.dot_dimension_numbers<[1], [0], [0], [1], [0, 0, 1, 1], [], []>} : vector<8x8xf32>, vector<8x32xf32>, vector<8x32xf32> -> vector<8x32xf32>
    %567 = arith.addf %566, %9 : vector<8x32xf32>
    %cst_239 = arith.constant dense<0.000000e+00> : vector<8x32xf32>
    %568 = tpu.matmul %562, %5, %cst_239 {dimension_numbers = #tpu.dot_dimension_numbers<[1], [0], [0], [1], [0, 0, 1, 1], [], []>} : vector<8x8xf32>, vector<8x32xf32>, vector<8x32xf32> -> vector<8x32xf32>
    %569 = arith.addf %568, %11 : vector<8x32xf32>
    %cst_240 = arith.constant dense<0.000000e+00> : vector<8x32xf32>
    %570 = tpu.matmul %477, %13, %cst_240 {dimension_numbers = #tpu.dot_dimension_numbers<[1], [0], [0], [1], [0, 0, 1, 1], [], []>} : vector<8x32xf32>, vector<32x32xf32>, vector<8x32xf32> -> vector<8x32xf32>
    %571 = vector.broadcast %31 : vector<1x32xf32> to vector<8x32xf32>
    %572 = arith.addf %570, %571 : vector<8x32xf32>
    %cst_241 = arith.constant dense<0.000000e+00> : vector<8x32xf32>
    %573 = tpu.matmul %477, %15, %cst_241 {dimension_numbers = #tpu.dot_dimension_numbers<[1], [0], [0], [1], [0, 0, 1, 1], [], []>} : vector<8x32xf32>, vector<32x32xf32>, vector<8x32xf32> -> vector<8x32xf32>
    %574 = vector.broadcast %33 : vector<1x32xf32> to vector<8x32xf32>
    %575 = arith.addf %573, %574 : vector<8x32xf32>
    %cst_242 = arith.constant dense<0.000000e+00> : vector<8x32xf32>
    %576 = tpu.matmul %477, %17, %cst_242 {dimension_numbers = #tpu.dot_dimension_numbers<[1], [0], [0], [1], [0, 0, 1, 1], [], []>} : vector<8x32xf32>, vector<32x32xf32>, vector<8x32xf32> -> vector<8x32xf32>
    %577 = vector.broadcast %35 : vector<1x32xf32> to vector<8x32xf32>
    %578 = arith.addf %576, %577 : vector<8x32xf32>
    %579 = arith.addf %565, %572 : vector<8x32xf32>
    %580 = arith.negf %579 : vector<8x32xf32>
    %581 = math.exp %580 : vector<8x32xf32>
    %cst_243 = arith.constant 1.000000e+00 : f32
    %582 = vector.broadcast %cst_243 : f32 to vector<8x32xf32>
    %583 = arith.addf %582, %581 : vector<8x32xf32>
    %584 = arith.divf %582, %583 : vector<8x32xf32>
    %585 = arith.addf %567, %575 : vector<8x32xf32>
    %586 = arith.negf %585 : vector<8x32xf32>
    %587 = math.exp %586 : vector<8x32xf32>
    %cst_244 = arith.constant 1.000000e+00 : f32
    %588 = vector.broadcast %cst_244 : f32 to vector<8x32xf32>
    %589 = arith.addf %588, %587 : vector<8x32xf32>
    %590 = arith.divf %588, %589 : vector<8x32xf32>
    %591 = arith.mulf %584, %578 : vector<8x32xf32>
    %592 = arith.addf %569, %591 : vector<8x32xf32>
    %593 = math.tanh %592 : vector<8x32xf32>
    %cst_245 = arith.constant 1.000000e+00 : f32
    %594 = vector.broadcast %cst_245 : f32 to vector<8x32xf32>
    %595 = arith.subf %594, %590 : vector<8x32xf32>
    %596 = arith.mulf %595, %593 : vector<8x32xf32>
    %597 = arith.mulf %590, %477 : vector<8x32xf32>
    %598 = arith.addf %596, %597 : vector<8x32xf32>
    %cst_246 = arith.constant dense<0.000000e+00> : vector<8x32xf32>
    %599 = tpu.matmul %598, %49, %cst_246 {dimension_numbers = #tpu.dot_dimension_numbers<[1], [0], [0], [1], [0, 0, 1, 1], [], []>} : vector<8x32xf32>, vector<32x32xf32>, vector<8x32xf32> -> vector<8x32xf32>
    %600 = vector.broadcast %61 : vector<1x32xf32> to vector<8x32xf32>
    %601 = arith.addf %599, %600 : vector<8x32xf32>
    %cst_247 = arith.constant dense<0.000000e+00> : vector<8x32xf32>
    %602 = tpu.matmul %598, %51, %cst_247 {dimension_numbers = #tpu.dot_dimension_numbers<[1], [0], [0], [1], [0, 0, 1, 1], [], []>} : vector<8x32xf32>, vector<32x32xf32>, vector<8x32xf32> -> vector<8x32xf32>
    %603 = vector.broadcast %63 : vector<1x32xf32> to vector<8x32xf32>
    %604 = arith.addf %602, %603 : vector<8x32xf32>
    %cst_248 = arith.constant dense<0.000000e+00> : vector<8x32xf32>
    %605 = tpu.matmul %598, %53, %cst_248 {dimension_numbers = #tpu.dot_dimension_numbers<[1], [0], [0], [1], [0, 0, 1, 1], [], []>} : vector<8x32xf32>, vector<32x32xf32>, vector<8x32xf32> -> vector<8x32xf32>
    %606 = vector.broadcast %65 : vector<1x32xf32> to vector<8x32xf32>
    %607 = arith.addf %605, %606 : vector<8x32xf32>
    %cst_249 = arith.constant dense<0.000000e+00> : vector<8x32xf32>
    %608 = tpu.matmul %515, %19, %cst_249 {dimension_numbers = #tpu.dot_dimension_numbers<[1], [0], [0], [1], [0, 0, 1, 1], [], []>} : vector<8x32xf32>, vector<32x32xf32>, vector<8x32xf32> -> vector<8x32xf32>
    %609 = vector.broadcast %37 : vector<1x32xf32> to vector<8x32xf32>
    %610 = arith.addf %608, %609 : vector<8x32xf32>
    %cst_250 = arith.constant dense<0.000000e+00> : vector<8x32xf32>
    %611 = tpu.matmul %515, %21, %cst_250 {dimension_numbers = #tpu.dot_dimension_numbers<[1], [0], [0], [1], [0, 0, 1, 1], [], []>} : vector<8x32xf32>, vector<32x32xf32>, vector<8x32xf32> -> vector<8x32xf32>
    %612 = vector.broadcast %39 : vector<1x32xf32> to vector<8x32xf32>
    %613 = arith.addf %611, %612 : vector<8x32xf32>
    %cst_251 = arith.constant dense<0.000000e+00> : vector<8x32xf32>
    %614 = tpu.matmul %515, %23, %cst_251 {dimension_numbers = #tpu.dot_dimension_numbers<[1], [0], [0], [1], [0, 0, 1, 1], [], []>} : vector<8x32xf32>, vector<32x32xf32>, vector<8x32xf32> -> vector<8x32xf32>
    %615 = vector.broadcast %41 : vector<1x32xf32> to vector<8x32xf32>
    %616 = arith.addf %614, %615 : vector<8x32xf32>
    %617 = arith.addf %601, %610 : vector<8x32xf32>
    %618 = arith.negf %617 : vector<8x32xf32>
    %619 = math.exp %618 : vector<8x32xf32>
    %cst_252 = arith.constant 1.000000e+00 : f32
    %620 = vector.broadcast %cst_252 : f32 to vector<8x32xf32>
    %621 = arith.addf %620, %619 : vector<8x32xf32>
    %622 = arith.divf %620, %621 : vector<8x32xf32>
    %623 = arith.addf %604, %613 : vector<8x32xf32>
    %624 = arith.negf %623 : vector<8x32xf32>
    %625 = math.exp %624 : vector<8x32xf32>
    %cst_253 = arith.constant 1.000000e+00 : f32
    %626 = vector.broadcast %cst_253 : f32 to vector<8x32xf32>
    %627 = arith.addf %626, %625 : vector<8x32xf32>
    %628 = arith.divf %626, %627 : vector<8x32xf32>
    %629 = arith.mulf %622, %616 : vector<8x32xf32>
    %630 = arith.addf %607, %629 : vector<8x32xf32>
    %631 = math.tanh %630 : vector<8x32xf32>
    %cst_254 = arith.constant 1.000000e+00 : f32
    %632 = vector.broadcast %cst_254 : f32 to vector<8x32xf32>
    %633 = arith.subf %632, %628 : vector<8x32xf32>
    %634 = arith.mulf %633, %631 : vector<8x32xf32>
    %635 = arith.mulf %628, %515 : vector<8x32xf32>
    %636 = arith.addf %634, %635 : vector<8x32xf32>
    %cst_255 = arith.constant dense<0.000000e+00> : vector<8x32xf32>
    %637 = tpu.matmul %636, %55, %cst_255 {dimension_numbers = #tpu.dot_dimension_numbers<[1], [0], [0], [1], [0, 0, 1, 1], [], []>} : vector<8x32xf32>, vector<32x32xf32>, vector<8x32xf32> -> vector<8x32xf32>
    %638 = vector.broadcast %67 : vector<1x32xf32> to vector<8x32xf32>
    %639 = arith.addf %637, %638 : vector<8x32xf32>
    %cst_256 = arith.constant dense<0.000000e+00> : vector<8x32xf32>
    %640 = tpu.matmul %636, %57, %cst_256 {dimension_numbers = #tpu.dot_dimension_numbers<[1], [0], [0], [1], [0, 0, 1, 1], [], []>} : vector<8x32xf32>, vector<32x32xf32>, vector<8x32xf32> -> vector<8x32xf32>
    %641 = vector.broadcast %69 : vector<1x32xf32> to vector<8x32xf32>
    %642 = arith.addf %640, %641 : vector<8x32xf32>
    %cst_257 = arith.constant dense<0.000000e+00> : vector<8x32xf32>
    %643 = tpu.matmul %636, %59, %cst_257 {dimension_numbers = #tpu.dot_dimension_numbers<[1], [0], [0], [1], [0, 0, 1, 1], [], []>} : vector<8x32xf32>, vector<32x32xf32>, vector<8x32xf32> -> vector<8x32xf32>
    %644 = vector.broadcast %71 : vector<1x32xf32> to vector<8x32xf32>
    %645 = arith.addf %643, %644 : vector<8x32xf32>
    %cst_258 = arith.constant dense<0.000000e+00> : vector<8x32xf32>
    %646 = tpu.matmul %553, %25, %cst_258 {dimension_numbers = #tpu.dot_dimension_numbers<[1], [0], [0], [1], [0, 0, 1, 1], [], []>} : vector<8x32xf32>, vector<32x32xf32>, vector<8x32xf32> -> vector<8x32xf32>
    %647 = vector.broadcast %43 : vector<1x32xf32> to vector<8x32xf32>
    %648 = arith.addf %646, %647 : vector<8x32xf32>
    %cst_259 = arith.constant dense<0.000000e+00> : vector<8x32xf32>
    %649 = tpu.matmul %553, %27, %cst_259 {dimension_numbers = #tpu.dot_dimension_numbers<[1], [0], [0], [1], [0, 0, 1, 1], [], []>} : vector<8x32xf32>, vector<32x32xf32>, vector<8x32xf32> -> vector<8x32xf32>
    %650 = vector.broadcast %45 : vector<1x32xf32> to vector<8x32xf32>
    %651 = arith.addf %649, %650 : vector<8x32xf32>
    %cst_260 = arith.constant dense<0.000000e+00> : vector<8x32xf32>
    %652 = tpu.matmul %553, %29, %cst_260 {dimension_numbers = #tpu.dot_dimension_numbers<[1], [0], [0], [1], [0, 0, 1, 1], [], []>} : vector<8x32xf32>, vector<32x32xf32>, vector<8x32xf32> -> vector<8x32xf32>
    %653 = vector.broadcast %47 : vector<1x32xf32> to vector<8x32xf32>
    %654 = arith.addf %652, %653 : vector<8x32xf32>
    %655 = arith.addf %639, %648 : vector<8x32xf32>
    %656 = arith.negf %655 : vector<8x32xf32>
    %657 = math.exp %656 : vector<8x32xf32>
    %cst_261 = arith.constant 1.000000e+00 : f32
    %658 = vector.broadcast %cst_261 : f32 to vector<8x32xf32>
    %659 = arith.addf %658, %657 : vector<8x32xf32>
    %660 = arith.divf %658, %659 : vector<8x32xf32>
    %661 = arith.addf %642, %651 : vector<8x32xf32>
    %662 = arith.negf %661 : vector<8x32xf32>
    %663 = math.exp %662 : vector<8x32xf32>
    %cst_262 = arith.constant 1.000000e+00 : f32
    %664 = vector.broadcast %cst_262 : f32 to vector<8x32xf32>
    %665 = arith.addf %664, %663 : vector<8x32xf32>
    %666 = arith.divf %664, %665 : vector<8x32xf32>
    %667 = arith.mulf %660, %654 : vector<8x32xf32>
    %668 = arith.addf %645, %667 : vector<8x32xf32>
    %669 = math.tanh %668 : vector<8x32xf32>
    %cst_263 = arith.constant 1.000000e+00 : f32
    %670 = vector.broadcast %cst_263 : f32 to vector<8x32xf32>
    %671 = arith.subf %670, %666 : vector<8x32xf32>
    %672 = arith.mulf %671, %669 : vector<8x32xf32>
    %673 = arith.mulf %666, %553 : vector<8x32xf32>
    %674 = arith.addf %672, %673 : vector<8x32xf32>
    %cst_264 = arith.constant dense<0.000000e+00> : vector<8x32xf32>
    %675 = tpu.matmul %674, %72, %cst_264 {dimension_numbers = #tpu.dot_dimension_numbers<[1], [0], [0], [1], [0, 0, 1, 1], [], []>} : vector<8x32xf32>, vector<32x32xf32>, vector<8x32xf32> -> vector<8x32xf32>
    %676 = vector.broadcast %73 : vector<1x32xf32> to vector<8x32xf32>
    %677 = arith.addf %675, %676 : vector<8x32xf32>
    %cst_265 = arith.constant 0.000000e+00 : f32
    %678 = vector.broadcast %cst_265 : f32 to vector<8x32xf32>
    %679 = arith.maximumf %677, %678 : vector<8x32xf32>
    %cst_266 = arith.constant dense<0.000000e+00> : vector<8x8xf32>
    %680 = tpu.matmul %679, %74, %cst_266 {dimension_numbers = #tpu.dot_dimension_numbers<[1], [0], [0], [1], [0, 0, 1, 1], [], []>} : vector<8x32xf32>, vector<32x8xf32>, vector<8x8xf32> -> vector<8x8xf32>
    %681 = vector.broadcast %75 : vector<1x8xf32> to vector<8x8xf32>
    %682 = arith.addf %680, %681 : vector<8x8xf32>
    %683 = math.tanh %682 : vector<8x8xf32>
    %c0_267 = arith.constant 0 : index
    %c32 = arith.constant 32 : index
    %684 = vector.load %arg12[%c0_267, %c32] : memref<8x64xf32, #tpu.memory_space<vmem>>, vector<8x8xf32>
    tpu.vector_store %arg12[%c0_267, %c32], %683 {strides = array<i32>} : memref<8x64xf32, #tpu.memory_space<vmem>>, vector<8x8xf32>,
    %cst_268 = arith.constant dense<0.000000e+00> : vector<8x32xf32>
    %685 = tpu.matmul %683, %1, %cst_268 {dimension_numbers = #tpu.dot_dimension_numbers<[1], [0], [0], [1], [0, 0, 1, 1], [], []>} : vector<8x8xf32>, vector<8x32xf32>, vector<8x32xf32> -> vector<8x32xf32>
    %686 = arith.addf %685, %7 : vector<8x32xf32>
    %cst_269 = arith.constant dense<0.000000e+00> : vector<8x32xf32>
    %687 = tpu.matmul %683, %3, %cst_269 {dimension_numbers = #tpu.dot_dimension_numbers<[1], [0], [0], [1], [0, 0, 1, 1], [], []>} : vector<8x8xf32>, vector<8x32xf32>, vector<8x32xf32> -> vector<8x32xf32>
    %688 = arith.addf %687, %9 : vector<8x32xf32>
    %cst_270 = arith.constant dense<0.000000e+00> : vector<8x32xf32>
    %689 = tpu.matmul %683, %5, %cst_270 {dimension_numbers = #tpu.dot_dimension_numbers<[1], [0], [0], [1], [0, 0, 1, 1], [], []>} : vector<8x8xf32>, vector<8x32xf32>, vector<8x32xf32> -> vector<8x32xf32>
    %690 = arith.addf %689, %11 : vector<8x32xf32>
    %cst_271 = arith.constant dense<0.000000e+00> : vector<8x32xf32>
    %691 = tpu.matmul %598, %13, %cst_271 {dimension_numbers = #tpu.dot_dimension_numbers<[1], [0], [0], [1], [0, 0, 1, 1], [], []>} : vector<8x32xf32>, vector<32x32xf32>, vector<8x32xf32> -> vector<8x32xf32>
    %692 = vector.broadcast %31 : vector<1x32xf32> to vector<8x32xf32>
    %693 = arith.addf %691, %692 : vector<8x32xf32>
    %cst_272 = arith.constant dense<0.000000e+00> : vector<8x32xf32>
    %694 = tpu.matmul %598, %15, %cst_272 {dimension_numbers = #tpu.dot_dimension_numbers<[1], [0], [0], [1], [0, 0, 1, 1], [], []>} : vector<8x32xf32>, vector<32x32xf32>, vector<8x32xf32> -> vector<8x32xf32>
    %695 = vector.broadcast %33 : vector<1x32xf32> to vector<8x32xf32>
    %696 = arith.addf %694, %695 : vector<8x32xf32>
    %cst_273 = arith.constant dense<0.000000e+00> : vector<8x32xf32>
    %697 = tpu.matmul %598, %17, %cst_273 {dimension_numbers = #tpu.dot_dimension_numbers<[1], [0], [0], [1], [0, 0, 1, 1], [], []>} : vector<8x32xf32>, vector<32x32xf32>, vector<8x32xf32> -> vector<8x32xf32>
    %698 = vector.broadcast %35 : vector<1x32xf32> to vector<8x32xf32>
    %699 = arith.addf %697, %698 : vector<8x32xf32>
    %700 = arith.addf %686, %693 : vector<8x32xf32>
    %701 = arith.negf %700 : vector<8x32xf32>
    %702 = math.exp %701 : vector<8x32xf32>
    %cst_274 = arith.constant 1.000000e+00 : f32
    %703 = vector.broadcast %cst_274 : f32 to vector<8x32xf32>
    %704 = arith.addf %703, %702 : vector<8x32xf32>
    %705 = arith.divf %703, %704 : vector<8x32xf32>
    %706 = arith.addf %688, %696 : vector<8x32xf32>
    %707 = arith.negf %706 : vector<8x32xf32>
    %708 = math.exp %707 : vector<8x32xf32>
    %cst_275 = arith.constant 1.000000e+00 : f32
    %709 = vector.broadcast %cst_275 : f32 to vector<8x32xf32>
    %710 = arith.addf %709, %708 : vector<8x32xf32>
    %711 = arith.divf %709, %710 : vector<8x32xf32>
    %712 = arith.mulf %705, %699 : vector<8x32xf32>
    %713 = arith.addf %690, %712 : vector<8x32xf32>
    %714 = math.tanh %713 : vector<8x32xf32>
    %cst_276 = arith.constant 1.000000e+00 : f32
    %715 = vector.broadcast %cst_276 : f32 to vector<8x32xf32>
    %716 = arith.subf %715, %711 : vector<8x32xf32>
    %717 = arith.mulf %716, %714 : vector<8x32xf32>
    %718 = arith.mulf %711, %598 : vector<8x32xf32>
    %719 = arith.addf %717, %718 : vector<8x32xf32>
    %cst_277 = arith.constant dense<0.000000e+00> : vector<8x32xf32>
    %720 = tpu.matmul %719, %49, %cst_277 {dimension_numbers = #tpu.dot_dimension_numbers<[1], [0], [0], [1], [0, 0, 1, 1], [], []>} : vector<8x32xf32>, vector<32x32xf32>, vector<8x32xf32> -> vector<8x32xf32>
    %721 = vector.broadcast %61 : vector<1x32xf32> to vector<8x32xf32>
    %722 = arith.addf %720, %721 : vector<8x32xf32>
    %cst_278 = arith.constant dense<0.000000e+00> : vector<8x32xf32>
    %723 = tpu.matmul %719, %51, %cst_278 {dimension_numbers = #tpu.dot_dimension_numbers<[1], [0], [0], [1], [0, 0, 1, 1], [], []>} : vector<8x32xf32>, vector<32x32xf32>, vector<8x32xf32> -> vector<8x32xf32>
    %724 = vector.broadcast %63 : vector<1x32xf32> to vector<8x32xf32>
    %725 = arith.addf %723, %724 : vector<8x32xf32>
    %cst_279 = arith.constant dense<0.000000e+00> : vector<8x32xf32>
    %726 = tpu.matmul %719, %53, %cst_279 {dimension_numbers = #tpu.dot_dimension_numbers<[1], [0], [0], [1], [0, 0, 1, 1], [], []>} : vector<8x32xf32>, vector<32x32xf32>, vector<8x32xf32> -> vector<8x32xf32>
    %727 = vector.broadcast %65 : vector<1x32xf32> to vector<8x32xf32>
    %728 = arith.addf %726, %727 : vector<8x32xf32>
    %cst_280 = arith.constant dense<0.000000e+00> : vector<8x32xf32>
    %729 = tpu.matmul %636, %19, %cst_280 {dimension_numbers = #tpu.dot_dimension_numbers<[1], [0], [0], [1], [0, 0, 1, 1], [], []>} : vector<8x32xf32>, vector<32x32xf32>, vector<8x32xf32> -> vector<8x32xf32>
    %730 = vector.broadcast %37 : vector<1x32xf32> to vector<8x32xf32>
    %731 = arith.addf %729, %730 : vector<8x32xf32>
    %cst_281 = arith.constant dense<0.000000e+00> : vector<8x32xf32>
    %732 = tpu.matmul %636, %21, %cst_281 {dimension_numbers = #tpu.dot_dimension_numbers<[1], [0], [0], [1], [0, 0, 1, 1], [], []>} : vector<8x32xf32>, vector<32x32xf32>, vector<8x32xf32> -> vector<8x32xf32>
    %733 = vector.broadcast %39 : vector<1x32xf32> to vector<8x32xf32>
    %734 = arith.addf %732, %733 : vector<8x32xf32>
    %cst_282 = arith.constant dense<0.000000e+00> : vector<8x32xf32>
    %735 = tpu.matmul %636, %23, %cst_282 {dimension_numbers = #tpu.dot_dimension_numbers<[1], [0], [0], [1], [0, 0, 1, 1], [], []>} : vector<8x32xf32>, vector<32x32xf32>, vector<8x32xf32> -> vector<8x32xf32>
    %736 = vector.broadcast %41 : vector<1x32xf32> to vector<8x32xf32>
    %737 = arith.addf %735, %736 : vector<8x32xf32>
    %738 = arith.addf %722, %731 : vector<8x32xf32>
    %739 = arith.negf %738 : vector<8x32xf32>
    %740 = math.exp %739 : vector<8x32xf32>
    %cst_283 = arith.constant 1.000000e+00 : f32
    %741 = vector.broadcast %cst_283 : f32 to vector<8x32xf32>
    %742 = arith.addf %741, %740 : vector<8x32xf32>
    %743 = arith.divf %741, %742 : vector<8x32xf32>
    %744 = arith.addf %725, %734 : vector<8x32xf32>
    %745 = arith.negf %744 : vector<8x32xf32>
    %746 = math.exp %745 : vector<8x32xf32>
    %cst_284 = arith.constant 1.000000e+00 : f32
    %747 = vector.broadcast %cst_284 : f32 to vector<8x32xf32>
    %748 = arith.addf %747, %746 : vector<8x32xf32>
    %749 = arith.divf %747, %748 : vector<8x32xf32>
    %750 = arith.mulf %743, %737 : vector<8x32xf32>
    %751 = arith.addf %728, %750 : vector<8x32xf32>
    %752 = math.tanh %751 : vector<8x32xf32>
    %cst_285 = arith.constant 1.000000e+00 : f32
    %753 = vector.broadcast %cst_285 : f32 to vector<8x32xf32>
    %754 = arith.subf %753, %749 : vector<8x32xf32>
    %755 = arith.mulf %754, %752 : vector<8x32xf32>
    %756 = arith.mulf %749, %636 : vector<8x32xf32>
    %757 = arith.addf %755, %756 : vector<8x32xf32>
    %cst_286 = arith.constant dense<0.000000e+00> : vector<8x32xf32>
    %758 = tpu.matmul %757, %55, %cst_286 {dimension_numbers = #tpu.dot_dimension_numbers<[1], [0], [0], [1], [0, 0, 1, 1], [], []>} : vector<8x32xf32>, vector<32x32xf32>, vector<8x32xf32> -> vector<8x32xf32>
    %759 = vector.broadcast %67 : vector<1x32xf32> to vector<8x32xf32>
    %760 = arith.addf %758, %759 : vector<8x32xf32>
    %cst_287 = arith.constant dense<0.000000e+00> : vector<8x32xf32>
    %761 = tpu.matmul %757, %57, %cst_287 {dimension_numbers = #tpu.dot_dimension_numbers<[1], [0], [0], [1], [0, 0, 1, 1], [], []>} : vector<8x32xf32>, vector<32x32xf32>, vector<8x32xf32> -> vector<8x32xf32>
    %762 = vector.broadcast %69 : vector<1x32xf32> to vector<8x32xf32>
    %763 = arith.addf %761, %762 : vector<8x32xf32>
    %cst_288 = arith.constant dense<0.000000e+00> : vector<8x32xf32>
    %764 = tpu.matmul %757, %59, %cst_288 {dimension_numbers = #tpu.dot_dimension_numbers<[1], [0], [0], [1], [0, 0, 1, 1], [], []>} : vector<8x32xf32>, vector<32x32xf32>, vector<8x32xf32> -> vector<8x32xf32>
    %765 = vector.broadcast %71 : vector<1x32xf32> to vector<8x32xf32>
    %766 = arith.addf %764, %765 : vector<8x32xf32>
    %cst_289 = arith.constant dense<0.000000e+00> : vector<8x32xf32>
    %767 = tpu.matmul %674, %25, %cst_289 {dimension_numbers = #tpu.dot_dimension_numbers<[1], [0], [0], [1], [0, 0, 1, 1], [], []>} : vector<8x32xf32>, vector<32x32xf32>, vector<8x32xf32> -> vector<8x32xf32>
    %768 = vector.broadcast %43 : vector<1x32xf32> to vector<8x32xf32>
    %769 = arith.addf %767, %768 : vector<8x32xf32>
    %cst_290 = arith.constant dense<0.000000e+00> : vector<8x32xf32>
    %770 = tpu.matmul %674, %27, %cst_290 {dimension_numbers = #tpu.dot_dimension_numbers<[1], [0], [0], [1], [0, 0, 1, 1], [], []>} : vector<8x32xf32>, vector<32x32xf32>, vector<8x32xf32> -> vector<8x32xf32>
    %771 = vector.broadcast %45 : vector<1x32xf32> to vector<8x32xf32>
    %772 = arith.addf %770, %771 : vector<8x32xf32>
    %cst_291 = arith.constant dense<0.000000e+00> : vector<8x32xf32>
    %773 = tpu.matmul %674, %29, %cst_291 {dimension_numbers = #tpu.dot_dimension_numbers<[1], [0], [0], [1], [0, 0, 1, 1], [], []>} : vector<8x32xf32>, vector<32x32xf32>, vector<8x32xf32> -> vector<8x32xf32>
    %774 = vector.broadcast %47 : vector<1x32xf32> to vector<8x32xf32>
    %775 = arith.addf %773, %774 : vector<8x32xf32>
    %776 = arith.addf %760, %769 : vector<8x32xf32>
    %777 = arith.negf %776 : vector<8x32xf32>
    %778 = math.exp %777 : vector<8x32xf32>
    %cst_292 = arith.constant 1.000000e+00 : f32
    %779 = vector.broadcast %cst_292 : f32 to vector<8x32xf32>
    %780 = arith.addf %779, %778 : vector<8x32xf32>
    %781 = arith.divf %779, %780 : vector<8x32xf32>
    %782 = arith.addf %763, %772 : vector<8x32xf32>
    %783 = arith.negf %782 : vector<8x32xf32>
    %784 = math.exp %783 : vector<8x32xf32>
    %cst_293 = arith.constant 1.000000e+00 : f32
    %785 = vector.broadcast %cst_293 : f32 to vector<8x32xf32>
    %786 = arith.addf %785, %784 : vector<8x32xf32>
    %787 = arith.divf %785, %786 : vector<8x32xf32>
    %788 = arith.mulf %781, %775 : vector<8x32xf32>
    %789 = arith.addf %766, %788 : vector<8x32xf32>
    %790 = math.tanh %789 : vector<8x32xf32>
    %cst_294 = arith.constant 1.000000e+00 : f32
    %791 = vector.broadcast %cst_294 : f32 to vector<8x32xf32>
    %792 = arith.subf %791, %787 : vector<8x32xf32>
    %793 = arith.mulf %792, %790 : vector<8x32xf32>
    %794 = arith.mulf %787, %674 : vector<8x32xf32>
    %795 = arith.addf %793, %794 : vector<8x32xf32>
    %cst_295 = arith.constant dense<0.000000e+00> : vector<8x32xf32>
    %796 = tpu.matmul %795, %72, %cst_295 {dimension_numbers = #tpu.dot_dimension_numbers<[1], [0], [0], [1], [0, 0, 1, 1], [], []>} : vector<8x32xf32>, vector<32x32xf32>, vector<8x32xf32> -> vector<8x32xf32>
    %797 = vector.broadcast %73 : vector<1x32xf32> to vector<8x32xf32>
    %798 = arith.addf %796, %797 : vector<8x32xf32>
    %cst_296 = arith.constant 0.000000e+00 : f32
    %799 = vector.broadcast %cst_296 : f32 to vector<8x32xf32>
    %800 = arith.maximumf %798, %799 : vector<8x32xf32>
    %cst_297 = arith.constant dense<0.000000e+00> : vector<8x8xf32>
    %801 = tpu.matmul %800, %74, %cst_297 {dimension_numbers = #tpu.dot_dimension_numbers<[1], [0], [0], [1], [0, 0, 1, 1], [], []>} : vector<8x32xf32>, vector<32x8xf32>, vector<8x8xf32> -> vector<8x8xf32>
    %802 = vector.broadcast %75 : vector<1x8xf32> to vector<8x8xf32>
    %803 = arith.addf %801, %802 : vector<8x8xf32>
    %804 = math.tanh %803 : vector<8x8xf32>
    %c0_298 = arith.constant 0 : index
    %c40 = arith.constant 40 : index
    %805 = vector.load %arg12[%c0_298, %c40] : memref<8x64xf32, #tpu.memory_space<vmem>>, vector<8x8xf32>
    tpu.vector_store %arg12[%c0_298, %c40], %804 {strides = array<i32>} : memref<8x64xf32, #tpu.memory_space<vmem>>, vector<8x8xf32>,
    %cst_299 = arith.constant dense<0.000000e+00> : vector<8x32xf32>
    %806 = tpu.matmul %804, %1, %cst_299 {dimension_numbers = #tpu.dot_dimension_numbers<[1], [0], [0], [1], [0, 0, 1, 1], [], []>} : vector<8x8xf32>, vector<8x32xf32>, vector<8x32xf32> -> vector<8x32xf32>
    %807 = arith.addf %806, %7 : vector<8x32xf32>
    %cst_300 = arith.constant dense<0.000000e+00> : vector<8x32xf32>
    %808 = tpu.matmul %804, %3, %cst_300 {dimension_numbers = #tpu.dot_dimension_numbers<[1], [0], [0], [1], [0, 0, 1, 1], [], []>} : vector<8x8xf32>, vector<8x32xf32>, vector<8x32xf32> -> vector<8x32xf32>
    %809 = arith.addf %808, %9 : vector<8x32xf32>
    %cst_301 = arith.constant dense<0.000000e+00> : vector<8x32xf32>
    %810 = tpu.matmul %804, %5, %cst_301 {dimension_numbers = #tpu.dot_dimension_numbers<[1], [0], [0], [1], [0, 0, 1, 1], [], []>} : vector<8x8xf32>, vector<8x32xf32>, vector<8x32xf32> -> vector<8x32xf32>
    %811 = arith.addf %810, %11 : vector<8x32xf32>
    %cst_302 = arith.constant dense<0.000000e+00> : vector<8x32xf32>
    %812 = tpu.matmul %719, %13, %cst_302 {dimension_numbers = #tpu.dot_dimension_numbers<[1], [0], [0], [1], [0, 0, 1, 1], [], []>} : vector<8x32xf32>, vector<32x32xf32>, vector<8x32xf32> -> vector<8x32xf32>
    %813 = vector.broadcast %31 : vector<1x32xf32> to vector<8x32xf32>
    %814 = arith.addf %812, %813 : vector<8x32xf32>
    %cst_303 = arith.constant dense<0.000000e+00> : vector<8x32xf32>
    %815 = tpu.matmul %719, %15, %cst_303 {dimension_numbers = #tpu.dot_dimension_numbers<[1], [0], [0], [1], [0, 0, 1, 1], [], []>} : vector<8x32xf32>, vector<32x32xf32>, vector<8x32xf32> -> vector<8x32xf32>
    %816 = vector.broadcast %33 : vector<1x32xf32> to vector<8x32xf32>
    %817 = arith.addf %815, %816 : vector<8x32xf32>
    %cst_304 = arith.constant dense<0.000000e+00> : vector<8x32xf32>
    %818 = tpu.matmul %719, %17, %cst_304 {dimension_numbers = #tpu.dot_dimension_numbers<[1], [0], [0], [1], [0, 0, 1, 1], [], []>} : vector<8x32xf32>, vector<32x32xf32>, vector<8x32xf32> -> vector<8x32xf32>
    %819 = vector.broadcast %35 : vector<1x32xf32> to vector<8x32xf32>
    %820 = arith.addf %818, %819 : vector<8x32xf32>
    %821 = arith.addf %807, %814 : vector<8x32xf32>
    %822 = arith.negf %821 : vector<8x32xf32>
    %823 = math.exp %822 : vector<8x32xf32>
    %cst_305 = arith.constant 1.000000e+00 : f32
    %824 = vector.broadcast %cst_305 : f32 to vector<8x32xf32>
    %825 = arith.addf %824, %823 : vector<8x32xf32>
    %826 = arith.divf %824, %825 : vector<8x32xf32>
    %827 = arith.addf %809, %817 : vector<8x32xf32>
    %828 = arith.negf %827 : vector<8x32xf32>
    %829 = math.exp %828 : vector<8x32xf32>
    %cst_306 = arith.constant 1.000000e+00 : f32
    %830 = vector.broadcast %cst_306 : f32 to vector<8x32xf32>
    %831 = arith.addf %830, %829 : vector<8x32xf32>
    %832 = arith.divf %830, %831 : vector<8x32xf32>
    %833 = arith.mulf %826, %820 : vector<8x32xf32>
    %834 = arith.addf %811, %833 : vector<8x32xf32>
    %835 = math.tanh %834 : vector<8x32xf32>
    %cst_307 = arith.constant 1.000000e+00 : f32
    %836 = vector.broadcast %cst_307 : f32 to vector<8x32xf32>
    %837 = arith.subf %836, %832 : vector<8x32xf32>
    %838 = arith.mulf %837, %835 : vector<8x32xf32>
    %839 = arith.mulf %832, %719 : vector<8x32xf32>
    %840 = arith.addf %838, %839 : vector<8x32xf32>
    %cst_308 = arith.constant dense<0.000000e+00> : vector<8x32xf32>
    %841 = tpu.matmul %840, %49, %cst_308 {dimension_numbers = #tpu.dot_dimension_numbers<[1], [0], [0], [1], [0, 0, 1, 1], [], []>} : vector<8x32xf32>, vector<32x32xf32>, vector<8x32xf32> -> vector<8x32xf32>
    %842 = vector.broadcast %61 : vector<1x32xf32> to vector<8x32xf32>
    %843 = arith.addf %841, %842 : vector<8x32xf32>
    %cst_309 = arith.constant dense<0.000000e+00> : vector<8x32xf32>
    %844 = tpu.matmul %840, %51, %cst_309 {dimension_numbers = #tpu.dot_dimension_numbers<[1], [0], [0], [1], [0, 0, 1, 1], [], []>} : vector<8x32xf32>, vector<32x32xf32>, vector<8x32xf32> -> vector<8x32xf32>
    %845 = vector.broadcast %63 : vector<1x32xf32> to vector<8x32xf32>
    %846 = arith.addf %844, %845 : vector<8x32xf32>
    %cst_310 = arith.constant dense<0.000000e+00> : vector<8x32xf32>
    %847 = tpu.matmul %840, %53, %cst_310 {dimension_numbers = #tpu.dot_dimension_numbers<[1], [0], [0], [1], [0, 0, 1, 1], [], []>} : vector<8x32xf32>, vector<32x32xf32>, vector<8x32xf32> -> vector<8x32xf32>
    %848 = vector.broadcast %65 : vector<1x32xf32> to vector<8x32xf32>
    %849 = arith.addf %847, %848 : vector<8x32xf32>
    %cst_311 = arith.constant dense<0.000000e+00> : vector<8x32xf32>
    %850 = tpu.matmul %757, %19, %cst_311 {dimension_numbers = #tpu.dot_dimension_numbers<[1], [0], [0], [1], [0, 0, 1, 1], [], []>} : vector<8x32xf32>, vector<32x32xf32>, vector<8x32xf32> -> vector<8x32xf32>
    %851 = vector.broadcast %37 : vector<1x32xf32> to vector<8x32xf32>
    %852 = arith.addf %850, %851 : vector<8x32xf32>
    %cst_312 = arith.constant dense<0.000000e+00> : vector<8x32xf32>
    %853 = tpu.matmul %757, %21, %cst_312 {dimension_numbers = #tpu.dot_dimension_numbers<[1], [0], [0], [1], [0, 0, 1, 1], [], []>} : vector<8x32xf32>, vector<32x32xf32>, vector<8x32xf32> -> vector<8x32xf32>
    %854 = vector.broadcast %39 : vector<1x32xf32> to vector<8x32xf32>
    %855 = arith.addf %853, %854 : vector<8x32xf32>
    %cst_313 = arith.constant dense<0.000000e+00> : vector<8x32xf32>
    %856 = tpu.matmul %757, %23, %cst_313 {dimension_numbers = #tpu.dot_dimension_numbers<[1], [0], [0], [1], [0, 0, 1, 1], [], []>} : vector<8x32xf32>, vector<32x32xf32>, vector<8x32xf32> -> vector<8x32xf32>
    %857 = vector.broadcast %41 : vector<1x32xf32> to vector<8x32xf32>
    %858 = arith.addf %856, %857 : vector<8x32xf32>
    %859 = arith.addf %843, %852 : vector<8x32xf32>
    %860 = arith.negf %859 : vector<8x32xf32>
    %861 = math.exp %860 : vector<8x32xf32>
    %cst_314 = arith.constant 1.000000e+00 : f32
    %862 = vector.broadcast %cst_314 : f32 to vector<8x32xf32>
    %863 = arith.addf %862, %861 : vector<8x32xf32>
    %864 = arith.divf %862, %863 : vector<8x32xf32>
    %865 = arith.addf %846, %855 : vector<8x32xf32>
    %866 = arith.negf %865 : vector<8x32xf32>
    %867 = math.exp %866 : vector<8x32xf32>
    %cst_315 = arith.constant 1.000000e+00 : f32
    %868 = vector.broadcast %cst_315 : f32 to vector<8x32xf32>
    %869 = arith.addf %868, %867 : vector<8x32xf32>
    %870 = arith.divf %868, %869 : vector<8x32xf32>
    %871 = arith.mulf %864, %858 : vector<8x32xf32>
    %872 = arith.addf %849, %871 : vector<8x32xf32>
    %873 = math.tanh %872 : vector<8x32xf32>
    %cst_316 = arith.constant 1.000000e+00 : f32
    %874 = vector.broadcast %cst_316 : f32 to vector<8x32xf32>
    %875 = arith.subf %874, %870 : vector<8x32xf32>
    %876 = arith.mulf %875, %873 : vector<8x32xf32>
    %877 = arith.mulf %870, %757 : vector<8x32xf32>
    %878 = arith.addf %876, %877 : vector<8x32xf32>
    %cst_317 = arith.constant dense<0.000000e+00> : vector<8x32xf32>
    %879 = tpu.matmul %878, %55, %cst_317 {dimension_numbers = #tpu.dot_dimension_numbers<[1], [0], [0], [1], [0, 0, 1, 1], [], []>} : vector<8x32xf32>, vector<32x32xf32>, vector<8x32xf32> -> vector<8x32xf32>
    %880 = vector.broadcast %67 : vector<1x32xf32> to vector<8x32xf32>
    %881 = arith.addf %879, %880 : vector<8x32xf32>
    %cst_318 = arith.constant dense<0.000000e+00> : vector<8x32xf32>
    %882 = tpu.matmul %878, %57, %cst_318 {dimension_numbers = #tpu.dot_dimension_numbers<[1], [0], [0], [1], [0, 0, 1, 1], [], []>} : vector<8x32xf32>, vector<32x32xf32>, vector<8x32xf32> -> vector<8x32xf32>
    %883 = vector.broadcast %69 : vector<1x32xf32> to vector<8x32xf32>
    %884 = arith.addf %882, %883 : vector<8x32xf32>
    %cst_319 = arith.constant dense<0.000000e+00> : vector<8x32xf32>
    %885 = tpu.matmul %878, %59, %cst_319 {dimension_numbers = #tpu.dot_dimension_numbers<[1], [0], [0], [1], [0, 0, 1, 1], [], []>} : vector<8x32xf32>, vector<32x32xf32>, vector<8x32xf32> -> vector<8x32xf32>
    %886 = vector.broadcast %71 : vector<1x32xf32> to vector<8x32xf32>
    %887 = arith.addf %885, %886 : vector<8x32xf32>
    %cst_320 = arith.constant dense<0.000000e+00> : vector<8x32xf32>
    %888 = tpu.matmul %795, %25, %cst_320 {dimension_numbers = #tpu.dot_dimension_numbers<[1], [0], [0], [1], [0, 0, 1, 1], [], []>} : vector<8x32xf32>, vector<32x32xf32>, vector<8x32xf32> -> vector<8x32xf32>
    %889 = vector.broadcast %43 : vector<1x32xf32> to vector<8x32xf32>
    %890 = arith.addf %888, %889 : vector<8x32xf32>
    %cst_321 = arith.constant dense<0.000000e+00> : vector<8x32xf32>
    %891 = tpu.matmul %795, %27, %cst_321 {dimension_numbers = #tpu.dot_dimension_numbers<[1], [0], [0], [1], [0, 0, 1, 1], [], []>} : vector<8x32xf32>, vector<32x32xf32>, vector<8x32xf32> -> vector<8x32xf32>
    %892 = vector.broadcast %45 : vector<1x32xf32> to vector<8x32xf32>
    %893 = arith.addf %891, %892 : vector<8x32xf32>
    %cst_322 = arith.constant dense<0.000000e+00> : vector<8x32xf32>
    %894 = tpu.matmul %795, %29, %cst_322 {dimension_numbers = #tpu.dot_dimension_numbers<[1], [0], [0], [1], [0, 0, 1, 1], [], []>} : vector<8x32xf32>, vector<32x32xf32>, vector<8x32xf32> -> vector<8x32xf32>
    %895 = vector.broadcast %47 : vector<1x32xf32> to vector<8x32xf32>
    %896 = arith.addf %894, %895 : vector<8x32xf32>
    %897 = arith.addf %881, %890 : vector<8x32xf32>
    %898 = arith.negf %897 : vector<8x32xf32>
    %899 = math.exp %898 : vector<8x32xf32>
    %cst_323 = arith.constant 1.000000e+00 : f32
    %900 = vector.broadcast %cst_323 : f32 to vector<8x32xf32>
    %901 = arith.addf %900, %899 : vector<8x32xf32>
    %902 = arith.divf %900, %901 : vector<8x32xf32>
    %903 = arith.addf %884, %893 : vector<8x32xf32>
    %904 = arith.negf %903 : vector<8x32xf32>
    %905 = math.exp %904 : vector<8x32xf32>
    %cst_324 = arith.constant 1.000000e+00 : f32
    %906 = vector.broadcast %cst_324 : f32 to vector<8x32xf32>
    %907 = arith.addf %906, %905 : vector<8x32xf32>
    %908 = arith.divf %906, %907 : vector<8x32xf32>
    %909 = arith.mulf %902, %896 : vector<8x32xf32>
    %910 = arith.addf %887, %909 : vector<8x32xf32>
    %911 = math.tanh %910 : vector<8x32xf32>
    %cst_325 = arith.constant 1.000000e+00 : f32
    %912 = vector.broadcast %cst_325 : f32 to vector<8x32xf32>
    %913 = arith.subf %912, %908 : vector<8x32xf32>
    %914 = arith.mulf %913, %911 : vector<8x32xf32>
    %915 = arith.mulf %908, %795 : vector<8x32xf32>
    %916 = arith.addf %914, %915 : vector<8x32xf32>
    %cst_326 = arith.constant dense<0.000000e+00> : vector<8x32xf32>
    %917 = tpu.matmul %916, %72, %cst_326 {dimension_numbers = #tpu.dot_dimension_numbers<[1], [0], [0], [1], [0, 0, 1, 1], [], []>} : vector<8x32xf32>, vector<32x32xf32>, vector<8x32xf32> -> vector<8x32xf32>
    %918 = vector.broadcast %73 : vector<1x32xf32> to vector<8x32xf32>
    %919 = arith.addf %917, %918 : vector<8x32xf32>
    %cst_327 = arith.constant 0.000000e+00 : f32
    %920 = vector.broadcast %cst_327 : f32 to vector<8x32xf32>
    %921 = arith.maximumf %919, %920 : vector<8x32xf32>
    %cst_328 = arith.constant dense<0.000000e+00> : vector<8x8xf32>
    %922 = tpu.matmul %921, %74, %cst_328 {dimension_numbers = #tpu.dot_dimension_numbers<[1], [0], [0], [1], [0, 0, 1, 1], [], []>} : vector<8x32xf32>, vector<32x8xf32>, vector<8x8xf32> -> vector<8x8xf32>
    %923 = vector.broadcast %75 : vector<1x8xf32> to vector<8x8xf32>
    %924 = arith.addf %922, %923 : vector<8x8xf32>
    %925 = math.tanh %924 : vector<8x8xf32>
    %c0_329 = arith.constant 0 : index
    %c48 = arith.constant 48 : index
    %926 = vector.load %arg12[%c0_329, %c48] : memref<8x64xf32, #tpu.memory_space<vmem>>, vector<8x8xf32>
    tpu.vector_store %arg12[%c0_329, %c48], %925 {strides = array<i32>} : memref<8x64xf32, #tpu.memory_space<vmem>>, vector<8x8xf32>,
    %cst_330 = arith.constant dense<0.000000e+00> : vector<8x32xf32>
    %927 = tpu.matmul %925, %1, %cst_330 {dimension_numbers = #tpu.dot_dimension_numbers<[1], [0], [0], [1], [0, 0, 1, 1], [], []>} : vector<8x8xf32>, vector<8x32xf32>, vector<8x32xf32> -> vector<8x32xf32>
    %928 = arith.addf %927, %7 : vector<8x32xf32>
    %cst_331 = arith.constant dense<0.000000e+00> : vector<8x32xf32>
    %929 = tpu.matmul %925, %3, %cst_331 {dimension_numbers = #tpu.dot_dimension_numbers<[1], [0], [0], [1], [0, 0, 1, 1], [], []>} : vector<8x8xf32>, vector<8x32xf32>, vector<8x32xf32> -> vector<8x32xf32>
    %930 = arith.addf %929, %9 : vector<8x32xf32>
    %cst_332 = arith.constant dense<0.000000e+00> : vector<8x32xf32>
    %931 = tpu.matmul %925, %5, %cst_332 {dimension_numbers = #tpu.dot_dimension_numbers<[1], [0], [0], [1], [0, 0, 1, 1], [], []>} : vector<8x8xf32>, vector<8x32xf32>, vector<8x32xf32> -> vector<8x32xf32>
    %932 = arith.addf %931, %11 : vector<8x32xf32>
    %cst_333 = arith.constant dense<0.000000e+00> : vector<8x32xf32>
    %933 = tpu.matmul %840, %13, %cst_333 {dimension_numbers = #tpu.dot_dimension_numbers<[1], [0], [0], [1], [0, 0, 1, 1], [], []>} : vector<8x32xf32>, vector<32x32xf32>, vector<8x32xf32> -> vector<8x32xf32>
    %934 = vector.broadcast %31 : vector<1x32xf32> to vector<8x32xf32>
    %935 = arith.addf %933, %934 : vector<8x32xf32>
    %cst_334 = arith.constant dense<0.000000e+00> : vector<8x32xf32>
    %936 = tpu.matmul %840, %15, %cst_334 {dimension_numbers = #tpu.dot_dimension_numbers<[1], [0], [0], [1], [0, 0, 1, 1], [], []>} : vector<8x32xf32>, vector<32x32xf32>, vector<8x32xf32> -> vector<8x32xf32>
    %937 = vector.broadcast %33 : vector<1x32xf32> to vector<8x32xf32>
    %938 = arith.addf %936, %937 : vector<8x32xf32>
    %cst_335 = arith.constant dense<0.000000e+00> : vector<8x32xf32>
    %939 = tpu.matmul %840, %17, %cst_335 {dimension_numbers = #tpu.dot_dimension_numbers<[1], [0], [0], [1], [0, 0, 1, 1], [], []>} : vector<8x32xf32>, vector<32x32xf32>, vector<8x32xf32> -> vector<8x32xf32>
    %940 = vector.broadcast %35 : vector<1x32xf32> to vector<8x32xf32>
    %941 = arith.addf %939, %940 : vector<8x32xf32>
    %942 = arith.addf %928, %935 : vector<8x32xf32>
    %943 = arith.negf %942 : vector<8x32xf32>
    %944 = math.exp %943 : vector<8x32xf32>
    %cst_336 = arith.constant 1.000000e+00 : f32
    %945 = vector.broadcast %cst_336 : f32 to vector<8x32xf32>
    %946 = arith.addf %945, %944 : vector<8x32xf32>
    %947 = arith.divf %945, %946 : vector<8x32xf32>
    %948 = arith.addf %930, %938 : vector<8x32xf32>
    %949 = arith.negf %948 : vector<8x32xf32>
    %950 = math.exp %949 : vector<8x32xf32>
    %cst_337 = arith.constant 1.000000e+00 : f32
    %951 = vector.broadcast %cst_337 : f32 to vector<8x32xf32>
    %952 = arith.addf %951, %950 : vector<8x32xf32>
    %953 = arith.divf %951, %952 : vector<8x32xf32>
    %954 = arith.mulf %947, %941 : vector<8x32xf32>
    %955 = arith.addf %932, %954 : vector<8x32xf32>
    %956 = math.tanh %955 : vector<8x32xf32>
    %cst_338 = arith.constant 1.000000e+00 : f32
    %957 = vector.broadcast %cst_338 : f32 to vector<8x32xf32>
    %958 = arith.subf %957, %953 : vector<8x32xf32>
    %959 = arith.mulf %958, %956 : vector<8x32xf32>
    %960 = arith.mulf %953, %840 : vector<8x32xf32>
    %961 = arith.addf %959, %960 : vector<8x32xf32>
    %cst_339 = arith.constant dense<0.000000e+00> : vector<8x32xf32>
    %962 = tpu.matmul %961, %49, %cst_339 {dimension_numbers = #tpu.dot_dimension_numbers<[1], [0], [0], [1], [0, 0, 1, 1], [], []>} : vector<8x32xf32>, vector<32x32xf32>, vector<8x32xf32> -> vector<8x32xf32>
    %963 = vector.broadcast %61 : vector<1x32xf32> to vector<8x32xf32>
    %964 = arith.addf %962, %963 : vector<8x32xf32>
    %cst_340 = arith.constant dense<0.000000e+00> : vector<8x32xf32>
    %965 = tpu.matmul %961, %51, %cst_340 {dimension_numbers = #tpu.dot_dimension_numbers<[1], [0], [0], [1], [0, 0, 1, 1], [], []>} : vector<8x32xf32>, vector<32x32xf32>, vector<8x32xf32> -> vector<8x32xf32>
    %966 = vector.broadcast %63 : vector<1x32xf32> to vector<8x32xf32>
    %967 = arith.addf %965, %966 : vector<8x32xf32>
    %cst_341 = arith.constant dense<0.000000e+00> : vector<8x32xf32>
    %968 = tpu.matmul %961, %53, %cst_341 {dimension_numbers = #tpu.dot_dimension_numbers<[1], [0], [0], [1], [0, 0, 1, 1], [], []>} : vector<8x32xf32>, vector<32x32xf32>, vector<8x32xf32> -> vector<8x32xf32>
    %969 = vector.broadcast %65 : vector<1x32xf32> to vector<8x32xf32>
    %970 = arith.addf %968, %969 : vector<8x32xf32>
    %cst_342 = arith.constant dense<0.000000e+00> : vector<8x32xf32>
    %971 = tpu.matmul %878, %19, %cst_342 {dimension_numbers = #tpu.dot_dimension_numbers<[1], [0], [0], [1], [0, 0, 1, 1], [], []>} : vector<8x32xf32>, vector<32x32xf32>, vector<8x32xf32> -> vector<8x32xf32>
    %972 = vector.broadcast %37 : vector<1x32xf32> to vector<8x32xf32>
    %973 = arith.addf %971, %972 : vector<8x32xf32>
    %cst_343 = arith.constant dense<0.000000e+00> : vector<8x32xf32>
    %974 = tpu.matmul %878, %21, %cst_343 {dimension_numbers = #tpu.dot_dimension_numbers<[1], [0], [0], [1], [0, 0, 1, 1], [], []>} : vector<8x32xf32>, vector<32x32xf32>, vector<8x32xf32> -> vector<8x32xf32>
    %975 = vector.broadcast %39 : vector<1x32xf32> to vector<8x32xf32>
    %976 = arith.addf %974, %975 : vector<8x32xf32>
    %cst_344 = arith.constant dense<0.000000e+00> : vector<8x32xf32>
    %977 = tpu.matmul %878, %23, %cst_344 {dimension_numbers = #tpu.dot_dimension_numbers<[1], [0], [0], [1], [0, 0, 1, 1], [], []>} : vector<8x32xf32>, vector<32x32xf32>, vector<8x32xf32> -> vector<8x32xf32>
    %978 = vector.broadcast %41 : vector<1x32xf32> to vector<8x32xf32>
    %979 = arith.addf %977, %978 : vector<8x32xf32>
    %980 = arith.addf %964, %973 : vector<8x32xf32>
    %981 = arith.negf %980 : vector<8x32xf32>
    %982 = math.exp %981 : vector<8x32xf32>
    %cst_345 = arith.constant 1.000000e+00 : f32
    %983 = vector.broadcast %cst_345 : f32 to vector<8x32xf32>
    %984 = arith.addf %983, %982 : vector<8x32xf32>
    %985 = arith.divf %983, %984 : vector<8x32xf32>
    %986 = arith.addf %967, %976 : vector<8x32xf32>
    %987 = arith.negf %986 : vector<8x32xf32>
    %988 = math.exp %987 : vector<8x32xf32>
    %cst_346 = arith.constant 1.000000e+00 : f32
    %989 = vector.broadcast %cst_346 : f32 to vector<8x32xf32>
    %990 = arith.addf %989, %988 : vector<8x32xf32>
    %991 = arith.divf %989, %990 : vector<8x32xf32>
    %992 = arith.mulf %985, %979 : vector<8x32xf32>
    %993 = arith.addf %970, %992 : vector<8x32xf32>
    %994 = math.tanh %993 : vector<8x32xf32>
    %cst_347 = arith.constant 1.000000e+00 : f32
    %995 = vector.broadcast %cst_347 : f32 to vector<8x32xf32>
    %996 = arith.subf %995, %991 : vector<8x32xf32>
    %997 = arith.mulf %996, %994 : vector<8x32xf32>
    %998 = arith.mulf %991, %878 : vector<8x32xf32>
    %999 = arith.addf %997, %998 : vector<8x32xf32>
    %cst_348 = arith.constant dense<0.000000e+00> : vector<8x32xf32>
    %1000 = tpu.matmul %999, %55, %cst_348 {dimension_numbers = #tpu.dot_dimension_numbers<[1], [0], [0], [1], [0, 0, 1, 1], [], []>} : vector<8x32xf32>, vector<32x32xf32>, vector<8x32xf32> -> vector<8x32xf32>
    %1001 = vector.broadcast %67 : vector<1x32xf32> to vector<8x32xf32>
    %1002 = arith.addf %1000, %1001 : vector<8x32xf32>
    %cst_349 = arith.constant dense<0.000000e+00> : vector<8x32xf32>
    %1003 = tpu.matmul %999, %57, %cst_349 {dimension_numbers = #tpu.dot_dimension_numbers<[1], [0], [0], [1], [0, 0, 1, 1], [], []>} : vector<8x32xf32>, vector<32x32xf32>, vector<8x32xf32> -> vector<8x32xf32>
    %1004 = vector.broadcast %69 : vector<1x32xf32> to vector<8x32xf32>
    %1005 = arith.addf %1003, %1004 : vector<8x32xf32>
    %cst_350 = arith.constant dense<0.000000e+00> : vector<8x32xf32>
    %1006 = tpu.matmul %999, %59, %cst_350 {dimension_numbers = #tpu.dot_dimension_numbers<[1], [0], [0], [1], [0, 0, 1, 1], [], []>} : vector<8x32xf32>, vector<32x32xf32>, vector<8x32xf32> -> vector<8x32xf32>
    %1007 = vector.broadcast %71 : vector<1x32xf32> to vector<8x32xf32>
    %1008 = arith.addf %1006, %1007 : vector<8x32xf32>
    %cst_351 = arith.constant dense<0.000000e+00> : vector<8x32xf32>
    %1009 = tpu.matmul %916, %25, %cst_351 {dimension_numbers = #tpu.dot_dimension_numbers<[1], [0], [0], [1], [0, 0, 1, 1], [], []>} : vector<8x32xf32>, vector<32x32xf32>, vector<8x32xf32> -> vector<8x32xf32>
    %1010 = vector.broadcast %43 : vector<1x32xf32> to vector<8x32xf32>
    %1011 = arith.addf %1009, %1010 : vector<8x32xf32>
    %cst_352 = arith.constant dense<0.000000e+00> : vector<8x32xf32>
    %1012 = tpu.matmul %916, %27, %cst_352 {dimension_numbers = #tpu.dot_dimension_numbers<[1], [0], [0], [1], [0, 0, 1, 1], [], []>} : vector<8x32xf32>, vector<32x32xf32>, vector<8x32xf32> -> vector<8x32xf32>
    %1013 = vector.broadcast %45 : vector<1x32xf32> to vector<8x32xf32>
    %1014 = arith.addf %1012, %1013 : vector<8x32xf32>
    %cst_353 = arith.constant dense<0.000000e+00> : vector<8x32xf32>
    %1015 = tpu.matmul %916, %29, %cst_353 {dimension_numbers = #tpu.dot_dimension_numbers<[1], [0], [0], [1], [0, 0, 1, 1], [], []>} : vector<8x32xf32>, vector<32x32xf32>, vector<8x32xf32> -> vector<8x32xf32>
    %1016 = vector.broadcast %47 : vector<1x32xf32> to vector<8x32xf32>
    %1017 = arith.addf %1015, %1016 : vector<8x32xf32>
    %1018 = arith.addf %1002, %1011 : vector<8x32xf32>
    %1019 = arith.negf %1018 : vector<8x32xf32>
    %1020 = math.exp %1019 : vector<8x32xf32>
    %cst_354 = arith.constant 1.000000e+00 : f32
    %1021 = vector.broadcast %cst_354 : f32 to vector<8x32xf32>
    %1022 = arith.addf %1021, %1020 : vector<8x32xf32>
    %1023 = arith.divf %1021, %1022 : vector<8x32xf32>
    %1024 = arith.addf %1005, %1014 : vector<8x32xf32>
    %1025 = arith.negf %1024 : vector<8x32xf32>
    %1026 = math.exp %1025 : vector<8x32xf32>
    %cst_355 = arith.constant 1.000000e+00 : f32
    %1027 = vector.broadcast %cst_355 : f32 to vector<8x32xf32>
    %1028 = arith.addf %1027, %1026 : vector<8x32xf32>
    %1029 = arith.divf %1027, %1028 : vector<8x32xf32>
    %1030 = arith.mulf %1023, %1017 : vector<8x32xf32>
    %1031 = arith.addf %1008, %1030 : vector<8x32xf32>
    %1032 = math.tanh %1031 : vector<8x32xf32>
    %cst_356 = arith.constant 1.000000e+00 : f32
    %1033 = vector.broadcast %cst_356 : f32 to vector<8x32xf32>
    %1034 = arith.subf %1033, %1029 : vector<8x32xf32>
    %1035 = arith.mulf %1034, %1032 : vector<8x32xf32>
    %1036 = arith.mulf %1029, %916 : vector<8x32xf32>
    %1037 = arith.addf %1035, %1036 : vector<8x32xf32>
    %cst_357 = arith.constant dense<0.000000e+00> : vector<8x32xf32>
    %1038 = tpu.matmul %1037, %72, %cst_357 {dimension_numbers = #tpu.dot_dimension_numbers<[1], [0], [0], [1], [0, 0, 1, 1], [], []>} : vector<8x32xf32>, vector<32x32xf32>, vector<8x32xf32> -> vector<8x32xf32>
    %1039 = vector.broadcast %73 : vector<1x32xf32> to vector<8x32xf32>
    %1040 = arith.addf %1038, %1039 : vector<8x32xf32>
    %cst_358 = arith.constant 0.000000e+00 : f32
    %1041 = vector.broadcast %cst_358 : f32 to vector<8x32xf32>
    %1042 = arith.maximumf %1040, %1041 : vector<8x32xf32>
    %cst_359 = arith.constant dense<0.000000e+00> : vector<8x8xf32>
    %1043 = tpu.matmul %1042, %74, %cst_359 {dimension_numbers = #tpu.dot_dimension_numbers<[1], [0], [0], [1], [0, 0, 1, 1], [], []>} : vector<8x32xf32>, vector<32x8xf32>, vector<8x8xf32> -> vector<8x8xf32>
    %1044 = vector.broadcast %75 : vector<1x8xf32> to vector<8x8xf32>
    %1045 = arith.addf %1043, %1044 : vector<8x8xf32>
    %1046 = math.tanh %1045 : vector<8x8xf32>
    %c0_360 = arith.constant 0 : index
    %c56 = arith.constant 56 : index
    %1047 = vector.load %arg12[%c0_360, %c56] : memref<8x64xf32, #tpu.memory_space<vmem>>, vector<8x8xf32>
    tpu.vector_store %arg12[%c0_360, %c56], %1046 {strides = array<i32>} : memref<8x64xf32, #tpu.memory_space<vmem>>, vector<8x8xf32>,
    return
  }
  func.func @transform_0(%arg0: i32) -> (i32, i32) {
    %c0_i32 = arith.constant 0 : i32
    %c0_i32_0 = arith.constant 0 : i32
    return %arg0, %c0_i32 : i32, i32
  }
  func.func @transform_1(%arg0: i32) -> (i32, i32, i32) {
    %c0_i32 = arith.constant 0 : i32
    %c0_i32_0 = arith.constant 0 : i32
    %c0_i32_1 = arith.constant 0 : i32
    return %c0_i32, %arg0, %c0_i32_0 : i32, i32, i32
  }
  func.func @transform_2(%arg0: i32) -> (i32, i32, i32) {
    %c0_i32 = arith.constant 0 : i32
    %c0_i32_0 = arith.constant 0 : i32
    %c0_i32_1 = arith.constant 0 : i32
    %c0_i32_2 = arith.constant 0 : i32
    return %c0_i32, %c0_i32_0, %c0_i32_1 : i32, i32, i32
  }
  func.func @transform_3(%arg0: i32) -> (i32, i32, i32) {
    %c0_i32 = arith.constant 0 : i32
    %c0_i32_0 = arith.constant 0 : i32
    %c0_i32_1 = arith.constant 0 : i32
    %c0_i32_2 = arith.constant 0 : i32
    return %c0_i32, %c0_i32_0, %c0_i32_1 : i32, i32, i32
  }
  func.func @transform_4(%arg0: i32) -> (i32, i32, i32) {
    %c0_i32 = arith.constant 0 : i32
    %c0_i32_0 = arith.constant 0 : i32
    %c0_i32_1 = arith.constant 0 : i32
    %c0_i32_2 = arith.constant 0 : i32
    return %c0_i32, %c0_i32_0, %c0_i32_1 : i32, i32, i32
  }
  func.func @transform_5(%arg0: i32) -> (i32, i32, i32) {
    %c0_i32 = arith.constant 0 : i32
    %c0_i32_0 = arith.constant 0 : i32
    %c0_i32_1 = arith.constant 0 : i32
    %c0_i32_2 = arith.constant 0 : i32
    return %c0_i32, %c0_i32_0, %c0_i32_1 : i32, i32, i32
  }
  func.func @transform_6(%arg0: i32) -> (i32, i32, i32) {
    %c0_i32 = arith.constant 0 : i32
    %c0_i32_0 = arith.constant 0 : i32
    %c0_i32_1 = arith.constant 0 : i32
    %c0_i32_2 = arith.constant 0 : i32
    return %c0_i32, %c0_i32_0, %c0_i32_1 : i32, i32, i32
  }
  func.func @transform_7(%arg0: i32) -> (i32, i32) {
    %c0_i32 = arith.constant 0 : i32
    %c0_i32_0 = arith.constant 0 : i32
    %c0_i32_1 = arith.constant 0 : i32
    return %c0_i32, %c0_i32_0 : i32, i32
  }
  func.func @transform_8(%arg0: i32) -> (i32, i32) {
    %c0_i32 = arith.constant 0 : i32
    %c0_i32_0 = arith.constant 0 : i32
    %c0_i32_1 = arith.constant 0 : i32
    return %c0_i32, %c0_i32_0 : i32, i32
  }
  func.func @transform_9(%arg0: i32) -> (i32, i32) {
    %c0_i32 = arith.constant 0 : i32
    %c0_i32_0 = arith.constant 0 : i32
    %c0_i32_1 = arith.constant 0 : i32
    return %c0_i32, %c0_i32_0 : i32, i32
  }
  func.func @transform_10(%arg0: i32) -> (i32, i32) {
    %c0_i32 = arith.constant 0 : i32
    %c0_i32_0 = arith.constant 0 : i32
    %c0_i32_1 = arith.constant 0 : i32
    return %c0_i32, %c0_i32_0 : i32, i32
  }
  func.func @transform_11(%arg0: i32) -> (i32, i32) {
    %c0_i32 = arith.constant 0 : i32
    %c0_i32_0 = arith.constant 0 : i32
    return %arg0, %c0_i32 : i32, i32
  }
}

</mosaic_0001>

<llo_original>
// kernel: conditional_timegan_generator.1
$region0: #{conditional_timegan_generator.1}
  #allocation0 [shape = 'u32[]', space=smem, size = 0x4, offset = 0x4, fixed_abs, tag = 'smem constant byte address 0x4 - core index']
  #allocation1 [shape = 'u32[72,128]{1,0:T(1,128)}', space=vmem, size = 0x9000, scoped, tag = 'internal scratch']
  %s0 = inlined_call_operand.vmem [shape: f32[8,8], index: 0, kind: input, shape index: {}]
  %s1 = inlined_call_operand.vmem [shape: f32[3,8,32], index: 1, kind: input, shape index: {}]
  %s2 = inlined_call_operand.hbm [shape: f32[3,8,32], index: 2, kind: input, shape index: {}]
  %s3 = inlined_call_operand.hbm [shape: f32[6,32,32], index: 3, kind: input, shape index: {}]
  %s4 = inlined_call_operand.vmem [shape: f32[6,1,32], index: 4, kind: input, shape index: {}]
  %s5 = inlined_call_operand.hbm [shape: f32[9,32,32], index: 5, kind: input, shape index: {}]
  %s6 = inlined_call_operand.vmem [shape: f32[9,1,32], index: 6, kind: input, shape index: {}]
  %s7 = inlined_call_operand.hbm [shape: f32[32,32], index: 7, kind: input, shape index: {}]
  %s8 = inlined_call_operand.vmem [shape: f32[1,32], index: 8, kind: input, shape index: {}]
  %s9 = inlined_call_operand.vmem [shape: f32[32,8], index: 9, kind: input, shape index: {}]
  %s10 = inlined_call_operand.vmem [shape: f32[1,8], index: 10, kind: input, shape index: {}]
  %s11 = inlined_call_operand.vmem [shape: f32[8,64], index: 11, kind: output, shape index: {}]
  %s12 = sld [smem:[#allocation0]]
  $region70: #{conditional_timegan_generator.1} parent=0
    _
  %s14 = ssub.s32 1, %s12
  %s15 = scalar_select 0, %s14, %s12
  $region1: #{conditional_timegan_generator.1} parent=0
    #allocation2 [shape = 'u8[12288]{0}', space=vmem, size = 0x3000, scoped, tag = 'input window, operand 2, single buffered']
    #allocation3 [shape = 's32[1]{0}', space=sflag, size = 0x4, scoped, tag = 'scoped memory for conditional_timegan_generator.1']
    #allocation4 [shape = 'u8[98304]{0}', space=vmem, size = 0x18000, scoped, tag = 'input window, operand 3, single buffered']
    #allocation5 [shape = 's32[1]{0}', space=sflag, size = 0x4, scoped, tag = 'scoped memory for conditional_timegan_generator.1']
    #allocation6 [shape = 'u8[147456]{0}', space=vmem, size = 0x24000, scoped, tag = 'input window, operand 5, single buffered']
    #allocation7 [shape = 'u8[16384]{0}', space=vmem, size = 0x4000, scoped, tag = 'input window, operand 7, single buffered']
    #allocation8 [shape = 's32[1]{0}', space=sflag, size = 0x4, scoped, tag = 'scoped memory for conditional_timegan_generator.1']
    %16 = vsyncpa [#allocation3], 0
    %17 = vsyncpa [#allocation5], 0
    %18 = vsyncpa [#allocation8], 0
    // Predicated region
    $region2: #{conditional_timegan_generator.1} parent=1 // pred_check
      _
    $region3: #{conditional_timegan_generator.1} parent=1 // pred_check_branch
      %20 = sbr.rel (0) target = $region5
    $region4: #{conditional_timegan_generator.1} parent=1 // pred_region
      _
    $region5: #{conditional_timegan_generator.1} parent=1 // pred_fallthru
      _
    // Predicated region
    $region6: #{conditional_timegan_generator.1} parent=1 // pred_check
      _
    $region7: #{conditional_timegan_generator.1} parent=1 // pred_check_branch
      %22 = sbr.rel (0) target = $region9
    $region8: #{conditional_timegan_generator.1} parent=1 // pred_region
      _
    $region9: #{conditional_timegan_generator.1} parent=1 // pred_fallthru
      _
    // Predicated region
    $region10: #{conditional_timegan_generator.1} parent=1 // pred_check
      _
    $region11: #{conditional_timegan_generator.1} parent=1 // pred_check_branch
      %24 = sbr.rel (0) target = $region13
    $region12: #{conditional_timegan_generator.1} parent=1 // pred_region
      %26 = vsyncadd [#allocation3], 0
      %s27 = sshll.u32 %s2, 4
      %s28 = int_to_ptr.hbm [resolvable:$true] %s27
      %s29 = sshll.u32 [#allocation2], 4
      %s30 = int_to_ptr.vmem [resolvable:$true] %s29
      %35 = dma.hbm_to_vmem [thread:$0]  %s28, 384, %s30, [#allocation3], 128, 128, 8
    $region13: #{conditional_timegan_generator.1} parent=1 // pred_fallthru
      _
    // Predicated region
    $region14: #{conditional_timegan_generator.1} parent=1 // pred_check
      _
    $region15: #{conditional_timegan_generator.1} parent=1 // pred_check_branch
      %37 = sbr.rel (0) target = $region17
    $region16: #{conditional_timegan_generator.1} parent=1 // pred_region
      %39 = vsyncadd [#allocation5], 0
      %s40 = sshll.u32 %s3, 4
      %s41 = int_to_ptr.hbm [resolvable:$true] %s40
      %s42 = sshll.u32 [#allocation4], 4
      %s43 = int_to_ptr.vmem [resolvable:$true] %s42
      %48 = dma.hbm_to_vmem [thread:$0]  %s41, 3072, %s43, [#allocation5], 128, 128, 8
    $region17: #{conditional_timegan_generator.1} parent=1 // pred_fallthru
      _
    // Predicated region
    $region18: #{conditional_timegan_generator.1} parent=1 // pred_check
      _
    $region19: #{conditional_timegan_generator.1} parent=1 // pred_check_branch
      %50 = sbr.rel (0) target = $region21
    $region20: #{conditional_timegan_generator.1} parent=1 // pred_region
      _
    $region21: #{conditional_timegan_generator.1} parent=1 // pred_fallthru
      _
    // Predicated region
    $region22: #{conditional_timegan_generator.1} parent=1 // pred_check
      _
    $region23: #{conditional_timegan_generator.1} parent=1 // pred_check_branch
      %52 = sbr.rel (0) target = $region25
    $region24: #{conditional_timegan_generator.1} parent=1 // pred_region
      %54 = vsyncadd [#allocation5], 0
      %s55 = sshll.u32 %s5, 4
      %s56 = int_to_ptr.hbm [resolvable:$true] %s55
      %s57 = sshll.u32 [#allocation6], 4
      %s58 = int_to_ptr.vmem [resolvable:$true] %s57
      %63 = dma.hbm_to_vmem [thread:$0]  %s56, 4608, %s58, [#allocation5], 128, 128, 8
    $region25: #{conditional_timegan_generator.1} parent=1 // pred_fallthru
      _
    // Predicated region
    $region26: #{conditional_timegan_generator.1} parent=1 // pred_check
      _
    $region27: #{conditional_timegan_generator.1} parent=1 // pred_check_branch
      %65 = sbr.rel (0) target = $region29
    $region28: #{conditional_timegan_generator.1} parent=1 // pred_region
      _
    $region29: #{conditional_timegan_generator.1} parent=1 // pred_fallthru
      _
    // Predicated region
    $region30: #{conditional_timegan_generator.1} parent=1 // pred_check
      _
    $region31: #{conditional_timegan_generator.1} parent=1 // pred_check_branch
      %67 = sbr.rel (0) target = $region33
    $region32: #{conditional_timegan_generator.1} parent=1 // pred_region
      %69 = vsyncadd [#allocation8], 0
      %s70 = sshll.u32 %s7, 4
      %s71 = int_to_ptr.hbm [resolvable:$true] %s70
      %s72 = sshll.u32 [#allocation7], 4
      %s73 = int_to_ptr.vmem [resolvable:$true] %s72
      %78 = dma.hbm_to_vmem [thread:$0]  %s71, 512, %s73, [#allocation8], 128, 128, 8
    $region33: #{conditional_timegan_generator.1} parent=1 // pred_fallthru
      _
    // Predicated region
    $region34: #{conditional_timegan_generator.1} parent=1 // pred_check
      _
    $region35: #{conditional_timegan_generator.1} parent=1 // pred_check_branch
      %80 = sbr.rel (0) target = $region37
    $region36: #{conditional_timegan_generator.1} parent=1 // pred_region
      _
    $region37: #{conditional_timegan_generator.1} parent=1 // pred_fallthru
      _
    // Predicated region
    $region38: #{conditional_timegan_generator.1} parent=1 // pred_check
      _
    $region39: #{conditional_timegan_generator.1} parent=1 // pred_check_branch
      %82 = sbr.rel (0) target = $region41
    $region40: #{conditional_timegan_generator.1} parent=1 // pred_region
      _
    $region41: #{conditional_timegan_generator.1} parent=1 // pred_fallthru
      _
    // Predicated region
    $region42: #{conditional_timegan_generator.1} parent=1 // pred_check
      _
    $region43: #{conditional_timegan_generator.1} parent=1 // pred_check_branch
      %84 = sbr.rel (0) target = $region45
    $region44: #{conditional_timegan_generator.1} parent=1 // pred_region
      _
    $region45: #{conditional_timegan_generator.1} parent=1 // pred_fallthru
      _
    // Predicated region
    $region46: #{conditional_timegan_generator.1} parent=1 // pred_check
      _
    $region47: #{conditional_timegan_generator.1} parent=1 // pred_check_branch
      %86 = sbr.rel (0) target = $region49
    $region48: #{conditional_timegan_generator.1} parent=1 // pred_region
      %88 = dma.done [#allocation3], 384
    $region49: #{conditional_timegan_generator.1} parent=1 // pred_fallthru
      _
    // Predicated region
    $region50: #{conditional_timegan_generator.1} parent=1 // pred_check
      _
    $region51: #{conditional_timegan_generator.1} parent=1 // pred_check_branch
      %90 = sbr.rel (0) target = $region53
    $region52: #{conditional_timegan_generator.1} parent=1 // pred_region
      %92 = dma.done [#allocation5], 3072
    $region53: #{conditional_timegan_generator.1} parent=1 // pred_fallthru
      _
    // Predicated region
    $region54: #{conditional_timegan_generator.1} parent=1 // pred_check
      _
    $region55: #{conditional_timegan_generator.1} parent=1 // pred_check_branch
      %94 = sbr.rel (0) target = $region57
    $region56: #{conditional_timegan_generator.1} parent=1 // pred_region
      %96 = dma.done [#allocation5], 4608
    $region57: #{conditional_timegan_generator.1} parent=1 // pred_fallthru
      _
    // Predicated region
    $region58: #{conditional_timegan_generator.1} parent=1 // pred_check
      _
    $region59: #{conditional_timegan_generator.1} parent=1 // pred_check_branch
      %98 = sbr.rel (0) target = $region61
    $region60: #{conditional_timegan_generator.1} parent=1 // pred_region
      %100 = dma.done [#allocation8], 512
    $region61: #{conditional_timegan_generator.1} parent=1 // pred_fallthru
      _
    %v101 = vld [vmem:[#allocation2] sm:$0xff]
    %s102 = scalar_lea.vmem [#allocation2], 8
    %v103 = vld [vmem:[%s102] sm:$0xff]
    %s104 = scalar_lea.vmem [#allocation2], 16
    %v105 = vld [vmem:[%s104] sm:$0xff]
    %v106 = vld [vmem:[%s1] sm:$0xff]
    %s107 = scalar_lea.vmem %s1, 8
    %v108 = vld [vmem:[%s107] sm:$0xff]
    %s109 = scalar_lea.vmem %s1, 16
    %v110 = vld [vmem:[%s109] sm:$0xff]
    %v111 = vld [vmem:[#allocation6] sm:$0xff]
    %v112 = vld [vmem:[#allocation6 + $0x8] sm:$0xff]
    %v113 = vld [vmem:[#allocation6 + $0x10] sm:$0xff]
    %v114 = vld [vmem:[#allocation6 + $0x18] sm:$0xff]
    %s115 = scalar_lea.vmem [#allocation6], 32
    %v116 = vld [vmem:[%s115] sm:$0xff]
    %v117 = vld [vmem:[%s115 + $0x8] sm:$0xff]
    %v118 = vld [vmem:[%s115 + $0x10] sm:$0xff]
    %v119 = vld [vmem:[%s115 + $0x18] sm:$0xff]
    %s120 = scalar_lea.vmem [#allocation6], 64
    %v121 = vld [vmem:[%s120] sm:$0xff]
    %v122 = vld [vmem:[%s120 + $0x8] sm:$0xff]
    %v123 = vld [vmem:[%s120 + $0x10] sm:$0xff]
    %v124 = vld [vmem:[%s120 + $0x18] sm:$0xff]
    %s125 = scalar_lea.vmem [#allocation6], 96
    %v126 = vld [vmem:[%s125] sm:$0xff]
    %v127 = vld [vmem:[%s125 + $0x8] sm:$0xff]
    %v128 = vld [vmem:[%s125 + $0x10] sm:$0xff]
    %v129 = vld [vmem:[%s125 + $0x18] sm:$0xff]
    %s130 = scalar_lea.vmem [#allocation6], 128
    %v131 = vld [vmem:[%s130] sm:$0xff]
    %v132 = vld [vmem:[%s130 + $0x8] sm:$0xff]
    %v133 = vld [vmem:[%s130 + $0x10] sm:$0xff]
    %v134 = vld [vmem:[%s130 + $0x18] sm:$0xff]
    %s135 = scalar_lea.vmem [#allocation6], 160
    %v136 = vld [vmem:[%s135] sm:$0xff]
    %v137 = vld [vmem:[%s135 + $0x8] sm:$0xff]
    %v138 = vld [vmem:[%s135 + $0x10] sm:$0xff]
    %v139 = vld [vmem:[%s135 + $0x18] sm:$0xff]
    %s140 = scalar_lea.vmem [#allocation6], 192
    %v141 = vld [vmem:[%s140] sm:$0xff]
    %v142 = vld [vmem:[%s140 + $0x8] sm:$0xff]
    %v143 = vld [vmem:[%s140 + $0x10] sm:$0xff]
    %v144 = vld [vmem:[%s140 + $0x18] sm:$0xff]
    %s145 = scalar_lea.vmem [#allocation6], 224
    %v146 = vld [vmem:[%s145] sm:$0xff]
    %v147 = vld [vmem:[%s145 + $0x8] sm:$0xff]
    %v148 = vld [vmem:[%s145 + $0x10] sm:$0xff]
    %v149 = vld [vmem:[%s145 + $0x18] sm:$0xff]
    %s150 = scalar_lea.vmem [#allocation6], 256
    %v151 = vld [vmem:[%s150] sm:$0xff]
    %v152 = vld [vmem:[%s150 + $0x8] sm:$0xff]
    %v153 = vld [vmem:[%s150 + $0x10] sm:$0xff]
    %v154 = vld [vmem:[%s150 + $0x18] sm:$0xff]
    %v155 = vld [vmem:[%s6] sm:$0x1]
    %s156 = scalar_lea.vmem %s6, 1
    %v157 = vld [vmem:[%s156] sm:$0x1]
    %s158 = scalar_lea.vmem %s6, 2
    %v159 = vld [vmem:[%s158] sm:$0x1]
    %s160 = scalar_lea.vmem %s6, 3
    %v161 = vld [vmem:[%s160] sm:$0x1]
    %s162 = scalar_lea.vmem %s6, 4
    %v163 = vld [vmem:[%s162] sm:$0x1]
    %s164 = scalar_lea.vmem %s6, 5
    %v165 = vld [vmem:[%s164] sm:$0x1]
    %s166 = scalar_lea.vmem %s6, 6
    %v167 = vld [vmem:[%s166] sm:$0x1]
    %s168 = scalar_lea.vmem %s6, 7
    %v169 = vld [vmem:[%s168] sm:$0x1]
    %s170 = scalar_lea.vmem %s6, 8
    %v171 = vld [vmem:[%s170] sm:$0x1]
    %v172 = vld [vmem:[#allocation4] sm:$0xff]
    %v173 = vld [vmem:[#allocation4 + $0x8] sm:$0xff]
    %v174 = vld [vmem:[#allocation4 + $0x10] sm:$0xff]
    %v175 = vld [vmem:[#allocation4 + $0x18] sm:$0xff]
    %s176 = scalar_lea.vmem [#allocation4], 32
    %v177 = vld [vmem:[%s176] sm:$0xff]
    %v178 = vld [vmem:[%s176 + $0x8] sm:$0xff]
    %v179 = vld [vmem:[%s176 + $0x10] sm:$0xff]
    %v180 = vld [vmem:[%s176 + $0x18] sm:$0xff]
    %s181 = scalar_lea.vmem [#allocation4], 64
    %v182 = vld [vmem:[%s181] sm:$0xff]
    %v183 = vld [vmem:[%s181 + $0x8] sm:$0xff]
    %v184 = vld [vmem:[%s181 + $0x10] sm:$0xff]
    %v185 = vld [vmem:[%s181 + $0x18] sm:$0xff]
    %s186 = scalar_lea.vmem [#allocation4], 96
    %v187 = vld [vmem:[%s186] sm:$0xff]
    %v188 = vld [vmem:[%s186 + $0x8] sm:$0xff]
    %v189 = vld [vmem:[%s186 + $0x10] sm:$0xff]
    %v190 = vld [vmem:[%s186 + $0x18] sm:$0xff]
    %s191 = scalar_lea.vmem [#allocation4], 128
    %v192 = vld [vmem:[%s191] sm:$0xff]
    %v193 = vld [vmem:[%s191 + $0x8] sm:$0xff]
    %v194 = vld [vmem:[%s191 + $0x10] sm:$0xff]
    %v195 = vld [vmem:[%s191 + $0x18] sm:$0xff]
    %s196 = scalar_lea.vmem [#allocation4], 160
    %v197 = vld [vmem:[%s196] sm:$0xff]
    %v198 = vld [vmem:[%s196 + $0x8] sm:$0xff]
    %v199 = vld [vmem:[%s196 + $0x10] sm:$0xff]
    %v200 = vld [vmem:[%s196 + $0x18] sm:$0xff]
    %v201 = vld [vmem:[%s4] sm:$0x1]
    %s202 = scalar_lea.vmem %s4, 1
    %v203 = vld [vmem:[%s202] sm:$0x1]
    %s204 = scalar_lea.vmem %s4, 2
    %v205 = vld [vmem:[%s204] sm:$0x1]
    %s206 = scalar_lea.vmem %s4, 3
    %v207 = vld [vmem:[%s206] sm:$0x1]
    %s208 = scalar_lea.vmem %s4, 4
    %v209 = vld [vmem:[%s208] sm:$0x1]
    %s210 = scalar_lea.vmem %s4, 5
    %v211 = vld [vmem:[%s210] sm:$0x1]
    %v212 = vld [vmem:[#allocation7] sm:$0xff]
    %v213 = vld [vmem:[#allocation7 + $0x8] sm:$0xff]
    %v214 = vld [vmem:[#allocation7 + $0x10] sm:$0xff]
    %v215 = vld [vmem:[#allocation7 + $0x18] sm:$0xff]
    %v216 = vld [vmem:[%s8] sm:$0x1]
    %v217 = vld [vmem:[%s9] sm:$0xff]
    %v218 = vld [vmem:[%s9 + $0x8] sm:$0xff]
    %v219 = vld [vmem:[%s9 + $0x10] sm:$0xff]
    %v220 = vld [vmem:[%s9 + $0x18] sm:$0xff]
    %v221 = vld [vmem:[%s10] sm:$0x1]
    %v222 = vld [vmem:[%s0] sm:$0xff]
    %vm223 = vcmask 64512
    %v225 = vsel %vm223, %v222, 0
    %227 = vmatpush.msra.mxu0 0.0
    %228 = vmatpush.msra.mxu0 0.0
    %229 = vmatpush.msra.mxu0 0.0
    %230 = vmatpush.msra.mxu0 0.0
    %231 = vmatpush.msra.mxu0 0.0
    %232 = vmatpush.msra.mxu0 0.0
    %233 = vmatpush.msra.mxu0 0.0
    %234 = vmatpush.msra.mxu0 0.0
    %235 = vmatpush.msra.mxu0 0.0
    %236 = vmatpush.msra.mxu0 0.0
    %237 = vmatpush.msra.mxu0 0.0
    %238 = vmatpush.msra.mxu0 0.0
    %239 = vmatpush.msra.mxu0 0.0
    %240 = vmatpush.msra.mxu0 0.0
    %241 = vmatpush.msra.mxu0 0.0
    %242 = vmatpush.msra.mxu0 %v101
    %243 = vmatmul.f32.gmra.mxu0 %v225
    %v244 = vpop.f32.mrf.mxu0
    %v245 = vadd.f32 %v106, %v244
    %246 = vdwg.mxu0
    %247 = vmatpush.msra.mxu0 0.0
    %248 = vmatpush.msra.mxu0 0.0
    %249 = vmatpush.msra.mxu0 0.0
    %250 = vmatpush.msra.mxu0 0.0
    %251 = vmatpush.msra.mxu0 0.0
    %252 = vmatpush.msra.mxu0 0.0
    %253 = vmatpush.msra.mxu0 0.0
    %254 = vmatpush.msra.mxu0 0.0
    %255 = vmatpush.msra.mxu0 0.0
    %256 = vmatpush.msra.mxu0 0.0
    %257 = vmatpush.msra.mxu0 0.0
    %258 = vmatpush.msra.mxu0 0.0
    %259 = vmatpush.msra.mxu0 0.0
    %260 = vmatpush.msra.mxu0 0.0
    %261 = vmatpush.msra.mxu0 0.0
    %262 = vmatpush.msra.mxu0 %v103
    %263 = vmatmul.f32.gmra.mxu0 %v225
    %v264 = vpop.f32.mrf.mxu0
    %v265 = vadd.f32 %v108, %v264
    %266 = vdwg.mxu0
    %267 = vmatpush.msra.mxu0 0.0
    %268 = vmatpush.msra.mxu0 0.0
    %269 = vmatpush.msra.mxu0 0.0
    %270 = vmatpush.msra.mxu0 0.0
    %271 = vmatpush.msra.mxu0 0.0
    %272 = vmatpush.msra.mxu0 0.0
    %273 = vmatpush.msra.mxu0 0.0
    %274 = vmatpush.msra.mxu0 0.0
    %275 = vmatpush.msra.mxu0 0.0
    %276 = vmatpush.msra.mxu0 0.0
    %277 = vmatpush.msra.mxu0 0.0
    %278 = vmatpush.msra.mxu0 0.0
    %279 = vmatpush.msra.mxu0 0.0
    %280 = vmatpush.msra.mxu0 0.0
    %281 = vmatpush.msra.mxu0 0.0
    %282 = vmatpush.msra.mxu0 %v105
    %283 = vmatmul.f32.gmra.mxu0 %v225
    %v284 = vpop.f32.mrf.mxu0
    %v285 = vadd.f32 %v110, %v284
    %286 = vdwg.mxu0
    %v288 = vperm.slane %v155, 0
    %vm290 = vcmask 261120
    %v292 = vsel %vm290, 0.0, 0
    %294 = vmatpush.msra.mxu0 0.0
    %295 = vmatpush.msra.mxu0 0.0
    %296 = vmatpush.msra.mxu0 0.0
    %297 = vmatpush.msra.mxu0 0.0
    %298 = vmatpush.msra.mxu0 0.0
    %299 = vmatpush.msra.mxu0 0.0
    %300 = vmatpush.msra.mxu0 0.0
    %301 = vmatpush.msra.mxu0 0.0
    %302 = vmatpush.msra.mxu0 0.0
    %303 = vmatpush.msra.mxu0 0.0
    %304 = vmatpush.msra.mxu0 0.0
    %305 = vmatpush.msra.mxu0 0.0
    %306 = vmatpush.msra.mxu0 %v114
    %307 = vmatpush.msra.mxu0 %v113
    %308 = vmatpush.msra.mxu0 %v112
    %309 = vmatpush.msra.mxu0 %v111
    %310 = vmatmul.f32.gmra.mxu0 %v292
    %v311 = vpop.f32.mrf.mxu0
    %v312 = vadd.f32 %v288, %v311
    %313 = vdwg.mxu0
    %v315 = vperm.slane %v157, 0
    %317 = vmatpush.msra.mxu0 0.0
    %318 = vmatpush.msra.mxu0 0.0
    %319 = vmatpush.msra.mxu0 0.0
    %320 = vmatpush.msra.mxu0 0.0
    %321 = vmatpush.msra.mxu0 0.0
    %322 = vmatpush.msra.mxu0 0.0
    %323 = vmatpush.msra.mxu0 0.0
    %324 = vmatpush.msra.mxu0 0.0
    %325 = vmatpush.msra.mxu0 0.0
    %326 = vmatpush.msra.mxu0 0.0
    %327 = vmatpush.msra.mxu0 0.0
    %328 = vmatpush.msra.mxu0 0.0
    %329 = vmatpush.msra.mxu0 %v119
    %330 = vmatpush.msra.mxu0 %v118
    %331 = vmatpush.msra.mxu0 %v117
    %332 = vmatpush.msra.mxu0 %v116
    %333 = vmatmul.f32.gmra.mxu0 %v292
    %v334 = vpop.f32.mrf.mxu0
    %v335 = vadd.f32 %v315, %v334
    %336 = vdwg.mxu0
    %v338 = vperm.slane %v159, 0
    %340 = vmatpush.msra.mxu0 0.0
    %341 = vmatpush.msra.mxu0 0.0
    %342 = vmatpush.msra.mxu0 0.0
    %343 = vmatpush.msra.mxu0 0.0
    %344 = vmatpush.msra.mxu0 0.0
    %345 = vmatpush.msra.mxu0 0.0
    %346 = vmatpush.msra.mxu0 0.0
    %347 = vmatpush.msra.mxu0 0.0
    %348 = vmatpush.msra.mxu0 0.0
    %349 = vmatpush.msra.mxu0 0.0
    %350 = vmatpush.msra.mxu0 0.0
    %351 = vmatpush.msra.mxu0 0.0
    %352 = vmatpush.msra.mxu0 %v124
    %353 = vmatpush.msra.mxu0 %v123
    %354 = vmatpush.msra.mxu0 %v122
    %355 = vmatpush.msra.mxu0 %v121
    %356 = vmatmul.f32.gmra.mxu0 %v292
    %v357 = vpop.f32.mrf.mxu0
    %v358 = vadd.f32 %v338, %v357
    %359 = vdwg.mxu0
    %v360 = vadd.f32 %v245, %v312
    %v361 = vxor.u32 %v360, 2147483648
    %v362 = vmul.f32 %v361, 1.442695
    %v363 = vpow.pop %v362
    %v364 = vadd.f32 %v363, 1.0
    %v365 = vrcp.pop %v364
    %v366 = vmul.f32 %v364, %v365
    %v367 = vsub.f32 1.0, %v366
    %v368 = vmul.f32 %v365, %v367
    %v369 = vadd.f32 %v365, %v368
    %vm370 = vweird.f32 %v364
    %vm371 = vweird.f32 %v365
    %vm372 = vmor %vm370, %vm371
    %v373 = vsel %vm372, %v365, %v369
    %v374 = vand.u32 2147483647, %v364
    %vm375 = vcmp.eq.f32.partialorder %v374, 8.507059e+37
    %v376 = vand.u32 %v364, 2147483648
    %v377 = vor.u32 1.1754944e-38, %v376
    %v378 = vsel %vm375, %v377, %v373
    %v379 = vmul.f32 1.0, %v378
    %v380 = vadd.f32 %v265, %v335
    %v381 = vxor.u32 %v380, 2147483648
    %v382 = vmul.f32 %v381, 1.442695
    %v383 = vpow.pop %v382
    %v384 = vadd.f32 %v383, 1.0
    %v385 = vrcp.pop %v384
    %v386 = vmul.f32 %v384, %v385
    %v387 = vsub.f32 1.0, %v386
    %v388 = vmul.f32 %v385, %v387
    %v389 = vadd.f32 %v385, %v388
    %vm390 = vweird.f32 %v384
    %vm391 = vweird.f32 %v385
    %vm392 = vmor %vm390, %vm391
    %v393 = vsel %vm392, %v385, %v389
    %v394 = vand.u32 2147483647, %v384
    %vm395 = vcmp.eq.f32.partialorder %v394, 8.507059e+37
    %v396 = vand.u32 %v384, 2147483648
    %v397 = vor.u32 1.1754944e-38, %v396
    %v398 = vsel %vm395, %v397, %v393
    %v399 = vmul.f32 1.0, %v398
    %v400 = vmul.f32 %v379, %v358
    %v401 = vadd.f32 %v285, %v400
    %v402 = vtanh.pop %v401
    %v403 = vsub.f32 1.0, %v399
    %v404 = vmul.f32 %v403, %v402
    %v405 = vmul.f32 %v399, 0.0
    %v406 = vadd.f32 %v404, %v405
    %v408 = vperm.slane %v201, 0
    %v411 = vsel %vm290, %v406, 0
    %413 = vmatpush.msra.mxu0 0.0
    %414 = vmatpush.msra.mxu0 0.0
    %415 = vmatpush.msra.mxu0 0.0
    %416 = vmatpush.msra.mxu0 0.0
    %417 = vmatpush.msra.mxu0 0.0
    %418 = vmatpush.msra.mxu0 0.0
    %419 = vmatpush.msra.mxu0 0.0
    %420 = vmatpush.msra.mxu0 0.0
    %421 = vmatpush.msra.mxu0 0.0
    %422 = vmatpush.msra.mxu0 0.0
    %423 = vmatpush.msra.mxu0 0.0
    %424 = vmatpush.msra.mxu0 0.0
    %425 = vmatpush.msra.mxu0 %v175
    %426 = vmatpush.msra.mxu0 %v174
    %427 = vmatpush.msra.mxu0 %v173
    %428 = vmatpush.msra.mxu0 %v172
    %429 = vmatmul.f32.gmra.mxu0 %v411
    %v430 = vpop.f32.mrf.mxu0
    %v431 = vadd.f32 %v408, %v430
    %432 = vdwg.mxu0
    %v434 = vperm.slane %v203, 0
    %436 = vmatpush.msra.mxu0 0.0
    %437 = vmatpush.msra.mxu0 0.0
    %438 = vmatpush.msra.mxu0 0.0
    %439 = vmatpush.msra.mxu0 0.0
    %440 = vmatpush.msra.mxu0 0.0
    %441 = vmatpush.msra.mxu0 0.0
    %442 = vmatpush.msra.mxu0 0.0
    %443 = vmatpush.msra.mxu0 0.0
    %444 = vmatpush.msra.mxu0 0.0
    %445 = vmatpush.msra.mxu0 0.0
    %446 = vmatpush.msra.mxu0 0.0
    %447 = vmatpush.msra.mxu0 0.0
    %448 = vmatpush.msra.mxu0 %v180
    %449 = vmatpush.msra.mxu0 %v179
    %450 = vmatpush.msra.mxu0 %v178
    %451 = vmatpush.msra.mxu0 %v177
    %452 = vmatmul.f32.gmra.mxu0 %v411
    %v453 = vpop.f32.mrf.mxu0
    %v454 = vadd.f32 %v434, %v453
    %455 = vdwg.mxu0
    %v457 = vperm.slane %v205, 0
    %459 = vmatpush.msra.mxu0 0.0
    %460 = vmatpush.msra.mxu0 0.0
    %461 = vmatpush.msra.mxu0 0.0
    %462 = vmatpush.msra.mxu0 0.0
    %463 = vmatpush.msra.mxu0 0.0
    %464 = vmatpush.msra.mxu0 0.0
    %465 = vmatpush.msra.mxu0 0.0
    %466 = vmatpush.msra.mxu0 0.0
    %467 = vmatpush.msra.mxu0 0.0
    %468 = vmatpush.msra.mxu0 0.0
    %469 = vmatpush.msra.mxu0 0.0
    %470 = vmatpush.msra.mxu0 0.0
    %471 = vmatpush.msra.mxu0 %v185
    %472 = vmatpush.msra.mxu0 %v184
    %473 = vmatpush.msra.mxu0 %v183
    %474 = vmatpush.msra.mxu0 %v182
    %475 = vmatmul.f32.gmra.mxu0 %v411
    %v476 = vpop.f32.mrf.mxu0
    %v477 = vadd.f32 %v457, %v476
    %478 = vdwg.mxu0
    %v480 = vperm.slane %v161, 0
    %482 = vmatpush.msra.mxu0 0.0
    %483 = vmatpush.msra.mxu0 0.0
    %484 = vmatpush.msra.mxu0 0.0
    %485 = vmatpush.msra.mxu0 0.0
    %486 = vmatpush.msra.mxu0 0.0
    %487 = vmatpush.msra.mxu0 0.0
    %488 = vmatpush.msra.mxu0 0.0
    %489 = vmatpush.msra.mxu0 0.0
    %490 = vmatpush.msra.mxu0 0.0
    %491 = vmatpush.msra.mxu0 0.0
    %492 = vmatpush.msra.mxu0 0.0
    %493 = vmatpush.msra.mxu0 0.0
    %494 = vmatpush.msra.mxu0 %v129
    %495 = vmatpush.msra.mxu0 %v128
    %496 = vmatpush.msra.mxu0 %v127
    %497 = vmatpush.msra.mxu0 %v126
    %498 = vmatmul.f32.gmra.mxu0 %v292
    %v499 = vpop.f32.mrf.mxu0
    %v500 = vadd.f32 %v480, %v499
    %501 = vdwg.mxu0
    %v503 = vperm.slane %v163, 0
    %505 = vmatpush.msra.mxu0 0.0
    %506 = vmatpush.msra.mxu0 0.0
    %507 = vmatpush.msra.mxu0 0.0
    %508 = vmatpush.msra.mxu0 0.0
    %509 = vmatpush.msra.mxu0 0.0
    %510 = vmatpush.msra.mxu0 0.0
    %511 = vmatpush.msra.mxu0 0.0
    %512 = vmatpush.msra.mxu0 0.0
    %513 = vmatpush.msra.mxu0 0.0
    %514 = vmatpush.msra.mxu0 0.0
    %515 = vmatpush.msra.mxu0 0.0
    %516 = vmatpush.msra.mxu0 0.0
    %517 = vmatpush.msra.mxu0 %v134
    %518 = vmatpush.msra.mxu0 %v133
    %519 = vmatpush.msra.mxu0 %v132
    %520 = vmatpush.msra.mxu0 %v131
    %521 = vmatmul.f32.gmra.mxu0 %v292
    %v522 = vpop.f32.mrf.mxu0
    %v523 = vadd.f32 %v503, %v522
    %524 = vdwg.mxu0
    %v526 = vperm.slane %v165, 0
    %528 = vmatpush.msra.mxu0 0.0
    %529 = vmatpush.msra.mxu0 0.0
    %530 = vmatpush.msra.mxu0 0.0
    %531 = vmatpush.msra.mxu0 0.0
    %532 = vmatpush.msra.mxu0 0.0
    %533 = vmatpush.msra.mxu0 0.0
    %534 = vmatpush.msra.mxu0 0.0
    %535 = vmatpush.msra.mxu0 0.0
    %536 = vmatpush.msra.mxu0 0.0
    %537 = vmatpush.msra.mxu0 0.0
    %538 = vmatpush.msra.mxu0 0.0
    %539 = vmatpush.msra.mxu0 0.0
    %540 = vmatpush.msra.mxu0 %v139
    %541 = vmatpush.msra.mxu0 %v138
    %542 = vmatpush.msra.mxu0 %v137
    %543 = vmatpush.msra.mxu0 %v136
    %544 = vmatmul.f32.gmra.mxu0 %v292
    %v545 = vpop.f32.mrf.mxu0
    %v546 = vadd.f32 %v526, %v545
    %547 = vdwg.mxu0
    %v548 = vadd.f32 %v431, %v500
    %v549 = vxor.u32 %v548, 2147483648
    %v550 = vmul.f32 %v549, 1.442695
    %v551 = vpow.pop %v550
    %v552 = vadd.f32 %v551, 1.0
    %v553 = vrcp.pop %v552
    %v554 = vmul.f32 %v552, %v553
    %v555 = vsub.f32 1.0, %v554
    %v556 = vmul.f32 %v553, %v555
    %v557 = vadd.f32 %v553, %v556
    %vm558 = vweird.f32 %v552
    %vm559 = vweird.f32 %v553
    %vm560 = vmor %vm558, %vm559
    %v561 = vsel %vm560, %v553, %v557
    %v562 = vand.u32 2147483647, %v552
    %vm563 = vcmp.eq.f32.partialorder %v562, 8.507059e+37
    %v564 = vand.u32 %v552, 2147483648
    %v565 = vor.u32 1.1754944e-38, %v564
    %v566 = vsel %vm563, %v565, %v561
    %v567 = vmul.f32 1.0, %v566
    %v568 = vadd.f32 %v454, %v523
    %v569 = vxor.u32 %v568, 2147483648
    %v570 = vmul.f32 %v569, 1.442695
    %v571 = vpow.pop %v570
    %v572 = vadd.f32 %v571, 1.0
    %v573 = vrcp.pop %v572
    %v574 = vmul.f32 %v572, %v573
    %v575 = vsub.f32 1.0, %v574
    %v576 = vmul.f32 %v573, %v575
    %v577 = vadd.f32 %v573, %v576
    %vm578 = vweird.f32 %v572
    %vm579 = vweird.f32 %v573
    %vm580 = vmor %vm578, %vm579
    %v581 = vsel %vm580, %v573, %v577
    %v582 = vand.u32 2147483647, %v572
    %vm583 = vcmp.eq.f32.partialorder %v582, 8.507059e+37
    %v584 = vand.u32 %v572, 2147483648
    %v585 = vor.u32 1.1754944e-38, %v584
    %v586 = vsel %vm583, %v585, %v581
    %v587 = vmul.f32 1.0, %v586
    %v588 = vmul.f32 %v567, %v546
    %v589 = vadd.f32 %v477, %v588
    %v590 = vtanh.pop %v589
    %v591 = vsub.f32 1.0, %v587
    %v592 = vmul.f32 %v591, %v590
    %v593 = vmul.f32 %v587, 0.0
    %v594 = vadd.f32 %v592, %v593
    %v596 = vperm.slane %v207, 0
    %v599 = vsel %vm290, %v594, 0
    %601 = vmatpush.msra.mxu0 0.0
    %602 = vmatpush.msra.mxu0 0.0
    %603 = vmatpush.msra.mxu0 0.0
    %604 = vmatpush.msra.mxu0 0.0
    %605 = vmatpush.msra.mxu0 0.0
    %606 = vmatpush.msra.mxu0 0.0
    %607 = vmatpush.msra.mxu0 0.0
    %608 = vmatpush.msra.mxu0 0.0
    %609 = vmatpush.msra.mxu0 0.0
    %610 = vmatpush.msra.mxu0 0.0
    %611 = vmatpush.msra.mxu0 0.0
    %612 = vmatpush.msra.mxu0 0.0
    %613 = vmatpush.msra.mxu0 %v190
    %614 = vmatpush.msra.mxu0 %v189
    %615 = vmatpush.msra.mxu0 %v188
    %616 = vmatpush.msra.mxu0 %v187
    %617 = vmatmul.f32.gmra.mxu0 %v599
    %v618 = vpop.f32.mrf.mxu0
    %v619 = vadd.f32 %v596, %v618
    %620 = vdwg.mxu0
    %v622 = vperm.slane %v209, 0
    %624 = vmatpush.msra.mxu0 0.0
    %625 = vmatpush.msra.mxu0 0.0
    %626 = vmatpush.msra.mxu0 0.0
    %627 = vmatpush.msra.mxu0 0.0
    %628 = vmatpush.msra.mxu0 0.0
    %629 = vmatpush.msra.mxu0 0.0
    %630 = vmatpush.msra.mxu0 0.0
    %631 = vmatpush.msra.mxu0 0.0
    %632 = vmatpush.msra.mxu0 0.0
    %633 = vmatpush.msra.mxu0 0.0
    %634 = vmatpush.msra.mxu0 0.0
    %635 = vmatpush.msra.mxu0 0.0
    %636 = vmatpush.msra.mxu0 %v195
    %637 = vmatpush.msra.mxu0 %v194
    %638 = vmatpush.msra.mxu0 %v193
    %639 = vmatpush.msra.mxu0 %v192
    %640 = vmatmul.f32.gmra.mxu0 %v599
    %v641 = vpop.f32.mrf.mxu0
    %v642 = vadd.f32 %v622, %v641
    %643 = vdwg.mxu0
    %v645 = vperm.slane %v211, 0
    %647 = vmatpush.msra.mxu0 0.0
    %648 = vmatpush.msra.mxu0 0.0
    %649 = vmatpush.msra.mxu0 0.0
    %650 = vmatpush.msra.mxu0 0.0
    %651 = vmatpush.msra.mxu0 0.0
    %652 = vmatpush.msra.mxu0 0.0
    %653 = vmatpush.msra.mxu0 0.0
    %654 = vmatpush.msra.mxu0 0.0
    %655 = vmatpush.msra.mxu0 0.0
    %656 = vmatpush.msra.mxu0 0.0
    %657 = vmatpush.msra.mxu0 0.0
    %658 = vmatpush.msra.mxu0 0.0
    %659 = vmatpush.msra.mxu0 %v200
    %660 = vmatpush.msra.mxu0 %v199
    %661 = vmatpush.msra.mxu0 %v198
    %662 = vmatpush.msra.mxu0 %v197
    %663 = vmatmul.f32.gmra.mxu0 %v599
    %v664 = vpop.f32.mrf.mxu0
    %v665 = vadd.f32 %v645, %v664
    %666 = vdwg.mxu0
    %v668 = vperm.slane %v167, 0
    %670 = vmatpush.msra.mxu0 0.0
    %671 = vmatpush.msra.mxu0 0.0
    %672 = vmatpush.msra.mxu0 0.0
    %673 = vmatpush.msra.mxu0 0.0
    %674 = vmatpush.msra.mxu0 0.0
    %675 = vmatpush.msra.mxu0 0.0
    %676 = vmatpush.msra.mxu0 0.0
    %677 = vmatpush.msra.mxu0 0.0
    %678 = vmatpush.msra.mxu0 0.0
    %679 = vmatpush.msra.mxu0 0.0
    %680 = vmatpush.msra.mxu0 0.0
    %681 = vmatpush.msra.mxu0 0.0
    %682 = vmatpush.msra.mxu0 %v144
    %683 = vmatpush.msra.mxu0 %v143
    %684 = vmatpush.msra.mxu0 %v142
    %685 = vmatpush.msra.mxu0 %v141
    %686 = vmatmul.f32.gmra.mxu0 %v292
    %v687 = vpop.f32.mrf.mxu0
    %v688 = vadd.f32 %v668, %v687
    %689 = vdwg.mxu0
    %v691 = vperm.slane %v169, 0
    %693 = vmatpush.msra.mxu0 0.0
    %694 = vmatpush.msra.mxu0 0.0
    %695 = vmatpush.msra.mxu0 0.0
    %696 = vmatpush.msra.mxu0 0.0
    %697 = vmatpush.msra.mxu0 0.0
    %698 = vmatpush.msra.mxu0 0.0
    %699 = vmatpush.msra.mxu0 0.0
    %700 = vmatpush.msra.mxu0 0.0
    %701 = vmatpush.msra.mxu0 0.0
    %702 = vmatpush.msra.mxu0 0.0
    %703 = vmatpush.msra.mxu0 0.0
    %704 = vmatpush.msra.mxu0 0.0
    %705 = vmatpush.msra.mxu0 %v149
    %706 = vmatpush.msra.mxu0 %v148
    %707 = vmatpush.msra.mxu0 %v147
    %708 = vmatpush.msra.mxu0 %v146
    %709 = vmatmul.f32.gmra.mxu0 %v292
    %v710 = vpop.f32.mrf.mxu0
    %v711 = vadd.f32 %v691, %v710
    %712 = vdwg.mxu0
    %v714 = vperm.slane %v171, 0
    %716 = vmatpush.msra.mxu0 0.0
    %717 = vmatpush.msra.mxu0 0.0
    %718 = vmatpush.msra.mxu0 0.0
    %719 = vmatpush.msra.mxu0 0.0
    %720 = vmatpush.msra.mxu0 0.0
    %721 = vmatpush.msra.mxu0 0.0
    %722 = vmatpush.msra.mxu0 0.0
    %723 = vmatpush.msra.mxu0 0.0
    %724 = vmatpush.msra.mxu0 0.0
    %725 = vmatpush.msra.mxu0 0.0
    %726 = vmatpush.msra.mxu0 0.0
    %727 = vmatpush.msra.mxu0 0.0
    %728 = vmatpush.msra.mxu0 %v154
    %729 = vmatpush.msra.mxu0 %v153
    %730 = vmatpush.msra.mxu0 %v152
    %731 = vmatpush.msra.mxu0 %v151
    %732 = vmatmul.f32.gmra.mxu0 %v292
    %v733 = vpop.f32.mrf.mxu0
    %v734 = vadd.f32 %v714, %v733
    %735 = vdwg.mxu0
    %v736 = vadd.f32 %v619, %v688
    %v737 = vxor.u32 %v736, 2147483648
    %v738 = vmul.f32 %v737, 1.442695
    %v739 = vpow.pop %v738
    %v740 = vadd.f32 %v739, 1.0
    %v741 = vrcp.pop %v740
    %v742 = vmul.f32 %v740, %v741
    %v743 = vsub.f32 1.0, %v742
    %v744 = vmul.f32 %v741, %v743
    %v745 = vadd.f32 %v741, %v744
    %vm746 = vweird.f32 %v740
    %vm747 = vweird.f32 %v741
    %vm748 = vmor %vm746, %vm747
    %v749 = vsel %vm748, %v741, %v745
    %v750 = vand.u32 2147483647, %v740
    %vm751 = vcmp.eq.f32.partialorder %v750, 8.507059e+37
    %v752 = vand.u32 %v740, 2147483648
    %v753 = vor.u32 1.1754944e-38, %v752
    %v754 = vsel %vm751, %v753, %v749
    %v755 = vmul.f32 1.0, %v754
    %v756 = vadd.f32 %v642, %v711
    %v757 = vxor.u32 %v756, 2147483648
    %v758 = vmul.f32 %v757, 1.442695
    %v759 = vpow.pop %v758
    %v760 = vadd.f32 %v759, 1.0
    %v761 = vrcp.pop %v760
    %v762 = vmul.f32 %v760, %v761
    %v763 = vsub.f32 1.0, %v762
    %v764 = vmul.f32 %v761, %v763
    %v765 = vadd.f32 %v761, %v764
    %vm766 = vweird.f32 %v760
    %vm767 = vweird.f32 %v761
    %vm768 = vmor %vm766, %vm767
    %v769 = vsel %vm768, %v761, %v765
    %v770 = vand.u32 2147483647, %v760
    %vm771 = vcmp.eq.f32.partialorder %v770, 8.507059e+37
    %v772 = vand.u32 %v760, 2147483648
    %v773 = vor.u32 1.1754944e-38, %v772
    %v774 = vsel %vm771, %v773, %v769
    %v775 = vmul.f32 1.0, %v774
    %v776 = vmul.f32 %v755, %v734
    %v777 = vadd.f32 %v665, %v776
    %v778 = vtanh.pop %v777
    %v779 = vsub.f32 1.0, %v775
    %v780 = vmul.f32 %v779, %v778
    %v781 = vmul.f32 %v775, 0.0
    %v782 = vadd.f32 %v780, %v781
    %v784 = vperm.slane %v216, 0
    %v787 = vsel %vm290, %v782, 0
    %789 = vmatpush.msra.mxu0 0.0
    %790 = vmatpush.msra.mxu0 0.0
    %791 = vmatpush.msra.mxu0 0.0
    %792 = vmatpush.msra.mxu0 0.0
    %793 = vmatpush.msra.mxu0 0.0
    %794 = vmatpush.msra.mxu0 0.0
    %795 = vmatpush.msra.mxu0 0.0
    %796 = vmatpush.msra.mxu0 0.0
    %797 = vmatpush.msra.mxu0 0.0
    %798 = vmatpush.msra.mxu0 0.0
    %799 = vmatpush.msra.mxu0 0.0
    %800 = vmatpush.msra.mxu0 0.0
    %801 = vmatpush.msra.mxu0 %v215
    %802 = vmatpush.msra.mxu0 %v214
    %803 = vmatpush.msra.mxu0 %v213
    %804 = vmatpush.msra.mxu0 %v212
    %805 = vmatmul.f32.gmra.mxu0 %v787
    %v806 = vpop.f32.mrf.mxu0
    %v807 = vadd.f32 %v784, %v806
    %808 = vdwg.mxu0
    %v809 = vmax.f32 %v807, 0.0
    %v811 = vperm.slane %v221, 0
    %v814 = vsel %vm290, %v809, 0
    %816 = vmatpush.msra.mxu0 0.0
    %817 = vmatpush.msra.mxu0 0.0
    %818 = vmatpush.msra.mxu0 0.0
    %819 = vmatpush.msra.mxu0 0.0
    %820 = vmatpush.msra.mxu0 0.0
    %821 = vmatpush.msra.mxu0 0.0
    %822 = vmatpush.msra.mxu0 0.0
    %823 = vmatpush.msra.mxu0 0.0
    %824 = vmatpush.msra.mxu0 0.0
    %825 = vmatpush.msra.mxu0 0.0
    %826 = vmatpush.msra.mxu0 0.0
    %827 = vmatpush.msra.mxu0 0.0
    %828 = vmatpush.msra.mxu0 %v220
    %829 = vmatpush.msra.mxu0 %v219
    %830 = vmatpush.msra.mxu0 %v218
    %831 = vmatpush.msra.mxu0 %v217
    %832 = vmatmul.f32.gmra.mxu0 %v814
    %v833 = vpop.f32.mrf.mxu0
    %v834 = vadd.f32 %v811, %v833
    %835 = vdwg.mxu0
    %v836 = vtanh.pop %v834
    %837 = vst.msk [vmem:[%s11] sm:$0xff] %vm223, %v836
    %v839 = vsel %vm223, %v836, 0
    %841 = vmatpush.msra.mxu0 0.0
    %842 = vmatpush.msra.mxu0 0.0
    %843 = vmatpush.msra.mxu0 0.0
    %844 = vmatpush.msra.mxu0 0.0
    %845 = vmatpush.msra.mxu0 0.0
    %846 = vmatpush.msra.mxu0 0.0
    %847 = vmatpush.msra.mxu0 0.0
    %848 = vmatpush.msra.mxu0 0.0
    %849 = vmatpush.msra.mxu0 0.0
    %850 = vmatpush.msra.mxu0 0.0
    %851 = vmatpush.msra.mxu0 0.0
    %852 = vmatpush.msra.mxu0 0.0
    %853 = vmatpush.msra.mxu0 0.0
    %854 = vmatpush.msra.mxu0 0.0
    %855 = vmatpush.msra.mxu0 0.0
    %856 = vmatpush.msra.mxu0 %v101
    %857 = vmatmul.f32.gmra.mxu0 %v839
    %v858 = vpop.f32.mrf.mxu0
    %v859 = vadd.f32 %v106, %v858
    %860 = vdwg.mxu0
    %861 = vmatpush.msra.mxu0 0.0
    %862 = vmatpush.msra.mxu0 0.0
    %863 = vmatpush.msra.mxu0 0.0
    %864 = vmatpush.msra.mxu0 0.0
    %865 = vmatpush.msra.mxu0 0.0
    %866 = vmatpush.msra.mxu0 0.0
    %867 = vmatpush.msra.mxu0 0.0
    %868 = vmatpush.msra.mxu0 0.0
    %869 = vmatpush.msra.mxu0 0.0
    %870 = vmatpush.msra.mxu0 0.0
    %871 = vmatpush.msra.mxu0 0.0
    %872 = vmatpush.msra.mxu0 0.0
    %873 = vmatpush.msra.mxu0 0.0
    %874 = vmatpush.msra.mxu0 0.0
    %875 = vmatpush.msra.mxu0 0.0
    %876 = vmatpush.msra.mxu0 %v103
    %877 = vmatmul.f32.gmra.mxu0 %v839
    %v878 = vpop.f32.mrf.mxu0
    %v879 = vadd.f32 %v108, %v878
    %880 = vdwg.mxu0
    %881 = vmatpush.msra.mxu0 0.0
    %882 = vmatpush.msra.mxu0 0.0
    %883 = vmatpush.msra.mxu0 0.0
    %884 = vmatpush.msra.mxu0 0.0
    %885 = vmatpush.msra.mxu0 0.0
    %886 = vmatpush.msra.mxu0 0.0
    %887 = vmatpush.msra.mxu0 0.0
    %888 = vmatpush.msra.mxu0 0.0
    %889 = vmatpush.msra.mxu0 0.0
    %890 = vmatpush.msra.mxu0 0.0
    %891 = vmatpush.msra.mxu0 0.0
    %892 = vmatpush.msra.mxu0 0.0
    %893 = vmatpush.msra.mxu0 0.0
    %894 = vmatpush.msra.mxu0 0.0
    %895 = vmatpush.msra.mxu0 0.0
    %896 = vmatpush.msra.mxu0 %v105
    %897 = vmatmul.f32.gmra.mxu0 %v839
    %v898 = vpop.f32.mrf.mxu0
    %v899 = vadd.f32 %v110, %v898
    %900 = vdwg.mxu0
    %901 = vmatpush.msra.mxu0 0.0
    %902 = vmatpush.msra.mxu0 0.0
    %903 = vmatpush.msra.mxu0 0.0
    %904 = vmatpush.msra.mxu0 0.0
    %905 = vmatpush.msra.mxu0 0.0
    %906 = vmatpush.msra.mxu0 0.0
    %907 = vmatpush.msra.mxu0 0.0
    %908 = vmatpush.msra.mxu0 0.0
    %909 = vmatpush.msra.mxu0 0.0
    %910 = vmatpush.msra.mxu0 0.0
    %911 = vmatpush.msra.mxu0 0.0
    %912 = vmatpush.msra.mxu0 0.0
    %913 = vmatpush.msra.mxu0 %v114
    %914 = vmatpush.msra.mxu0 %v113
    %915 = vmatpush.msra.mxu0 %v112
    %916 = vmatpush.msra.mxu0 %v111
    %917 = vmatmul.f32.gmra.mxu0 %v411
    %v918 = vpop.f32.mrf.mxu0
    %v919 = vadd.f32 %v288, %v918
    %920 = vdwg.mxu0
    %921 = vmatpush.msra.mxu0 0.0
    %922 = vmatpush.msra.mxu0 0.0
    %923 = vmatpush.msra.mxu0 0.0
    %924 = vmatpush.msra.mxu0 0.0
    %925 = vmatpush.msra.mxu0 0.0
    %926 = vmatpush.msra.mxu0 0.0
    %927 = vmatpush.msra.mxu0 0.0
    %928 = vmatpush.msra.mxu0 0.0
    %929 = vmatpush.msra.mxu0 0.0
    %930 = vmatpush.msra.mxu0 0.0
    %931 = vmatpush.msra.mxu0 0.0
    %932 = vmatpush.msra.mxu0 0.0
    %933 = vmatpush.msra.mxu0 %v119
    %934 = vmatpush.msra.mxu0 %v118
    %935 = vmatpush.msra.mxu0 %v117
    %936 = vmatpush.msra.mxu0 %v116
    %937 = vmatmul.f32.gmra.mxu0 %v411
    %v938 = vpop.f32.mrf.mxu0
    %v939 = vadd.f32 %v315, %v938
    %940 = vdwg.mxu0
    %941 = vmatpush.msra.mxu0 0.0
    %942 = vmatpush.msra.mxu0 0.0
    %943 = vmatpush.msra.mxu0 0.0
    %944 = vmatpush.msra.mxu0 0.0
    %945 = vmatpush.msra.mxu0 0.0
    %946 = vmatpush.msra.mxu0 0.0
    %947 = vmatpush.msra.mxu0 0.0
    %948 = vmatpush.msra.mxu0 0.0
    %949 = vmatpush.msra.mxu0 0.0
    %950 = vmatpush.msra.mxu0 0.0
    %951 = vmatpush.msra.mxu0 0.0
    %952 = vmatpush.msra.mxu0 0.0
    %953 = vmatpush.msra.mxu0 %v124
    %954 = vmatpush.msra.mxu0 %v123
    %955 = vmatpush.msra.mxu0 %v122
    %956 = vmatpush.msra.mxu0 %v121
    %957 = vmatmul.f32.gmra.mxu0 %v411
    %v958 = vpop.f32.mrf.mxu0
    %v959 = vadd.f32 %v338, %v958
    %960 = vdwg.mxu0
    %v961 = vadd.f32 %v859, %v919
    %v962 = vxor.u32 %v961, 2147483648
    %v963 = vmul.f32 %v962, 1.442695
    %v964 = vpow.pop %v963
    %v965 = vadd.f32 %v964, 1.0
    %v966 = vrcp.pop %v965
    %v967 = vmul.f32 %v965, %v966
    %v968 = vsub.f32 1.0, %v967
    %v969 = vmul.f32 %v966, %v968
    %v970 = vadd.f32 %v966, %v969
    %vm971 = vweird.f32 %v965
    %vm972 = vweird.f32 %v966
    %vm973 = vmor %vm971, %vm972
    %v974 = vsel %vm973, %v966, %v970
    %v975 = vand.u32 2147483647, %v965
    %vm976 = vcmp.eq.f32.partialorder %v975, 8.507059e+37
    %v977 = vand.u32 %v965, 2147483648
    %v978 = vor.u32 1.1754944e-38, %v977
    %v979 = vsel %vm976, %v978, %v974
    %v980 = vmul.f32 1.0, %v979
    %v981 = vadd.f32 %v879, %v939
    %v982 = vxor.u32 %v981, 2147483648
    %v983 = vmul.f32 %v982, 1.442695
    %v984 = vpow.pop %v983
    %v985 = vadd.f32 %v984, 1.0
    %v986 = vrcp.pop %v985
    %v987 = vmul.f32 %v985, %v986
    %v988 = vsub.f32 1.0, %v987
    %v989 = vmul.f32 %v986, %v988
    %v990 = vadd.f32 %v986, %v989
    %vm991 = vweird.f32 %v985
    %vm992 = vweird.f32 %v986
    %vm993 = vmor %vm991, %vm992
    %v994 = vsel %vm993, %v986, %v990
    %v995 = vand.u32 2147483647, %v985
    %vm996 = vcmp.eq.f32.partialorder %v995, 8.507059e+37
    %v997 = vand.u32 %v985, 2147483648
    %v998 = vor.u32 1.1754944e-38, %v997
    %v999 = vsel %vm996, %v998, %v994
    %v1000 = vmul.f32 1.0, %v999
    %v1001 = vmul.f32 %v980, %v959
    %v1002 = vadd.f32 %v899, %v1001
    %v1003 = vtanh.pop %v1002
    %v1004 = vsub.f32 1.0, %v1000
    %v1005 = vmul.f32 %v1004, %v1003
    %v1006 = vmul.f32 %v1000, %v406
    %v1007 = vadd.f32 %v1005, %v1006
    %v1009 = vsel %vm290, %v1007, 0
    %1011 = vmatpush.msra.mxu0 0.0
    %1012 = vmatpush.msra.mxu0 0.0
    %1013 = vmatpush.msra.mxu0 0.0
    %1014 = vmatpush.msra.mxu0 0.0
    %1015 = vmatpush.msra.mxu0 0.0
    %1016 = vmatpush.msra.mxu0 0.0
    %1017 = vmatpush.msra.mxu0 0.0
    %1018 = vmatpush.msra.mxu0 0.0
    %1019 = vmatpush.msra.mxu0 0.0
    %1020 = vmatpush.msra.mxu0 0.0
    %1021 = vmatpush.msra.mxu0 0.0
    %1022 = vmatpush.msra.mxu0 0.0
    %1023 = vmatpush.msra.mxu0 %v175
    %1024 = vmatpush.msra.mxu0 %v174
    %1025 = vmatpush.msra.mxu0 %v173
    %1026 = vmatpush.msra.mxu0 %v172
    %1027 = vmatmul.f32.gmra.mxu0 %v1009
    %v1028 = vpop.f32.mrf.mxu0
    %v1029 = vadd.f32 %v408, %v1028
    %1030 = vdwg.mxu0
    %1031 = vmatpush.msra.mxu0 0.0
    %1032 = vmatpush.msra.mxu0 0.0
    %1033 = vmatpush.msra.mxu0 0.0
    %1034 = vmatpush.msra.mxu0 0.0
    %1035 = vmatpush.msra.mxu0 0.0
    %1036 = vmatpush.msra.mxu0 0.0
    %1037 = vmatpush.msra.mxu0 0.0
    %1038 = vmatpush.msra.mxu0 0.0
    %1039 = vmatpush.msra.mxu0 0.0
    %1040 = vmatpush.msra.mxu0 0.0
    %1041 = vmatpush.msra.mxu0 0.0
    %1042 = vmatpush.msra.mxu0 0.0
    %1043 = vmatpush.msra.mxu0 %v180
    %1044 = vmatpush.msra.mxu0 %v179
    %1045 = vmatpush.msra.mxu0 %v178
    %1046 = vmatpush.msra.mxu0 %v177
    %1047 = vmatmul.f32.gmra.mxu0 %v1009
    %v1048 = vpop.f32.mrf.mxu0
    %v1049 = vadd.f32 %v434, %v1048
    %1050 = vdwg.mxu0
    %1051 = vmatpush.msra.mxu0 0.0
    %1052 = vmatpush.msra.mxu0 0.0
    %1053 = vmatpush.msra.mxu0 0.0
    %1054 = vmatpush.msra.mxu0 0.0
    %1055 = vmatpush.msra.mxu0 0.0
    %1056 = vmatpush.msra.mxu0 0.0
    %1057 = vmatpush.msra.mxu0 0.0
    %1058 = vmatpush.msra.mxu0 0.0
    %1059 = vmatpush.msra.mxu0 0.0
    %1060 = vmatpush.msra.mxu0 0.0
    %1061 = vmatpush.msra.mxu0 0.0
    %1062 = vmatpush.msra.mxu0 0.0
    %1063 = vmatpush.msra.mxu0 %v185
    %1064 = vmatpush.msra.mxu0 %v184
    %1065 = vmatpush.msra.mxu0 %v183
    %1066 = vmatpush.msra.mxu0 %v182
    %1067 = vmatmul.f32.gmra.mxu0 %v1009
    %v1068 = vpop.f32.mrf.mxu0
    %v1069 = vadd.f32 %v457, %v1068
    %1070 = vdwg.mxu0
    %1071 = vmatpush.msra.mxu0 0.0
    %1072 = vmatpush.msra.mxu0 0.0
    %1073 = vmatpush.msra.mxu0 0.0
    %1074 = vmatpush.msra.mxu0 0.0
    %1075 = vmatpush.msra.mxu0 0.0
    %1076 = vmatpush.msra.mxu0 0.0
    %1077 = vmatpush.msra.mxu0 0.0
    %1078 = vmatpush.msra.mxu0 0.0
    %1079 = vmatpush.msra.mxu0 0.0
    %1080 = vmatpush.msra.mxu0 0.0
    %1081 = vmatpush.msra.mxu0 0.0
    %1082 = vmatpush.msra.mxu0 0.0
    %1083 = vmatpush.msra.mxu0 %v129
    %1084 = vmatpush.msra.mxu0 %v128
    %1085 = vmatpush.msra.mxu0 %v127
    %1086 = vmatpush.msra.mxu0 %v126
    %1087 = vmatmul.f32.gmra.mxu0 %v599
    %v1088 = vpop.f32.mrf.mxu0
    %v1089 = vadd.f32 %v480, %v1088
    %1090 = vdwg.mxu0
    %1091 = vmatpush.msra.mxu0 0.0
    %1092 = vmatpush.msra.mxu0 0.0
    %1093 = vmatpush.msra.mxu0 0.0
    %1094 = vmatpush.msra.mxu0 0.0
    %1095 = vmatpush.msra.mxu0 0.0
    %1096 = vmatpush.msra.mxu0 0.0
    %1097 = vmatpush.msra.mxu0 0.0
    %1098 = vmatpush.msra.mxu0 0.0
    %1099 = vmatpush.msra.mxu0 0.0
    %1100 = vmatpush.msra.mxu0 0.0
    %1101 = vmatpush.msra.mxu0 0.0
    %1102 = vmatpush.msra.mxu0 0.0
    %1103 = vmatpush.msra.mxu0 %v134
    %1104 = vmatpush.msra.mxu0 %v133
    %1105 = vmatpush.msra.mxu0 %v132
    %1106 = vmatpush.msra.mxu0 %v131
    %1107 = vmatmul.f32.gmra.mxu0 %v599
    %v1108 = vpop.f32.mrf.mxu0
    %v1109 = vadd.f32 %v503, %v1108
    %1110 = vdwg.mxu0
    %1111 = vmatpush.msra.mxu0 0.0
    %1112 = vmatpush.msra.mxu0 0.0
    %1113 = vmatpush.msra.mxu0 0.0
    %1114 = vmatpush.msra.mxu0 0.0
    %1115 = vmatpush.msra.mxu0 0.0
    %1116 = vmatpush.msra.mxu0 0.0
    %1117 = vmatpush.msra.mxu0 0.0
    %1118 = vmatpush.msra.mxu0 0.0
    %1119 = vmatpush.msra.mxu0 0.0
    %1120 = vmatpush.msra.mxu0 0.0
    %1121 = vmatpush.msra.mxu0 0.0
    %1122 = vmatpush.msra.mxu0 0.0
    %1123 = vmatpush.msra.mxu0 %v139
    %1124 = vmatpush.msra.mxu0 %v138
    %1125 = vmatpush.msra.mxu0 %v137
    %1126 = vmatpush.msra.mxu0 %v136
    %1127 = vmatmul.f32.gmra.mxu0 %v599
    %v1128 = vpop.f32.mrf.mxu0
    %v1129 = vadd.f32 %v526, %v1128
    %1130 = vdwg.mxu0
    %v1131 = vadd.f32 %v1029, %v1089
    %v1132 = vxor.u32 %v1131, 2147483648
    %v1133 = vmul.f32 %v1132, 1.442695
    %v1134 = vpow.pop %v1133
    %v1135 = vadd.f32 %v1134, 1.0
    %v1136 = vrcp.pop %v1135
    %v1137 = vmul.f32 %v1135, %v1136
    %v1138 = vsub.f32 1.0, %v1137
    %v1139 = vmul.f32 %v1136, %v1138
    %v1140 = vadd.f32 %v1136, %v1139
    %vm1141 = vweird.f32 %v1135
    %vm1142 = vweird.f32 %v1136
    %vm1143 = vmor %vm1141, %vm1142
    %v1144 = vsel %vm1143, %v1136, %v1140
    %v1145 = vand.u32 2147483647, %v1135
    %vm1146 = vcmp.eq.f32.partialorder %v1145, 8.507059e+37
    %v1147 = vand.u32 %v1135, 2147483648
    %v1148 = vor.u32 1.1754944e-38, %v1147
    %v1149 = vsel %vm1146, %v1148, %v1144
    %v1150 = vmul.f32 1.0, %v1149
    %v1151 = vadd.f32 %v1049, %v1109
    %v1152 = vxor.u32 %v1151, 2147483648
    %v1153 = vmul.f32 %v1152, 1.442695
    %v1154 = vpow.pop %v1153
    %v1155 = vadd.f32 %v1154, 1.0
    %v1156 = vrcp.pop %v1155
    %v1157 = vmul.f32 %v1155, %v1156
    %v1158 = vsub.f32 1.0, %v1157
    %v1159 = vmul.f32 %v1156, %v1158
    %v1160 = vadd.f32 %v1156, %v1159
    %vm1161 = vweird.f32 %v1155
    %vm1162 = vweird.f32 %v1156
    %vm1163 = vmor %vm1161, %vm1162
    %v1164 = vsel %vm1163, %v1156, %v1160
    %v1165 = vand.u32 2147483647, %v1155
    %vm1166 = vcmp.eq.f32.partialorder %v1165, 8.507059e+37
    %v1167 = vand.u32 %v1155, 2147483648
    %v1168 = vor.u32 1.1754944e-38, %v1167
    %v1169 = vsel %vm1166, %v1168, %v1164
    %v1170 = vmul.f32 1.0, %v1169
    %v1171 = vmul.f32 %v1150, %v1129
    %v1172 = vadd.f32 %v1069, %v1171
    %v1173 = vtanh.pop %v1172
    %v1174 = vsub.f32 1.0, %v1170
    %v1175 = vmul.f32 %v1174, %v1173
    %v1176 = vmul.f32 %v1170, %v594
    %v1177 = vadd.f32 %v1175, %v1176
    %v1179 = vsel %vm290, %v1177, 0
    %1181 = vmatpush.msra.mxu0 0.0
    %1182 = vmatpush.msra.mxu0 0.0
    %1183 = vmatpush.msra.mxu0 0.0
    %1184 = vmatpush.msra.mxu0 0.0
    %1185 = vmatpush.msra.mxu0 0.0
    %1186 = vmatpush.msra.mxu0 0.0
    %1187 = vmatpush.msra.mxu0 0.0
    %1188 = vmatpush.msra.mxu0 0.0
    %1189 = vmatpush.msra.mxu0 0.0
    %1190 = vmatpush.msra.mxu0 0.0
    %1191 = vmatpush.msra.mxu0 0.0
    %1192 = vmatpush.msra.mxu0 0.0
    %1193 = vmatpush.msra.mxu0 %v190
    %1194 = vmatpush.msra.mxu0 %v189
    %1195 = vmatpush.msra.mxu0 %v188
    %1196 = vmatpush.msra.mxu0 %v187
    %1197 = vmatmul.f32.gmra.mxu0 %v1179
    %v1198 = vpop.f32.mrf.mxu0
    %v1199 = vadd.f32 %v596, %v1198
    %1200 = vdwg.mxu0
    %1201 = vmatpush.msra.mxu0 0.0
    %1202 = vmatpush.msra.mxu0 0.0
    %1203 = vmatpush.msra.mxu0 0.0
    %1204 = vmatpush.msra.mxu0 0.0
    %1205 = vmatpush.msra.mxu0 0.0
    %1206 = vmatpush.msra.mxu0 0.0
    %1207 = vmatpush.msra.mxu0 0.0
    %1208 = vmatpush.msra.mxu0 0.0
    %1209 = vmatpush.msra.mxu0 0.0
    %1210 = vmatpush.msra.mxu0 0.0
    %1211 = vmatpush.msra.mxu0 0.0
    %1212 = vmatpush.msra.mxu0 0.0
    %1213 = vmatpush.msra.mxu0 %v195
    %1214 = vmatpush.msra.mxu0 %v194
    %1215 = vmatpush.msra.mxu0 %v193
    %1216 = vmatpush.msra.mxu0 %v192
    %1217 = vmatmul.f32.gmra.mxu0 %v1179
    %v1218 = vpop.f32.mrf.mxu0
    %v1219 = vadd.f32 %v622, %v1218
    %1220 = vdwg.mxu0
    %1221 = vmatpush.msra.mxu0 0.0
    %1222 = vmatpush.msra.mxu0 0.0
    %1223 = vmatpush.msra.mxu0 0.0
    %1224 = vmatpush.msra.mxu0 0.0
    %1225 = vmatpush.msra.mxu0 0.0
    %1226 = vmatpush.msra.mxu0 0.0
    %1227 = vmatpush.msra.mxu0 0.0
    %1228 = vmatpush.msra.mxu0 0.0
    %1229 = vmatpush.msra.mxu0 0.0
    %1230 = vmatpush.msra.mxu0 0.0
    %1231 = vmatpush.msra.mxu0 0.0
    %1232 = vmatpush.msra.mxu0 0.0
    %1233 = vmatpush.msra.mxu0 %v200
    %1234 = vmatpush.msra.mxu0 %v199
    %1235 = vmatpush.msra.mxu0 %v198
    %1236 = vmatpush.msra.mxu0 %v197
    %1237 = vmatmul.f32.gmra.mxu0 %v1179
    %v1238 = vpop.f32.mrf.mxu0
    %v1239 = vadd.f32 %v645, %v1238
    %1240 = vdwg.mxu0
    %1241 = vmatpush.msra.mxu0 0.0
    %1242 = vmatpush.msra.mxu0 0.0
    %1243 = vmatpush.msra.mxu0 0.0
    %1244 = vmatpush.msra.mxu0 0.0
    %1245 = vmatpush.msra.mxu0 0.0
    %1246 = vmatpush.msra.mxu0 0.0
    %1247 = vmatpush.msra.mxu0 0.0
    %1248 = vmatpush.msra.mxu0 0.0
    %1249 = vmatpush.msra.mxu0 0.0
    %1250 = vmatpush.msra.mxu0 0.0
    %1251 = vmatpush.msra.mxu0 0.0
    %1252 = vmatpush.msra.mxu0 0.0
    %1253 = vmatpush.msra.mxu0 %v144
    %1254 = vmatpush.msra.mxu0 %v143
    %1255 = vmatpush.msra.mxu0 %v142
    %1256 = vmatpush.msra.mxu0 %v141
    %1257 = vmatmul.f32.gmra.mxu0 %v787
    %v1258 = vpop.f32.mrf.mxu0
    %v1259 = vadd.f32 %v668, %v1258
    %1260 = vdwg.mxu0
    %1261 = vmatpush.msra.mxu0 0.0
    %1262 = vmatpush.msra.mxu0 0.0
    %1263 = vmatpush.msra.mxu0 0.0
    %1264 = vmatpush.msra.mxu0 0.0
    %1265 = vmatpush.msra.mxu0 0.0
    %1266 = vmatpush.msra.mxu0 0.0
    %1267 = vmatpush.msra.mxu0 0.0
    %1268 = vmatpush.msra.mxu0 0.0
    %1269 = vmatpush.msra.mxu0 0.0
    %1270 = vmatpush.msra.mxu0 0.0
    %1271 = vmatpush.msra.mxu0 0.0
    %1272 = vmatpush.msra.mxu0 0.0
    %1273 = vmatpush.msra.mxu0 %v149
    %1274 = vmatpush.msra.mxu0 %v148
    %1275 = vmatpush.msra.mxu0 %v147
    %1276 = vmatpush.msra.mxu0 %v146
    %1277 = vmatmul.f32.gmra.mxu0 %v787
    %v1278 = vpop.f32.mrf.mxu0
    %v1279 = vadd.f32 %v691, %v1278
    %1280 = vdwg.mxu0
    %1281 = vmatpush.msra.mxu0 0.0
    %1282 = vmatpush.msra.mxu0 0.0
    %1283 = vmatpush.msra.mxu0 0.0
    %1284 = vmatpush.msra.mxu0 0.0
    %1285 = vmatpush.msra.mxu0 0.0
    %1286 = vmatpush.msra.mxu0 0.0
    %1287 = vmatpush.msra.mxu0 0.0
    %1288 = vmatpush.msra.mxu0 0.0
    %1289 = vmatpush.msra.mxu0 0.0
    %1290 = vmatpush.msra.mxu0 0.0
    %1291 = vmatpush.msra.mxu0 0.0
    %1292 = vmatpush.msra.mxu0 0.0
    %1293 = vmatpush.msra.mxu0 %v154
    %1294 = vmatpush.msra.mxu0 %v153
    %1295 = vmatpush.msra.mxu0 %v152
    %1296 = vmatpush.msra.mxu0 %v151
    %1297 = vmatmul.f32.gmra.mxu0 %v787
    %v1298 = vpop.f32.mrf.mxu0
    %v1299 = vadd.f32 %v714, %v1298
    %1300 = vdwg.mxu0
    %v1301 = vadd.f32 %v1199, %v1259
    %v1302 = vxor.u32 %v1301, 2147483648
    %v1303 = vmul.f32 %v1302, 1.442695
    %v1304 = vpow.pop %v1303
    %v1305 = vadd.f32 %v1304, 1.0
    %v1306 = vrcp.pop %v1305
    %v1307 = vmul.f32 %v1305, %v1306
    %v1308 = vsub.f32 1.0, %v1307
    %v1309 = vmul.f32 %v1306, %v1308
    %v1310 = vadd.f32 %v1306, %v1309
    %vm1311 = vweird.f32 %v1305
    %vm1312 = vweird.f32 %v1306
    %vm1313 = vmor %vm1311, %vm1312
    %v1314 = vsel %vm1313, %v1306, %v1310
    %v1315 = vand.u32 2147483647, %v1305
    %vm1316 = vcmp.eq.f32.partialorder %v1315, 8.507059e+37
    %v1317 = vand.u32 %v1305, 2147483648
    %v1318 = vor.u32 1.1754944e-38, %v1317
    %v1319 = vsel %vm1316, %v1318, %v1314
    %v1320 = vmul.f32 1.0, %v1319
    %v1321 = vadd.f32 %v1219, %v1279
    %v1322 = vxor.u32 %v1321, 2147483648
    %v1323 = vmul.f32 %v1322, 1.442695
    %v1324 = vpow.pop %v1323
    %v1325 = vadd.f32 %v1324, 1.0
    %v1326 = vrcp.pop %v1325
    %v1327 = vmul.f32 %v1325, %v1326
    %v1328 = vsub.f32 1.0, %v1327
    %v1329 = vmul.f32 %v1326, %v1328
    %v1330 = vadd.f32 %v1326, %v1329
    %vm1331 = vweird.f32 %v1325
    %vm1332 = vweird.f32 %v1326
    %vm1333 = vmor %vm1331, %vm1332
    %v1334 = vsel %vm1333, %v1326, %v1330
    %v1335 = vand.u32 2147483647, %v1325
    %vm1336 = vcmp.eq.f32.partialorder %v1335, 8.507059e+37
    %v1337 = vand.u32 %v1325, 2147483648
    %v1338 = vor.u32 1.1754944e-38, %v1337
    %v1339 = vsel %vm1336, %v1338, %v1334
    %v1340 = vmul.f32 1.0, %v1339
    %v1341 = vmul.f32 %v1320, %v1299
    %v1342 = vadd.f32 %v1239, %v1341
    %v1343 = vtanh.pop %v1342
    %v1344 = vsub.f32 1.0, %v1340
    %v1345 = vmul.f32 %v1344, %v1343
    %v1346 = vmul.f32 %v1340, %v782
    %v1347 = vadd.f32 %v1345, %v1346
    %v1349 = vsel %vm290, %v1347, 0
    %1351 = vmatpush.msra.mxu0 0.0
    %1352 = vmatpush.msra.mxu0 0.0
    %1353 = vmatpush.msra.mxu0 0.0
    %1354 = vmatpush.msra.mxu0 0.0
    %1355 = vmatpush.msra.mxu0 0.0
    %1356 = vmatpush.msra.mxu0 0.0
    %1357 = vmatpush.msra.mxu0 0.0
    %1358 = vmatpush.msra.mxu0 0.0
    %1359 = vmatpush.msra.mxu0 0.0
    %1360 = vmatpush.msra.mxu0 0.0
    %1361 = vmatpush.msra.mxu0 0.0
    %1362 = vmatpush.msra.mxu0 0.0
    %1363 = vmatpush.msra.mxu0 %v215
    %1364 = vmatpush.msra.mxu0 %v214
    %1365 = vmatpush.msra.mxu0 %v213
    %1366 = vmatpush.msra.mxu0 %v212
    %1367 = vmatmul.f32.gmra.mxu0 %v1349
    %v1368 = vpop.f32.mrf.mxu0
    %v1369 = vadd.f32 %v784, %v1368
    %1370 = vdwg.mxu0
    %v1371 = vmax.f32 %v1369, 0.0
    %v1373 = vsel %vm290, %v1371, 0
    %1375 = vmatpush.msra.mxu0 0.0
    %1376 = vmatpush.msra.mxu0 0.0
    %1377 = vmatpush.msra.mxu0 0.0
    %1378 = vmatpush.msra.mxu0 0.0
    %1379 = vmatpush.msra.mxu0 0.0
    %1380 = vmatpush.msra.mxu0 0.0
    %1381 = vmatpush.msra.mxu0 0.0
    %1382 = vmatpush.msra.mxu0 0.0
    %1383 = vmatpush.msra.mxu0 0.0
    %1384 = vmatpush.msra.mxu0 0.0
    %1385 = vmatpush.msra.mxu0 0.0
    %1386 = vmatpush.msra.mxu0 0.0
    %1387 = vmatpush.msra.mxu0 %v220
    %1388 = vmatpush.msra.mxu0 %v219
    %1389 = vmatpush.msra.mxu0 %v218
    %1390 = vmatpush.msra.mxu0 %v217
    %1391 = vmatmul.f32.gmra.mxu0 %v1373
    %v1392 = vpop.f32.mrf.mxu0
    %v1393 = vadd.f32 %v811, %v1392
    %1394 = vdwg.mxu0
    %v1395 = vtanh.pop %v1393
    %1397 = vrot.lane.b32.xlu0 %v1395, 8
    %v1398 = vpop.permute.xlu0 %1397
    %vm1400 = vcmask 130112
    %1401 = vst.msk [vmem:[%s11] sm:$0xff] %vm1400, %v1398
    %v1402 = vsel %vm223, %v1395, 0
    %1404 = vmatpush.msra.mxu0 0.0
    %1405 = vmatpush.msra.mxu0 0.0
    %1406 = vmatpush.msra.mxu0 0.0
    %1407 = vmatpush.msra.mxu0 0.0
    %1408 = vmatpush.msra.mxu0 0.0
    %1409 = vmatpush.msra.mxu0 0.0
    %1410 = vmatpush.msra.mxu0 0.0
    %1411 = vmatpush.msra.mxu0 0.0
    %1412 = vmatpush.msra.mxu0 0.0
    %1413 = vmatpush.msra.mxu0 0.0
    %1414 = vmatpush.msra.mxu0 0.0
    %1415 = vmatpush.msra.mxu0 0.0
    %1416 = vmatpush.msra.mxu0 0.0
    %1417 = vmatpush.msra.mxu0 0.0
    %1418 = vmatpush.msra.mxu0 0.0
    %1419 = vmatpush.msra.mxu0 %v101
    %1420 = vmatmul.f32.gmra.mxu0 %v1402
    %v1421 = vpop.f32.mrf.mxu0
    %v1422 = vadd.f32 %v106, %v1421
    %1423 = vdwg.mxu0
    %1424 = vmatpush.msra.mxu0 0.0
    %1425 = vmatpush.msra.mxu0 0.0
    %1426 = vmatpush.msra.mxu0 0.0
    %1427 = vmatpush.msra.mxu0 0.0
    %1428 = vmatpush.msra.mxu0 0.0
    %1429 = vmatpush.msra.mxu0 0.0
    %1430 = vmatpush.msra.mxu0 0.0
    %1431 = vmatpush.msra.mxu0 0.0
    %1432 = vmatpush.msra.mxu0 0.0
    %1433 = vmatpush.msra.mxu0 0.0
    %1434 = vmatpush.msra.mxu0 0.0
    %1435 = vmatpush.msra.mxu0 0.0
    %1436 = vmatpush.msra.mxu0 0.0
    %1437 = vmatpush.msra.mxu0 0.0
    %1438 = vmatpush.msra.mxu0 0.0
    %1439 = vmatpush.msra.mxu0 %v103
    %1440 = vmatmul.f32.gmra.mxu0 %v1402
    %v1441 = vpop.f32.mrf.mxu0
    %v1442 = vadd.f32 %v108, %v1441
    %1443 = vdwg.mxu0
    %1444 = vmatpush.msra.mxu0 0.0
    %1445 = vmatpush.msra.mxu0 0.0
    %1446 = vmatpush.msra.mxu0 0.0
    %1447 = vmatpush.msra.mxu0 0.0
    %1448 = vmatpush.msra.mxu0 0.0
    %1449 = vmatpush.msra.mxu0 0.0
    %1450 = vmatpush.msra.mxu0 0.0
    %1451 = vmatpush.msra.mxu0 0.0
    %1452 = vmatpush.msra.mxu0 0.0
    %1453 = vmatpush.msra.mxu0 0.0
    %1454 = vmatpush.msra.mxu0 0.0
    %1455 = vmatpush.msra.mxu0 0.0
    %1456 = vmatpush.msra.mxu0 0.0
    %1457 = vmatpush.msra.mxu0 0.0
    %1458 = vmatpush.msra.mxu0 0.0
    %1459 = vmatpush.msra.mxu0 %v105
    %1460 = vmatmul.f32.gmra.mxu0 %v1402
    %v1461 = vpop.f32.mrf.mxu0
    %v1462 = vadd.f32 %v110, %v1461
    %1463 = vdwg.mxu0
    %1464 = vmatpush.msra.mxu0 0.0
    %1465 = vmatpush.msra.mxu0 0.0
    %1466 = vmatpush.msra.mxu0 0.0
    %1467 = vmatpush.msra.mxu0 0.0
    %1468 = vmatpush.msra.mxu0 0.0
    %1469 = vmatpush.msra.mxu0 0.0
    %1470 = vmatpush.msra.mxu0 0.0
    %1471 = vmatpush.msra.mxu0 0.0
    %1472 = vmatpush.msra.mxu0 0.0
    %1473 = vmatpush.msra.mxu0 0.0
    %1474 = vmatpush.msra.mxu0 0.0
    %1475 = vmatpush.msra.mxu0 0.0
    %1476 = vmatpush.msra.mxu0 %v114
    %1477 = vmatpush.msra.mxu0 %v113
    %1478 = vmatpush.msra.mxu0 %v112
    %1479 = vmatpush.msra.mxu0 %v111
    %1480 = vmatmul.f32.gmra.mxu0 %v1009
    %v1481 = vpop.f32.mrf.mxu0
    %v1482 = vadd.f32 %v288, %v1481
    %1483 = vdwg.mxu0
    %1484 = vmatpush.msra.mxu0 0.0
    %1485 = vmatpush.msra.mxu0 0.0
    %1486 = vmatpush.msra.mxu0 0.0
    %1487 = vmatpush.msra.mxu0 0.0
    %1488 = vmatpush.msra.mxu0 0.0
    %1489 = vmatpush.msra.mxu0 0.0
    %1490 = vmatpush.msra.mxu0 0.0
    %1491 = vmatpush.msra.mxu0 0.0
    %1492 = vmatpush.msra.mxu0 0.0
    %1493 = vmatpush.msra.mxu0 0.0
    %1494 = vmatpush.msra.mxu0 0.0
    %1495 = vmatpush.msra.mxu0 0.0
    %1496 = vmatpush.msra.mxu0 %v119
    %1497 = vmatpush.msra.mxu0 %v118
    %1498 = vmatpush.msra.mxu0 %v117
    %1499 = vmatpush.msra.mxu0 %v116
    %1500 = vmatmul.f32.gmra.mxu0 %v1009
    %v1501 = vpop.f32.mrf.mxu0
    %v1502 = vadd.f32 %v315, %v1501
    %1503 = vdwg.mxu0
    %1504 = vmatpush.msra.mxu0 0.0
    %1505 = vmatpush.msra.mxu0 0.0
    %1506 = vmatpush.msra.mxu0 0.0
    %1507 = vmatpush.msra.mxu0 0.0
    %1508 = vmatpush.msra.mxu0 0.0
    %1509 = vmatpush.msra.mxu0 0.0
    %1510 = vmatpush.msra.mxu0 0.0
    %1511 = vmatpush.msra.mxu0 0.0
    %1512 = vmatpush.msra.mxu0 0.0
    %1513 = vmatpush.msra.mxu0 0.0
    %1514 = vmatpush.msra.mxu0 0.0
    %1515 = vmatpush.msra.mxu0 0.0
    %1516 = vmatpush.msra.mxu0 %v124
    %1517 = vmatpush.msra.mxu0 %v123
    %1518 = vmatpush.msra.mxu0 %v122
    %1519 = vmatpush.msra.mxu0 %v121
    %1520 = vmatmul.f32.gmra.mxu0 %v1009
    %v1521 = vpop.f32.mrf.mxu0
    %v1522 = vadd.f32 %v338, %v1521
    %1523 = vdwg.mxu0
    %v1524 = vadd.f32 %v1422, %v1482
    %v1525 = vxor.u32 %v1524, 2147483648
    %v1526 = vmul.f32 %v1525, 1.442695
    %v1527 = vpow.pop %v1526
    %v1528 = vadd.f32 %v1527, 1.0
    %v1529 = vrcp.pop %v1528
    %v1530 = vmul.f32 %v1528, %v1529
    %v1531 = vsub.f32 1.0, %v1530
    %v1532 = vmul.f32 %v1529, %v1531
    %v1533 = vadd.f32 %v1529, %v1532
    %vm1534 = vweird.f32 %v1528
    %vm1535 = vweird.f32 %v1529
    %vm1536 = vmor %vm1534, %vm1535
    %v1537 = vsel %vm1536, %v1529, %v1533
    %v1538 = vand.u32 2147483647, %v1528
    %vm1539 = vcmp.eq.f32.partialorder %v1538, 8.507059e+37
    %v1540 = vand.u32 %v1528, 2147483648
    %v1541 = vor.u32 1.1754944e-38, %v1540
    %v1542 = vsel %vm1539, %v1541, %v1537
    %v1543 = vmul.f32 1.0, %v1542
    %v1544 = vadd.f32 %v1442, %v1502
    %v1545 = vxor.u32 %v1544, 2147483648
    %v1546 = vmul.f32 %v1545, 1.442695
    %v1547 = vpow.pop %v1546
    %v1548 = vadd.f32 %v1547, 1.0
    %v1549 = vrcp.pop %v1548
    %v1550 = vmul.f32 %v1548, %v1549
    %v1551 = vsub.f32 1.0, %v1550
    %v1552 = vmul.f32 %v1549, %v1551
    %v1553 = vadd.f32 %v1549, %v1552
    %vm1554 = vweird.f32 %v1548
    %vm1555 = vweird.f32 %v1549
    %vm1556 = vmor %vm1554, %vm1555
    %v1557 = vsel %vm1556, %v1549, %v1553
    %v1558 = vand.u32 2147483647, %v1548
    %vm1559 = vcmp.eq.f32.partialorder %v1558, 8.507059e+37
    %v1560 = vand.u32 %v1548, 2147483648
    %v1561 = vor.u32 1.1754944e-38, %v1560
    %v1562 = vsel %vm1559, %v1561, %v1557
    %v1563 = vmul.f32 1.0, %v1562
    %v1564 = vmul.f32 %v1543, %v1522
    %v1565 = vadd.f32 %v1462, %v1564
    %v1566 = vtanh.pop %v1565
    %v1567 = vsub.f32 1.0, %v1563
    %v1568 = vmul.f32 %v1567, %v1566
    %v1569 = vmul.f32 %v1563, %v1007
    %v1570 = vadd.f32 %v1568, %v1569
    %v1572 = vsel %vm290, %v1570, 0
    %1574 = vmatpush.msra.mxu0 0.0
    %1575 = vmatpush.msra.mxu0 0.0
    %1576 = vmatpush.msra.mxu0 0.0
    %1577 = vmatpush.msra.mxu0 0.0
    %1578 = vmatpush.msra.mxu0 0.0
    %1579 = vmatpush.msra.mxu0 0.0
    %1580 = vmatpush.msra.mxu0 0.0
    %1581 = vmatpush.msra.mxu0 0.0
    %1582 = vmatpush.msra.mxu0 0.0
    %1583 = vmatpush.msra.mxu0 0.0
    %1584 = vmatpush.msra.mxu0 0.0
    %1585 = vmatpush.msra.mxu0 0.0
    %1586 = vmatpush.msra.mxu0 %v175
    %1587 = vmatpush.msra.mxu0 %v174
    %1588 = vmatpush.msra.mxu0 %v173
    %1589 = vmatpush.msra.mxu0 %v172
    %1590 = vmatmul.f32.gmra.mxu0 %v1572
    %v1591 = vpop.f32.mrf.mxu0
    %v1592 = vadd.f32 %v408, %v1591
    %1593 = vdwg.mxu0
    %1594 = vmatpush.msra.mxu0 0.0
    %1595 = vmatpush.msra.mxu0 0.0
    %1596 = vmatpush.msra.mxu0 0.0
    %1597 = vmatpush.msra.mxu0 0.0
    %1598 = vmatpush.msra.mxu0 0.0
    %1599 = vmatpush.msra.mxu0 0.0
    %1600 = vmatpush.msra.mxu0 0.0
    %1601 = vmatpush.msra.mxu0 0.0
    %1602 = vmatpush.msra.mxu0 0.0
    %1603 = vmatpush.msra.mxu0 0.0
    %1604 = vmatpush.msra.mxu0 0.0
    %1605 = vmatpush.msra.mxu0 0.0
    %1606 = vmatpush.msra.mxu0 %v180
    %1607 = vmatpush.msra.mxu0 %v179
    %1608 = vmatpush.msra.mxu0 %v178
    %1609 = vmatpush.msra.mxu0 %v177
    %1610 = vmatmul.f32.gmra.mxu0 %v1572
    %v1611 = vpop.f32.mrf.mxu0
    %v1612 = vadd.f32 %v434, %v1611
    %1613 = vdwg.mxu0
    %1614 = vmatpush.msra.mxu0 0.0
    %1615 = vmatpush.msra.mxu0 0.0
    %1616 = vmatpush.msra.mxu0 0.0
    %1617 = vmatpush.msra.mxu0 0.0
    %1618 = vmatpush.msra.mxu0 0.0
    %1619 = vmatpush.msra.mxu0 0.0
    %1620 = vmatpush.msra.mxu0 0.0
    %1621 = vmatpush.msra.mxu0 0.0
    %1622 = vmatpush.msra.mxu0 0.0
    %1623 = vmatpush.msra.mxu0 0.0
    %1624 = vmatpush.msra.mxu0 0.0
    %1625 = vmatpush.msra.mxu0 0.0
    %1626 = vmatpush.msra.mxu0 %v185
    %1627 = vmatpush.msra.mxu0 %v184
    %1628 = vmatpush.msra.mxu0 %v183
    %1629 = vmatpush.msra.mxu0 %v182
    %1630 = vmatmul.f32.gmra.mxu0 %v1572
    %v1631 = vpop.f32.mrf.mxu0
    %v1632 = vadd.f32 %v457, %v1631
    %1633 = vdwg.mxu0
    %1634 = vmatpush.msra.mxu0 0.0
    %1635 = vmatpush.msra.mxu0 0.0
    %1636 = vmatpush.msra.mxu0 0.0
    %1637 = vmatpush.msra.mxu0 0.0
    %1638 = vmatpush.msra.mxu0 0.0
    %1639 = vmatpush.msra.mxu0 0.0
    %1640 = vmatpush.msra.mxu0 0.0
    %1641 = vmatpush.msra.mxu0 0.0
    %1642 = vmatpush.msra.mxu0 0.0
    %1643 = vmatpush.msra.mxu0 0.0
    %1644 = vmatpush.msra.mxu0 0.0
    %1645 = vmatpush.msra.mxu0 0.0
    %1646 = vmatpush.msra.mxu0 %v129
    %1647 = vmatpush.msra.mxu0 %v128
    %1648 = vmatpush.msra.mxu0 %v127
    %1649 = vmatpush.msra.mxu0 %v126
    %1650 = vmatmul.f32.gmra.mxu0 %v1179
    %v1651 = vpop.f32.mrf.mxu0
    %v1652 = vadd.f32 %v480, %v1651
    %1653 = vdwg.mxu0
    %1654 = vmatpush.msra.mxu0 0.0
    %1655 = vmatpush.msra.mxu0 0.0
    %1656 = vmatpush.msra.mxu0 0.0
    %1657 = vmatpush.msra.mxu0 0.0
    %1658 = vmatpush.msra.mxu0 0.0
    %1659 = vmatpush.msra.mxu0 0.0
    %1660 = vmatpush.msra.mxu0 0.0
    %1661 = vmatpush.msra.mxu0 0.0
    %1662 = vmatpush.msra.mxu0 0.0
    %1663 = vmatpush.msra.mxu0 0.0
    %1664 = vmatpush.msra.mxu0 0.0
    %1665 = vmatpush.msra.mxu0 0.0
    %1666 = vmatpush.msra.mxu0 %v134
    %1667 = vmatpush.msra.mxu0 %v133
    %1668 = vmatpush.msra.mxu0 %v132
    %1669 = vmatpush.msra.mxu0 %v131
    %1670 = vmatmul.f32.gmra.mxu0 %v1179
    %v1671 = vpop.f32.mrf.mxu0
    %v1672 = vadd.f32 %v503, %v1671
    %1673 = vdwg.mxu0
    %1674 = vmatpush.msra.mxu0 0.0
    %1675 = vmatpush.msra.mxu0 0.0
    %1676 = vmatpush.msra.mxu0 0.0
    %1677 = vmatpush.msra.mxu0 0.0
    %1678 = vmatpush.msra.mxu0 0.0
    %1679 = vmatpush.msra.mxu0 0.0
    %1680 = vmatpush.msra.mxu0 0.0
    %1681 = vmatpush.msra.mxu0 0.0
    %1682 = vmatpush.msra.mxu0 0.0
    %1683 = vmatpush.msra.mxu0 0.0
    %1684 = vmatpush.msra.mxu0 0.0
    %1685 = vmatpush.msra.mxu0 0.0
    %1686 = vmatpush.msra.mxu0 %v139
    %1687 = vmatpush.msra.mxu0 %v138
    %1688 = vmatpush.msra.mxu0 %v137
    %1689 = vmatpush.msra.mxu0 %v136
    %1690 = vmatmul.f32.gmra.mxu0 %v1179
    %v1691 = vpop.f32.mrf.mxu0
    %v1692 = vadd.f32 %v526, %v1691
    %1693 = vdwg.mxu0
    %v1694 = vadd.f32 %v1592, %v1652
    %v1695 = vxor.u32 %v1694, 2147483648
    %v1696 = vmul.f32 %v1695, 1.442695
    %v1697 = vpow.pop %v1696
    %v1698 = vadd.f32 %v1697, 1.0
    %v1699 = vrcp.pop %v1698
    %v1700 = vmul.f32 %v1698, %v1699
    %v1701 = vsub.f32 1.0, %v1700
    %v1702 = vmul.f32 %v1699, %v1701
    %v1703 = vadd.f32 %v1699, %v1702
    %vm1704 = vweird.f32 %v1698
    %vm1705 = vweird.f32 %v1699
    %vm1706 = vmor %vm1704, %vm1705
    %v1707 = vsel %vm1706, %v1699, %v1703
    %v1708 = vand.u32 2147483647, %v1698
    %vm1709 = vcmp.eq.f32.partialorder %v1708, 8.507059e+37
    %v1710 = vand.u32 %v1698, 2147483648
    %v1711 = vor.u32 1.1754944e-38, %v1710
    %v1712 = vsel %vm1709, %v1711, %v1707
    %v1713 = vmul.f32 1.0, %v1712
    %v1714 = vadd.f32 %v1612, %v1672
    %v1715 = vxor.u32 %v1714, 2147483648
    %v1716 = vmul.f32 %v1715, 1.442695
    %v1717 = vpow.pop %v1716
    %v1718 = vadd.f32 %v1717, 1.0
    %v1719 = vrcp.pop %v1718
    %v1720 = vmul.f32 %v1718, %v1719
    %v1721 = vsub.f32 1.0, %v1720
    %v1722 = vmul.f32 %v1719, %v1721
    %v1723 = vadd.f32 %v1719, %v1722
    %vm1724 = vweird.f32 %v1718
    %vm1725 = vweird.f32 %v1719
    %vm1726 = vmor %vm1724, %vm1725
    %v1727 = vsel %vm1726, %v1719, %v1723
    %v1728 = vand.u32 2147483647, %v1718
    %vm1729 = vcmp.eq.f32.partialorder %v1728, 8.507059e+37
    %v1730 = vand.u32 %v1718, 2147483648
    %v1731 = vor.u32 1.1754944e-38, %v1730
    %v1732 = vsel %vm1729, %v1731, %v1727
    %v1733 = vmul.f32 1.0, %v1732
    %v1734 = vmul.f32 %v1713, %v1692
    %v1735 = vadd.f32 %v1632, %v1734
    %v1736 = vtanh.pop %v1735
    %v1737 = vsub.f32 1.0, %v1733
    %v1738 = vmul.f32 %v1737, %v1736
    %v1739 = vmul.f32 %v1733, %v1177
    %v1740 = vadd.f32 %v1738, %v1739
    %v1742 = vsel %vm290, %v1740, 0
    %1744 = vmatpush.msra.mxu0 0.0
    %1745 = vmatpush.msra.mxu0 0.0
    %1746 = vmatpush.msra.mxu0 0.0
    %1747 = vmatpush.msra.mxu0 0.0
    %1748 = vmatpush.msra.mxu0 0.0
    %1749 = vmatpush.msra.mxu0 0.0
    %1750 = vmatpush.msra.mxu0 0.0
    %1751 = vmatpush.msra.mxu0 0.0
    %1752 = vmatpush.msra.mxu0 0.0
    %1753 = vmatpush.msra.mxu0 0.0
    %1754 = vmatpush.msra.mxu0 0.0
    %1755 = vmatpush.msra.mxu0 0.0
    %1756 = vmatpush.msra.mxu0 %v190
    %1757 = vmatpush.msra.mxu0 %v189
    %1758 = vmatpush.msra.mxu0 %v188
    %1759 = vmatpush.msra.mxu0 %v187
    %1760 = vmatmul.f32.gmra.mxu0 %v1742
    %v1761 = vpop.f32.mrf.mxu0
    %v1762 = vadd.f32 %v596, %v1761
    %1763 = vdwg.mxu0
    %1764 = vmatpush.msra.mxu0 0.0
    %1765 = vmatpush.msra.mxu0 0.0
    %1766 = vmatpush.msra.mxu0 0.0
    %1767 = vmatpush.msra.mxu0 0.0
    %1768 = vmatpush.msra.mxu0 0.0
    %1769 = vmatpush.msra.mxu0 0.0
    %1770 = vmatpush.msra.mxu0 0.0
    %1771 = vmatpush.msra.mxu0 0.0
    %1772 = vmatpush.msra.mxu0 0.0
    %1773 = vmatpush.msra.mxu0 0.0
    %1774 = vmatpush.msra.mxu0 0.0
    %1775 = vmatpush.msra.mxu0 0.0
    %1776 = vmatpush.msra.mxu0 %v195
    %1777 = vmatpush.msra.mxu0 %v194
    %1778 = vmatpush.msra.mxu0 %v193
    %1779 = vmatpush.msra.mxu0 %v192
    %1780 = vmatmul.f32.gmra.mxu0 %v1742
    %v1781 = vpop.f32.mrf.mxu0
    %v1782 = vadd.f32 %v622, %v1781
    %1783 = vdwg.mxu0
    %1784 = vmatpush.msra.mxu0 0.0
    %1785 = vmatpush.msra.mxu0 0.0
    %1786 = vmatpush.msra.mxu0 0.0
    %1787 = vmatpush.msra.mxu0 0.0
    %1788 = vmatpush.msra.mxu0 0.0
    %1789 = vmatpush.msra.mxu0 0.0
    %1790 = vmatpush.msra.mxu0 0.0
    %1791 = vmatpush.msra.mxu0 0.0
    %1792 = vmatpush.msra.mxu0 0.0
    %1793 = vmatpush.msra.mxu0 0.0
    %1794 = vmatpush.msra.mxu0 0.0
    %1795 = vmatpush.msra.mxu0 0.0
    %1796 = vmatpush.msra.mxu0 %v200
    %1797 = vmatpush.msra.mxu0 %v199
    %1798 = vmatpush.msra.mxu0 %v198
    %1799 = vmatpush.msra.mxu0 %v197
    %1800 = vmatmul.f32.gmra.mxu0 %v1742
    %v1801 = vpop.f32.mrf.mxu0
    %v1802 = vadd.f32 %v645, %v1801
    %1803 = vdwg.mxu0
    %1804 = vmatpush.msra.mxu0 0.0
    %1805 = vmatpush.msra.mxu0 0.0
    %1806 = vmatpush.msra.mxu0 0.0
    %1807 = vmatpush.msra.mxu0 0.0
    %1808 = vmatpush.msra.mxu0 0.0
    %1809 = vmatpush.msra.mxu0 0.0
    %1810 = vmatpush.msra.mxu0 0.0
    %1811 = vmatpush.msra.mxu0 0.0
    %1812 = vmatpush.msra.mxu0 0.0
    %1813 = vmatpush.msra.mxu0 0.0
    %1814 = vmatpush.msra.mxu0 0.0
    %1815 = vmatpush.msra.mxu0 0.0
    %1816 = vmatpush.msra.mxu0 %v144
    %1817 = vmatpush.msra.mxu0 %v143
    %1818 = vmatpush.msra.mxu0 %v142
    %1819 = vmatpush.msra.mxu0 %v141
    %1820 = vmatmul.f32.gmra.mxu0 %v1349
    %v1821 = vpop.f32.mrf.mxu0
    %v1822 = vadd.f32 %v668, %v1821
    %1823 = vdwg.mxu0
    %1824 = vmatpush.msra.mxu0 0.0
    %1825 = vmatpush.msra.mxu0 0.0
    %1826 = vmatpush.msra.mxu0 0.0
    %1827 = vmatpush.msra.mxu0 0.0
    %1828 = vmatpush.msra.mxu0 0.0
    %1829 = vmatpush.msra.mxu0 0.0
    %1830 = vmatpush.msra.mxu0 0.0
    %1831 = vmatpush.msra.mxu0 0.0
    %1832 = vmatpush.msra.mxu0 0.0
    %1833 = vmatpush.msra.mxu0 0.0
    %1834 = vmatpush.msra.mxu0 0.0
    %1835 = vmatpush.msra.mxu0 0.0
    %1836 = vmatpush.msra.mxu0 %v149
    %1837 = vmatpush.msra.mxu0 %v148
    %1838 = vmatpush.msra.mxu0 %v147
    %1839 = vmatpush.msra.mxu0 %v146
    %1840 = vmatmul.f32.gmra.mxu0 %v1349
    %v1841 = vpop.f32.mrf.mxu0
    %v1842 = vadd.f32 %v691, %v1841
    %1843 = vdwg.mxu0
    %1844 = vmatpush.msra.mxu0 0.0
    %1845 = vmatpush.msra.mxu0 0.0
    %1846 = vmatpush.msra.mxu0 0.0
    %1847 = vmatpush.msra.mxu0 0.0
    %1848 = vmatpush.msra.mxu0 0.0
    %1849 = vmatpush.msra.mxu0 0.0
    %1850 = vmatpush.msra.mxu0 0.0
    %1851 = vmatpush.msra.mxu0 0.0
    %1852 = vmatpush.msra.mxu0 0.0
    %1853 = vmatpush.msra.mxu0 0.0
    %1854 = vmatpush.msra.mxu0 0.0
    %1855 = vmatpush.msra.mxu0 0.0
    %1856 = vmatpush.msra.mxu0 %v154
    %1857 = vmatpush.msra.mxu0 %v153
    %1858 = vmatpush.msra.mxu0 %v152
    %1859 = vmatpush.msra.mxu0 %v151
    %1860 = vmatmul.f32.gmra.mxu0 %v1349
    %v1861 = vpop.f32.mrf.mxu0
    %v1862 = vadd.f32 %v714, %v1861
    %1863 = vdwg.mxu0
    %v1864 = vadd.f32 %v1762, %v1822
    %v1865 = vxor.u32 %v1864, 2147483648
    %v1866 = vmul.f32 %v1865, 1.442695
    %v1867 = vpow.pop %v1866
    %v1868 = vadd.f32 %v1867, 1.0
    %v1869 = vrcp.pop %v1868
    %v1870 = vmul.f32 %v1868, %v1869
    %v1871 = vsub.f32 1.0, %v1870
    %v1872 = vmul.f32 %v1869, %v1871
    %v1873 = vadd.f32 %v1869, %v1872
    %vm1874 = vweird.f32 %v1868
    %vm1875 = vweird.f32 %v1869
    %vm1876 = vmor %vm1874, %vm1875
    %v1877 = vsel %vm1876, %v1869, %v1873
    %v1878 = vand.u32 2147483647, %v1868
    %vm1879 = vcmp.eq.f32.partialorder %v1878, 8.507059e+37
    %v1880 = vand.u32 %v1868, 2147483648
    %v1881 = vor.u32 1.1754944e-38, %v1880
    %v1882 = vsel %vm1879, %v1881, %v1877
    %v1883 = vmul.f32 1.0, %v1882
    %v1884 = vadd.f32 %v1782, %v1842
    %v1885 = vxor.u32 %v1884, 2147483648
    %v1886 = vmul.f32 %v1885, 1.442695
    %v1887 = vpow.pop %v1886
    %v1888 = vadd.f32 %v1887, 1.0
    %v1889 = vrcp.pop %v1888
    %v1890 = vmul.f32 %v1888, %v1889
    %v1891 = vsub.f32 1.0, %v1890
    %v1892 = vmul.f32 %v1889, %v1891
    %v1893 = vadd.f32 %v1889, %v1892
    %vm1894 = vweird.f32 %v1888
    %vm1895 = vweird.f32 %v1889
    %vm1896 = vmor %vm1894, %vm1895
    %v1897 = vsel %vm1896, %v1889, %v1893
    %v1898 = vand.u32 2147483647, %v1888
    %vm1899 = vcmp.eq.f32.partialorder %v1898, 8.507059e+37
    %v1900 = vand.u32 %v1888, 2147483648
    %v1901 = vor.u32 1.1754944e-38, %v1900
    %v1902 = vsel %vm1899, %v1901, %v1897
    %v1903 = vmul.f32 1.0, %v1902
    %v1904 = vmul.f32 %v1883, %v1862
    %v1905 = vadd.f32 %v1802, %v1904
    %v1906 = vtanh.pop %v1905
    %v1907 = vsub.f32 1.0, %v1903
    %v1908 = vmul.f32 %v1907, %v1906
    %v1909 = vmul.f32 %v1903, %v1347
    %v1910 = vadd.f32 %v1908, %v1909
    %v1912 = vsel %vm290, %v1910, 0
    %1914 = vmatpush.msra.mxu0 0.0
    %1915 = vmatpush.msra.mxu0 0.0
    %1916 = vmatpush.msra.mxu0 0.0
    %1917 = vmatpush.msra.mxu0 0.0
    %1918 = vmatpush.msra.mxu0 0.0
    %1919 = vmatpush.msra.mxu0 0.0
    %1920 = vmatpush.msra.mxu0 0.0
    %1921 = vmatpush.msra.mxu0 0.0
    %1922 = vmatpush.msra.mxu0 0.0
    %1923 = vmatpush.msra.mxu0 0.0
    %1924 = vmatpush.msra.mxu0 0.0
    %1925 = vmatpush.msra.mxu0 0.0
    %1926 = vmatpush.msra.mxu0 %v215
    %1927 = vmatpush.msra.mxu0 %v214
    %1928 = vmatpush.msra.mxu0 %v213
    %1929 = vmatpush.msra.mxu0 %v212
    %1930 = vmatmul.f32.gmra.mxu0 %v1912
    %v1931 = vpop.f32.mrf.mxu0
    %v1932 = vadd.f32 %v784, %v1931
    %1933 = vdwg.mxu0
    %v1934 = vmax.f32 %v1932, 0.0
    %v1936 = vsel %vm290, %v1934, 0
    %1938 = vmatpush.msra.mxu0 0.0
    %1939 = vmatpush.msra.mxu0 0.0
    %1940 = vmatpush.msra.mxu0 0.0
    %1941 = vmatpush.msra.mxu0 0.0
    %1942 = vmatpush.msra.mxu0 0.0
    %1943 = vmatpush.msra.mxu0 0.0
    %1944 = vmatpush.msra.mxu0 0.0
    %1945 = vmatpush.msra.mxu0 0.0
    %1946 = vmatpush.msra.mxu0 0.0
    %1947 = vmatpush.msra.mxu0 0.0
    %1948 = vmatpush.msra.mxu0 0.0
    %1949 = vmatpush.msra.mxu0 0.0
    %1950 = vmatpush.msra.mxu0 %v220
    %1951 = vmatpush.msra.mxu0 %v219
    %1952 = vmatpush.msra.mxu0 %v218
    %1953 = vmatpush.msra.mxu0 %v217
    %1954 = vmatmul.f32.gmra.mxu0 %v1936
    %v1955 = vpop.f32.mrf.mxu0
    %v1956 = vadd.f32 %v811, %v1955
    %1957 = vdwg.mxu0
    %v1958 = vtanh.pop %v1956
    %1960 = vrot.lane.b32.xlu0 %v1958, 16
    %v1961 = vpop.permute.xlu0 %1960
    %vm1963 = vcmask 195712
    %1964 = vst.msk [vmem:[%s11] sm:$0xff] %vm1963, %v1961
    %v1965 = vsel %vm223, %v1958, 0
    %1967 = vmatpush.msra.mxu0 0.0
    %1968 = vmatpush.msra.mxu0 0.0
    %1969 = vmatpush.msra.mxu0 0.0
    %1970 = vmatpush.msra.mxu0 0.0
    %1971 = vmatpush.msra.mxu0 0.0
    %1972 = vmatpush.msra.mxu0 0.0
    %1973 = vmatpush.msra.mxu0 0.0
    %1974 = vmatpush.msra.mxu0 0.0
    %1975 = vmatpush.msra.mxu0 0.0
    %1976 = vmatpush.msra.mxu0 0.0
    %1977 = vmatpush.msra.mxu0 0.0
    %1978 = vmatpush.msra.mxu0 0.0
    %1979 = vmatpush.msra.mxu0 0.0
    %1980 = vmatpush.msra.mxu0 0.0
    %1981 = vmatpush.msra.mxu0 0.0
    %1982 = vmatpush.msra.mxu0 %v101
    %1983 = vmatmul.f32.gmra.mxu0 %v1965
    %v1984 = vpop.f32.mrf.mxu0
    %v1985 = vadd.f32 %v106, %v1984
    %1986 = vdwg.mxu0
    %1987 = vmatpush.msra.mxu0 0.0
    %1988 = vmatpush.msra.mxu0 0.0
    %1989 = vmatpush.msra.mxu0 0.0
    %1990 = vmatpush.msra.mxu0 0.0
    %1991 = vmatpush.msra.mxu0 0.0
    %1992 = vmatpush.msra.mxu0 0.0
    %1993 = vmatpush.msra.mxu0 0.0
    %1994 = vmatpush.msra.mxu0 0.0
    %1995 = vmatpush.msra.mxu0 0.0
    %1996 = vmatpush.msra.mxu0 0.0
    %1997 = vmatpush.msra.mxu0 0.0
    %1998 = vmatpush.msra.mxu0 0.0
    %1999 = vmatpush.msra.mxu0 0.0
    %2000 = vmatpush.msra.mxu0 0.0
    %2001 = vmatpush.msra.mxu0 0.0
    %2002 = vmatpush.msra.mxu0 %v103
    %2003 = vmatmul.f32.gmra.mxu0 %v1965
    %v2004 = vpop.f32.mrf.mxu0
    %v2005 = vadd.f32 %v108, %v2004
    %2006 = vdwg.mxu0
    %2007 = vmatpush.msra.mxu0 0.0
    %2008 = vmatpush.msra.mxu0 0.0
    %2009 = vmatpush.msra.mxu0 0.0
    %2010 = vmatpush.msra.mxu0 0.0
    %2011 = vmatpush.msra.mxu0 0.0
    %2012 = vmatpush.msra.mxu0 0.0
    %2013 = vmatpush.msra.mxu0 0.0
    %2014 = vmatpush.msra.mxu0 0.0
    %2015 = vmatpush.msra.mxu0 0.0
    %2016 = vmatpush.msra.mxu0 0.0
    %2017 = vmatpush.msra.mxu0 0.0
    %2018 = vmatpush.msra.mxu0 0.0
    %2019 = vmatpush.msra.mxu0 0.0
    %2020 = vmatpush.msra.mxu0 0.0
    %2021 = vmatpush.msra.mxu0 0.0
    %2022 = vmatpush.msra.mxu0 %v105
    %2023 = vmatmul.f32.gmra.mxu0 %v1965
    %v2024 = vpop.f32.mrf.mxu0
    %v2025 = vadd.f32 %v110, %v2024
    %2026 = vdwg.mxu0
    %2027 = vmatpush.msra.mxu0 0.0
    %2028 = vmatpush.msra.mxu0 0.0
    %2029 = vmatpush.msra.mxu0 0.0
    %2030 = vmatpush.msra.mxu0 0.0
    %2031 = vmatpush.msra.mxu0 0.0
    %2032 = vmatpush.msra.mxu0 0.0
    %2033 = vmatpush.msra.mxu0 0.0
    %2034 = vmatpush.msra.mxu0 0.0
    %2035 = vmatpush.msra.mxu0 0.0
    %2036 = vmatpush.msra.mxu0 0.0
    %2037 = vmatpush.msra.mxu0 0.0
    %2038 = vmatpush.msra.mxu0 0.0
    %2039 = vmatpush.msra.mxu0 %v114
    %2040 = vmatpush.msra.mxu0 %v113
    %2041 = vmatpush.msra.mxu0 %v112
    %2042 = vmatpush.msra.mxu0 %v111
    %2043 = vmatmul.f32.gmra.mxu0 %v1572
    %v2044 = vpop.f32.mrf.mxu0
    %v2045 = vadd.f32 %v288, %v2044
    %2046 = vdwg.mxu0
    %2047 = vmatpush.msra.mxu0 0.0
    %2048 = vmatpush.msra.mxu0 0.0
    %2049 = vmatpush.msra.mxu0 0.0
    %2050 = vmatpush.msra.mxu0 0.0
    %2051 = vmatpush.msra.mxu0 0.0
    %2052 = vmatpush.msra.mxu0 0.0
    %2053 = vmatpush.msra.mxu0 0.0
    %2054 = vmatpush.msra.mxu0 0.0
    %2055 = vmatpush.msra.mxu0 0.0
    %2056 = vmatpush.msra.mxu0 0.0
    %2057 = vmatpush.msra.mxu0 0.0
    %2058 = vmatpush.msra.mxu0 0.0
    %2059 = vmatpush.msra.mxu0 %v119
    %2060 = vmatpush.msra.mxu0 %v118
    %2061 = vmatpush.msra.mxu0 %v117
    %2062 = vmatpush.msra.mxu0 %v116
    %2063 = vmatmul.f32.gmra.mxu0 %v1572
    %v2064 = vpop.f32.mrf.mxu0
    %v2065 = vadd.f32 %v315, %v2064
    %2066 = vdwg.mxu0
    %2067 = vmatpush.msra.mxu0 0.0
    %2068 = vmatpush.msra.mxu0 0.0
    %2069 = vmatpush.msra.mxu0 0.0
    %2070 = vmatpush.msra.mxu0 0.0
    %2071 = vmatpush.msra.mxu0 0.0
    %2072 = vmatpush.msra.mxu0 0.0
    %2073 = vmatpush.msra.mxu0 0.0
    %2074 = vmatpush.msra.mxu0 0.0
    %2075 = vmatpush.msra.mxu0 0.0
    %2076 = vmatpush.msra.mxu0 0.0
    %2077 = vmatpush.msra.mxu0 0.0
    %2078 = vmatpush.msra.mxu0 0.0
    %2079 = vmatpush.msra.mxu0 %v124
    %2080 = vmatpush.msra.mxu0 %v123
    %2081 = vmatpush.msra.mxu0 %v122
    %2082 = vmatpush.msra.mxu0 %v121
    %2083 = vmatmul.f32.gmra.mxu0 %v1572
    %v2084 = vpop.f32.mrf.mxu0
    %v2085 = vadd.f32 %v338, %v2084
    %2086 = vdwg.mxu0
    %v2087 = vadd.f32 %v1985, %v2045
    %v2088 = vxor.u32 %v2087, 2147483648
    %v2089 = vmul.f32 %v2088, 1.442695
    %v2090 = vpow.pop %v2089
    %v2091 = vadd.f32 %v2090, 1.0
    %v2092 = vrcp.pop %v2091
    %v2093 = vmul.f32 %v2091, %v2092
    %v2094 = vsub.f32 1.0, %v2093
    %v2095 = vmul.f32 %v2092, %v2094
    %v2096 = vadd.f32 %v2092, %v2095
    %vm2097 = vweird.f32 %v2091
    %vm2098 = vweird.f32 %v2092
    %vm2099 = vmor %vm2097, %vm2098
    %v2100 = vsel %vm2099, %v2092, %v2096
    %v2101 = vand.u32 2147483647, %v2091
    %vm2102 = vcmp.eq.f32.partialorder %v2101, 8.507059e+37
    %v2103 = vand.u32 %v2091, 2147483648
    %v2104 = vor.u32 1.1754944e-38, %v2103
    %v2105 = vsel %vm2102, %v2104, %v2100
    %v2106 = vmul.f32 1.0, %v2105
    %v2107 = vadd.f32 %v2005, %v2065
    %v2108 = vxor.u32 %v2107, 2147483648
    %v2109 = vmul.f32 %v2108, 1.442695
    %v2110 = vpow.pop %v2109
    %v2111 = vadd.f32 %v2110, 1.0
    %v2112 = vrcp.pop %v2111
    %v2113 = vmul.f32 %v2111, %v2112
    %v2114 = vsub.f32 1.0, %v2113
    %v2115 = vmul.f32 %v2112, %v2114
    %v2116 = vadd.f32 %v2112, %v2115
    %vm2117 = vweird.f32 %v2111
    %vm2118 = vweird.f32 %v2112
    %vm2119 = vmor %vm2117, %vm2118
    %v2120 = vsel %vm2119, %v2112, %v2116
    %v2121 = vand.u32 2147483647, %v2111
    %vm2122 = vcmp.eq.f32.partialorder %v2121, 8.507059e+37
    %v2123 = vand.u32 %v2111, 2147483648
    %v2124 = vor.u32 1.1754944e-38, %v2123
    %v2125 = vsel %vm2122, %v2124, %v2120
    %v2126 = vmul.f32 1.0, %v2125
    %v2127 = vmul.f32 %v2106, %v2085
    %v2128 = vadd.f32 %v2025, %v2127
    %v2129 = vtanh.pop %v2128
    %v2130 = vsub.f32 1.0, %v2126
    %v2131 = vmul.f32 %v2130, %v2129
    %v2132 = vmul.f32 %v2126, %v1570
    %v2133 = vadd.f32 %v2131, %v2132
    %v2135 = vsel %vm290, %v2133, 0
    %2137 = vmatpush.msra.mxu0 0.0
    %2138 = vmatpush.msra.mxu0 0.0
    %2139 = vmatpush.msra.mxu0 0.0
    %2140 = vmatpush.msra.mxu0 0.0
    %2141 = vmatpush.msra.mxu0 0.0
    %2142 = vmatpush.msra.mxu0 0.0
    %2143 = vmatpush.msra.mxu0 0.0
    %2144 = vmatpush.msra.mxu0 0.0
    %2145 = vmatpush.msra.mxu0 0.0
    %2146 = vmatpush.msra.mxu0 0.0
    %2147 = vmatpush.msra.mxu0 0.0
    %2148 = vmatpush.msra.mxu0 0.0
    %2149 = vmatpush.msra.mxu0 %v175
    %2150 = vmatpush.msra.mxu0 %v174
    %2151 = vmatpush.msra.mxu0 %v173
    %2152 = vmatpush.msra.mxu0 %v172
    %2153 = vmatmul.f32.gmra.mxu0 %v2135
    %v2154 = vpop.f32.mrf.mxu0
    %v2155 = vadd.f32 %v408, %v2154
    %2156 = vdwg.mxu0
    %2157 = vmatpush.msra.mxu0 0.0
    %2158 = vmatpush.msra.mxu0 0.0
    %2159 = vmatpush.msra.mxu0 0.0
    %2160 = vmatpush.msra.mxu0 0.0
    %2161 = vmatpush.msra.mxu0 0.0
    %2162 = vmatpush.msra.mxu0 0.0
    %2163 = vmatpush.msra.mxu0 0.0
    %2164 = vmatpush.msra.mxu0 0.0
    %2165 = vmatpush.msra.mxu0 0.0
    %2166 = vmatpush.msra.mxu0 0.0
    %2167 = vmatpush.msra.mxu0 0.0
    %2168 = vmatpush.msra.mxu0 0.0
    %2169 = vmatpush.msra.mxu0 %v180
    %2170 = vmatpush.msra.mxu0 %v179
    %2171 = vmatpush.msra.mxu0 %v178
    %2172 = vmatpush.msra.mxu0 %v177
    %2173 = vmatmul.f32.gmra.mxu0 %v2135
    %v2174 = vpop.f32.mrf.mxu0
    %v2175 = vadd.f32 %v434, %v2174
    %2176 = vdwg.mxu0
    %2177 = vmatpush.msra.mxu0 0.0
    %2178 = vmatpush.msra.mxu0 0.0
    %2179 = vmatpush.msra.mxu0 0.0
    %2180 = vmatpush.msra.mxu0 0.0
    %2181 = vmatpush.msra.mxu0 0.0
    %2182 = vmatpush.msra.mxu0 0.0
    %2183 = vmatpush.msra.mxu0 0.0
    %2184 = vmatpush.msra.mxu0 0.0
    %2185 = vmatpush.msra.mxu0 0.0
    %2186 = vmatpush.msra.mxu0 0.0
    %2187 = vmatpush.msra.mxu0 0.0
    %2188 = vmatpush.msra.mxu0 0.0
    %2189 = vmatpush.msra.mxu0 %v185
    %2190 = vmatpush.msra.mxu0 %v184
    %2191 = vmatpush.msra.mxu0 %v183
    %2192 = vmatpush.msra.mxu0 %v182
    %2193 = vmatmul.f32.gmra.mxu0 %v2135
    %v2194 = vpop.f32.mrf.mxu0
    %v2195 = vadd.f32 %v457, %v2194
    %2196 = vdwg.mxu0
    %2197 = vmatpush.msra.mxu0 0.0
    %2198 = vmatpush.msra.mxu0 0.0
    %2199 = vmatpush.msra.mxu0 0.0
    %2200 = vmatpush.msra.mxu0 0.0
    %2201 = vmatpush.msra.mxu0 0.0
    %2202 = vmatpush.msra.mxu0 0.0
    %2203 = vmatpush.msra.mxu0 0.0
    %2204 = vmatpush.msra.mxu0 0.0
    %2205 = vmatpush.msra.mxu0 0.0
    %2206 = vmatpush.msra.mxu0 0.0
    %2207 = vmatpush.msra.mxu0 0.0
    %2208 = vmatpush.msra.mxu0 0.0
    %2209 = vmatpush.msra.mxu0 %v129
    %2210 = vmatpush.msra.mxu0 %v128
    %2211 = vmatpush.msra.mxu0 %v127
    %2212 = vmatpush.msra.mxu0 %v126
    %2213 = vmatmul.f32.gmra.mxu0 %v1742
    %v2214 = vpop.f32.mrf.mxu0
    %v2215 = vadd.f32 %v480, %v2214
    %2216 = vdwg.mxu0
    %2217 = vmatpush.msra.mxu0 0.0
    %2218 = vmatpush.msra.mxu0 0.0
    %2219 = vmatpush.msra.mxu0 0.0
    %2220 = vmatpush.msra.mxu0 0.0
    %2221 = vmatpush.msra.mxu0 0.0
    %2222 = vmatpush.msra.mxu0 0.0
    %2223 = vmatpush.msra.mxu0 0.0
    %2224 = vmatpush.msra.mxu0 0.0
    %2225 = vmatpush.msra.mxu0 0.0
    %2226 = vmatpush.msra.mxu0 0.0
    %2227 = vmatpush.msra.mxu0 0.0
    %2228 = vmatpush.msra.mxu0 0.0
    %2229 = vmatpush.msra.mxu0 %v134
    %2230 = vmatpush.msra.mxu0 %v133
    %2231 = vmatpush.msra.mxu0 %v132
    %2232 = vmatpush.msra.mxu0 %v131
    %2233 = vmatmul.f32.gmra.mxu0 %v1742
    %v2234 = vpop.f32.mrf.mxu0
    %v2235 = vadd.f32 %v503, %v2234
    %2236 = vdwg.mxu0
    %2237 = vmatpush.msra.mxu0 0.0
    %2238 = vmatpush.msra.mxu0 0.0
    %2239 = vmatpush.msra.mxu0 0.0
    %2240 = vmatpush.msra.mxu0 0.0
    %2241 = vmatpush.msra.mxu0 0.0
    %2242 = vmatpush.msra.mxu0 0.0
    %2243 = vmatpush.msra.mxu0 0.0
    %2244 = vmatpush.msra.mxu0 0.0
    %2245 = vmatpush.msra.mxu0 0.0
    %2246 = vmatpush.msra.mxu0 0.0
    %2247 = vmatpush.msra.mxu0 0.0
    %2248 = vmatpush.msra.mxu0 0.0
    %2249 = vmatpush.msra.mxu0 %v139
    %2250 = vmatpush.msra.mxu0 %v138
    %2251 = vmatpush.msra.mxu0 %v137
    %2252 = vmatpush.msra.mxu0 %v136
    %2253 = vmatmul.f32.gmra.mxu0 %v1742
    %v2254 = vpop.f32.mrf.mxu0
    %v2255 = vadd.f32 %v526, %v2254
    %2256 = vdwg.mxu0
    %v2257 = vadd.f32 %v2155, %v2215
    %v2258 = vxor.u32 %v2257, 2147483648
    %v2259 = vmul.f32 %v2258, 1.442695
    %v2260 = vpow.pop %v2259
    %v2261 = vadd.f32 %v2260, 1.0
    %v2262 = vrcp.pop %v2261
    %v2263 = vmul.f32 %v2261, %v2262
    %v2264 = vsub.f32 1.0, %v2263
    %v2265 = vmul.f32 %v2262, %v2264
    %v2266 = vadd.f32 %v2262, %v2265
    %vm2267 = vweird.f32 %v2261
    %vm2268 = vweird.f32 %v2262
    %vm2269 = vmor %vm2267, %vm2268
    %v2270 = vsel %vm2269, %v2262, %v2266
    %v2271 = vand.u32 2147483647, %v2261
    %vm2272 = vcmp.eq.f32.partialorder %v2271, 8.507059e+37
    %v2273 = vand.u32 %v2261, 2147483648
    %v2274 = vor.u32 1.1754944e-38, %v2273
    %v2275 = vsel %vm2272, %v2274, %v2270
    %v2276 = vmul.f32 1.0, %v2275
    %v2277 = vadd.f32 %v2175, %v2235
    %v2278 = vxor.u32 %v2277, 2147483648
    %v2279 = vmul.f32 %v2278, 1.442695
    %v2280 = vpow.pop %v2279
    %v2281 = vadd.f32 %v2280, 1.0
    %v2282 = vrcp.pop %v2281
    %v2283 = vmul.f32 %v2281, %v2282
    %v2284 = vsub.f32 1.0, %v2283
    %v2285 = vmul.f32 %v2282, %v2284
    %v2286 = vadd.f32 %v2282, %v2285
    %vm2287 = vweird.f32 %v2281
    %vm2288 = vweird.f32 %v2282
    %vm2289 = vmor %vm2287, %vm2288
    %v2290 = vsel %vm2289, %v2282, %v2286
    %v2291 = vand.u32 2147483647, %v2281
    %vm2292 = vcmp.eq.f32.partialorder %v2291, 8.507059e+37
    %v2293 = vand.u32 %v2281, 2147483648
    %v2294 = vor.u32 1.1754944e-38, %v2293
    %v2295 = vsel %vm2292, %v2294, %v2290
    %v2296 = vmul.f32 1.0, %v2295
    %v2297 = vmul.f32 %v2276, %v2255
    %v2298 = vadd.f32 %v2195, %v2297
    %v2299 = vtanh.pop %v2298
    %v2300 = vsub.f32 1.0, %v2296
    %v2301 = vmul.f32 %v2300, %v2299
    %v2302 = vmul.f32 %v2296, %v1740
    %v2303 = vadd.f32 %v2301, %v2302
    %v2305 = vsel %vm290, %v2303, 0
    %2307 = vmatpush.msra.mxu0 0.0
    %2308 = vmatpush.msra.mxu0 0.0
    %2309 = vmatpush.msra.mxu0 0.0
    %2310 = vmatpush.msra.mxu0 0.0
    %2311 = vmatpush.msra.mxu0 0.0
    %2312 = vmatpush.msra.mxu0 0.0
    %2313 = vmatpush.msra.mxu0 0.0
    %2314 = vmatpush.msra.mxu0 0.0
    %2315 = vmatpush.msra.mxu0 0.0
    %2316 = vmatpush.msra.mxu0 0.0
    %2317 = vmatpush.msra.mxu0 0.0
    %2318 = vmatpush.msra.mxu0 0.0
    %2319 = vmatpush.msra.mxu0 %v190
    %2320 = vmatpush.msra.mxu0 %v189
    %2321 = vmatpush.msra.mxu0 %v188
    %2322 = vmatpush.msra.mxu0 %v187
    %2323 = vmatmul.f32.gmra.mxu0 %v2305
    %v2324 = vpop.f32.mrf.mxu0
    %v2325 = vadd.f32 %v596, %v2324
    %2326 = vdwg.mxu0
    %2327 = vmatpush.msra.mxu0 0.0
    %2328 = vmatpush.msra.mxu0 0.0
    %2329 = vmatpush.msra.mxu0 0.0
    %2330 = vmatpush.msra.mxu0 0.0
    %2331 = vmatpush.msra.mxu0 0.0
    %2332 = vmatpush.msra.mxu0 0.0
    %2333 = vmatpush.msra.mxu0 0.0
    %2334 = vmatpush.msra.mxu0 0.0
    %2335 = vmatpush.msra.mxu0 0.0
    %2336 = vmatpush.msra.mxu0 0.0
    %2337 = vmatpush.msra.mxu0 0.0
    %2338 = vmatpush.msra.mxu0 0.0
    %2339 = vmatpush.msra.mxu0 %v195
    %2340 = vmatpush.msra.mxu0 %v194
    %2341 = vmatpush.msra.mxu0 %v193
    %2342 = vmatpush.msra.mxu0 %v192
    %2343 = vmatmul.f32.gmra.mxu0 %v2305
    %v2344 = vpop.f32.mrf.mxu0
    %v2345 = vadd.f32 %v622, %v2344
    %2346 = vdwg.mxu0
    %2347 = vmatpush.msra.mxu0 0.0
    %2348 = vmatpush.msra.mxu0 0.0
    %2349 = vmatpush.msra.mxu0 0.0
    %2350 = vmatpush.msra.mxu0 0.0
    %2351 = vmatpush.msra.mxu0 0.0
    %2352 = vmatpush.msra.mxu0 0.0
    %2353 = vmatpush.msra.mxu0 0.0
    %2354 = vmatpush.msra.mxu0 0.0
    %2355 = vmatpush.msra.mxu0 0.0
    %2356 = vmatpush.msra.mxu0 0.0
    %2357 = vmatpush.msra.mxu0 0.0
    %2358 = vmatpush.msra.mxu0 0.0
    %2359 = vmatpush.msra.mxu0 %v200
    %2360 = vmatpush.msra.mxu0 %v199
    %2361 = vmatpush.msra.mxu0 %v198
    %2362 = vmatpush.msra.mxu0 %v197
    %2363 = vmatmul.f32.gmra.mxu0 %v2305
    %v2364 = vpop.f32.mrf.mxu0
    %v2365 = vadd.f32 %v645, %v2364
    %2366 = vdwg.mxu0
    %2367 = vmatpush.msra.mxu0 0.0
    %2368 = vmatpush.msra.mxu0 0.0
    %2369 = vmatpush.msra.mxu0 0.0
    %2370 = vmatpush.msra.mxu0 0.0
    %2371 = vmatpush.msra.mxu0 0.0
    %2372 = vmatpush.msra.mxu0 0.0
    %2373 = vmatpush.msra.mxu0 0.0
    %2374 = vmatpush.msra.mxu0 0.0
    %2375 = vmatpush.msra.mxu0 0.0
    %2376 = vmatpush.msra.mxu0 0.0
    %2377 = vmatpush.msra.mxu0 0.0
    %2378 = vmatpush.msra.mxu0 0.0
    %2379 = vmatpush.msra.mxu0 %v144
    %2380 = vmatpush.msra.mxu0 %v143
    %2381 = vmatpush.msra.mxu0 %v142
    %2382 = vmatpush.msra.mxu0 %v141
    %2383 = vmatmul.f32.gmra.mxu0 %v1912
    %v2384 = vpop.f32.mrf.mxu0
    %v2385 = vadd.f32 %v668, %v2384
    %2386 = vdwg.mxu0
    %2387 = vmatpush.msra.mxu0 0.0
    %2388 = vmatpush.msra.mxu0 0.0
    %2389 = vmatpush.msra.mxu0 0.0
    %2390 = vmatpush.msra.mxu0 0.0
    %2391 = vmatpush.msra.mxu0 0.0
    %2392 = vmatpush.msra.mxu0 0.0
    %2393 = vmatpush.msra.mxu0 0.0
    %2394 = vmatpush.msra.mxu0 0.0
    %2395 = vmatpush.msra.mxu0 0.0
    %2396 = vmatpush.msra.mxu0 0.0
    %2397 = vmatpush.msra.mxu0 0.0
    %2398 = vmatpush.msra.mxu0 0.0
    %2399 = vmatpush.msra.mxu0 %v149
    %2400 = vmatpush.msra.mxu0 %v148
    %2401 = vmatpush.msra.mxu0 %v147
    %2402 = vmatpush.msra.mxu0 %v146
    %2403 = vmatmul.f32.gmra.mxu0 %v1912
    %v2404 = vpop.f32.mrf.mxu0
    %v2405 = vadd.f32 %v691, %v2404
    %2406 = vdwg.mxu0
    %2407 = vmatpush.msra.mxu0 0.0
    %2408 = vmatpush.msra.mxu0 0.0
    %2409 = vmatpush.msra.mxu0 0.0
    %2410 = vmatpush.msra.mxu0 0.0
    %2411 = vmatpush.msra.mxu0 0.0
    %2412 = vmatpush.msra.mxu0 0.0
    %2413 = vmatpush.msra.mxu0 0.0
    %2414 = vmatpush.msra.mxu0 0.0
    %2415 = vmatpush.msra.mxu0 0.0
    %2416 = vmatpush.msra.mxu0 0.0
    %2417 = vmatpush.msra.mxu0 0.0
    %2418 = vmatpush.msra.mxu0 0.0
    %2419 = vmatpush.msra.mxu0 %v154
    %2420 = vmatpush.msra.mxu0 %v153
    %2421 = vmatpush.msra.mxu0 %v152
    %2422 = vmatpush.msra.mxu0 %v151
    %2423 = vmatmul.f32.gmra.mxu0 %v1912
    %v2424 = vpop.f32.mrf.mxu0
    %v2425 = vadd.f32 %v714, %v2424
    %2426 = vdwg.mxu0
    %v2427 = vadd.f32 %v2325, %v2385
    %v2428 = vxor.u32 %v2427, 2147483648
    %v2429 = vmul.f32 %v2428, 1.442695
    %v2430 = vpow.pop %v2429
    %v2431 = vadd.f32 %v2430, 1.0
    %v2432 = vrcp.pop %v2431
    %v2433 = vmul.f32 %v2431, %v2432
    %v2434 = vsub.f32 1.0, %v2433
    %v2435 = vmul.f32 %v2432, %v2434
    %v2436 = vadd.f32 %v2432, %v2435
    %vm2437 = vweird.f32 %v2431
    %vm2438 = vweird.f32 %v2432
    %vm2439 = vmor %vm2437, %vm2438
    %v2440 = vsel %vm2439, %v2432, %v2436
    %v2441 = vand.u32 2147483647, %v2431
    %vm2442 = vcmp.eq.f32.partialorder %v2441, 8.507059e+37
    %v2443 = vand.u32 %v2431, 2147483648
    %v2444 = vor.u32 1.1754944e-38, %v2443
    %v2445 = vsel %vm2442, %v2444, %v2440
    %v2446 = vmul.f32 1.0, %v2445
    %v2447 = vadd.f32 %v2345, %v2405
    %v2448 = vxor.u32 %v2447, 2147483648
    %v2449 = vmul.f32 %v2448, 1.442695
    %v2450 = vpow.pop %v2449
    %v2451 = vadd.f32 %v2450, 1.0
    %v2452 = vrcp.pop %v2451
    %v2453 = vmul.f32 %v2451, %v2452
    %v2454 = vsub.f32 1.0, %v2453
    %v2455 = vmul.f32 %v2452, %v2454
    %v2456 = vadd.f32 %v2452, %v2455
    %vm2457 = vweird.f32 %v2451
    %vm2458 = vweird.f32 %v2452
    %vm2459 = vmor %vm2457, %vm2458
    %v2460 = vsel %vm2459, %v2452, %v2456
    %v2461 = vand.u32 2147483647, %v2451
    %vm2462 = vcmp.eq.f32.partialorder %v2461, 8.507059e+37
    %v2463 = vand.u32 %v2451, 2147483648
    %v2464 = vor.u32 1.1754944e-38, %v2463
    %v2465 = vsel %vm2462, %v2464, %v2460
    %v2466 = vmul.f32 1.0, %v2465
    %v2467 = vmul.f32 %v2446, %v2425
    %v2468 = vadd.f32 %v2365, %v2467
    %v2469 = vtanh.pop %v2468
    %v2470 = vsub.f32 1.0, %v2466
    %v2471 = vmul.f32 %v2470, %v2469
    %v2472 = vmul.f32 %v2466, %v1910
    %v2473 = vadd.f32 %v2471, %v2472
    %v2475 = vsel %vm290, %v2473, 0
    %2477 = vmatpush.msra.mxu0 0.0
    %2478 = vmatpush.msra.mxu0 0.0
    %2479 = vmatpush.msra.mxu0 0.0
    %2480 = vmatpush.msra.mxu0 0.0
    %2481 = vmatpush.msra.mxu0 0.0
    %2482 = vmatpush.msra.mxu0 0.0
    %2483 = vmatpush.msra.mxu0 0.0
    %2484 = vmatpush.msra.mxu0 0.0
    %2485 = vmatpush.msra.mxu0 0.0
    %2486 = vmatpush.msra.mxu0 0.0
    %2487 = vmatpush.msra.mxu0 0.0
    %2488 = vmatpush.msra.mxu0 0.0
    %2489 = vmatpush.msra.mxu0 %v215
    %2490 = vmatpush.msra.mxu0 %v214
    %2491 = vmatpush.msra.mxu0 %v213
    %2492 = vmatpush.msra.mxu0 %v212
    %2493 = vmatmul.f32.gmra.mxu0 %v2475
    %v2494 = vpop.f32.mrf.mxu0
    %v2495 = vadd.f32 %v784, %v2494
    %2496 = vdwg.mxu0
    %v2497 = vmax.f32 %v2495, 0.0
    %v2499 = vsel %vm290, %v2497, 0
    %2501 = vmatpush.msra.mxu0 0.0
    %2502 = vmatpush.msra.mxu0 0.0
    %2503 = vmatpush.msra.mxu0 0.0
    %2504 = vmatpush.msra.mxu0 0.0
    %2505 = vmatpush.msra.mxu0 0.0
    %2506 = vmatpush.msra.mxu0 0.0
    %2507 = vmatpush.msra.mxu0 0.0
    %2508 = vmatpush.msra.mxu0 0.0
    %2509 = vmatpush.msra.mxu0 0.0
    %2510 = vmatpush.msra.mxu0 0.0
    %2511 = vmatpush.msra.mxu0 0.0
    %2512 = vmatpush.msra.mxu0 0.0
    %2513 = vmatpush.msra.mxu0 %v220
    %2514 = vmatpush.msra.mxu0 %v219
    %2515 = vmatpush.msra.mxu0 %v218
    %2516 = vmatpush.msra.mxu0 %v217
    %2517 = vmatmul.f32.gmra.mxu0 %v2499
    %v2518 = vpop.f32.mrf.mxu0
    %v2519 = vadd.f32 %v811, %v2518
    %2520 = vdwg.mxu0
    %v2521 = vtanh.pop %v2519
    %2523 = vrot.lane.b32.xlu0 %v2521, 24
    %v2524 = vpop.permute.xlu0 %2523
    %vm2526 = vcmask 261312
    %2527 = vst.msk [vmem:[%s11] sm:$0xff] %vm2526, %v2524
    %v2528 = vsel %vm223, %v2521, 0
    %2530 = vmatpush.msra.mxu0 0.0
    %2531 = vmatpush.msra.mxu0 0.0
    %2532 = vmatpush.msra.mxu0 0.0
    %2533 = vmatpush.msra.mxu0 0.0
    %2534 = vmatpush.msra.mxu0 0.0
    %2535 = vmatpush.msra.mxu0 0.0
    %2536 = vmatpush.msra.mxu0 0.0
    %2537 = vmatpush.msra.mxu0 0.0
    %2538 = vmatpush.msra.mxu0 0.0
    %2539 = vmatpush.msra.mxu0 0.0
    %2540 = vmatpush.msra.mxu0 0.0
    %2541 = vmatpush.msra.mxu0 0.0
    %2542 = vmatpush.msra.mxu0 0.0
    %2543 = vmatpush.msra.mxu0 0.0
    %2544 = vmatpush.msra.mxu0 0.0
    %2545 = vmatpush.msra.mxu0 %v101
    %2546 = vmatmul.f32.gmra.mxu0 %v2528
    %v2547 = vpop.f32.mrf.mxu0
    %v2548 = vadd.f32 %v106, %v2547
    %2549 = vdwg.mxu0
    %2550 = vmatpush.msra.mxu0 0.0
    %2551 = vmatpush.msra.mxu0 0.0
    %2552 = vmatpush.msra.mxu0 0.0
    %2553 = vmatpush.msra.mxu0 0.0
    %2554 = vmatpush.msra.mxu0 0.0
    %2555 = vmatpush.msra.mxu0 0.0
    %2556 = vmatpush.msra.mxu0 0.0
    %2557 = vmatpush.msra.mxu0 0.0
    %2558 = vmatpush.msra.mxu0 0.0
    %2559 = vmatpush.msra.mxu0 0.0
    %2560 = vmatpush.msra.mxu0 0.0
    %2561 = vmatpush.msra.mxu0 0.0
    %2562 = vmatpush.msra.mxu0 0.0
    %2563 = vmatpush.msra.mxu0 0.0
    %2564 = vmatpush.msra.mxu0 0.0
    %2565 = vmatpush.msra.mxu0 %v103
    %2566 = vmatmul.f32.gmra.mxu0 %v2528
    %v2567 = vpop.f32.mrf.mxu0
    %v2568 = vadd.f32 %v108, %v2567
    %2569 = vdwg.mxu0
    %2570 = vmatpush.msra.mxu0 0.0
    %2571 = vmatpush.msra.mxu0 0.0
    %2572 = vmatpush.msra.mxu0 0.0
    %2573 = vmatpush.msra.mxu0 0.0
    %2574 = vmatpush.msra.mxu0 0.0
    %2575 = vmatpush.msra.mxu0 0.0
    %2576 = vmatpush.msra.mxu0 0.0
    %2577 = vmatpush.msra.mxu0 0.0
    %2578 = vmatpush.msra.mxu0 0.0
    %2579 = vmatpush.msra.mxu0 0.0
    %2580 = vmatpush.msra.mxu0 0.0
    %2581 = vmatpush.msra.mxu0 0.0
    %2582 = vmatpush.msra.mxu0 0.0
    %2583 = vmatpush.msra.mxu0 0.0
    %2584 = vmatpush.msra.mxu0 0.0
    %2585 = vmatpush.msra.mxu0 %v105
    %2586 = vmatmul.f32.gmra.mxu0 %v2528
    %v2587 = vpop.f32.mrf.mxu0
    %v2588 = vadd.f32 %v110, %v2587
    %2589 = vdwg.mxu0
    %2590 = vmatpush.msra.mxu0 0.0
    %2591 = vmatpush.msra.mxu0 0.0
    %2592 = vmatpush.msra.mxu0 0.0
    %2593 = vmatpush.msra.mxu0 0.0
    %2594 = vmatpush.msra.mxu0 0.0
    %2595 = vmatpush.msra.mxu0 0.0
    %2596 = vmatpush.msra.mxu0 0.0
    %2597 = vmatpush.msra.mxu0 0.0
    %2598 = vmatpush.msra.mxu0 0.0
    %2599 = vmatpush.msra.mxu0 0.0
    %2600 = vmatpush.msra.mxu0 0.0
    %2601 = vmatpush.msra.mxu0 0.0
    %2602 = vmatpush.msra.mxu0 %v114
    %2603 = vmatpush.msra.mxu0 %v113
    %2604 = vmatpush.msra.mxu0 %v112
    %2605 = vmatpush.msra.mxu0 %v111
    %2606 = vmatmul.f32.gmra.mxu0 %v2135
    %v2607 = vpop.f32.mrf.mxu0
    %v2608 = vadd.f32 %v288, %v2607
    %2609 = vdwg.mxu0
    %2610 = vmatpush.msra.mxu0 0.0
    %2611 = vmatpush.msra.mxu0 0.0
    %2612 = vmatpush.msra.mxu0 0.0
    %2613 = vmatpush.msra.mxu0 0.0
    %2614 = vmatpush.msra.mxu0 0.0
    %2615 = vmatpush.msra.mxu0 0.0
    %2616 = vmatpush.msra.mxu0 0.0
    %2617 = vmatpush.msra.mxu0 0.0
    %2618 = vmatpush.msra.mxu0 0.0
    %2619 = vmatpush.msra.mxu0 0.0
    %2620 = vmatpush.msra.mxu0 0.0
    %2621 = vmatpush.msra.mxu0 0.0
    %2622 = vmatpush.msra.mxu0 %v119
    %2623 = vmatpush.msra.mxu0 %v118
    %2624 = vmatpush.msra.mxu0 %v117
    %2625 = vmatpush.msra.mxu0 %v116
    %2626 = vmatmul.f32.gmra.mxu0 %v2135
    %v2627 = vpop.f32.mrf.mxu0
    %v2628 = vadd.f32 %v315, %v2627
    %2629 = vdwg.mxu0
    %2630 = vmatpush.msra.mxu0 0.0
    %2631 = vmatpush.msra.mxu0 0.0
    %2632 = vmatpush.msra.mxu0 0.0
    %2633 = vmatpush.msra.mxu0 0.0
    %2634 = vmatpush.msra.mxu0 0.0
    %2635 = vmatpush.msra.mxu0 0.0
    %2636 = vmatpush.msra.mxu0 0.0
    %2637 = vmatpush.msra.mxu0 0.0
    %2638 = vmatpush.msra.mxu0 0.0
    %2639 = vmatpush.msra.mxu0 0.0
    %2640 = vmatpush.msra.mxu0 0.0
    %2641 = vmatpush.msra.mxu0 0.0
    %2642 = vmatpush.msra.mxu0 %v124
    %2643 = vmatpush.msra.mxu0 %v123
    %2644 = vmatpush.msra.mxu0 %v122
    %2645 = vmatpush.msra.mxu0 %v121
    %2646 = vmatmul.f32.gmra.mxu0 %v2135
    %v2647 = vpop.f32.mrf.mxu0
    %v2648 = vadd.f32 %v338, %v2647
    %2649 = vdwg.mxu0
    %v2650 = vadd.f32 %v2548, %v2608
    %v2651 = vxor.u32 %v2650, 2147483648
    %v2652 = vmul.f32 %v2651, 1.442695
    %v2653 = vpow.pop %v2652
    %v2654 = vadd.f32 %v2653, 1.0
    %v2655 = vrcp.pop %v2654
    %v2656 = vmul.f32 %v2654, %v2655
    %v2657 = vsub.f32 1.0, %v2656
    %v2658 = vmul.f32 %v2655, %v2657
    %v2659 = vadd.f32 %v2655, %v2658
    %vm2660 = vweird.f32 %v2654
    %vm2661 = vweird.f32 %v2655
    %vm2662 = vmor %vm2660, %vm2661
    %v2663 = vsel %vm2662, %v2655, %v2659
    %v2664 = vand.u32 2147483647, %v2654
    %vm2665 = vcmp.eq.f32.partialorder %v2664, 8.507059e+37
    %v2666 = vand.u32 %v2654, 2147483648
    %v2667 = vor.u32 1.1754944e-38, %v2666
    %v2668 = vsel %vm2665, %v2667, %v2663
    %v2669 = vmul.f32 1.0, %v2668
    %v2670 = vadd.f32 %v2568, %v2628
    %v2671 = vxor.u32 %v2670, 2147483648
    %v2672 = vmul.f32 %v2671, 1.442695
    %v2673 = vpow.pop %v2672
    %v2674 = vadd.f32 %v2673, 1.0
    %v2675 = vrcp.pop %v2674
    %v2676 = vmul.f32 %v2674, %v2675
    %v2677 = vsub.f32 1.0, %v2676
    %v2678 = vmul.f32 %v2675, %v2677
    %v2679 = vadd.f32 %v2675, %v2678
    %vm2680 = vweird.f32 %v2674
    %vm2681 = vweird.f32 %v2675
    %vm2682 = vmor %vm2680, %vm2681
    %v2683 = vsel %vm2682, %v2675, %v2679
    %v2684 = vand.u32 2147483647, %v2674
    %vm2685 = vcmp.eq.f32.partialorder %v2684, 8.507059e+37
    %v2686 = vand.u32 %v2674, 2147483648
    %v2687 = vor.u32 1.1754944e-38, %v2686
    %v2688 = vsel %vm2685, %v2687, %v2683
    %v2689 = vmul.f32 1.0, %v2688
    %v2690 = vmul.f32 %v2669, %v2648
    %v2691 = vadd.f32 %v2588, %v2690
    %v2692 = vtanh.pop %v2691
    %v2693 = vsub.f32 1.0, %v2689
    %v2694 = vmul.f32 %v2693, %v2692
    %v2695 = vmul.f32 %v2689, %v2133
    %v2696 = vadd.f32 %v2694, %v2695
    %v2698 = vsel %vm290, %v2696, 0
    %2700 = vmatpush.msra.mxu0 0.0
    %2701 = vmatpush.msra.mxu0 0.0
    %2702 = vmatpush.msra.mxu0 0.0
    %2703 = vmatpush.msra.mxu0 0.0
    %2704 = vmatpush.msra.mxu0 0.0
    %2705 = vmatpush.msra.mxu0 0.0
    %2706 = vmatpush.msra.mxu0 0.0
    %2707 = vmatpush.msra.mxu0 0.0
    %2708 = vmatpush.msra.mxu0 0.0
    %2709 = vmatpush.msra.mxu0 0.0
    %2710 = vmatpush.msra.mxu0 0.0
    %2711 = vmatpush.msra.mxu0 0.0
    %2712 = vmatpush.msra.mxu0 %v175
    %2713 = vmatpush.msra.mxu0 %v174
    %2714 = vmatpush.msra.mxu0 %v173
    %2715 = vmatpush.msra.mxu0 %v172
    %2716 = vmatmul.f32.gmra.mxu0 %v2698
    %v2717 = vpop.f32.mrf.mxu0
    %v2718 = vadd.f32 %v408, %v2717
    %2719 = vdwg.mxu0
    %2720 = vmatpush.msra.mxu0 0.0
    %2721 = vmatpush.msra.mxu0 0.0
    %2722 = vmatpush.msra.mxu0 0.0
    %2723 = vmatpush.msra.mxu0 0.0
    %2724 = vmatpush.msra.mxu0 0.0
    %2725 = vmatpush.msra.mxu0 0.0
    %2726 = vmatpush.msra.mxu0 0.0
    %2727 = vmatpush.msra.mxu0 0.0
    %2728 = vmatpush.msra.mxu0 0.0
    %2729 = vmatpush.msra.mxu0 0.0
    %2730 = vmatpush.msra.mxu0 0.0
    %2731 = vmatpush.msra.mxu0 0.0
    %2732 = vmatpush.msra.mxu0 %v180
    %2733 = vmatpush.msra.mxu0 %v179
    %2734 = vmatpush.msra.mxu0 %v178
    %2735 = vmatpush.msra.mxu0 %v177
    %2736 = vmatmul.f32.gmra.mxu0 %v2698
    %v2737 = vpop.f32.mrf.mxu0
    %v2738 = vadd.f32 %v434, %v2737
    %2739 = vdwg.mxu0
    %2740 = vmatpush.msra.mxu0 0.0
    %2741 = vmatpush.msra.mxu0 0.0
    %2742 = vmatpush.msra.mxu0 0.0
    %2743 = vmatpush.msra.mxu0 0.0
    %2744 = vmatpush.msra.mxu0 0.0
    %2745 = vmatpush.msra.mxu0 0.0
    %2746 = vmatpush.msra.mxu0 0.0
    %2747 = vmatpush.msra.mxu0 0.0
    %2748 = vmatpush.msra.mxu0 0.0
    %2749 = vmatpush.msra.mxu0 0.0
    %2750 = vmatpush.msra.mxu0 0.0
    %2751 = vmatpush.msra.mxu0 0.0
    %2752 = vmatpush.msra.mxu0 %v185
    %2753 = vmatpush.msra.mxu0 %v184
    %2754 = vmatpush.msra.mxu0 %v183
    %2755 = vmatpush.msra.mxu0 %v182
    %2756 = vmatmul.f32.gmra.mxu0 %v2698
    %v2757 = vpop.f32.mrf.mxu0
    %v2758 = vadd.f32 %v457, %v2757
    %2759 = vdwg.mxu0
    %2760 = vmatpush.msra.mxu0 0.0
    %2761 = vmatpush.msra.mxu0 0.0
    %2762 = vmatpush.msra.mxu0 0.0
    %2763 = vmatpush.msra.mxu0 0.0
    %2764 = vmatpush.msra.mxu0 0.0
    %2765 = vmatpush.msra.mxu0 0.0
    %2766 = vmatpush.msra.mxu0 0.0
    %2767 = vmatpush.msra.mxu0 0.0
    %2768 = vmatpush.msra.mxu0 0.0
    %2769 = vmatpush.msra.mxu0 0.0
    %2770 = vmatpush.msra.mxu0 0.0
    %2771 = vmatpush.msra.mxu0 0.0
    %2772 = vmatpush.msra.mxu0 %v129
    %2773 = vmatpush.msra.mxu0 %v128
    %2774 = vmatpush.msra.mxu0 %v127
    %2775 = vmatpush.msra.mxu0 %v126
    %2776 = vmatmul.f32.gmra.mxu0 %v2305
    %v2777 = vpop.f32.mrf.mxu0
    %v2778 = vadd.f32 %v480, %v2777
    %2779 = vdwg.mxu0
    %2780 = vmatpush.msra.mxu0 0.0
    %2781 = vmatpush.msra.mxu0 0.0
    %2782 = vmatpush.msra.mxu0 0.0
    %2783 = vmatpush.msra.mxu0 0.0
    %2784 = vmatpush.msra.mxu0 0.0
    %2785 = vmatpush.msra.mxu0 0.0
    %2786 = vmatpush.msra.mxu0 0.0
    %2787 = vmatpush.msra.mxu0 0.0
    %2788 = vmatpush.msra.mxu0 0.0
    %2789 = vmatpush.msra.mxu0 0.0
    %2790 = vmatpush.msra.mxu0 0.0
    %2791 = vmatpush.msra.mxu0 0.0
    %2792 = vmatpush.msra.mxu0 %v134
    %2793 = vmatpush.msra.mxu0 %v133
    %2794 = vmatpush.msra.mxu0 %v132
    %2795 = vmatpush.msra.mxu0 %v131
    %2796 = vmatmul.f32.gmra.mxu0 %v2305
    %v2797 = vpop.f32.mrf.mxu0
    %v2798 = vadd.f32 %v503, %v2797
    %2799 = vdwg.mxu0
    %2800 = vmatpush.msra.mxu0 0.0
    %2801 = vmatpush.msra.mxu0 0.0
    %2802 = vmatpush.msra.mxu0 0.0
    %2803 = vmatpush.msra.mxu0 0.0
    %2804 = vmatpush.msra.mxu0 0.0
    %2805 = vmatpush.msra.mxu0 0.0
    %2806 = vmatpush.msra.mxu0 0.0
    %2807 = vmatpush.msra.mxu0 0.0
    %2808 = vmatpush.msra.mxu0 0.0
    %2809 = vmatpush.msra.mxu0 0.0
    %2810 = vmatpush.msra.mxu0 0.0
    %2811 = vmatpush.msra.mxu0 0.0
    %2812 = vmatpush.msra.mxu0 %v139
    %2813 = vmatpush.msra.mxu0 %v138
    %2814 = vmatpush.msra.mxu0 %v137
    %2815 = vmatpush.msra.mxu0 %v136
    %2816 = vmatmul.f32.gmra.mxu0 %v2305
    %v2817 = vpop.f32.mrf.mxu0
    %v2818 = vadd.f32 %v526, %v2817
    %2819 = vdwg.mxu0
    %v2820 = vadd.f32 %v2718, %v2778
    %v2821 = vxor.u32 %v2820, 2147483648
    %v2822 = vmul.f32 %v2821, 1.442695
    %v2823 = vpow.pop %v2822
    %v2824 = vadd.f32 %v2823, 1.0
    %v2825 = vrcp.pop %v2824
    %v2826 = vmul.f32 %v2824, %v2825
    %v2827 = vsub.f32 1.0, %v2826
    %v2828 = vmul.f32 %v2825, %v2827
    %v2829 = vadd.f32 %v2825, %v2828
    %vm2830 = vweird.f32 %v2824
    %vm2831 = vweird.f32 %v2825
    %vm2832 = vmor %vm2830, %vm2831
    %v2833 = vsel %vm2832, %v2825, %v2829
    %v2834 = vand.u32 2147483647, %v2824
    %vm2835 = vcmp.eq.f32.partialorder %v2834, 8.507059e+37
    %v2836 = vand.u32 %v2824, 2147483648
    %v2837 = vor.u32 1.1754944e-38, %v2836
    %v2838 = vsel %vm2835, %v2837, %v2833
    %v2839 = vmul.f32 1.0, %v2838
    %v2840 = vadd.f32 %v2738, %v2798
    %v2841 = vxor.u32 %v2840, 2147483648
    %v2842 = vmul.f32 %v2841, 1.442695
    %v2843 = vpow.pop %v2842
    %v2844 = vadd.f32 %v2843, 1.0
    %v2845 = vrcp.pop %v2844
    %v2846 = vmul.f32 %v2844, %v2845
    %v2847 = vsub.f32 1.0, %v2846
    %v2848 = vmul.f32 %v2845, %v2847
    %v2849 = vadd.f32 %v2845, %v2848
    %vm2850 = vweird.f32 %v2844
    %vm2851 = vweird.f32 %v2845
    %vm2852 = vmor %vm2850, %vm2851
    %v2853 = vsel %vm2852, %v2845, %v2849
    %v2854 = vand.u32 2147483647, %v2844
    %vm2855 = vcmp.eq.f32.partialorder %v2854, 8.507059e+37
    %v2856 = vand.u32 %v2844, 2147483648
    %v2857 = vor.u32 1.1754944e-38, %v2856
    %v2858 = vsel %vm2855, %v2857, %v2853
    %v2859 = vmul.f32 1.0, %v2858
    %v2860 = vmul.f32 %v2839, %v2818
    %v2861 = vadd.f32 %v2758, %v2860
    %v2862 = vtanh.pop %v2861
    %v2863 = vsub.f32 1.0, %v2859
    %v2864 = vmul.f32 %v2863, %v2862
    %v2865 = vmul.f32 %v2859, %v2303
    %v2866 = vadd.f32 %v2864, %v2865
    %v2868 = vsel %vm290, %v2866, 0
    %2870 = vmatpush.msra.mxu0 0.0
    %2871 = vmatpush.msra.mxu0 0.0
    %2872 = vmatpush.msra.mxu0 0.0
    %2873 = vmatpush.msra.mxu0 0.0
    %2874 = vmatpush.msra.mxu0 0.0
    %2875 = vmatpush.msra.mxu0 0.0
    %2876 = vmatpush.msra.mxu0 0.0
    %2877 = vmatpush.msra.mxu0 0.0
    %2878 = vmatpush.msra.mxu0 0.0
    %2879 = vmatpush.msra.mxu0 0.0
    %2880 = vmatpush.msra.mxu0 0.0
    %2881 = vmatpush.msra.mxu0 0.0
    %2882 = vmatpush.msra.mxu0 %v190
    %2883 = vmatpush.msra.mxu0 %v189
    %2884 = vmatpush.msra.mxu0 %v188
    %2885 = vmatpush.msra.mxu0 %v187
    %2886 = vmatmul.f32.gmra.mxu0 %v2868
    %v2887 = vpop.f32.mrf.mxu0
    %v2888 = vadd.f32 %v596, %v2887
    %2889 = vdwg.mxu0
    %2890 = vmatpush.msra.mxu0 0.0
    %2891 = vmatpush.msra.mxu0 0.0
    %2892 = vmatpush.msra.mxu0 0.0
    %2893 = vmatpush.msra.mxu0 0.0
    %2894 = vmatpush.msra.mxu0 0.0
    %2895 = vmatpush.msra.mxu0 0.0
    %2896 = vmatpush.msra.mxu0 0.0
    %2897 = vmatpush.msra.mxu0 0.0
    %2898 = vmatpush.msra.mxu0 0.0
    %2899 = vmatpush.msra.mxu0 0.0
    %2900 = vmatpush.msra.mxu0 0.0
    %2901 = vmatpush.msra.mxu0 0.0
    %2902 = vmatpush.msra.mxu0 %v195
    %2903 = vmatpush.msra.mxu0 %v194
    %2904 = vmatpush.msra.mxu0 %v193
    %2905 = vmatpush.msra.mxu0 %v192
    %2906 = vmatmul.f32.gmra.mxu0 %v2868
    %v2907 = vpop.f32.mrf.mxu0
    %v2908 = vadd.f32 %v622, %v2907
    %2909 = vdwg.mxu0
    %2910 = vmatpush.msra.mxu0 0.0
    %2911 = vmatpush.msra.mxu0 0.0
    %2912 = vmatpush.msra.mxu0 0.0
    %2913 = vmatpush.msra.mxu0 0.0
    %2914 = vmatpush.msra.mxu0 0.0
    %2915 = vmatpush.msra.mxu0 0.0
    %2916 = vmatpush.msra.mxu0 0.0
    %2917 = vmatpush.msra.mxu0 0.0
    %2918 = vmatpush.msra.mxu0 0.0
    %2919 = vmatpush.msra.mxu0 0.0
    %2920 = vmatpush.msra.mxu0 0.0
    %2921 = vmatpush.msra.mxu0 0.0
    %2922 = vmatpush.msra.mxu0 %v200
    %2923 = vmatpush.msra.mxu0 %v199
    %2924 = vmatpush.msra.mxu0 %v198
    %2925 = vmatpush.msra.mxu0 %v197
    %2926 = vmatmul.f32.gmra.mxu0 %v2868
    %v2927 = vpop.f32.mrf.mxu0
    %v2928 = vadd.f32 %v645, %v2927
    %2929 = vdwg.mxu0
    %2930 = vmatpush.msra.mxu0 0.0
    %2931 = vmatpush.msra.mxu0 0.0
    %2932 = vmatpush.msra.mxu0 0.0
    %2933 = vmatpush.msra.mxu0 0.0
    %2934 = vmatpush.msra.mxu0 0.0
    %2935 = vmatpush.msra.mxu0 0.0
    %2936 = vmatpush.msra.mxu0 0.0
    %2937 = vmatpush.msra.mxu0 0.0
    %2938 = vmatpush.msra.mxu0 0.0
    %2939 = vmatpush.msra.mxu0 0.0
    %2940 = vmatpush.msra.mxu0 0.0
    %2941 = vmatpush.msra.mxu0 0.0
    %2942 = vmatpush.msra.mxu0 %v144
    %2943 = vmatpush.msra.mxu0 %v143
    %2944 = vmatpush.msra.mxu0 %v142
    %2945 = vmatpush.msra.mxu0 %v141
    %2946 = vmatmul.f32.gmra.mxu0 %v2475
    %v2947 = vpop.f32.mrf.mxu0
    %v2948 = vadd.f32 %v668, %v2947
    %2949 = vdwg.mxu0
    %2950 = vmatpush.msra.mxu0 0.0
    %2951 = vmatpush.msra.mxu0 0.0
    %2952 = vmatpush.msra.mxu0 0.0
    %2953 = vmatpush.msra.mxu0 0.0
    %2954 = vmatpush.msra.mxu0 0.0
    %2955 = vmatpush.msra.mxu0 0.0
    %2956 = vmatpush.msra.mxu0 0.0
    %2957 = vmatpush.msra.mxu0 0.0
    %2958 = vmatpush.msra.mxu0 0.0
    %2959 = vmatpush.msra.mxu0 0.0
    %2960 = vmatpush.msra.mxu0 0.0
    %2961 = vmatpush.msra.mxu0 0.0
    %2962 = vmatpush.msra.mxu0 %v149
    %2963 = vmatpush.msra.mxu0 %v148
    %2964 = vmatpush.msra.mxu0 %v147
    %2965 = vmatpush.msra.mxu0 %v146
    %2966 = vmatmul.f32.gmra.mxu0 %v2475
    %v2967 = vpop.f32.mrf.mxu0
    %v2968 = vadd.f32 %v691, %v2967
    %2969 = vdwg.mxu0
    %2970 = vmatpush.msra.mxu0 0.0
    %2971 = vmatpush.msra.mxu0 0.0
    %2972 = vmatpush.msra.mxu0 0.0
    %2973 = vmatpush.msra.mxu0 0.0
    %2974 = vmatpush.msra.mxu0 0.0
    %2975 = vmatpush.msra.mxu0 0.0
    %2976 = vmatpush.msra.mxu0 0.0
    %2977 = vmatpush.msra.mxu0 0.0
    %2978 = vmatpush.msra.mxu0 0.0
    %2979 = vmatpush.msra.mxu0 0.0
    %2980 = vmatpush.msra.mxu0 0.0
    %2981 = vmatpush.msra.mxu0 0.0
    %2982 = vmatpush.msra.mxu0 %v154
    %2983 = vmatpush.msra.mxu0 %v153
    %2984 = vmatpush.msra.mxu0 %v152
    %2985 = vmatpush.msra.mxu0 %v151
    %2986 = vmatmul.f32.gmra.mxu0 %v2475
    %v2987 = vpop.f32.mrf.mxu0
    %v2988 = vadd.f32 %v714, %v2987
    %2989 = vdwg.mxu0
    %v2990 = vadd.f32 %v2888, %v2948
    %v2991 = vxor.u32 %v2990, 2147483648
    %v2992 = vmul.f32 %v2991, 1.442695
    %v2993 = vpow.pop %v2992
    %v2994 = vadd.f32 %v2993, 1.0
    %v2995 = vrcp.pop %v2994
    %v2996 = vmul.f32 %v2994, %v2995
    %v2997 = vsub.f32 1.0, %v2996
    %v2998 = vmul.f32 %v2995, %v2997
    %v2999 = vadd.f32 %v2995, %v2998
    %vm3000 = vweird.f32 %v2994
    %vm3001 = vweird.f32 %v2995
    %vm3002 = vmor %vm3000, %vm3001
    %v3003 = vsel %vm3002, %v2995, %v2999
    %v3004 = vand.u32 2147483647, %v2994
    %vm3005 = vcmp.eq.f32.partialorder %v3004, 8.507059e+37
    %v3006 = vand.u32 %v2994, 2147483648
    %v3007 = vor.u32 1.1754944e-38, %v3006
    %v3008 = vsel %vm3005, %v3007, %v3003
    %v3009 = vmul.f32 1.0, %v3008
    %v3010 = vadd.f32 %v2908, %v2968
    %v3011 = vxor.u32 %v3010, 2147483648
    %v3012 = vmul.f32 %v3011, 1.442695
    %v3013 = vpow.pop %v3012
    %v3014 = vadd.f32 %v3013, 1.0
    %v3015 = vrcp.pop %v3014
    %v3016 = vmul.f32 %v3014, %v3015
    %v3017 = vsub.f32 1.0, %v3016
    %v3018 = vmul.f32 %v3015, %v3017
    %v3019 = vadd.f32 %v3015, %v3018
    %vm3020 = vweird.f32 %v3014
    %vm3021 = vweird.f32 %v3015
    %vm3022 = vmor %vm3020, %vm3021
    %v3023 = vsel %vm3022, %v3015, %v3019
    %v3024 = vand.u32 2147483647, %v3014
    %vm3025 = vcmp.eq.f32.partialorder %v3024, 8.507059e+37
    %v3026 = vand.u32 %v3014, 2147483648
    %v3027 = vor.u32 1.1754944e-38, %v3026
    %v3028 = vsel %vm3025, %v3027, %v3023
    %v3029 = vmul.f32 1.0, %v3028
    %v3030 = vmul.f32 %v3009, %v2988
    %v3031 = vadd.f32 %v2928, %v3030
    %v3032 = vtanh.pop %v3031
    %v3033 = vsub.f32 1.0, %v3029
    %v3034 = vmul.f32 %v3033, %v3032
    %v3035 = vmul.f32 %v3029, %v2473
    %v3036 = vadd.f32 %v3034, %v3035
    %v3038 = vsel %vm290, %v3036, 0
    %3040 = vmatpush.msra.mxu0 0.0
    %3041 = vmatpush.msra.mxu0 0.0
    %3042 = vmatpush.msra.mxu0 0.0
    %3043 = vmatpush.msra.mxu0 0.0
    %3044 = vmatpush.msra.mxu0 0.0
    %3045 = vmatpush.msra.mxu0 0.0
    %3046 = vmatpush.msra.mxu0 0.0
    %3047 = vmatpush.msra.mxu0 0.0
    %3048 = vmatpush.msra.mxu0 0.0
    %3049 = vmatpush.msra.mxu0 0.0
    %3050 = vmatpush.msra.mxu0 0.0
    %3051 = vmatpush.msra.mxu0 0.0
    %3052 = vmatpush.msra.mxu0 %v215
    %3053 = vmatpush.msra.mxu0 %v214
    %3054 = vmatpush.msra.mxu0 %v213
    %3055 = vmatpush.msra.mxu0 %v212
    %3056 = vmatmul.f32.gmra.mxu0 %v3038
    %v3057 = vpop.f32.mrf.mxu0
    %v3058 = vadd.f32 %v784, %v3057
    %3059 = vdwg.mxu0
    %v3060 = vmax.f32 %v3058, 0.0
    %v3062 = vsel %vm290, %v3060, 0
    %3064 = vmatpush.msra.mxu0 0.0
    %3065 = vmatpush.msra.mxu0 0.0
    %3066 = vmatpush.msra.mxu0 0.0
    %3067 = vmatpush.msra.mxu0 0.0
    %3068 = vmatpush.msra.mxu0 0.0
    %3069 = vmatpush.msra.mxu0 0.0
    %3070 = vmatpush.msra.mxu0 0.0
    %3071 = vmatpush.msra.mxu0 0.0
    %3072 = vmatpush.msra.mxu0 0.0
    %3073 = vmatpush.msra.mxu0 0.0
    %3074 = vmatpush.msra.mxu0 0.0
    %3075 = vmatpush.msra.mxu0 0.0
    %3076 = vmatpush.msra.mxu0 %v220
    %3077 = vmatpush.msra.mxu0 %v219
    %3078 = vmatpush.msra.mxu0 %v218
    %3079 = vmatpush.msra.mxu0 %v217
    %3080 = vmatmul.f32.gmra.mxu0 %v3062
    %v3081 = vpop.f32.mrf.mxu0
    %v3082 = vadd.f32 %v811, %v3081
    %3083 = vdwg.mxu0
    %v3084 = vtanh.pop %v3082
    %3086 = vrot.lane.b32.xlu0 %v3084, 32
    %v3087 = vpop.permute.xlu0 %3086
    %vm3089 = vcmask 326912
    %3090 = vst.msk [vmem:[%s11] sm:$0xff] %vm3089, %v3087
    %v3091 = vsel %vm223, %v3084, 0
    %3093 = vmatpush.msra.mxu0 0.0
    %3094 = vmatpush.msra.mxu0 0.0
    %3095 = vmatpush.msra.mxu0 0.0
    %3096 = vmatpush.msra.mxu0 0.0
    %3097 = vmatpush.msra.mxu0 0.0
    %3098 = vmatpush.msra.mxu0 0.0
    %3099 = vmatpush.msra.mxu0 0.0
    %3100 = vmatpush.msra.mxu0 0.0
    %3101 = vmatpush.msra.mxu0 0.0
    %3102 = vmatpush.msra.mxu0 0.0
    %3103 = vmatpush.msra.mxu0 0.0
    %3104 = vmatpush.msra.mxu0 0.0
    %3105 = vmatpush.msra.mxu0 0.0
    %3106 = vmatpush.msra.mxu0 0.0
    %3107 = vmatpush.msra.mxu0 0.0
    %3108 = vmatpush.msra.mxu0 %v101
    %3109 = vmatmul.f32.gmra.mxu0 %v3091
    %v3110 = vpop.f32.mrf.mxu0
    %v3111 = vadd.f32 %v106, %v3110
    %3112 = vdwg.mxu0
    %3113 = vmatpush.msra.mxu0 0.0
    %3114 = vmatpush.msra.mxu0 0.0
    %3115 = vmatpush.msra.mxu0 0.0
    %3116 = vmatpush.msra.mxu0 0.0
    %3117 = vmatpush.msra.mxu0 0.0
    %3118 = vmatpush.msra.mxu0 0.0
    %3119 = vmatpush.msra.mxu0 0.0
    %3120 = vmatpush.msra.mxu0 0.0
    %3121 = vmatpush.msra.mxu0 0.0
    %3122 = vmatpush.msra.mxu0 0.0
    %3123 = vmatpush.msra.mxu0 0.0
    %3124 = vmatpush.msra.mxu0 0.0
    %3125 = vmatpush.msra.mxu0 0.0
    %3126 = vmatpush.msra.mxu0 0.0
    %3127 = vmatpush.msra.mxu0 0.0
    %3128 = vmatpush.msra.mxu0 %v103
    %3129 = vmatmul.f32.gmra.mxu0 %v3091
    %v3130 = vpop.f32.mrf.mxu0
    %v3131 = vadd.f32 %v108, %v3130
    %3132 = vdwg.mxu0
    %3133 = vmatpush.msra.mxu0 0.0
    %3134 = vmatpush.msra.mxu0 0.0
    %3135 = vmatpush.msra.mxu0 0.0
    %3136 = vmatpush.msra.mxu0 0.0
    %3137 = vmatpush.msra.mxu0 0.0
    %3138 = vmatpush.msra.mxu0 0.0
    %3139 = vmatpush.msra.mxu0 0.0
    %3140 = vmatpush.msra.mxu0 0.0
    %3141 = vmatpush.msra.mxu0 0.0
    %3142 = vmatpush.msra.mxu0 0.0
    %3143 = vmatpush.msra.mxu0 0.0
    %3144 = vmatpush.msra.mxu0 0.0
    %3145 = vmatpush.msra.mxu0 0.0
    %3146 = vmatpush.msra.mxu0 0.0
    %3147 = vmatpush.msra.mxu0 0.0
    %3148 = vmatpush.msra.mxu0 %v105
    %3149 = vmatmul.f32.gmra.mxu0 %v3091
    %v3150 = vpop.f32.mrf.mxu0
    %v3151 = vadd.f32 %v110, %v3150
    %3152 = vdwg.mxu0
    %3153 = vmatpush.msra.mxu0 0.0
    %3154 = vmatpush.msra.mxu0 0.0
    %3155 = vmatpush.msra.mxu0 0.0
    %3156 = vmatpush.msra.mxu0 0.0
    %3157 = vmatpush.msra.mxu0 0.0
    %3158 = vmatpush.msra.mxu0 0.0
    %3159 = vmatpush.msra.mxu0 0.0
    %3160 = vmatpush.msra.mxu0 0.0
    %3161 = vmatpush.msra.mxu0 0.0
    %3162 = vmatpush.msra.mxu0 0.0
    %3163 = vmatpush.msra.mxu0 0.0
    %3164 = vmatpush.msra.mxu0 0.0
    %3165 = vmatpush.msra.mxu0 %v114
    %3166 = vmatpush.msra.mxu0 %v113
    %3167 = vmatpush.msra.mxu0 %v112
    %3168 = vmatpush.msra.mxu0 %v111
    %3169 = vmatmul.f32.gmra.mxu0 %v2698
    %v3170 = vpop.f32.mrf.mxu0
    %v3171 = vadd.f32 %v288, %v3170
    %3172 = vdwg.mxu0
    %3173 = vmatpush.msra.mxu0 0.0
    %3174 = vmatpush.msra.mxu0 0.0
    %3175 = vmatpush.msra.mxu0 0.0
    %3176 = vmatpush.msra.mxu0 0.0
    %3177 = vmatpush.msra.mxu0 0.0
    %3178 = vmatpush.msra.mxu0 0.0
    %3179 = vmatpush.msra.mxu0 0.0
    %3180 = vmatpush.msra.mxu0 0.0
    %3181 = vmatpush.msra.mxu0 0.0
    %3182 = vmatpush.msra.mxu0 0.0
    %3183 = vmatpush.msra.mxu0 0.0
    %3184 = vmatpush.msra.mxu0 0.0
    %3185 = vmatpush.msra.mxu0 %v119
    %3186 = vmatpush.msra.mxu0 %v118
    %3187 = vmatpush.msra.mxu0 %v117
    %3188 = vmatpush.msra.mxu0 %v116
    %3189 = vmatmul.f32.gmra.mxu0 %v2698
    %v3190 = vpop.f32.mrf.mxu0
    %v3191 = vadd.f32 %v315, %v3190
    %3192 = vdwg.mxu0
    %3193 = vmatpush.msra.mxu0 0.0
    %3194 = vmatpush.msra.mxu0 0.0
    %3195 = vmatpush.msra.mxu0 0.0
    %3196 = vmatpush.msra.mxu0 0.0
    %3197 = vmatpush.msra.mxu0 0.0
    %3198 = vmatpush.msra.mxu0 0.0
    %3199 = vmatpush.msra.mxu0 0.0
    %3200 = vmatpush.msra.mxu0 0.0
    %3201 = vmatpush.msra.mxu0 0.0
    %3202 = vmatpush.msra.mxu0 0.0
    %3203 = vmatpush.msra.mxu0 0.0
    %3204 = vmatpush.msra.mxu0 0.0
    %3205 = vmatpush.msra.mxu0 %v124
    %3206 = vmatpush.msra.mxu0 %v123
    %3207 = vmatpush.msra.mxu0 %v122
    %3208 = vmatpush.msra.mxu0 %v121
    %3209 = vmatmul.f32.gmra.mxu0 %v2698
    %v3210 = vpop.f32.mrf.mxu0
    %v3211 = vadd.f32 %v338, %v3210
    %3212 = vdwg.mxu0
    %v3213 = vadd.f32 %v3111, %v3171
    %v3214 = vxor.u32 %v3213, 2147483648
    %v3215 = vmul.f32 %v3214, 1.442695
    %v3216 = vpow.pop %v3215
    %v3217 = vadd.f32 %v3216, 1.0
    %v3218 = vrcp.pop %v3217
    %v3219 = vmul.f32 %v3217, %v3218
    %v3220 = vsub.f32 1.0, %v3219
    %v3221 = vmul.f32 %v3218, %v3220
    %v3222 = vadd.f32 %v3218, %v3221
    %vm3223 = vweird.f32 %v3217
    %vm3224 = vweird.f32 %v3218
    %vm3225 = vmor %vm3223, %vm3224
    %v3226 = vsel %vm3225, %v3218, %v3222
    %v3227 = vand.u32 2147483647, %v3217
    %vm3228 = vcmp.eq.f32.partialorder %v3227, 8.507059e+37
    %v3229 = vand.u32 %v3217, 2147483648
    %v3230 = vor.u32 1.1754944e-38, %v3229
    %v3231 = vsel %vm3228, %v3230, %v3226
    %v3232 = vmul.f32 1.0, %v3231
    %v3233 = vadd.f32 %v3131, %v3191
    %v3234 = vxor.u32 %v3233, 2147483648
    %v3235 = vmul.f32 %v3234, 1.442695
    %v3236 = vpow.pop %v3235
    %v3237 = vadd.f32 %v3236, 1.0
    %v3238 = vrcp.pop %v3237
    %v3239 = vmul.f32 %v3237, %v3238
    %v3240 = vsub.f32 1.0, %v3239
    %v3241 = vmul.f32 %v3238, %v3240
    %v3242 = vadd.f32 %v3238, %v3241
    %vm3243 = vweird.f32 %v3237
    %vm3244 = vweird.f32 %v3238
    %vm3245 = vmor %vm3243, %vm3244
    %v3246 = vsel %vm3245, %v3238, %v3242
    %v3247 = vand.u32 2147483647, %v3237
    %vm3248 = vcmp.eq.f32.partialorder %v3247, 8.507059e+37
    %v3249 = vand.u32 %v3237, 2147483648
    %v3250 = vor.u32 1.1754944e-38, %v3249
    %v3251 = vsel %vm3248, %v3250, %v3246
    %v3252 = vmul.f32 1.0, %v3251
    %v3253 = vmul.f32 %v3232, %v3211
    %v3254 = vadd.f32 %v3151, %v3253
    %v3255 = vtanh.pop %v3254
    %v3256 = vsub.f32 1.0, %v3252
    %v3257 = vmul.f32 %v3256, %v3255
    %v3258 = vmul.f32 %v3252, %v2696
    %v3259 = vadd.f32 %v3257, %v3258
    %v3261 = vsel %vm290, %v3259, 0
    %3263 = vmatpush.msra.mxu0 0.0
    %3264 = vmatpush.msra.mxu0 0.0
    %3265 = vmatpush.msra.mxu0 0.0
    %3266 = vmatpush.msra.mxu0 0.0
    %3267 = vmatpush.msra.mxu0 0.0
    %3268 = vmatpush.msra.mxu0 0.0
    %3269 = vmatpush.msra.mxu0 0.0
    %3270 = vmatpush.msra.mxu0 0.0
    %3271 = vmatpush.msra.mxu0 0.0
    %3272 = vmatpush.msra.mxu0 0.0
    %3273 = vmatpush.msra.mxu0 0.0
    %3274 = vmatpush.msra.mxu0 0.0
    %3275 = vmatpush.msra.mxu0 %v175
    %3276 = vmatpush.msra.mxu0 %v174
    %3277 = vmatpush.msra.mxu0 %v173
    %3278 = vmatpush.msra.mxu0 %v172
    %3279 = vmatmul.f32.gmra.mxu0 %v3261
    %v3280 = vpop.f32.mrf.mxu0
    %v3281 = vadd.f32 %v408, %v3280
    %3282 = vdwg.mxu0
    %3283 = vmatpush.msra.mxu0 0.0
    %3284 = vmatpush.msra.mxu0 0.0
    %3285 = vmatpush.msra.mxu0 0.0
    %3286 = vmatpush.msra.mxu0 0.0
    %3287 = vmatpush.msra.mxu0 0.0
    %3288 = vmatpush.msra.mxu0 0.0
    %3289 = vmatpush.msra.mxu0 0.0
    %3290 = vmatpush.msra.mxu0 0.0
    %3291 = vmatpush.msra.mxu0 0.0
    %3292 = vmatpush.msra.mxu0 0.0
    %3293 = vmatpush.msra.mxu0 0.0
    %3294 = vmatpush.msra.mxu0 0.0
    %3295 = vmatpush.msra.mxu0 %v180
    %3296 = vmatpush.msra.mxu0 %v179
    %3297 = vmatpush.msra.mxu0 %v178
    %3298 = vmatpush.msra.mxu0 %v177
    %3299 = vmatmul.f32.gmra.mxu0 %v3261
    %v3300 = vpop.f32.mrf.mxu0
    %v3301 = vadd.f32 %v434, %v3300
    %3302 = vdwg.mxu0
    %3303 = vmatpush.msra.mxu0 0.0
    %3304 = vmatpush.msra.mxu0 0.0
    %3305 = vmatpush.msra.mxu0 0.0
    %3306 = vmatpush.msra.mxu0 0.0
    %3307 = vmatpush.msra.mxu0 0.0
    %3308 = vmatpush.msra.mxu0 0.0
    %3309 = vmatpush.msra.mxu0 0.0
    %3310 = vmatpush.msra.mxu0 0.0
    %3311 = vmatpush.msra.mxu0 0.0
    %3312 = vmatpush.msra.mxu0 0.0
    %3313 = vmatpush.msra.mxu0 0.0
    %3314 = vmatpush.msra.mxu0 0.0
    %3315 = vmatpush.msra.mxu0 %v185
    %3316 = vmatpush.msra.mxu0 %v184
    %3317 = vmatpush.msra.mxu0 %v183
    %3318 = vmatpush.msra.mxu0 %v182
    %3319 = vmatmul.f32.gmra.mxu0 %v3261
    %v3320 = vpop.f32.mrf.mxu0
    %v3321 = vadd.f32 %v457, %v3320
    %3322 = vdwg.mxu0
    %3323 = vmatpush.msra.mxu0 0.0
    %3324 = vmatpush.msra.mxu0 0.0
    %3325 = vmatpush.msra.mxu0 0.0
    %3326 = vmatpush.msra.mxu0 0.0
    %3327 = vmatpush.msra.mxu0 0.0
    %3328 = vmatpush.msra.mxu0 0.0
    %3329 = vmatpush.msra.mxu0 0.0
    %3330 = vmatpush.msra.mxu0 0.0
    %3331 = vmatpush.msra.mxu0 0.0
    %3332 = vmatpush.msra.mxu0 0.0
    %3333 = vmatpush.msra.mxu0 0.0
    %3334 = vmatpush.msra.mxu0 0.0
    %3335 = vmatpush.msra.mxu0 %v129
    %3336 = vmatpush.msra.mxu0 %v128
    %3337 = vmatpush.msra.mxu0 %v127
    %3338 = vmatpush.msra.mxu0 %v126
    %3339 = vmatmul.f32.gmra.mxu0 %v2868
    %v3340 = vpop.f32.mrf.mxu0
    %v3341 = vadd.f32 %v480, %v3340
    %3342 = vdwg.mxu0
    %3343 = vmatpush.msra.mxu0 0.0
    %3344 = vmatpush.msra.mxu0 0.0
    %3345 = vmatpush.msra.mxu0 0.0
    %3346 = vmatpush.msra.mxu0 0.0
    %3347 = vmatpush.msra.mxu0 0.0
    %3348 = vmatpush.msra.mxu0 0.0
    %3349 = vmatpush.msra.mxu0 0.0
    %3350 = vmatpush.msra.mxu0 0.0
    %3351 = vmatpush.msra.mxu0 0.0
    %3352 = vmatpush.msra.mxu0 0.0
    %3353 = vmatpush.msra.mxu0 0.0
    %3354 = vmatpush.msra.mxu0 0.0
    %3355 = vmatpush.msra.mxu0 %v134
    %3356 = vmatpush.msra.mxu0 %v133
    %3357 = vmatpush.msra.mxu0 %v132
    %3358 = vmatpush.msra.mxu0 %v131
    %3359 = vmatmul.f32.gmra.mxu0 %v2868
    %v3360 = vpop.f32.mrf.mxu0
    %v3361 = vadd.f32 %v503, %v3360
    %3362 = vdwg.mxu0
    %3363 = vmatpush.msra.mxu0 0.0
    %3364 = vmatpush.msra.mxu0 0.0
    %3365 = vmatpush.msra.mxu0 0.0
    %3366 = vmatpush.msra.mxu0 0.0
    %3367 = vmatpush.msra.mxu0 0.0
    %3368 = vmatpush.msra.mxu0 0.0
    %3369 = vmatpush.msra.mxu0 0.0
    %3370 = vmatpush.msra.mxu0 0.0
    %3371 = vmatpush.msra.mxu0 0.0
    %3372 = vmatpush.msra.mxu0 0.0
    %3373 = vmatpush.msra.mxu0 0.0
    %3374 = vmatpush.msra.mxu0 0.0
    %3375 = vmatpush.msra.mxu0 %v139
    %3376 = vmatpush.msra.mxu0 %v138
    %3377 = vmatpush.msra.mxu0 %v137
    %3378 = vmatpush.msra.mxu0 %v136
    %3379 = vmatmul.f32.gmra.mxu0 %v2868
    %v3380 = vpop.f32.mrf.mxu0
    %v3381 = vadd.f32 %v526, %v3380
    %3382 = vdwg.mxu0
    %v3383 = vadd.f32 %v3281, %v3341
    %v3384 = vxor.u32 %v3383, 2147483648
    %v3385 = vmul.f32 %v3384, 1.442695
    %v3386 = vpow.pop %v3385
    %v3387 = vadd.f32 %v3386, 1.0
    %v3388 = vrcp.pop %v3387
    %v3389 = vmul.f32 %v3387, %v3388
    %v3390 = vsub.f32 1.0, %v3389
    %v3391 = vmul.f32 %v3388, %v3390
    %v3392 = vadd.f32 %v3388, %v3391
    %vm3393 = vweird.f32 %v3387
    %vm3394 = vweird.f32 %v3388
    %vm3395 = vmor %vm3393, %vm3394
    %v3396 = vsel %vm3395, %v3388, %v3392
    %v3397 = vand.u32 2147483647, %v3387
    %vm3398 = vcmp.eq.f32.partialorder %v3397, 8.507059e+37
    %v3399 = vand.u32 %v3387, 2147483648
    %v3400 = vor.u32 1.1754944e-38, %v3399
    %v3401 = vsel %vm3398, %v3400, %v3396
    %v3402 = vmul.f32 1.0, %v3401
    %v3403 = vadd.f32 %v3301, %v3361
    %v3404 = vxor.u32 %v3403, 2147483648
    %v3405 = vmul.f32 %v3404, 1.442695
    %v3406 = vpow.pop %v3405
    %v3407 = vadd.f32 %v3406, 1.0
    %v3408 = vrcp.pop %v3407
    %v3409 = vmul.f32 %v3407, %v3408
    %v3410 = vsub.f32 1.0, %v3409
    %v3411 = vmul.f32 %v3408, %v3410
    %v3412 = vadd.f32 %v3408, %v3411
    %vm3413 = vweird.f32 %v3407
    %vm3414 = vweird.f32 %v3408
    %vm3415 = vmor %vm3413, %vm3414
    %v3416 = vsel %vm3415, %v3408, %v3412
    %v3417 = vand.u32 2147483647, %v3407
    %vm3418 = vcmp.eq.f32.partialorder %v3417, 8.507059e+37
    %v3419 = vand.u32 %v3407, 2147483648
    %v3420 = vor.u32 1.1754944e-38, %v3419
    %v3421 = vsel %vm3418, %v3420, %v3416
    %v3422 = vmul.f32 1.0, %v3421
    %v3423 = vmul.f32 %v3402, %v3381
    %v3424 = vadd.f32 %v3321, %v3423
    %v3425 = vtanh.pop %v3424
    %v3426 = vsub.f32 1.0, %v3422
    %v3427 = vmul.f32 %v3426, %v3425
    %v3428 = vmul.f32 %v3422, %v2866
    %v3429 = vadd.f32 %v3427, %v3428
    %v3431 = vsel %vm290, %v3429, 0
    %3433 = vmatpush.msra.mxu0 0.0
    %3434 = vmatpush.msra.mxu0 0.0
    %3435 = vmatpush.msra.mxu0 0.0
    %3436 = vmatpush.msra.mxu0 0.0
    %3437 = vmatpush.msra.mxu0 0.0
    %3438 = vmatpush.msra.mxu0 0.0
    %3439 = vmatpush.msra.mxu0 0.0
    %3440 = vmatpush.msra.mxu0 0.0
    %3441 = vmatpush.msra.mxu0 0.0
    %3442 = vmatpush.msra.mxu0 0.0
    %3443 = vmatpush.msra.mxu0 0.0
    %3444 = vmatpush.msra.mxu0 0.0
    %3445 = vmatpush.msra.mxu0 %v190
    %3446 = vmatpush.msra.mxu0 %v189
    %3447 = vmatpush.msra.mxu0 %v188
    %3448 = vmatpush.msra.mxu0 %v187
    %3449 = vmatmul.f32.gmra.mxu0 %v3431
    %v3450 = vpop.f32.mrf.mxu0
    %v3451 = vadd.f32 %v596, %v3450
    %3452 = vdwg.mxu0
    %3453 = vmatpush.msra.mxu0 0.0
    %3454 = vmatpush.msra.mxu0 0.0
    %3455 = vmatpush.msra.mxu0 0.0
    %3456 = vmatpush.msra.mxu0 0.0
    %3457 = vmatpush.msra.mxu0 0.0
    %3458 = vmatpush.msra.mxu0 0.0
    %3459 = vmatpush.msra.mxu0 0.0
    %3460 = vmatpush.msra.mxu0 0.0
    %3461 = vmatpush.msra.mxu0 0.0
    %3462 = vmatpush.msra.mxu0 0.0
    %3463 = vmatpush.msra.mxu0 0.0
    %3464 = vmatpush.msra.mxu0 0.0
    %3465 = vmatpush.msra.mxu0 %v195
    %3466 = vmatpush.msra.mxu0 %v194
    %3467 = vmatpush.msra.mxu0 %v193
    %3468 = vmatpush.msra.mxu0 %v192
    %3469 = vmatmul.f32.gmra.mxu0 %v3431
    %v3470 = vpop.f32.mrf.mxu0
    %v3471 = vadd.f32 %v622, %v3470
    %3472 = vdwg.mxu0
    %3473 = vmatpush.msra.mxu0 0.0
    %3474 = vmatpush.msra.mxu0 0.0
    %3475 = vmatpush.msra.mxu0 0.0
    %3476 = vmatpush.msra.mxu0 0.0
    %3477 = vmatpush.msra.mxu0 0.0
    %3478 = vmatpush.msra.mxu0 0.0
    %3479 = vmatpush.msra.mxu0 0.0
    %3480 = vmatpush.msra.mxu0 0.0
    %3481 = vmatpush.msra.mxu0 0.0
    %3482 = vmatpush.msra.mxu0 0.0
    %3483 = vmatpush.msra.mxu0 0.0
    %3484 = vmatpush.msra.mxu0 0.0
    %3485 = vmatpush.msra.mxu0 %v200
    %3486 = vmatpush.msra.mxu0 %v199
    %3487 = vmatpush.msra.mxu0 %v198
    %3488 = vmatpush.msra.mxu0 %v197
    %3489 = vmatmul.f32.gmra.mxu0 %v3431
    %v3490 = vpop.f32.mrf.mxu0
    %v3491 = vadd.f32 %v645, %v3490
    %3492 = vdwg.mxu0
    %3493 = vmatpush.msra.mxu0 0.0
    %3494 = vmatpush.msra.mxu0 0.0
    %3495 = vmatpush.msra.mxu0 0.0
    %3496 = vmatpush.msra.mxu0 0.0
    %3497 = vmatpush.msra.mxu0 0.0
    %3498 = vmatpush.msra.mxu0 0.0
    %3499 = vmatpush.msra.mxu0 0.0
    %3500 = vmatpush.msra.mxu0 0.0
    %3501 = vmatpush.msra.mxu0 0.0
    %3502 = vmatpush.msra.mxu0 0.0
    %3503 = vmatpush.msra.mxu0 0.0
    %3504 = vmatpush.msra.mxu0 0.0
    %3505 = vmatpush.msra.mxu0 %v144
    %3506 = vmatpush.msra.mxu0 %v143
    %3507 = vmatpush.msra.mxu0 %v142
    %3508 = vmatpush.msra.mxu0 %v141
    %3509 = vmatmul.f32.gmra.mxu0 %v3038
    %v3510 = vpop.f32.mrf.mxu0
    %v3511 = vadd.f32 %v668, %v3510
    %3512 = vdwg.mxu0
    %3513 = vmatpush.msra.mxu0 0.0
    %3514 = vmatpush.msra.mxu0 0.0
    %3515 = vmatpush.msra.mxu0 0.0
    %3516 = vmatpush.msra.mxu0 0.0
    %3517 = vmatpush.msra.mxu0 0.0
    %3518 = vmatpush.msra.mxu0 0.0
    %3519 = vmatpush.msra.mxu0 0.0
    %3520 = vmatpush.msra.mxu0 0.0
    %3521 = vmatpush.msra.mxu0 0.0
    %3522 = vmatpush.msra.mxu0 0.0
    %3523 = vmatpush.msra.mxu0 0.0
    %3524 = vmatpush.msra.mxu0 0.0
    %3525 = vmatpush.msra.mxu0 %v149
    %3526 = vmatpush.msra.mxu0 %v148
    %3527 = vmatpush.msra.mxu0 %v147
    %3528 = vmatpush.msra.mxu0 %v146
    %3529 = vmatmul.f32.gmra.mxu0 %v3038
    %v3530 = vpop.f32.mrf.mxu0
    %v3531 = vadd.f32 %v691, %v3530
    %3532 = vdwg.mxu0
    %3533 = vmatpush.msra.mxu0 0.0
    %3534 = vmatpush.msra.mxu0 0.0
    %3535 = vmatpush.msra.mxu0 0.0
    %3536 = vmatpush.msra.mxu0 0.0
    %3537 = vmatpush.msra.mxu0 0.0
    %3538 = vmatpush.msra.mxu0 0.0
    %3539 = vmatpush.msra.mxu0 0.0
    %3540 = vmatpush.msra.mxu0 0.0
    %3541 = vmatpush.msra.mxu0 0.0
    %3542 = vmatpush.msra.mxu0 0.0
    %3543 = vmatpush.msra.mxu0 0.0
    %3544 = vmatpush.msra.mxu0 0.0
    %3545 = vmatpush.msra.mxu0 %v154
    %3546 = vmatpush.msra.mxu0 %v153
    %3547 = vmatpush.msra.mxu0 %v152
    %3548 = vmatpush.msra.mxu0 %v151
    %3549 = vmatmul.f32.gmra.mxu0 %v3038
    %v3550 = vpop.f32.mrf.mxu0
    %v3551 = vadd.f32 %v714, %v3550
    %3552 = vdwg.mxu0
    %v3553 = vadd.f32 %v3451, %v3511
    %v3554 = vxor.u32 %v3553, 2147483648
    %v3555 = vmul.f32 %v3554, 1.442695
    %v3556 = vpow.pop %v3555
    %v3557 = vadd.f32 %v3556, 1.0
    %v3558 = vrcp.pop %v3557
    %v3559 = vmul.f32 %v3557, %v3558
    %v3560 = vsub.f32 1.0, %v3559
    %v3561 = vmul.f32 %v3558, %v3560
    %v3562 = vadd.f32 %v3558, %v3561
    %vm3563 = vweird.f32 %v3557
    %vm3564 = vweird.f32 %v3558
    %vm3565 = vmor %vm3563, %vm3564
    %v3566 = vsel %vm3565, %v3558, %v3562
    %v3567 = vand.u32 2147483647, %v3557
    %vm3568 = vcmp.eq.f32.partialorder %v3567, 8.507059e+37
    %v3569 = vand.u32 %v3557, 2147483648
    %v3570 = vor.u32 1.1754944e-38, %v3569
    %v3571 = vsel %vm3568, %v3570, %v3566
    %v3572 = vmul.f32 1.0, %v3571
    %v3573 = vadd.f32 %v3471, %v3531
    %v3574 = vxor.u32 %v3573, 2147483648
    %v3575 = vmul.f32 %v3574, 1.442695
    %v3576 = vpow.pop %v3575
    %v3577 = vadd.f32 %v3576, 1.0
    %v3578 = vrcp.pop %v3577
    %v3579 = vmul.f32 %v3577, %v3578
    %v3580 = vsub.f32 1.0, %v3579
    %v3581 = vmul.f32 %v3578, %v3580
    %v3582 = vadd.f32 %v3578, %v3581
    %vm3583 = vweird.f32 %v3577
    %vm3584 = vweird.f32 %v3578
    %vm3585 = vmor %vm3583, %vm3584
    %v3586 = vsel %vm3585, %v3578, %v3582
    %v3587 = vand.u32 2147483647, %v3577
    %vm3588 = vcmp.eq.f32.partialorder %v3587, 8.507059e+37
    %v3589 = vand.u32 %v3577, 2147483648
    %v3590 = vor.u32 1.1754944e-38, %v3589
    %v3591 = vsel %vm3588, %v3590, %v3586
    %v3592 = vmul.f32 1.0, %v3591
    %v3593 = vmul.f32 %v3572, %v3551
    %v3594 = vadd.f32 %v3491, %v3593
    %v3595 = vtanh.pop %v3594
    %v3596 = vsub.f32 1.0, %v3592
    %v3597 = vmul.f32 %v3596, %v3595
    %v3598 = vmul.f32 %v3592, %v3036
    %v3599 = vadd.f32 %v3597, %v3598
    %v3601 = vsel %vm290, %v3599, 0
    %3603 = vmatpush.msra.mxu0 0.0
    %3604 = vmatpush.msra.mxu0 0.0
    %3605 = vmatpush.msra.mxu0 0.0
    %3606 = vmatpush.msra.mxu0 0.0
    %3607 = vmatpush.msra.mxu0 0.0
    %3608 = vmatpush.msra.mxu0 0.0
    %3609 = vmatpush.msra.mxu0 0.0
    %3610 = vmatpush.msra.mxu0 0.0
    %3611 = vmatpush.msra.mxu0 0.0
    %3612 = vmatpush.msra.mxu0 0.0
    %3613 = vmatpush.msra.mxu0 0.0
    %3614 = vmatpush.msra.mxu0 0.0
    %3615 = vmatpush.msra.mxu0 %v215
    %3616 = vmatpush.msra.mxu0 %v214
    %3617 = vmatpush.msra.mxu0 %v213
    %3618 = vmatpush.msra.mxu0 %v212
    %3619 = vmatmul.f32.gmra.mxu0 %v3601
    %v3620 = vpop.f32.mrf.mxu0
    %v3621 = vadd.f32 %v784, %v3620
    %3622 = vdwg.mxu0
    %v3623 = vmax.f32 %v3621, 0.0
    %v3625 = vsel %vm290, %v3623, 0
    %3627 = vmatpush.msra.mxu0 0.0
    %3628 = vmatpush.msra.mxu0 0.0
    %3629 = vmatpush.msra.mxu0 0.0
    %3630 = vmatpush.msra.mxu0 0.0
    %3631 = vmatpush.msra.mxu0 0.0
    %3632 = vmatpush.msra.mxu0 0.0
    %3633 = vmatpush.msra.mxu0 0.0
    %3634 = vmatpush.msra.mxu0 0.0
    %3635 = vmatpush.msra.mxu0 0.0
    %3636 = vmatpush.msra.mxu0 0.0
    %3637 = vmatpush.msra.mxu0 0.0
    %3638 = vmatpush.msra.mxu0 0.0
    %3639 = vmatpush.msra.mxu0 %v220
    %3640 = vmatpush.msra.mxu0 %v219
    %3641 = vmatpush.msra.mxu0 %v218
    %3642 = vmatpush.msra.mxu0 %v217
    %3643 = vmatmul.f32.gmra.mxu0 %v3625
    %v3644 = vpop.f32.mrf.mxu0
    %v3645 = vadd.f32 %v811, %v3644
    %3646 = vdwg.mxu0
    %v3647 = vtanh.pop %v3645
    %3649 = vrot.lane.b32.xlu0 %v3647, 40
    %v3650 = vpop.permute.xlu0 %3649
    %vm3652 = vcmask 392512
    %3653 = vst.msk [vmem:[%s11] sm:$0xff] %vm3652, %v3650
    %v3654 = vsel %vm223, %v3647, 0
    %3656 = vmatpush.msra.mxu0 0.0
    %3657 = vmatpush.msra.mxu0 0.0
    %3658 = vmatpush.msra.mxu0 0.0
    %3659 = vmatpush.msra.mxu0 0.0
    %3660 = vmatpush.msra.mxu0 0.0
    %3661 = vmatpush.msra.mxu0 0.0
    %3662 = vmatpush.msra.mxu0 0.0
    %3663 = vmatpush.msra.mxu0 0.0
    %3664 = vmatpush.msra.mxu0 0.0
    %3665 = vmatpush.msra.mxu0 0.0
    %3666 = vmatpush.msra.mxu0 0.0
    %3667 = vmatpush.msra.mxu0 0.0
    %3668 = vmatpush.msra.mxu0 0.0
    %3669 = vmatpush.msra.mxu0 0.0
    %3670 = vmatpush.msra.mxu0 0.0
    %3671 = vmatpush.msra.mxu0 %v101
    %3672 = vmatmul.f32.gmra.mxu0 %v3654
    %v3673 = vpop.f32.mrf.mxu0
    %v3674 = vadd.f32 %v106, %v3673
    %3675 = vdwg.mxu0
    %3676 = vmatpush.msra.mxu0 0.0
    %3677 = vmatpush.msra.mxu0 0.0
    %3678 = vmatpush.msra.mxu0 0.0
    %3679 = vmatpush.msra.mxu0 0.0
    %3680 = vmatpush.msra.mxu0 0.0
    %3681 = vmatpush.msra.mxu0 0.0
    %3682 = vmatpush.msra.mxu0 0.0
    %3683 = vmatpush.msra.mxu0 0.0
    %3684 = vmatpush.msra.mxu0 0.0
    %3685 = vmatpush.msra.mxu0 0.0
    %3686 = vmatpush.msra.mxu0 0.0
    %3687 = vmatpush.msra.mxu0 0.0
    %3688 = vmatpush.msra.mxu0 0.0
    %3689 = vmatpush.msra.mxu0 0.0
    %3690 = vmatpush.msra.mxu0 0.0
    %3691 = vmatpush.msra.mxu0 %v103
    %3692 = vmatmul.f32.gmra.mxu0 %v3654
    %v3693 = vpop.f32.mrf.mxu0
    %v3694 = vadd.f32 %v108, %v3693
    %3695 = vdwg.mxu0
    %3696 = vmatpush.msra.mxu0 0.0
    %3697 = vmatpush.msra.mxu0 0.0
    %3698 = vmatpush.msra.mxu0 0.0
    %3699 = vmatpush.msra.mxu0 0.0
    %3700 = vmatpush.msra.mxu0 0.0
    %3701 = vmatpush.msra.mxu0 0.0
    %3702 = vmatpush.msra.mxu0 0.0
    %3703 = vmatpush.msra.mxu0 0.0
    %3704 = vmatpush.msra.mxu0 0.0
    %3705 = vmatpush.msra.mxu0 0.0
    %3706 = vmatpush.msra.mxu0 0.0
    %3707 = vmatpush.msra.mxu0 0.0
    %3708 = vmatpush.msra.mxu0 0.0
    %3709 = vmatpush.msra.mxu0 0.0
    %3710 = vmatpush.msra.mxu0 0.0
    %3711 = vmatpush.msra.mxu0 %v105
    %3712 = vmatmul.f32.gmra.mxu0 %v3654
    %v3713 = vpop.f32.mrf.mxu0
    %v3714 = vadd.f32 %v110, %v3713
    %3715 = vdwg.mxu0
    %3716 = vmatpush.msra.mxu0 0.0
    %3717 = vmatpush.msra.mxu0 0.0
    %3718 = vmatpush.msra.mxu0 0.0
    %3719 = vmatpush.msra.mxu0 0.0
    %3720 = vmatpush.msra.mxu0 0.0
    %3721 = vmatpush.msra.mxu0 0.0
    %3722 = vmatpush.msra.mxu0 0.0
    %3723 = vmatpush.msra.mxu0 0.0
    %3724 = vmatpush.msra.mxu0 0.0
    %3725 = vmatpush.msra.mxu0 0.0
    %3726 = vmatpush.msra.mxu0 0.0
    %3727 = vmatpush.msra.mxu0 0.0
    %3728 = vmatpush.msra.mxu0 %v114
    %3729 = vmatpush.msra.mxu0 %v113
    %3730 = vmatpush.msra.mxu0 %v112
    %3731 = vmatpush.msra.mxu0 %v111
    %3732 = vmatmul.f32.gmra.mxu0 %v3261
    %v3733 = vpop.f32.mrf.mxu0
    %v3734 = vadd.f32 %v288, %v3733
    %3735 = vdwg.mxu0
    %3736 = vmatpush.msra.mxu0 0.0
    %3737 = vmatpush.msra.mxu0 0.0
    %3738 = vmatpush.msra.mxu0 0.0
    %3739 = vmatpush.msra.mxu0 0.0
    %3740 = vmatpush.msra.mxu0 0.0
    %3741 = vmatpush.msra.mxu0 0.0
    %3742 = vmatpush.msra.mxu0 0.0
    %3743 = vmatpush.msra.mxu0 0.0
    %3744 = vmatpush.msra.mxu0 0.0
    %3745 = vmatpush.msra.mxu0 0.0
    %3746 = vmatpush.msra.mxu0 0.0
    %3747 = vmatpush.msra.mxu0 0.0
    %3748 = vmatpush.msra.mxu0 %v119
    %3749 = vmatpush.msra.mxu0 %v118
    %3750 = vmatpush.msra.mxu0 %v117
    %3751 = vmatpush.msra.mxu0 %v116
    %3752 = vmatmul.f32.gmra.mxu0 %v3261
    %v3753 = vpop.f32.mrf.mxu0
    %v3754 = vadd.f32 %v315, %v3753
    %3755 = vdwg.mxu0
    %3756 = vmatpush.msra.mxu0 0.0
    %3757 = vmatpush.msra.mxu0 0.0
    %3758 = vmatpush.msra.mxu0 0.0
    %3759 = vmatpush.msra.mxu0 0.0
    %3760 = vmatpush.msra.mxu0 0.0
    %3761 = vmatpush.msra.mxu0 0.0
    %3762 = vmatpush.msra.mxu0 0.0
    %3763 = vmatpush.msra.mxu0 0.0
    %3764 = vmatpush.msra.mxu0 0.0
    %3765 = vmatpush.msra.mxu0 0.0
    %3766 = vmatpush.msra.mxu0 0.0
    %3767 = vmatpush.msra.mxu0 0.0
    %3768 = vmatpush.msra.mxu0 %v124
    %3769 = vmatpush.msra.mxu0 %v123
    %3770 = vmatpush.msra.mxu0 %v122
    %3771 = vmatpush.msra.mxu0 %v121
    %3772 = vmatmul.f32.gmra.mxu0 %v3261
    %v3773 = vpop.f32.mrf.mxu0
    %v3774 = vadd.f32 %v338, %v3773
    %3775 = vdwg.mxu0
    %v3776 = vadd.f32 %v3674, %v3734
    %v3777 = vxor.u32 %v3776, 2147483648
    %v3778 = vmul.f32 %v3777, 1.442695
    %v3779 = vpow.pop %v3778
    %v3780 = vadd.f32 %v3779, 1.0
    %v3781 = vrcp.pop %v3780
    %v3782 = vmul.f32 %v3780, %v3781
    %v3783 = vsub.f32 1.0, %v3782
    %v3784 = vmul.f32 %v3781, %v3783
    %v3785 = vadd.f32 %v3781, %v3784
    %vm3786 = vweird.f32 %v3780
    %vm3787 = vweird.f32 %v3781
    %vm3788 = vmor %vm3786, %vm3787
    %v3789 = vsel %vm3788, %v3781, %v3785
    %v3790 = vand.u32 2147483647, %v3780
    %vm3791 = vcmp.eq.f32.partialorder %v3790, 8.507059e+37
    %v3792 = vand.u32 %v3780, 2147483648
    %v3793 = vor.u32 1.1754944e-38, %v3792
    %v3794 = vsel %vm3791, %v3793, %v3789
    %v3795 = vmul.f32 1.0, %v3794
    %v3796 = vadd.f32 %v3694, %v3754
    %v3797 = vxor.u32 %v3796, 2147483648
    %v3798 = vmul.f32 %v3797, 1.442695
    %v3799 = vpow.pop %v3798
    %v3800 = vadd.f32 %v3799, 1.0
    %v3801 = vrcp.pop %v3800
    %v3802 = vmul.f32 %v3800, %v3801
    %v3803 = vsub.f32 1.0, %v3802
    %v3804 = vmul.f32 %v3801, %v3803
    %v3805 = vadd.f32 %v3801, %v3804
    %vm3806 = vweird.f32 %v3800
    %vm3807 = vweird.f32 %v3801
    %vm3808 = vmor %vm3806, %vm3807
    %v3809 = vsel %vm3808, %v3801, %v3805
    %v3810 = vand.u32 2147483647, %v3800
    %vm3811 = vcmp.eq.f32.partialorder %v3810, 8.507059e+37
    %v3812 = vand.u32 %v3800, 2147483648
    %v3813 = vor.u32 1.1754944e-38, %v3812
    %v3814 = vsel %vm3811, %v3813, %v3809
    %v3815 = vmul.f32 1.0, %v3814
    %v3816 = vmul.f32 %v3795, %v3774
    %v3817 = vadd.f32 %v3714, %v3816
    %v3818 = vtanh.pop %v3817
    %v3819 = vsub.f32 1.0, %v3815
    %v3820 = vmul.f32 %v3819, %v3818
    %v3821 = vmul.f32 %v3815, %v3259
    %v3822 = vadd.f32 %v3820, %v3821
    %v3824 = vsel %vm290, %v3822, 0
    %3826 = vmatpush.msra.mxu0 0.0
    %3827 = vmatpush.msra.mxu0 0.0
    %3828 = vmatpush.msra.mxu0 0.0
    %3829 = vmatpush.msra.mxu0 0.0
    %3830 = vmatpush.msra.mxu0 0.0
    %3831 = vmatpush.msra.mxu0 0.0
    %3832 = vmatpush.msra.mxu0 0.0
    %3833 = vmatpush.msra.mxu0 0.0
    %3834 = vmatpush.msra.mxu0 0.0
    %3835 = vmatpush.msra.mxu0 0.0
    %3836 = vmatpush.msra.mxu0 0.0
    %3837 = vmatpush.msra.mxu0 0.0
    %3838 = vmatpush.msra.mxu0 %v175
    %3839 = vmatpush.msra.mxu0 %v174
    %3840 = vmatpush.msra.mxu0 %v173
    %3841 = vmatpush.msra.mxu0 %v172
    %3842 = vmatmul.f32.gmra.mxu0 %v3824
    %v3843 = vpop.f32.mrf.mxu0
    %v3844 = vadd.f32 %v408, %v3843
    %3845 = vdwg.mxu0
    %3846 = vmatpush.msra.mxu0 0.0
    %3847 = vmatpush.msra.mxu0 0.0
    %3848 = vmatpush.msra.mxu0 0.0
    %3849 = vmatpush.msra.mxu0 0.0
    %3850 = vmatpush.msra.mxu0 0.0
    %3851 = vmatpush.msra.mxu0 0.0
    %3852 = vmatpush.msra.mxu0 0.0
    %3853 = vmatpush.msra.mxu0 0.0
    %3854 = vmatpush.msra.mxu0 0.0
    %3855 = vmatpush.msra.mxu0 0.0
    %3856 = vmatpush.msra.mxu0 0.0
    %3857 = vmatpush.msra.mxu0 0.0
    %3858 = vmatpush.msra.mxu0 %v180
    %3859 = vmatpush.msra.mxu0 %v179
    %3860 = vmatpush.msra.mxu0 %v178
    %3861 = vmatpush.msra.mxu0 %v177
    %3862 = vmatmul.f32.gmra.mxu0 %v3824
    %v3863 = vpop.f32.mrf.mxu0
    %v3864 = vadd.f32 %v434, %v3863
    %3865 = vdwg.mxu0
    %3866 = vmatpush.msra.mxu0 0.0
    %3867 = vmatpush.msra.mxu0 0.0
    %3868 = vmatpush.msra.mxu0 0.0
    %3869 = vmatpush.msra.mxu0 0.0
    %3870 = vmatpush.msra.mxu0 0.0
    %3871 = vmatpush.msra.mxu0 0.0
    %3872 = vmatpush.msra.mxu0 0.0
    %3873 = vmatpush.msra.mxu0 0.0
    %3874 = vmatpush.msra.mxu0 0.0
    %3875 = vmatpush.msra.mxu0 0.0
    %3876 = vmatpush.msra.mxu0 0.0
    %3877 = vmatpush.msra.mxu0 0.0
    %3878 = vmatpush.msra.mxu0 %v185
    %3879 = vmatpush.msra.mxu0 %v184
    %3880 = vmatpush.msra.mxu0 %v183
    %3881 = vmatpush.msra.mxu0 %v182
    %3882 = vmatmul.f32.gmra.mxu0 %v3824
    %v3883 = vpop.f32.mrf.mxu0
    %v3884 = vadd.f32 %v457, %v3883
    %3885 = vdwg.mxu0
    %3886 = vmatpush.msra.mxu0 0.0
    %3887 = vmatpush.msra.mxu0 0.0
    %3888 = vmatpush.msra.mxu0 0.0
    %3889 = vmatpush.msra.mxu0 0.0
    %3890 = vmatpush.msra.mxu0 0.0
    %3891 = vmatpush.msra.mxu0 0.0
    %3892 = vmatpush.msra.mxu0 0.0
    %3893 = vmatpush.msra.mxu0 0.0
    %3894 = vmatpush.msra.mxu0 0.0
    %3895 = vmatpush.msra.mxu0 0.0
    %3896 = vmatpush.msra.mxu0 0.0
    %3897 = vmatpush.msra.mxu0 0.0
    %3898 = vmatpush.msra.mxu0 %v129
    %3899 = vmatpush.msra.mxu0 %v128
    %3900 = vmatpush.msra.mxu0 %v127
    %3901 = vmatpush.msra.mxu0 %v126
    %3902 = vmatmul.f32.gmra.mxu0 %v3431
    %v3903 = vpop.f32.mrf.mxu0
    %v3904 = vadd.f32 %v480, %v3903
    %3905 = vdwg.mxu0
    %3906 = vmatpush.msra.mxu0 0.0
    %3907 = vmatpush.msra.mxu0 0.0
    %3908 = vmatpush.msra.mxu0 0.0
    %3909 = vmatpush.msra.mxu0 0.0
    %3910 = vmatpush.msra.mxu0 0.0
    %3911 = vmatpush.msra.mxu0 0.0
    %3912 = vmatpush.msra.mxu0 0.0
    %3913 = vmatpush.msra.mxu0 0.0
    %3914 = vmatpush.msra.mxu0 0.0
    %3915 = vmatpush.msra.mxu0 0.0
    %3916 = vmatpush.msra.mxu0 0.0
    %3917 = vmatpush.msra.mxu0 0.0
    %3918 = vmatpush.msra.mxu0 %v134
    %3919 = vmatpush.msra.mxu0 %v133
    %3920 = vmatpush.msra.mxu0 %v132
    %3921 = vmatpush.msra.mxu0 %v131
    %3922 = vmatmul.f32.gmra.mxu0 %v3431
    %v3923 = vpop.f32.mrf.mxu0
    %v3924 = vadd.f32 %v503, %v3923
    %3925 = vdwg.mxu0
    %3926 = vmatpush.msra.mxu0 0.0
    %3927 = vmatpush.msra.mxu0 0.0
    %3928 = vmatpush.msra.mxu0 0.0
    %3929 = vmatpush.msra.mxu0 0.0
    %3930 = vmatpush.msra.mxu0 0.0
    %3931 = vmatpush.msra.mxu0 0.0
    %3932 = vmatpush.msra.mxu0 0.0
    %3933 = vmatpush.msra.mxu0 0.0
    %3934 = vmatpush.msra.mxu0 0.0
    %3935 = vmatpush.msra.mxu0 0.0
    %3936 = vmatpush.msra.mxu0 0.0
    %3937 = vmatpush.msra.mxu0 0.0
    %3938 = vmatpush.msra.mxu0 %v139
    %3939 = vmatpush.msra.mxu0 %v138
    %3940 = vmatpush.msra.mxu0 %v137
    %3941 = vmatpush.msra.mxu0 %v136
    %3942 = vmatmul.f32.gmra.mxu0 %v3431
    %v3943 = vpop.f32.mrf.mxu0
    %v3944 = vadd.f32 %v526, %v3943
    %3945 = vdwg.mxu0
    %v3946 = vadd.f32 %v3844, %v3904
    %v3947 = vxor.u32 %v3946, 2147483648
    %v3948 = vmul.f32 %v3947, 1.442695
    %v3949 = vpow.pop %v3948
    %v3950 = vadd.f32 %v3949, 1.0
    %v3951 = vrcp.pop %v3950
    %v3952 = vmul.f32 %v3950, %v3951
    %v3953 = vsub.f32 1.0, %v3952
    %v3954 = vmul.f32 %v3951, %v3953
    %v3955 = vadd.f32 %v3951, %v3954
    %vm3956 = vweird.f32 %v3950
    %vm3957 = vweird.f32 %v3951
    %vm3958 = vmor %vm3956, %vm3957
    %v3959 = vsel %vm3958, %v3951, %v3955
    %v3960 = vand.u32 2147483647, %v3950
    %vm3961 = vcmp.eq.f32.partialorder %v3960, 8.507059e+37
    %v3962 = vand.u32 %v3950, 2147483648
    %v3963 = vor.u32 1.1754944e-38, %v3962
    %v3964 = vsel %vm3961, %v3963, %v3959
    %v3965 = vmul.f32 1.0, %v3964
    %v3966 = vadd.f32 %v3864, %v3924
    %v3967 = vxor.u32 %v3966, 2147483648
    %v3968 = vmul.f32 %v3967, 1.442695
    %v3969 = vpow.pop %v3968
    %v3970 = vadd.f32 %v3969, 1.0
    %v3971 = vrcp.pop %v3970
    %v3972 = vmul.f32 %v3970, %v3971
    %v3973 = vsub.f32 1.0, %v3972
    %v3974 = vmul.f32 %v3971, %v3973
    %v3975 = vadd.f32 %v3971, %v3974
    %vm3976 = vweird.f32 %v3970
    %vm3977 = vweird.f32 %v3971
    %vm3978 = vmor %vm3976, %vm3977
    %v3979 = vsel %vm3978, %v3971, %v3975
    %v3980 = vand.u32 2147483647, %v3970
    %vm3981 = vcmp.eq.f32.partialorder %v3980, 8.507059e+37
    %v3982 = vand.u32 %v3970, 2147483648
    %v3983 = vor.u32 1.1754944e-38, %v3982
    %v3984 = vsel %vm3981, %v3983, %v3979
    %v3985 = vmul.f32 1.0, %v3984
    %v3986 = vmul.f32 %v3965, %v3944
    %v3987 = vadd.f32 %v3884, %v3986
    %v3988 = vtanh.pop %v3987
    %v3989 = vsub.f32 1.0, %v3985
    %v3990 = vmul.f32 %v3989, %v3988
    %v3991 = vmul.f32 %v3985, %v3429
    %v3992 = vadd.f32 %v3990, %v3991
    %v3994 = vsel %vm290, %v3992, 0
    %3996 = vmatpush.msra.mxu0 0.0
    %3997 = vmatpush.msra.mxu0 0.0
    %3998 = vmatpush.msra.mxu0 0.0
    %3999 = vmatpush.msra.mxu0 0.0
    %4000 = vmatpush.msra.mxu0 0.0
    %4001 = vmatpush.msra.mxu0 0.0
    %4002 = vmatpush.msra.mxu0 0.0
    %4003 = vmatpush.msra.mxu0 0.0
    %4004 = vmatpush.msra.mxu0 0.0
    %4005 = vmatpush.msra.mxu0 0.0
    %4006 = vmatpush.msra.mxu0 0.0
    %4007 = vmatpush.msra.mxu0 0.0
    %4008 = vmatpush.msra.mxu0 %v190
    %4009 = vmatpush.msra.mxu0 %v189
    %4010 = vmatpush.msra.mxu0 %v188
    %4011 = vmatpush.msra.mxu0 %v187
    %4012 = vmatmul.f32.gmra.mxu0 %v3994
    %v4013 = vpop.f32.mrf.mxu0
    %v4014 = vadd.f32 %v596, %v4013
    %4015 = vdwg.mxu0
    %4016 = vmatpush.msra.mxu0 0.0
    %4017 = vmatpush.msra.mxu0 0.0
    %4018 = vmatpush.msra.mxu0 0.0
    %4019 = vmatpush.msra.mxu0 0.0
    %4020 = vmatpush.msra.mxu0 0.0
    %4021 = vmatpush.msra.mxu0 0.0
    %4022 = vmatpush.msra.mxu0 0.0
    %4023 = vmatpush.msra.mxu0 0.0
    %4024 = vmatpush.msra.mxu0 0.0
    %4025 = vmatpush.msra.mxu0 0.0
    %4026 = vmatpush.msra.mxu0 0.0
    %4027 = vmatpush.msra.mxu0 0.0
    %4028 = vmatpush.msra.mxu0 %v195
    %4029 = vmatpush.msra.mxu0 %v194
    %4030 = vmatpush.msra.mxu0 %v193
    %4031 = vmatpush.msra.mxu0 %v192
    %4032 = vmatmul.f32.gmra.mxu0 %v3994
    %v4033 = vpop.f32.mrf.mxu0
    %v4034 = vadd.f32 %v622, %v4033
    %4035 = vdwg.mxu0
    %4036 = vmatpush.msra.mxu0 0.0
    %4037 = vmatpush.msra.mxu0 0.0
    %4038 = vmatpush.msra.mxu0 0.0
    %4039 = vmatpush.msra.mxu0 0.0
    %4040 = vmatpush.msra.mxu0 0.0
    %4041 = vmatpush.msra.mxu0 0.0
    %4042 = vmatpush.msra.mxu0 0.0
    %4043 = vmatpush.msra.mxu0 0.0
    %4044 = vmatpush.msra.mxu0 0.0
    %4045 = vmatpush.msra.mxu0 0.0
    %4046 = vmatpush.msra.mxu0 0.0
    %4047 = vmatpush.msra.mxu0 0.0
    %4048 = vmatpush.msra.mxu0 %v200
    %4049 = vmatpush.msra.mxu0 %v199
    %4050 = vmatpush.msra.mxu0 %v198
    %4051 = vmatpush.msra.mxu0 %v197
    %4052 = vmatmul.f32.gmra.mxu0 %v3994
    %v4053 = vpop.f32.mrf.mxu0
    %v4054 = vadd.f32 %v645, %v4053
    %4055 = vdwg.mxu0
    %4056 = vmatpush.msra.mxu0 0.0
    %4057 = vmatpush.msra.mxu0 0.0
    %4058 = vmatpush.msra.mxu0 0.0
    %4059 = vmatpush.msra.mxu0 0.0
    %4060 = vmatpush.msra.mxu0 0.0
    %4061 = vmatpush.msra.mxu0 0.0
    %4062 = vmatpush.msra.mxu0 0.0
    %4063 = vmatpush.msra.mxu0 0.0
    %4064 = vmatpush.msra.mxu0 0.0
    %4065 = vmatpush.msra.mxu0 0.0
    %4066 = vmatpush.msra.mxu0 0.0
    %4067 = vmatpush.msra.mxu0 0.0
    %4068 = vmatpush.msra.mxu0 %v144
    %4069 = vmatpush.msra.mxu0 %v143
    %4070 = vmatpush.msra.mxu0 %v142
    %4071 = vmatpush.msra.mxu0 %v141
    %4072 = vmatmul.f32.gmra.mxu0 %v3601
    %v4073 = vpop.f32.mrf.mxu0
    %v4074 = vadd.f32 %v668, %v4073
    %4075 = vdwg.mxu0
    %4076 = vmatpush.msra.mxu0 0.0
    %4077 = vmatpush.msra.mxu0 0.0
    %4078 = vmatpush.msra.mxu0 0.0
    %4079 = vmatpush.msra.mxu0 0.0
    %4080 = vmatpush.msra.mxu0 0.0
    %4081 = vmatpush.msra.mxu0 0.0
    %4082 = vmatpush.msra.mxu0 0.0
    %4083 = vmatpush.msra.mxu0 0.0
    %4084 = vmatpush.msra.mxu0 0.0
    %4085 = vmatpush.msra.mxu0 0.0
    %4086 = vmatpush.msra.mxu0 0.0
    %4087 = vmatpush.msra.mxu0 0.0
    %4088 = vmatpush.msra.mxu0 %v149
    %4089 = vmatpush.msra.mxu0 %v148
    %4090 = vmatpush.msra.mxu0 %v147
    %4091 = vmatpush.msra.mxu0 %v146
    %4092 = vmatmul.f32.gmra.mxu0 %v3601
    %v4093 = vpop.f32.mrf.mxu0
    %v4094 = vadd.f32 %v691, %v4093
    %4095 = vdwg.mxu0
    %4096 = vmatpush.msra.mxu0 0.0
    %4097 = vmatpush.msra.mxu0 0.0
    %4098 = vmatpush.msra.mxu0 0.0
    %4099 = vmatpush.msra.mxu0 0.0
    %4100 = vmatpush.msra.mxu0 0.0
    %4101 = vmatpush.msra.mxu0 0.0
    %4102 = vmatpush.msra.mxu0 0.0
    %4103 = vmatpush.msra.mxu0 0.0
    %4104 = vmatpush.msra.mxu0 0.0
    %4105 = vmatpush.msra.mxu0 0.0
    %4106 = vmatpush.msra.mxu0 0.0
    %4107 = vmatpush.msra.mxu0 0.0
    %4108 = vmatpush.msra.mxu0 %v154
    %4109 = vmatpush.msra.mxu0 %v153
    %4110 = vmatpush.msra.mxu0 %v152
    %4111 = vmatpush.msra.mxu0 %v151
    %4112 = vmatmul.f32.gmra.mxu0 %v3601
    %v4113 = vpop.f32.mrf.mxu0
    %v4114 = vadd.f32 %v714, %v4113
    %4115 = vdwg.mxu0
    %v4116 = vadd.f32 %v4014, %v4074
    %v4117 = vxor.u32 %v4116, 2147483648
    %v4118 = vmul.f32 %v4117, 1.442695
    %v4119 = vpow.pop %v4118
    %v4120 = vadd.f32 %v4119, 1.0
    %v4121 = vrcp.pop %v4120
    %v4122 = vmul.f32 %v4120, %v4121
    %v4123 = vsub.f32 1.0, %v4122
    %v4124 = vmul.f32 %v4121, %v4123
    %v4125 = vadd.f32 %v4121, %v4124
    %vm4126 = vweird.f32 %v4120
    %vm4127 = vweird.f32 %v4121
    %vm4128 = vmor %vm4126, %vm4127
    %v4129 = vsel %vm4128, %v4121, %v4125
    %v4130 = vand.u32 2147483647, %v4120
    %vm4131 = vcmp.eq.f32.partialorder %v4130, 8.507059e+37
    %v4132 = vand.u32 %v4120, 2147483648
    %v4133 = vor.u32 1.1754944e-38, %v4132
    %v4134 = vsel %vm4131, %v4133, %v4129
    %v4135 = vmul.f32 1.0, %v4134
    %v4136 = vadd.f32 %v4034, %v4094
    %v4137 = vxor.u32 %v4136, 2147483648
    %v4138 = vmul.f32 %v4137, 1.442695
    %v4139 = vpow.pop %v4138
    %v4140 = vadd.f32 %v4139, 1.0
    %v4141 = vrcp.pop %v4140
    %v4142 = vmul.f32 %v4140, %v4141
    %v4143 = vsub.f32 1.0, %v4142
    %v4144 = vmul.f32 %v4141, %v4143
    %v4145 = vadd.f32 %v4141, %v4144
    %vm4146 = vweird.f32 %v4140
    %vm4147 = vweird.f32 %v4141
    %vm4148 = vmor %vm4146, %vm4147
    %v4149 = vsel %vm4148, %v4141, %v4145
    %v4150 = vand.u32 2147483647, %v4140
    %vm4151 = vcmp.eq.f32.partialorder %v4150, 8.507059e+37
    %v4152 = vand.u32 %v4140, 2147483648
    %v4153 = vor.u32 1.1754944e-38, %v4152
    %v4154 = vsel %vm4151, %v4153, %v4149
    %v4155 = vmul.f32 1.0, %v4154
    %v4156 = vmul.f32 %v4135, %v4114
    %v4157 = vadd.f32 %v4054, %v4156
    %v4158 = vtanh.pop %v4157
    %v4159 = vsub.f32 1.0, %v4155
    %v4160 = vmul.f32 %v4159, %v4158
    %v4161 = vmul.f32 %v4155, %v3599
    %v4162 = vadd.f32 %v4160, %v4161
    %v4164 = vsel %vm290, %v4162, 0
    %4166 = vmatpush.msra.mxu0 0.0
    %4167 = vmatpush.msra.mxu0 0.0
    %4168 = vmatpush.msra.mxu0 0.0
    %4169 = vmatpush.msra.mxu0 0.0
    %4170 = vmatpush.msra.mxu0 0.0
    %4171 = vmatpush.msra.mxu0 0.0
    %4172 = vmatpush.msra.mxu0 0.0
    %4173 = vmatpush.msra.mxu0 0.0
    %4174 = vmatpush.msra.mxu0 0.0
    %4175 = vmatpush.msra.mxu0 0.0
    %4176 = vmatpush.msra.mxu0 0.0
    %4177 = vmatpush.msra.mxu0 0.0
    %4178 = vmatpush.msra.mxu0 %v215
    %4179 = vmatpush.msra.mxu0 %v214
    %4180 = vmatpush.msra.mxu0 %v213
    %4181 = vmatpush.msra.mxu0 %v212
    %4182 = vmatmul.f32.gmra.mxu0 %v4164
    %v4183 = vpop.f32.mrf.mxu0
    %v4184 = vadd.f32 %v784, %v4183
    %4185 = vdwg.mxu0
    %v4186 = vmax.f32 %v4184, 0.0
    %v4188 = vsel %vm290, %v4186, 0
    %4190 = vmatpush.msra.mxu0 0.0
    %4191 = vmatpush.msra.mxu0 0.0
    %4192 = vmatpush.msra.mxu0 0.0
    %4193 = vmatpush.msra.mxu0 0.0
    %4194 = vmatpush.msra.mxu0 0.0
    %4195 = vmatpush.msra.mxu0 0.0
    %4196 = vmatpush.msra.mxu0 0.0
    %4197 = vmatpush.msra.mxu0 0.0
    %4198 = vmatpush.msra.mxu0 0.0
    %4199 = vmatpush.msra.mxu0 0.0
    %4200 = vmatpush.msra.mxu0 0.0
    %4201 = vmatpush.msra.mxu0 0.0
    %4202 = vmatpush.msra.mxu0 %v220
    %4203 = vmatpush.msra.mxu0 %v219
    %4204 = vmatpush.msra.mxu0 %v218
    %4205 = vmatpush.msra.mxu0 %v217
    %4206 = vmatmul.f32.gmra.mxu0 %v4188
    %v4207 = vpop.f32.mrf.mxu0
    %v4208 = vadd.f32 %v811, %v4207
    %4209 = vdwg.mxu0
    %v4210 = vtanh.pop %v4208
    %4212 = vrot.lane.b32.xlu0 %v4210, 48
    %v4213 = vpop.permute.xlu0 %4212
    %vm4215 = vcmask 458112
    %4216 = vst.msk [vmem:[%s11] sm:$0xff] %vm4215, %v4213
    %v4217 = vsel %vm223, %v4210, 0
    %4219 = vmatpush.msra.mxu0 0.0
    %4220 = vmatpush.msra.mxu0 0.0
    %4221 = vmatpush.msra.mxu0 0.0
    %4222 = vmatpush.msra.mxu0 0.0
    %4223 = vmatpush.msra.mxu0 0.0
    %4224 = vmatpush.msra.mxu0 0.0
    %4225 = vmatpush.msra.mxu0 0.0
    %4226 = vmatpush.msra.mxu0 0.0
    %4227 = vmatpush.msra.mxu0 0.0
    %4228 = vmatpush.msra.mxu0 0.0
    %4229 = vmatpush.msra.mxu0 0.0
    %4230 = vmatpush.msra.mxu0 0.0
    %4231 = vmatpush.msra.mxu0 0.0
    %4232 = vmatpush.msra.mxu0 0.0
    %4233 = vmatpush.msra.mxu0 0.0
    %4234 = vmatpush.msra.mxu0 %v101
    %4235 = vmatmul.f32.gmra.mxu0 %v4217
    %v4236 = vpop.f32.mrf.mxu0
    %v4237 = vadd.f32 %v106, %v4236
    %4238 = vdwg.mxu0
    %4239 = vmatpush.msra.mxu0 0.0
    %4240 = vmatpush.msra.mxu0 0.0
    %4241 = vmatpush.msra.mxu0 0.0
    %4242 = vmatpush.msra.mxu0 0.0
    %4243 = vmatpush.msra.mxu0 0.0
    %4244 = vmatpush.msra.mxu0 0.0
    %4245 = vmatpush.msra.mxu0 0.0
    %4246 = vmatpush.msra.mxu0 0.0
    %4247 = vmatpush.msra.mxu0 0.0
    %4248 = vmatpush.msra.mxu0 0.0
    %4249 = vmatpush.msra.mxu0 0.0
    %4250 = vmatpush.msra.mxu0 0.0
    %4251 = vmatpush.msra.mxu0 0.0
    %4252 = vmatpush.msra.mxu0 0.0
    %4253 = vmatpush.msra.mxu0 0.0
    %4254 = vmatpush.msra.mxu0 %v103
    %4255 = vmatmul.f32.gmra.mxu0 %v4217
    %v4256 = vpop.f32.mrf.mxu0
    %v4257 = vadd.f32 %v108, %v4256
    %4258 = vdwg.mxu0
    %4259 = vmatpush.msra.mxu0 0.0
    %4260 = vmatpush.msra.mxu0 0.0
    %4261 = vmatpush.msra.mxu0 0.0
    %4262 = vmatpush.msra.mxu0 0.0
    %4263 = vmatpush.msra.mxu0 0.0
    %4264 = vmatpush.msra.mxu0 0.0
    %4265 = vmatpush.msra.mxu0 0.0
    %4266 = vmatpush.msra.mxu0 0.0
    %4267 = vmatpush.msra.mxu0 0.0
    %4268 = vmatpush.msra.mxu0 0.0
    %4269 = vmatpush.msra.mxu0 0.0
    %4270 = vmatpush.msra.mxu0 0.0
    %4271 = vmatpush.msra.mxu0 0.0
    %4272 = vmatpush.msra.mxu0 0.0
    %4273 = vmatpush.msra.mxu0 0.0
    %4274 = vmatpush.msra.mxu0 %v105
    %4275 = vmatmul.f32.gmra.mxu0 %v4217
    %v4276 = vpop.f32.mrf.mxu0
    %v4277 = vadd.f32 %v110, %v4276
    %4278 = vdwg.mxu0
    %4279 = vmatpush.msra.mxu0 0.0
    %4280 = vmatpush.msra.mxu0 0.0
    %4281 = vmatpush.msra.mxu0 0.0
    %4282 = vmatpush.msra.mxu0 0.0
    %4283 = vmatpush.msra.mxu0 0.0
    %4284 = vmatpush.msra.mxu0 0.0
    %4285 = vmatpush.msra.mxu0 0.0
    %4286 = vmatpush.msra.mxu0 0.0
    %4287 = vmatpush.msra.mxu0 0.0
    %4288 = vmatpush.msra.mxu0 0.0
    %4289 = vmatpush.msra.mxu0 0.0
    %4290 = vmatpush.msra.mxu0 0.0
    %4291 = vmatpush.msra.mxu0 %v114
    %4292 = vmatpush.msra.mxu0 %v113
    %4293 = vmatpush.msra.mxu0 %v112
    %4294 = vmatpush.msra.mxu0 %v111
    %4295 = vmatmul.f32.gmra.mxu0 %v3824
    %v4296 = vpop.f32.mrf.mxu0
    %v4297 = vadd.f32 %v288, %v4296
    %4298 = vdwg.mxu0
    %4299 = vmatpush.msra.mxu0 0.0
    %4300 = vmatpush.msra.mxu0 0.0
    %4301 = vmatpush.msra.mxu0 0.0
    %4302 = vmatpush.msra.mxu0 0.0
    %4303 = vmatpush.msra.mxu0 0.0
    %4304 = vmatpush.msra.mxu0 0.0
    %4305 = vmatpush.msra.mxu0 0.0
    %4306 = vmatpush.msra.mxu0 0.0
    %4307 = vmatpush.msra.mxu0 0.0
    %4308 = vmatpush.msra.mxu0 0.0
    %4309 = vmatpush.msra.mxu0 0.0
    %4310 = vmatpush.msra.mxu0 0.0
    %4311 = vmatpush.msra.mxu0 %v119
    %4312 = vmatpush.msra.mxu0 %v118
    %4313 = vmatpush.msra.mxu0 %v117
    %4314 = vmatpush.msra.mxu0 %v116
    %4315 = vmatmul.f32.gmra.mxu0 %v3824
    %v4316 = vpop.f32.mrf.mxu0
    %v4317 = vadd.f32 %v315, %v4316
    %4318 = vdwg.mxu0
    %4319 = vmatpush.msra.mxu0 0.0
    %4320 = vmatpush.msra.mxu0 0.0
    %4321 = vmatpush.msra.mxu0 0.0
    %4322 = vmatpush.msra.mxu0 0.0
    %4323 = vmatpush.msra.mxu0 0.0
    %4324 = vmatpush.msra.mxu0 0.0
    %4325 = vmatpush.msra.mxu0 0.0
    %4326 = vmatpush.msra.mxu0 0.0
    %4327 = vmatpush.msra.mxu0 0.0
    %4328 = vmatpush.msra.mxu0 0.0
    %4329 = vmatpush.msra.mxu0 0.0
    %4330 = vmatpush.msra.mxu0 0.0
    %4331 = vmatpush.msra.mxu0 %v124
    %4332 = vmatpush.msra.mxu0 %v123
    %4333 = vmatpush.msra.mxu0 %v122
    %4334 = vmatpush.msra.mxu0 %v121
    %4335 = vmatmul.f32.gmra.mxu0 %v3824
    %v4336 = vpop.f32.mrf.mxu0
    %v4337 = vadd.f32 %v338, %v4336
    %4338 = vdwg.mxu0
    %v4339 = vadd.f32 %v4237, %v4297
    %v4340 = vxor.u32 %v4339, 2147483648
    %v4341 = vmul.f32 %v4340, 1.442695
    %v4342 = vpow.pop %v4341
    %v4343 = vadd.f32 %v4342, 1.0
    %v4344 = vrcp.pop %v4343
    %v4345 = vmul.f32 %v4343, %v4344
    %v4346 = vsub.f32 1.0, %v4345
    %v4347 = vmul.f32 %v4344, %v4346
    %v4348 = vadd.f32 %v4344, %v4347
    %vm4349 = vweird.f32 %v4343
    %vm4350 = vweird.f32 %v4344
    %vm4351 = vmor %vm4349, %vm4350
    %v4352 = vsel %vm4351, %v4344, %v4348
    %v4353 = vand.u32 2147483647, %v4343
    %vm4354 = vcmp.eq.f32.partialorder %v4353, 8.507059e+37
    %v4355 = vand.u32 %v4343, 2147483648
    %v4356 = vor.u32 1.1754944e-38, %v4355
    %v4357 = vsel %vm4354, %v4356, %v4352
    %v4358 = vmul.f32 1.0, %v4357
    %v4359 = vadd.f32 %v4257, %v4317
    %v4360 = vxor.u32 %v4359, 2147483648
    %v4361 = vmul.f32 %v4360, 1.442695
    %v4362 = vpow.pop %v4361
    %v4363 = vadd.f32 %v4362, 1.0
    %v4364 = vrcp.pop %v4363
    %v4365 = vmul.f32 %v4363, %v4364
    %v4366 = vsub.f32 1.0, %v4365
    %v4367 = vmul.f32 %v4364, %v4366
    %v4368 = vadd.f32 %v4364, %v4367
    %vm4369 = vweird.f32 %v4363
    %vm4370 = vweird.f32 %v4364
    %vm4371 = vmor %vm4369, %vm4370
    %v4372 = vsel %vm4371, %v4364, %v4368
    %v4373 = vand.u32 2147483647, %v4363
    %vm4374 = vcmp.eq.f32.partialorder %v4373, 8.507059e+37
    %v4375 = vand.u32 %v4363, 2147483648
    %v4376 = vor.u32 1.1754944e-38, %v4375
    %v4377 = vsel %vm4374, %v4376, %v4372
    %v4378 = vmul.f32 1.0, %v4377
    %v4379 = vmul.f32 %v4358, %v4337
    %v4380 = vadd.f32 %v4277, %v4379
    %v4381 = vtanh.pop %v4380
    %v4382 = vsub.f32 1.0, %v4378
    %v4383 = vmul.f32 %v4382, %v4381
    %v4384 = vmul.f32 %v4378, %v3822
    %v4385 = vadd.f32 %v4383, %v4384
    %v4387 = vsel %vm290, %v4385, 0
    %4389 = vmatpush.msra.mxu0 0.0
    %4390 = vmatpush.msra.mxu0 0.0
    %4391 = vmatpush.msra.mxu0 0.0
    %4392 = vmatpush.msra.mxu0 0.0
    %4393 = vmatpush.msra.mxu0 0.0
    %4394 = vmatpush.msra.mxu0 0.0
    %4395 = vmatpush.msra.mxu0 0.0
    %4396 = vmatpush.msra.mxu0 0.0
    %4397 = vmatpush.msra.mxu0 0.0
    %4398 = vmatpush.msra.mxu0 0.0
    %4399 = vmatpush.msra.mxu0 0.0
    %4400 = vmatpush.msra.mxu0 0.0
    %4401 = vmatpush.msra.mxu0 %v175
    %4402 = vmatpush.msra.mxu0 %v174
    %4403 = vmatpush.msra.mxu0 %v173
    %4404 = vmatpush.msra.mxu0 %v172
    %4405 = vmatmul.f32.gmra.mxu0 %v4387
    %v4406 = vpop.f32.mrf.mxu0
    %v4407 = vadd.f32 %v408, %v4406
    %4408 = vdwg.mxu0
    %4409 = vmatpush.msra.mxu0 0.0
    %4410 = vmatpush.msra.mxu0 0.0
    %4411 = vmatpush.msra.mxu0 0.0
    %4412 = vmatpush.msra.mxu0 0.0
    %4413 = vmatpush.msra.mxu0 0.0
    %4414 = vmatpush.msra.mxu0 0.0
    %4415 = vmatpush.msra.mxu0 0.0
    %4416 = vmatpush.msra.mxu0 0.0
    %4417 = vmatpush.msra.mxu0 0.0
    %4418 = vmatpush.msra.mxu0 0.0
    %4419 = vmatpush.msra.mxu0 0.0
    %4420 = vmatpush.msra.mxu0 0.0
    %4421 = vmatpush.msra.mxu0 %v180
    %4422 = vmatpush.msra.mxu0 %v179
    %4423 = vmatpush.msra.mxu0 %v178
    %4424 = vmatpush.msra.mxu0 %v177
    %4425 = vmatmul.f32.gmra.mxu0 %v4387
    %v4426 = vpop.f32.mrf.mxu0
    %v4427 = vadd.f32 %v434, %v4426
    %4428 = vdwg.mxu0
    %4429 = vmatpush.msra.mxu0 0.0
    %4430 = vmatpush.msra.mxu0 0.0
    %4431 = vmatpush.msra.mxu0 0.0
    %4432 = vmatpush.msra.mxu0 0.0
    %4433 = vmatpush.msra.mxu0 0.0
    %4434 = vmatpush.msra.mxu0 0.0
    %4435 = vmatpush.msra.mxu0 0.0
    %4436 = vmatpush.msra.mxu0 0.0
    %4437 = vmatpush.msra.mxu0 0.0
    %4438 = vmatpush.msra.mxu0 0.0
    %4439 = vmatpush.msra.mxu0 0.0
    %4440 = vmatpush.msra.mxu0 0.0
    %4441 = vmatpush.msra.mxu0 %v185
    %4442 = vmatpush.msra.mxu0 %v184
    %4443 = vmatpush.msra.mxu0 %v183
    %4444 = vmatpush.msra.mxu0 %v182
    %4445 = vmatmul.f32.gmra.mxu0 %v4387
    %v4446 = vpop.f32.mrf.mxu0
    %v4447 = vadd.f32 %v457, %v4446
    %4448 = vdwg.mxu0
    %4449 = vmatpush.msra.mxu0 0.0
    %4450 = vmatpush.msra.mxu0 0.0
    %4451 = vmatpush.msra.mxu0 0.0
    %4452 = vmatpush.msra.mxu0 0.0
    %4453 = vmatpush.msra.mxu0 0.0
    %4454 = vmatpush.msra.mxu0 0.0
    %4455 = vmatpush.msra.mxu0 0.0
    %4456 = vmatpush.msra.mxu0 0.0
    %4457 = vmatpush.msra.mxu0 0.0
    %4458 = vmatpush.msra.mxu0 0.0
    %4459 = vmatpush.msra.mxu0 0.0
    %4460 = vmatpush.msra.mxu0 0.0
    %4461 = vmatpush.msra.mxu0 %v129
    %4462 = vmatpush.msra.mxu0 %v128
    %4463 = vmatpush.msra.mxu0 %v127
    %4464 = vmatpush.msra.mxu0 %v126
    %4465 = vmatmul.f32.gmra.mxu0 %v3994
    %v4466 = vpop.f32.mrf.mxu0
    %v4467 = vadd.f32 %v480, %v4466
    %4468 = vdwg.mxu0
    %4469 = vmatpush.msra.mxu0 0.0
    %4470 = vmatpush.msra.mxu0 0.0
    %4471 = vmatpush.msra.mxu0 0.0
    %4472 = vmatpush.msra.mxu0 0.0
    %4473 = vmatpush.msra.mxu0 0.0
    %4474 = vmatpush.msra.mxu0 0.0
    %4475 = vmatpush.msra.mxu0 0.0
    %4476 = vmatpush.msra.mxu0 0.0
    %4477 = vmatpush.msra.mxu0 0.0
    %4478 = vmatpush.msra.mxu0 0.0
    %4479 = vmatpush.msra.mxu0 0.0
    %4480 = vmatpush.msra.mxu0 0.0
    %4481 = vmatpush.msra.mxu0 %v134
    %4482 = vmatpush.msra.mxu0 %v133
    %4483 = vmatpush.msra.mxu0 %v132
    %4484 = vmatpush.msra.mxu0 %v131
    %4485 = vmatmul.f32.gmra.mxu0 %v3994
    %v4486 = vpop.f32.mrf.mxu0
    %v4487 = vadd.f32 %v503, %v4486
    %4488 = vdwg.mxu0
    %4489 = vmatpush.msra.mxu0 0.0
    %4490 = vmatpush.msra.mxu0 0.0
    %4491 = vmatpush.msra.mxu0 0.0
    %4492 = vmatpush.msra.mxu0 0.0
    %4493 = vmatpush.msra.mxu0 0.0
    %4494 = vmatpush.msra.mxu0 0.0
    %4495 = vmatpush.msra.mxu0 0.0
    %4496 = vmatpush.msra.mxu0 0.0
    %4497 = vmatpush.msra.mxu0 0.0
    %4498 = vmatpush.msra.mxu0 0.0
    %4499 = vmatpush.msra.mxu0 0.0
    %4500 = vmatpush.msra.mxu0 0.0
    %4501 = vmatpush.msra.mxu0 %v139
    %4502 = vmatpush.msra.mxu0 %v138
    %4503 = vmatpush.msra.mxu0 %v137
    %4504 = vmatpush.msra.mxu0 %v136
    %4505 = vmatmul.f32.gmra.mxu0 %v3994
    %v4506 = vpop.f32.mrf.mxu0
    %v4507 = vadd.f32 %v526, %v4506
    %4508 = vdwg.mxu0
    %v4509 = vadd.f32 %v4407, %v4467
    %v4510 = vxor.u32 %v4509, 2147483648
    %v4511 = vmul.f32 %v4510, 1.442695
    %v4512 = vpow.pop %v4511
    %v4513 = vadd.f32 %v4512, 1.0
    %v4514 = vrcp.pop %v4513
    %v4515 = vmul.f32 %v4513, %v4514
    %v4516 = vsub.f32 1.0, %v4515
    %v4517 = vmul.f32 %v4514, %v4516
    %v4518 = vadd.f32 %v4514, %v4517
    %vm4519 = vweird.f32 %v4513
    %vm4520 = vweird.f32 %v4514
    %vm4521 = vmor %vm4519, %vm4520
    %v4522 = vsel %vm4521, %v4514, %v4518
    %v4523 = vand.u32 2147483647, %v4513
    %vm4524 = vcmp.eq.f32.partialorder %v4523, 8.507059e+37
    %v4525 = vand.u32 %v4513, 2147483648
    %v4526 = vor.u32 1.1754944e-38, %v4525
    %v4527 = vsel %vm4524, %v4526, %v4522
    %v4528 = vmul.f32 1.0, %v4527
    %v4529 = vadd.f32 %v4427, %v4487
    %v4530 = vxor.u32 %v4529, 2147483648
    %v4531 = vmul.f32 %v4530, 1.442695
    %v4532 = vpow.pop %v4531
    %v4533 = vadd.f32 %v4532, 1.0
    %v4534 = vrcp.pop %v4533
    %v4535 = vmul.f32 %v4533, %v4534
    %v4536 = vsub.f32 1.0, %v4535
    %v4537 = vmul.f32 %v4534, %v4536
    %v4538 = vadd.f32 %v4534, %v4537
    %vm4539 = vweird.f32 %v4533
    %vm4540 = vweird.f32 %v4534
    %vm4541 = vmor %vm4539, %vm4540
    %v4542 = vsel %vm4541, %v4534, %v4538
    %v4543 = vand.u32 2147483647, %v4533
    %vm4544 = vcmp.eq.f32.partialorder %v4543, 8.507059e+37
    %v4545 = vand.u32 %v4533, 2147483648
    %v4546 = vor.u32 1.1754944e-38, %v4545
    %v4547 = vsel %vm4544, %v4546, %v4542
    %v4548 = vmul.f32 1.0, %v4547
    %v4549 = vmul.f32 %v4528, %v4507
    %v4550 = vadd.f32 %v4447, %v4549
    %v4551 = vtanh.pop %v4550
    %v4552 = vsub.f32 1.0, %v4548
    %v4553 = vmul.f32 %v4552, %v4551
    %v4554 = vmul.f32 %v4548, %v3992
    %v4555 = vadd.f32 %v4553, %v4554
    %v4557 = vsel %vm290, %v4555, 0
    %4559 = vmatpush.msra.mxu0 0.0
    %4560 = vmatpush.msra.mxu0 0.0
    %4561 = vmatpush.msra.mxu0 0.0
    %4562 = vmatpush.msra.mxu0 0.0
    %4563 = vmatpush.msra.mxu0 0.0
    %4564 = vmatpush.msra.mxu0 0.0
    %4565 = vmatpush.msra.mxu0 0.0
    %4566 = vmatpush.msra.mxu0 0.0
    %4567 = vmatpush.msra.mxu0 0.0
    %4568 = vmatpush.msra.mxu0 0.0
    %4569 = vmatpush.msra.mxu0 0.0
    %4570 = vmatpush.msra.mxu0 0.0
    %4571 = vmatpush.msra.mxu0 %v190
    %4572 = vmatpush.msra.mxu0 %v189
    %4573 = vmatpush.msra.mxu0 %v188
    %4574 = vmatpush.msra.mxu0 %v187
    %4575 = vmatmul.f32.gmra.mxu0 %v4557
    %v4576 = vpop.f32.mrf.mxu0
    %v4577 = vadd.f32 %v596, %v4576
    %4578 = vdwg.mxu0
    %4579 = vmatpush.msra.mxu0 0.0
    %4580 = vmatpush.msra.mxu0 0.0
    %4581 = vmatpush.msra.mxu0 0.0
    %4582 = vmatpush.msra.mxu0 0.0
    %4583 = vmatpush.msra.mxu0 0.0
    %4584 = vmatpush.msra.mxu0 0.0
    %4585 = vmatpush.msra.mxu0 0.0
    %4586 = vmatpush.msra.mxu0 0.0
    %4587 = vmatpush.msra.mxu0 0.0
    %4588 = vmatpush.msra.mxu0 0.0
    %4589 = vmatpush.msra.mxu0 0.0
    %4590 = vmatpush.msra.mxu0 0.0
    %4591 = vmatpush.msra.mxu0 %v195
    %4592 = vmatpush.msra.mxu0 %v194
    %4593 = vmatpush.msra.mxu0 %v193
    %4594 = vmatpush.msra.mxu0 %v192
    %4595 = vmatmul.f32.gmra.mxu0 %v4557
    %v4596 = vpop.f32.mrf.mxu0
    %v4597 = vadd.f32 %v622, %v4596
    %4598 = vdwg.mxu0
    %4599 = vmatpush.msra.mxu0 0.0
    %4600 = vmatpush.msra.mxu0 0.0
    %4601 = vmatpush.msra.mxu0 0.0
    %4602 = vmatpush.msra.mxu0 0.0
    %4603 = vmatpush.msra.mxu0 0.0
    %4604 = vmatpush.msra.mxu0 0.0
    %4605 = vmatpush.msra.mxu0 0.0
    %4606 = vmatpush.msra.mxu0 0.0
    %4607 = vmatpush.msra.mxu0 0.0
    %4608 = vmatpush.msra.mxu0 0.0
    %4609 = vmatpush.msra.mxu0 0.0
    %4610 = vmatpush.msra.mxu0 0.0
    %4611 = vmatpush.msra.mxu0 %v200
    %4612 = vmatpush.msra.mxu0 %v199
    %4613 = vmatpush.msra.mxu0 %v198
    %4614 = vmatpush.msra.mxu0 %v197
    %4615 = vmatmul.f32.gmra.mxu0 %v4557
    %v4616 = vpop.f32.mrf.mxu0
    %v4617 = vadd.f32 %v645, %v4616
    %4618 = vdwg.mxu0
    %4619 = vmatpush.msra.mxu0 0.0
    %4620 = vmatpush.msra.mxu0 0.0
    %4621 = vmatpush.msra.mxu0 0.0
    %4622 = vmatpush.msra.mxu0 0.0
    %4623 = vmatpush.msra.mxu0 0.0
    %4624 = vmatpush.msra.mxu0 0.0
    %4625 = vmatpush.msra.mxu0 0.0
    %4626 = vmatpush.msra.mxu0 0.0
    %4627 = vmatpush.msra.mxu0 0.0
    %4628 = vmatpush.msra.mxu0 0.0
    %4629 = vmatpush.msra.mxu0 0.0
    %4630 = vmatpush.msra.mxu0 0.0
    %4631 = vmatpush.msra.mxu0 %v144
    %4632 = vmatpush.msra.mxu0 %v143
    %4633 = vmatpush.msra.mxu0 %v142
    %4634 = vmatpush.msra.mxu0 %v141
    %4635 = vmatmul.f32.gmra.mxu0 %v4164
    %v4636 = vpop.f32.mrf.mxu0
    %v4637 = vadd.f32 %v668, %v4636
    %4638 = vdwg.mxu0
    %4639 = vmatpush.msra.mxu0 0.0
    %4640 = vmatpush.msra.mxu0 0.0
    %4641 = vmatpush.msra.mxu0 0.0
    %4642 = vmatpush.msra.mxu0 0.0
    %4643 = vmatpush.msra.mxu0 0.0
    %4644 = vmatpush.msra.mxu0 0.0
    %4645 = vmatpush.msra.mxu0 0.0
    %4646 = vmatpush.msra.mxu0 0.0
    %4647 = vmatpush.msra.mxu0 0.0
    %4648 = vmatpush.msra.mxu0 0.0
    %4649 = vmatpush.msra.mxu0 0.0
    %4650 = vmatpush.msra.mxu0 0.0
    %4651 = vmatpush.msra.mxu0 %v149
    %4652 = vmatpush.msra.mxu0 %v148
    %4653 = vmatpush.msra.mxu0 %v147
    %4654 = vmatpush.msra.mxu0 %v146
    %4655 = vmatmul.f32.gmra.mxu0 %v4164
    %v4656 = vpop.f32.mrf.mxu0
    %v4657 = vadd.f32 %v691, %v4656
    %4658 = vdwg.mxu0
    %4659 = vmatpush.msra.mxu0 0.0
    %4660 = vmatpush.msra.mxu0 0.0
    %4661 = vmatpush.msra.mxu0 0.0
    %4662 = vmatpush.msra.mxu0 0.0
    %4663 = vmatpush.msra.mxu0 0.0
    %4664 = vmatpush.msra.mxu0 0.0
    %4665 = vmatpush.msra.mxu0 0.0
    %4666 = vmatpush.msra.mxu0 0.0
    %4667 = vmatpush.msra.mxu0 0.0
    %4668 = vmatpush.msra.mxu0 0.0
    %4669 = vmatpush.msra.mxu0 0.0
    %4670 = vmatpush.msra.mxu0 0.0
    %4671 = vmatpush.msra.mxu0 %v154
    %4672 = vmatpush.msra.mxu0 %v153
    %4673 = vmatpush.msra.mxu0 %v152
    %4674 = vmatpush.msra.mxu0 %v151
    %4675 = vmatmul.f32.gmra.mxu0 %v4164
    %v4676 = vpop.f32.mrf.mxu0
    %v4677 = vadd.f32 %v714, %v4676
    %4678 = vdwg.mxu0
    %v4679 = vadd.f32 %v4577, %v4637
    %v4680 = vxor.u32 %v4679, 2147483648
    %v4681 = vmul.f32 %v4680, 1.442695
    %v4682 = vpow.pop %v4681
    %v4683 = vadd.f32 %v4682, 1.0
    %v4684 = vrcp.pop %v4683
    %v4685 = vmul.f32 %v4683, %v4684
    %v4686 = vsub.f32 1.0, %v4685
    %v4687 = vmul.f32 %v4684, %v4686
    %v4688 = vadd.f32 %v4684, %v4687
    %vm4689 = vweird.f32 %v4683
    %vm4690 = vweird.f32 %v4684
    %vm4691 = vmor %vm4689, %vm4690
    %v4692 = vsel %vm4691, %v4684, %v4688
    %v4693 = vand.u32 2147483647, %v4683
    %vm4694 = vcmp.eq.f32.partialorder %v4693, 8.507059e+37
    %v4695 = vand.u32 %v4683, 2147483648
    %v4696 = vor.u32 1.1754944e-38, %v4695
    %v4697 = vsel %vm4694, %v4696, %v4692
    %v4698 = vmul.f32 1.0, %v4697
    %v4699 = vadd.f32 %v4597, %v4657
    %v4700 = vxor.u32 %v4699, 2147483648
    %v4701 = vmul.f32 %v4700, 1.442695
    %v4702 = vpow.pop %v4701
    %v4703 = vadd.f32 %v4702, 1.0
    %v4704 = vrcp.pop %v4703
    %v4705 = vmul.f32 %v4703, %v4704
    %v4706 = vsub.f32 1.0, %v4705
    %v4707 = vmul.f32 %v4704, %v4706
    %v4708 = vadd.f32 %v4704, %v4707
    %vm4709 = vweird.f32 %v4703
    %vm4710 = vweird.f32 %v4704
    %vm4711 = vmor %vm4709, %vm4710
    %v4712 = vsel %vm4711, %v4704, %v4708
    %v4713 = vand.u32 2147483647, %v4703
    %vm4714 = vcmp.eq.f32.partialorder %v4713, 8.507059e+37
    %v4715 = vand.u32 %v4703, 2147483648
    %v4716 = vor.u32 1.1754944e-38, %v4715
    %v4717 = vsel %vm4714, %v4716, %v4712
    %v4718 = vmul.f32 1.0, %v4717
    %v4719 = vmul.f32 %v4698, %v4677
    %v4720 = vadd.f32 %v4617, %v4719
    %v4721 = vtanh.pop %v4720
    %v4722 = vsub.f32 1.0, %v4718
    %v4723 = vmul.f32 %v4722, %v4721
    %v4724 = vmul.f32 %v4718, %v4162
    %v4725 = vadd.f32 %v4723, %v4724
    %v4727 = vsel %vm290, %v4725, 0
    %4729 = vmatpush.msra.mxu0 0.0
    %4730 = vmatpush.msra.mxu0 0.0
    %4731 = vmatpush.msra.mxu0 0.0
    %4732 = vmatpush.msra.mxu0 0.0
    %4733 = vmatpush.msra.mxu0 0.0
    %4734 = vmatpush.msra.mxu0 0.0
    %4735 = vmatpush.msra.mxu0 0.0
    %4736 = vmatpush.msra.mxu0 0.0
    %4737 = vmatpush.msra.mxu0 0.0
    %4738 = vmatpush.msra.mxu0 0.0
    %4739 = vmatpush.msra.mxu0 0.0
    %4740 = vmatpush.msra.mxu0 0.0
    %4741 = vmatpush.msra.mxu0 %v215
    %4742 = vmatpush.msra.mxu0 %v214
    %4743 = vmatpush.msra.mxu0 %v213
    %4744 = vmatpush.msra.mxu0 %v212
    %4745 = vmatmul.f32.gmra.mxu0 %v4727
    %v4746 = vpop.f32.mrf.mxu0
    %v4747 = vadd.f32 %v784, %v4746
    %4748 = vdwg.mxu0
    %v4749 = vmax.f32 %v4747, 0.0
    %v4751 = vsel %vm290, %v4749, 0
    %4753 = vmatpush.msra.mxu0 0.0
    %4754 = vmatpush.msra.mxu0 0.0
    %4755 = vmatpush.msra.mxu0 0.0
    %4756 = vmatpush.msra.mxu0 0.0
    %4757 = vmatpush.msra.mxu0 0.0
    %4758 = vmatpush.msra.mxu0 0.0
    %4759 = vmatpush.msra.mxu0 0.0
    %4760 = vmatpush.msra.mxu0 0.0
    %4761 = vmatpush.msra.mxu0 0.0
    %4762 = vmatpush.msra.mxu0 0.0
    %4763 = vmatpush.msra.mxu0 0.0
    %4764 = vmatpush.msra.mxu0 0.0
    %4765 = vmatpush.msra.mxu0 %v220
    %4766 = vmatpush.msra.mxu0 %v219
    %4767 = vmatpush.msra.mxu0 %v218
    %4768 = vmatpush.msra.mxu0 %v217
    %4769 = vmatmul.f32.gmra.mxu0 %v4751
    %v4770 = vpop.f32.mrf.mxu0
    %v4771 = vadd.f32 %v811, %v4770
    %4772 = vdwg.mxu0
    %v4773 = vtanh.pop %v4771
    %4775 = vrot.lane.b32.xlu0 %v4773, 56
    %v4776 = vpop.permute.xlu0 %4775
    %vm4778 = vcmask 523712
    %4779 = vst.msk [vmem:[%s11] sm:$0xff] %vm4778, %v4776
    // Predicated region
    $region62: #{conditional_timegan_generator.1} parent=1 // pred_check
      _
    $region63: #{conditional_timegan_generator.1} parent=1 // pred_check_branch
      %4781 = sbr.rel (0) target = $region65
    $region64: #{conditional_timegan_generator.1} parent=1 // pred_region
      _
    $region65: #{conditional_timegan_generator.1} parent=1 // pred_fallthru
      _
    // Predicated region
    $region66: #{conditional_timegan_generator.1} parent=1 // pred_check
      _
    $region67: #{conditional_timegan_generator.1} parent=1 // pred_check_branch
      %4783 = sbr.rel (0) target = $region69
    $region68: #{conditional_timegan_generator.1} parent=1 // pred_region
      _
    $region69: #{conditional_timegan_generator.1} parent=1 // pred_fallthru
      _
    %4784 = vsyncpa [#allocation3], 1
    %4785 = vsyncpa [#allocation5], 1
    %4786 = vsyncpa [#allocation8], 1

</llo_original>
